<compile_context>
chip_gen: v6e
topology: v6e:2x2x1
jax: 0.10.0
libtpu: 0.0.40
codegen_flags: <defaults>
</compile_context>

<pallas_src>
import functools

import jax
import jax.numpy as jnp
from jax.experimental import pallas as pl
from jax.experimental.pallas import tpu as pltpu

INPUT_DIM = 784
HIDDEN_DIM = 400
LATENT_DIM = 20

# Lane-padded (multiple-of-128) sizes.
IN_PAD = 896      # 784 -> 896
HID_PAD = 512     # 400 -> 512
LAT_PAD = 128     # 20  -> 128
MLV_PAD = 2 * LAT_PAD  # fused [mu | logvar] output, 256 lanes

W_DTYPE = jnp.bfloat16   # weight storage dtype (DMA bandwidth win)


def _round_up(n, m):
    return ((n + m - 1) // m) * m


def _pad_to(a, shape):
    pads = [(0, s - d) for d, s in zip(a.shape, shape)]
    return jnp.pad(a, pads)


# ---------------------------------------------------------------------------
# Kernel
# ---------------------------------------------------------------------------
def _linear(x, w_ref, b_ref):
    w = w_ref[...].astype(jnp.float32)   # bf16 -> f32 for the dot
    return jnp.dot(x, w, preferred_element_type=jnp.float32) + b_ref[...]


def _resblock(x, wa_ref, ba_ref, wb_ref, bb_ref):
    out = jnp.maximum(_linear(x, wa_ref, ba_ref), 0.0)
    out = _linear(out, wb_ref, bb_ref) + x
    return jnp.maximum(out, 0.0)


def vae_kernel(x_ref, eps_ref,
               w1_ref, b1_ref,
               r1wa_ref, r1ba_ref, r1wb_ref, r1bb_ref,
               wml_ref, bml_ref,
               w3_ref, b3_ref,
               r2wa_ref, r2ba_ref, r2wb_ref, r2bb_ref,
               w4_ref, b4_ref,
               recon_ref, mlv_ref):
    x = x_ref[...]                                                # [TB, IN_PAD]

    # ---- encode ----
    h1 = jnp.maximum(_linear(x, w1_ref, b1_ref), 0.0)             # [TB, HID_PAD]
    h1 = _resblock(h1, r1wa_ref, r1ba_ref, r1wb_ref, r1bb_ref)
    mlv = _linear(h1, wml_ref, bml_ref)                           # [TB, 256] = [mu_pad | logvar_pad]
    mu_p = mlv[:, :LAT_PAD]                                       # padded lanes are exactly 0
    logvar_p = mlv[:, LAT_PAD:]                                   # padded lanes are exactly 0

    # ---- reparameterize ----
    std = jnp.exp(0.5 * logvar_p)
    z = mu_p + eps_ref[...] * std                                 # [TB, LAT_PAD]

    # ---- decode ----
    h3 = jnp.maximum(_linear(z, w3_ref, b3_ref), 0.0)             # [TB, HID_PAD]
    h3 = _resblock(h3, r2wa_ref, r2ba_ref, r2wb_ref, r2bb_ref)
    logits = _linear(h3, w4_ref, b4_ref)                          # [TB, IN_PAD]
    recon_ref[...] = jax.nn.sigmoid(logits)

    mlv_ref[...] = mlv


# ---------------------------------------------------------------------------
# Parameter init (PyTorch-style uniform(-1/sqrt(fan_in), 1/sqrt(fan_in)))
# Weights stored already transposed to [in, out]; biases as [1, out]; all f32.
# ---------------------------------------------------------------------------
def init_params(key):
    def linear(key, fan_in, fan_out):
        kw, kb = jax.random.split(key)
        bound = 1.0 / jnp.sqrt(float(fan_in))
        w = jax.random.uniform(kw, (fan_in, fan_out), jnp.float32, -bound, bound)
        b = jax.random.uniform(kb, (1, fan_out), jnp.float32, -bound, bound)
        return w, b

    keys = jax.random.split(key, 9)
    params = {}
    params["fc1"] = linear(keys[0], INPUT_DIM, HIDDEN_DIM)
    params["res1a"] = linear(keys[1], HIDDEN_DIM, HIDDEN_DIM)
    params["res1b"] = linear(keys[2], HIDDEN_DIM, HIDDEN_DIM)
    params["fc21"] = linear(keys[3], HIDDEN_DIM, LATENT_DIM)
    params["fc22"] = linear(keys[4], HIDDEN_DIM, LATENT_DIM)
    params["fc3"] = linear(keys[5], LATENT_DIM, HIDDEN_DIM)
    params["res2a"] = linear(keys[6], HIDDEN_DIM, HIDDEN_DIM)
    params["res2b"] = linear(keys[7], HIDDEN_DIM, HIDDEN_DIM)
    params["fc4"] = linear(keys[8], HIDDEN_DIM, INPUT_DIM)
    return params


def _pack_params(params):
    """Pad to lane multiples, fuse fc21/fc22, cast weights to bf16."""
    def wp(name, shape):
        w, _ = params[name]
        return _pad_to(w, shape).astype(W_DTYPE)

    def bp(name, width):
        _, b = params[name]
        return _pad_to(b, (1, width)).astype(jnp.float32)

    w1, b1 = wp("fc1", (IN_PAD, HID_PAD)), bp("fc1", HID_PAD)
    r1wa, r1ba = wp("res1a", (HID_PAD, HID_PAD)), bp("res1a", HID_PAD)
    r1wb, r1bb = wp("res1b", (HID_PAD, HID_PAD)), bp("res1b", HID_PAD)

    # Fused [mu | logvar] projection: mu in lanes [0,128), logvar in lanes [128,256).
    w21, b21 = params["fc21"]
    w22, b22 = params["fc22"]
    wml = jnp.zeros((HID_PAD, MLV_PAD), jnp.float32)
    wml = wml.at[:HIDDEN_DIM, :LATENT_DIM].set(w21)
    wml = wml.at[:HIDDEN_DIM, LAT_PAD:LAT_PAD + LATENT_DIM].set(w22)
    wml = wml.astype(W_DTYPE)
    bml = jnp.zeros((1, MLV_PAD), jnp.float32)
    bml = bml.at[:, :LATENT_DIM].set(b21)
    bml = bml.at[:, LAT_PAD:LAT_PAD + LATENT_DIM].set(b22)

    w3, b3 = wp("fc3", (LAT_PAD, HID_PAD)), bp("fc3", HID_PAD)
    r2wa, r2ba = wp("res2a", (HID_PAD, HID_PAD)), bp("res2a", HID_PAD)
    r2wb, r2bb = wp("res2b", (HID_PAD, HID_PAD)), bp("res2b", HID_PAD)
    w4, b4 = wp("fc4", (HID_PAD, IN_PAD)), bp("fc4", IN_PAD)

    return [w1, b1, r1wa, r1ba, r1wb, r1bb, wml, bml,
            w3, b3, r2wa, r2ba, r2wb, r2bb, w4, b4]


# ---------------------------------------------------------------------------
# Wrapper
# ---------------------------------------------------------------------------
@functools.partial(jax.jit, static_argnames=("block_b",))
def vae_forward(x, eps, params, *, block_b=None):
    """x: [B, 1, 28, 28] or [B, 784]; eps: [B, LATENT_DIM] ~ N(0, 1)."""
    x2d = x.reshape(-1, INPUT_DIM).astype(jnp.float32)   # == x.view(-1, 784)
    B = x2d.shape[0]

    # Batch tile: multiple of 8 (f32 sublane); 256 saturates MXU rows on v6e/v7x.
    if block_b is None:
        block_b = min(256, _round_up(B, 8))
    assert block_b % 8 == 0
    B_pad = _round_up(B, block_b)
    grid = (B_pad // block_b,)

    # Zero-pad batch rows and lane dims (zeros keep the math exact).
    x_p = _pad_to(x2d, (B_pad, IN_PAD))
    eps_p = _pad_to(eps.astype(jnp.float32), (B_pad, LAT_PAD))

    flat_params = _pack_params(params)

    def act_spec(width):
        return pl.BlockSpec((block_b, width), lambda i: (i, 0))

    def const_spec(arr):
        return pl.BlockSpec(arr.shape, lambda i: (0, 0))

    in_specs = [act_spec(IN_PAD), act_spec(LAT_PAD)] + [const_spec(p) for p in flat_params]
    out_specs = (act_spec(IN_PAD), act_spec(MLV_PAD))

    recon_p, mlv = pl.pallas_call(
        vae_kernel,
        grid=grid,
        out_shape=(
            jax.ShapeDtypeStruct((B_pad, IN_PAD), jnp.float32),
            jax.ShapeDtypeStruct((B_pad, MLV_PAD), jnp.float32),
        ),
        in_specs=in_specs,
        out_specs=out_specs,
        compiler_params=pltpu.CompilerParams(
            dimension_semantics=("parallel",),       # lets v7x shard batch tiles over 2 TCs
            vmem_limit_bytes=32 << 20,               # well under v7x's 64 MiB physical VMEM
        ),
    )(x_p, eps_p, *flat_params)

    recon = recon_p[:B, :INPUT_DIM]
    mu = mlv[:B, :LATENT_DIM]
    logvar = mlv[:B, LAT_PAD:LAT_PAD + LATENT_DIM]
    return recon, mu, logvar


# ---------------------------------------------------------------------------
# Pure-JAX f32 reference (mirrors the PyTorch forward) for validation
# ---------------------------------------------------------------------------
def vae_forward_ref(x, eps, params):
    x2d = x.reshape(-1, INPUT_DIM).astype(jnp.float32)

    def lin(h, name):
        w, b = params[name]
        return h @ w + b

    def res(h, a, b):
        out = jax.nn.relu(lin(h, a))
        out = lin(out, b) + h
        return jax.nn.relu(out)

    h1 = jax.nn.relu(lin(x2d, "fc1"))
    h1 = res(h1, "res1a", "res1b")
    mu = lin(h1, "fc21")
    logvar = lin(h1, "fc22")
    z = mu + eps * jnp.exp(0.5 * logvar)
    h3 = jax.nn.relu(lin(z, "fc3"))
    h3 = res(h3, "res2a", "res2b")
    recon = jax.nn.sigmoid(lin(h3, "fc4"))
    return recon, mu, logvar


if __name__ == "__main__":
    key = jax.random.PRNGKey(0)
    k_param, k_x, k_eps = jax.random.split(key, 3)

    B = 32
    params = init_params(k_param)
    # MNIST-style NCHW input in [0, 1]
    x = jax.random.uniform(k_x, (B, 1, 28, 28), jnp.float32)
    # eps drawn outside the kernel (torch.randn_like equivalent), fixed for determinism
    eps = jax.random.normal(k_eps, (B, LATENT_DIM), jnp.float32)

    # block_b=8 exercises the batch grid (grid=(4,)) at this small test size;
    # production use leaves block_b=None -> up to 256-row tiles.
    recon, mu, logvar = vae_forward(x, eps, params, block_b=8)
    jax.block_until_ready((recon, mu, logvar))

    r_ref, m_ref, lv_ref = vae_forward_ref(x, eps, params)
    assert recon.shape == (B, INPUT_DIM) and mu.shape == (B, LATENT_DIM)
    assert logvar.shape == (B, LATENT_DIM)
    # Tolerance relaxed vs the f32 reference because weights are stored in bf16.
    assert jnp.allclose(recon, r_ref, atol=2e-2, rtol=2e-2)
    assert jnp.allclose(mu, m_ref, atol=2e-2, rtol=2e-2)
    assert jnp.allclose(logvar, lv_ref, atol=2e-2, rtol=2e-2)

    print("KERNEL_OK")
</pallas_src>

<mosaic_0001>
module attributes {stable_mosaic.version = 11 : i64} {
  func.func @vae_kernel(%arg0: i32, %arg1: memref<8x896xf32, #tpu.memory_space<vmem>>, %arg2: memref<8x128xf32, #tpu.memory_space<vmem>>, %arg3: memref<896x512xbf16, #tpu.memory_space<vmem>>, %arg4: memref<1x512xf32, #tpu.memory_space<vmem>>, %arg5: memref<512x512xbf16, #tpu.memory_space<vmem>>, %arg6: memref<1x512xf32, #tpu.memory_space<vmem>>, %arg7: memref<512x512xbf16, #tpu.memory_space<vmem>>, %arg8: memref<1x512xf32, #tpu.memory_space<vmem>>, %arg9: memref<512x256xbf16, #tpu.memory_space<vmem>>, %arg10: memref<1x256xf32, #tpu.memory_space<vmem>>, %arg11: memref<128x512xbf16, #tpu.memory_space<vmem>>, %arg12: memref<1x512xf32, #tpu.memory_space<vmem>>, %arg13: memref<512x512xbf16, #tpu.memory_space<vmem>>, %arg14: memref<1x512xf32, #tpu.memory_space<vmem>>, %arg15: memref<512x512xbf16, #tpu.memory_space<vmem>>, %arg16: memref<1x512xf32, #tpu.memory_space<vmem>>, %arg17: memref<512x896xbf16, #tpu.memory_space<vmem>>, %arg18: memref<1x896xf32, #tpu.memory_space<vmem>>, %arg19: memref<8x896xf32, #tpu.memory_space<vmem>>, %arg20: memref<8x256xf32, #tpu.memory_space<vmem>>) attributes {dimension_semantics = [#tpu.dimension_semantics<parallel>], iteration_bounds = array<i64: 4>, scalar_prefetch = 0 : i64, scratch_operands = 0 : i64, tpu.core_type = #tpu.core_type<tc>, window_params = [{transform_indices = @transform_0, window_bounds = array<i64: 8, 896>}, {transform_indices = @transform_1, window_bounds = array<i64: 8, 128>}, {pipeline_mode = #tpu.pipeline_mode<synchronous>, transform_indices = @transform_2, window_bounds = array<i64: 896, 512>}, {pipeline_mode = #tpu.pipeline_mode<synchronous>, transform_indices = @transform_3, window_bounds = array<i64: 1, 512>}, {pipeline_mode = #tpu.pipeline_mode<synchronous>, transform_indices = @transform_4, window_bounds = array<i64: 512, 512>}, {pipeline_mode = #tpu.pipeline_mode<synchronous>, transform_indices = @transform_5, window_bounds = array<i64: 1, 512>}, {pipeline_mode = #tpu.pipeline_mode<synchronous>, transform_indices = @transform_6, window_bounds = array<i64: 512, 512>}, {pipeline_mode = #tpu.pipeline_mode<synchronous>, transform_indices = @transform_7, window_bounds = array<i64: 1, 512>}, {pipeline_mode = #tpu.pipeline_mode<synchronous>, transform_indices = @transform_8, window_bounds = array<i64: 512, 256>}, {pipeline_mode = #tpu.pipeline_mode<synchronous>, transform_indices = @transform_9, window_bounds = array<i64: 1, 256>}, {pipeline_mode = #tpu.pipeline_mode<synchronous>, transform_indices = @transform_10, window_bounds = array<i64: 128, 512>}, {pipeline_mode = #tpu.pipeline_mode<synchronous>, transform_indices = @transform_11, window_bounds = array<i64: 1, 512>}, {pipeline_mode = #tpu.pipeline_mode<synchronous>, transform_indices = @transform_12, window_bounds = array<i64: 512, 512>}, {pipeline_mode = #tpu.pipeline_mode<synchronous>, transform_indices = @transform_13, window_bounds = array<i64: 1, 512>}, {pipeline_mode = #tpu.pipeline_mode<synchronous>, transform_indices = @transform_14, window_bounds = array<i64: 512, 512>}, {pipeline_mode = #tpu.pipeline_mode<synchronous>, transform_indices = @transform_15, window_bounds = array<i64: 1, 512>}, {pipeline_mode = #tpu.pipeline_mode<synchronous>, transform_indices = @transform_16, window_bounds = array<i64: 512, 896>}, {pipeline_mode = #tpu.pipeline_mode<synchronous>, transform_indices = @transform_17, window_bounds = array<i64: 1, 896>}, {transform_indices = @transform_18, window_bounds = array<i64: 8, 896>}, {transform_indices = @transform_19, window_bounds = array<i64: 8, 256>}]} {
    %c0 = arith.constant 0 : index
    %c0_0 = arith.constant 0 : index
    %0 = vector.load %arg1[%c0, %c0_0] : memref<8x896xf32, #tpu.memory_space<vmem>>, vector<8x896xf32>
    %c0_1 = arith.constant 0 : index
    %c0_2 = arith.constant 0 : index
    %1 = vector.load %arg3[%c0_1, %c0_2] : memref<896x512xbf16, #tpu.memory_space<vmem>>, vector<896x512xbf16>
    %2 = arith.extf %1 : vector<896x512xbf16> to vector<896x512xf32>
    %cst = arith.constant dense<0.000000e+00> : vector<8x512xf32>
    %3 = tpu.matmul %0, %2, %cst {dimension_numbers = #tpu.dot_dimension_numbers<[1], [0], [0], [1], [0, 0, 1, 1], [], []>} : vector<8x896xf32>, vector<896x512xf32>, vector<8x512xf32> -> vector<8x512xf32>
    %c0_3 = arith.constant 0 : index
    %c0_4 = arith.constant 0 : index
    %4 = vector.load %arg4[%c0_3, %c0_4] : memref<1x512xf32, #tpu.memory_space<vmem>>, vector<1x512xf32>
    %5 = vector.broadcast %4 : vector<1x512xf32> to vector<8x512xf32>
    %6 = arith.addf %3, %5 : vector<8x512xf32>
    %cst_5 = arith.constant 0.000000e+00 : f32
    %7 = vector.broadcast %cst_5 : f32 to vector<8x512xf32>
    %8 = arith.maximumf %6, %7 : vector<8x512xf32>
    %c0_6 = arith.constant 0 : index
    %c0_7 = arith.constant 0 : index
    %9 = vector.load %arg5[%c0_6, %c0_7] : memref<512x512xbf16, #tpu.memory_space<vmem>>, vector<512x512xbf16>
    %10 = arith.extf %9 : vector<512x512xbf16> to vector<512x512xf32>
    %cst_8 = arith.constant dense<0.000000e+00> : vector<8x512xf32>
    %11 = tpu.matmul %8, %10, %cst_8 {dimension_numbers = #tpu.dot_dimension_numbers<[1], [0], [0], [1], [0, 0, 1, 1], [], []>} : vector<8x512xf32>, vector<512x512xf32>, vector<8x512xf32> -> vector<8x512xf32>
    %c0_9 = arith.constant 0 : index
    %c0_10 = arith.constant 0 : index
    %12 = vector.load %arg6[%c0_9, %c0_10] : memref<1x512xf32, #tpu.memory_space<vmem>>, vector<1x512xf32>
    %13 = vector.broadcast %12 : vector<1x512xf32> to vector<8x512xf32>
    %14 = arith.addf %11, %13 : vector<8x512xf32>
    %cst_11 = arith.constant 0.000000e+00 : f32
    %15 = vector.broadcast %cst_11 : f32 to vector<8x512xf32>
    %16 = arith.maximumf %14, %15 : vector<8x512xf32>
    %c0_12 = arith.constant 0 : index
    %c0_13 = arith.constant 0 : index
    %17 = vector.load %arg7[%c0_12, %c0_13] : memref<512x512xbf16, #tpu.memory_space<vmem>>, vector<512x512xbf16>
    %18 = arith.extf %17 : vector<512x512xbf16> to vector<512x512xf32>
    %cst_14 = arith.constant dense<0.000000e+00> : vector<8x512xf32>
    %19 = tpu.matmul %16, %18, %cst_14 {dimension_numbers = #tpu.dot_dimension_numbers<[1], [0], [0], [1], [0, 0, 1, 1], [], []>} : vector<8x512xf32>, vector<512x512xf32>, vector<8x512xf32> -> vector<8x512xf32>
    %c0_15 = arith.constant 0 : index
    %c0_16 = arith.constant 0 : index
    %20 = vector.load %arg8[%c0_15, %c0_16] : memref<1x512xf32, #tpu.memory_space<vmem>>, vector<1x512xf32>
    %21 = vector.broadcast %20 : vector<1x512xf32> to vector<8x512xf32>
    %22 = arith.addf %19, %21 : vector<8x512xf32>
    %23 = arith.addf %22, %8 : vector<8x512xf32>
    %cst_17 = arith.constant 0.000000e+00 : f32
    %24 = vector.broadcast %cst_17 : f32 to vector<8x512xf32>
    %25 = arith.maximumf %23, %24 : vector<8x512xf32>
    %c0_18 = arith.constant 0 : index
    %c0_19 = arith.constant 0 : index
    %26 = vector.load %arg9[%c0_18, %c0_19] : memref<512x256xbf16, #tpu.memory_space<vmem>>, vector<512x256xbf16>
    %27 = arith.extf %26 : vector<512x256xbf16> to vector<512x256xf32>
    %cst_20 = arith.constant dense<0.000000e+00> : vector<8x256xf32>
    %28 = tpu.matmul %25, %27, %cst_20 {dimension_numbers = #tpu.dot_dimension_numbers<[1], [0], [0], [1], [0, 0, 1, 1], [], []>} : vector<8x512xf32>, vector<512x256xf32>, vector<8x256xf32> -> vector<8x256xf32>
    %c0_21 = arith.constant 0 : index
    %c0_22 = arith.constant 0 : index
    %29 = vector.load %arg10[%c0_21, %c0_22] : memref<1x256xf32, #tpu.memory_space<vmem>>, vector<1x256xf32>
    %30 = vector.broadcast %29 : vector<1x256xf32> to vector<8x256xf32>
    %31 = arith.addf %28, %30 : vector<8x256xf32>
    %32 = vector.extract_strided_slice %31 {offsets = [0, 0], sizes = [8, 128], strides = [1, 1]} : vector<8x256xf32> to vector<8x128xf32>
    %33 = vector.extract_strided_slice %31 {offsets = [0, 128], sizes = [8, 128], strides = [1, 1]} : vector<8x256xf32> to vector<8x128xf32>
    %cst_23 = arith.constant 5.000000e-01 : f32
    %34 = vector.broadcast %cst_23 : f32 to vector<8x128xf32>
    %35 = arith.mulf %34, %33 : vector<8x128xf32>
    %36 = math.exp %35 : vector<8x128xf32>
    %c0_24 = arith.constant 0 : index
    %c0_25 = arith.constant 0 : index
    %37 = vector.load %arg2[%c0_24, %c0_25] : memref<8x128xf32, #tpu.memory_space<vmem>>, vector<8x128xf32>
    %38 = arith.mulf %37, %36 : vector<8x128xf32>
    %39 = arith.addf %32, %38 : vector<8x128xf32>
    %c0_26 = arith.constant 0 : index
    %c0_27 = arith.constant 0 : index
    %40 = vector.load %arg11[%c0_26, %c0_27] : memref<128x512xbf16, #tpu.memory_space<vmem>>, vector<128x512xbf16>
    %41 = arith.extf %40 : vector<128x512xbf16> to vector<128x512xf32>
    %cst_28 = arith.constant dense<0.000000e+00> : vector<8x512xf32>
    %42 = tpu.matmul %39, %41, %cst_28 {dimension_numbers = #tpu.dot_dimension_numbers<[1], [0], [0], [1], [0, 0, 1, 1], [], []>} : vector<8x128xf32>, vector<128x512xf32>, vector<8x512xf32> -> vector<8x512xf32>
    %c0_29 = arith.constant 0 : index
    %c0_30 = arith.constant 0 : index
    %43 = vector.load %arg12[%c0_29, %c0_30] : memref<1x512xf32, #tpu.memory_space<vmem>>, vector<1x512xf32>
    %44 = vector.broadcast %43 : vector<1x512xf32> to vector<8x512xf32>
    %45 = arith.addf %42, %44 : vector<8x512xf32>
    %cst_31 = arith.constant 0.000000e+00 : f32
    %46 = vector.broadcast %cst_31 : f32 to vector<8x512xf32>
    %47 = arith.maximumf %45, %46 : vector<8x512xf32>
    %c0_32 = arith.constant 0 : index
    %c0_33 = arith.constant 0 : index
    %48 = vector.load %arg13[%c0_32, %c0_33] : memref<512x512xbf16, #tpu.memory_space<vmem>>, vector<512x512xbf16>
    %49 = arith.extf %48 : vector<512x512xbf16> to vector<512x512xf32>
    %cst_34 = arith.constant dense<0.000000e+00> : vector<8x512xf32>
    %50 = tpu.matmul %47, %49, %cst_34 {dimension_numbers = #tpu.dot_dimension_numbers<[1], [0], [0], [1], [0, 0, 1, 1], [], []>} : vector<8x512xf32>, vector<512x512xf32>, vector<8x512xf32> -> vector<8x512xf32>
    %c0_35 = arith.constant 0 : index
    %c0_36 = arith.constant 0 : index
    %51 = vector.load %arg14[%c0_35, %c0_36] : memref<1x512xf32, #tpu.memory_space<vmem>>, vector<1x512xf32>
    %52 = vector.broadcast %51 : vector<1x512xf32> to vector<8x512xf32>
    %53 = arith.addf %50, %52 : vector<8x512xf32>
    %cst_37 = arith.constant 0.000000e+00 : f32
    %54 = vector.broadcast %cst_37 : f32 to vector<8x512xf32>
    %55 = arith.maximumf %53, %54 : vector<8x512xf32>
    %c0_38 = arith.constant 0 : index
    %c0_39 = arith.constant 0 : index
    %56 = vector.load %arg15[%c0_38, %c0_39] : memref<512x512xbf16, #tpu.memory_space<vmem>>, vector<512x512xbf16>
    %57 = arith.extf %56 : vector<512x512xbf16> to vector<512x512xf32>
    %cst_40 = arith.constant dense<0.000000e+00> : vector<8x512xf32>
    %58 = tpu.matmul %55, %57, %cst_40 {dimension_numbers = #tpu.dot_dimension_numbers<[1], [0], [0], [1], [0, 0, 1, 1], [], []>} : vector<8x512xf32>, vector<512x512xf32>, vector<8x512xf32> -> vector<8x512xf32>
    %c0_41 = arith.constant 0 : index
    %c0_42 = arith.constant 0 : index
    %59 = vector.load %arg16[%c0_41, %c0_42] : memref<1x512xf32, #tpu.memory_space<vmem>>, vector<1x512xf32>
    %60 = vector.broadcast %59 : vector<1x512xf32> to vector<8x512xf32>
    %61 = arith.addf %58, %60 : vector<8x512xf32>
    %62 = arith.addf %61, %47 : vector<8x512xf32>
    %cst_43 = arith.constant 0.000000e+00 : f32
    %63 = vector.broadcast %cst_43 : f32 to vector<8x512xf32>
    %64 = arith.maximumf %62, %63 : vector<8x512xf32>
    %c0_44 = arith.constant 0 : index
    %c0_45 = arith.constant 0 : index
    %65 = vector.load %arg17[%c0_44, %c0_45] : memref<512x896xbf16, #tpu.memory_space<vmem>>, vector<512x896xbf16>
    %66 = arith.extf %65 : vector<512x896xbf16> to vector<512x896xf32>
    %cst_46 = arith.constant dense<0.000000e+00> : vector<8x896xf32>
    %67 = tpu.matmul %64, %66, %cst_46 {dimension_numbers = #tpu.dot_dimension_numbers<[1], [0], [0], [1], [0, 0, 1, 1], [], []>} : vector<8x512xf32>, vector<512x896xf32>, vector<8x896xf32> -> vector<8x896xf32>
    %c0_47 = arith.constant 0 : index
    %c0_48 = arith.constant 0 : index
    %68 = vector.load %arg18[%c0_47, %c0_48] : memref<1x896xf32, #tpu.memory_space<vmem>>, vector<1x896xf32>
    %69 = vector.broadcast %68 : vector<1x896xf32> to vector<8x896xf32>
    %70 = arith.addf %67, %69 : vector<8x896xf32>
    %71 = arith.negf %70 : vector<8x896xf32>
    %72 = math.exp %71 : vector<8x896xf32>
    %cst_49 = arith.constant 1.000000e+00 : f32
    %73 = vector.broadcast %cst_49 : f32 to vector<8x896xf32>
    %74 = arith.addf %73, %72 : vector<8x896xf32>
    %75 = arith.divf %73, %74 : vector<8x896xf32>
    %c0_50 = arith.constant 0 : index
    %c0_51 = arith.constant 0 : index
    %76 = vector.load %arg19[%c0_50, %c0_51] : memref<8x896xf32, #tpu.memory_space<vmem>>, vector<8x896xf32>
    tpu.vector_store %arg19[%c0_50, %c0_51], %75 {strides = array<i32>} : memref<8x896xf32, #tpu.memory_space<vmem>>, vector<8x896xf32>,
    %c0_52 = arith.constant 0 : index
    %c0_53 = arith.constant 0 : index
    %77 = vector.load %arg20[%c0_52, %c0_53] : memref<8x256xf32, #tpu.memory_space<vmem>>, vector<8x256xf32>
    tpu.vector_store %arg20[%c0_52, %c0_53], %31 {strides = array<i32>} : memref<8x256xf32, #tpu.memory_space<vmem>>, vector<8x256xf32>,
    return
  }
  func.func @transform_0(%arg0: i32) -> (i32, i32) {
    %c0_i32 = arith.constant 0 : i32
    %c0_i32_0 = arith.constant 0 : i32
    return %arg0, %c0_i32 : i32, i32
  }
  func.func @transform_1(%arg0: i32) -> (i32, i32) {
    %c0_i32 = arith.constant 0 : i32
    %c0_i32_0 = arith.constant 0 : i32
    return %arg0, %c0_i32 : i32, i32
  }
  func.func @transform_2(%arg0: i32) -> (i32, i32) {
    %c0_i32 = arith.constant 0 : i32
    %c0_i32_0 = arith.constant 0 : i32
    %c0_i32_1 = arith.constant 0 : i32
    return %c0_i32, %c0_i32_0 : i32, i32
  }
  func.func @transform_3(%arg0: i32) -> (i32, i32) {
    %c0_i32 = arith.constant 0 : i32
    %c0_i32_0 = arith.constant 0 : i32
    %c0_i32_1 = arith.constant 0 : i32
    return %c0_i32, %c0_i32_0 : i32, i32
  }
  func.func @transform_4(%arg0: i32) -> (i32, i32) {
    %c0_i32 = arith.constant 0 : i32
    %c0_i32_0 = arith.constant 0 : i32
    %c0_i32_1 = arith.constant 0 : i32
    return %c0_i32, %c0_i32_0 : i32, i32
  }
  func.func @transform_5(%arg0: i32) -> (i32, i32) {
    %c0_i32 = arith.constant 0 : i32
    %c0_i32_0 = arith.constant 0 : i32
    %c0_i32_1 = arith.constant 0 : i32
    return %c0_i32, %c0_i32_0 : i32, i32
  }
  func.func @transform_6(%arg0: i32) -> (i32, i32) {
    %c0_i32 = arith.constant 0 : i32
    %c0_i32_0 = arith.constant 0 : i32
    %c0_i32_1 = arith.constant 0 : i32
    return %c0_i32, %c0_i32_0 : i32, i32
  }
  func.func @transform_7(%arg0: i32) -> (i32, i32) {
    %c0_i32 = arith.constant 0 : i32
    %c0_i32_0 = arith.constant 0 : i32
    %c0_i32_1 = arith.constant 0 : i32
    return %c0_i32, %c0_i32_0 : i32, i32
  }
  func.func @transform_8(%arg0: i32) -> (i32, i32) {
    %c0_i32 = arith.constant 0 : i32
    %c0_i32_0 = arith.constant 0 : i32
    %c0_i32_1 = arith.constant 0 : i32
    return %c0_i32, %c0_i32_0 : i32, i32
  }
  func.func @transform_9(%arg0: i32) -> (i32, i32) {
    %c0_i32 = arith.constant 0 : i32
    %c0_i32_0 = arith.constant 0 : i32
    %c0_i32_1 = arith.constant 0 : i32
    return %c0_i32, %c0_i32_0 : i32, i32
  }
  func.func @transform_10(%arg0: i32) -> (i32, i32) {
    %c0_i32 = arith.constant 0 : i32
    %c0_i32_0 = arith.constant 0 : i32
    %c0_i32_1 = arith.constant 0 : i32
    return %c0_i32, %c0_i32_0 : i32, i32
  }
  func.func @transform_11(%arg0: i32) -> (i32, i32) {
    %c0_i32 = arith.constant 0 : i32
    %c0_i32_0 = arith.constant 0 : i32
    %c0_i32_1 = arith.constant 0 : i32
    return %c0_i32, %c0_i32_0 : i32, i32
  }
  func.func @transform_12(%arg0: i32) -> (i32, i32) {
    %c0_i32 = arith.constant 0 : i32
    %c0_i32_0 = arith.constant 0 : i32
    %c0_i32_1 = arith.constant 0 : i32
    return %c0_i32, %c0_i32_0 : i32, i32
  }
  func.func @transform_13(%arg0: i32) -> (i32, i32) {
    %c0_i32 = arith.constant 0 : i32
    %c0_i32_0 = arith.constant 0 : i32
    %c0_i32_1 = arith.constant 0 : i32
    return %c0_i32, %c0_i32_0 : i32, i32
  }
  func.func @transform_14(%arg0: i32) -> (i32, i32) {
    %c0_i32 = arith.constant 0 : i32
    %c0_i32_0 = arith.constant 0 : i32
    %c0_i32_1 = arith.constant 0 : i32
    return %c0_i32, %c0_i32_0 : i32, i32
  }
  func.func @transform_15(%arg0: i32) -> (i32, i32) {
    %c0_i32 = arith.constant 0 : i32
    %c0_i32_0 = arith.constant 0 : i32
    %c0_i32_1 = arith.constant 0 : i32
    return %c0_i32, %c0_i32_0 : i32, i32
  }
  func.func @transform_16(%arg0: i32) -> (i32, i32) {
    %c0_i32 = arith.constant 0 : i32
    %c0_i32_0 = arith.constant 0 : i32
    %c0_i32_1 = arith.constant 0 : i32
    return %c0_i32, %c0_i32_0 : i32, i32
  }
  func.func @transform_17(%arg0: i32) -> (i32, i32) {
    %c0_i32 = arith.constant 0 : i32
    %c0_i32_0 = arith.constant 0 : i32
    %c0_i32_1 = arith.constant 0 : i32
    return %c0_i32, %c0_i32_0 : i32, i32
  }
  func.func @transform_18(%arg0: i32) -> (i32, i32) {
    %c0_i32 = arith.constant 0 : i32
    %c0_i32_0 = arith.constant 0 : i32
    return %arg0, %c0_i32 : i32, i32
  }
  func.func @transform_19(%arg0: i32) -> (i32, i32) {
    %c0_i32 = arith.constant 0 : i32
    %c0_i32_0 = arith.constant 0 : i32
    return %arg0, %c0_i32 : i32, i32
  }
}

</mosaic_0001>

<llo_original>
// kernel: vae_forward.1
$region0: #{vae_forward.1}
  #allocation0 [shape = 'u32[]', space=smem, size = 0x4, offset = 0x4, fixed_abs, tag = 'smem constant byte address 0x4 - core index']
  #allocation1 [shape = 'u32[144,128]{1,0:T(1,128)}', space=vmem, size = 0x12000, scoped, tag = 'internal scratch']
  %s0 = inlined_call_operand.vmem [shape: f32[32,896], index: 0, kind: input, shape index: {}]
  %s1 = inlined_call_operand.vmem [shape: f32[32,128], index: 1, kind: input, shape index: {}]
  %s2 = inlined_call_operand.vmem [shape: bf16[896,512], index: 2, kind: input, shape index: {}]
  %s3 = inlined_call_operand.vmem [shape: f32[1,512], index: 3, kind: input, shape index: {}]
  %s4 = inlined_call_operand.vmem [shape: bf16[512,512], index: 4, kind: input, shape index: {}]
  %s5 = inlined_call_operand.vmem [shape: f32[1,512], index: 5, kind: input, shape index: {}]
  %s6 = inlined_call_operand.vmem [shape: bf16[512,512], index: 6, kind: input, shape index: {}]
  %s7 = inlined_call_operand.vmem [shape: f32[1,512], index: 7, kind: input, shape index: {}]
  %s8 = inlined_call_operand.vmem [shape: bf16[512,256], index: 8, kind: input, shape index: {}]
  %s9 = inlined_call_operand.vmem [shape: f32[1,256], index: 9, kind: input, shape index: {}]
  %s10 = inlined_call_operand.vmem [shape: bf16[128,512], index: 10, kind: input, shape index: {}]
  %s11 = inlined_call_operand.vmem [shape: f32[1,512], index: 11, kind: input, shape index: {}]
  %s12 = inlined_call_operand.vmem [shape: bf16[512,512], index: 12, kind: input, shape index: {}]
  %s13 = inlined_call_operand.vmem [shape: f32[1,512], index: 13, kind: input, shape index: {}]
  %s14 = inlined_call_operand.vmem [shape: bf16[512,512], index: 14, kind: input, shape index: {}]
  %s15 = inlined_call_operand.vmem [shape: f32[1,512], index: 15, kind: input, shape index: {}]
  %s16 = inlined_call_operand.vmem [shape: bf16[512,896], index: 16, kind: input, shape index: {}]
  %s17 = inlined_call_operand.vmem [shape: f32[1,896], index: 17, kind: input, shape index: {}]
  %s18 = inlined_call_operand.hbm [shape: f32[32,896], index: 18, kind: output, shape index: {0}]
  %s19 = inlined_call_operand.vmem [shape: f32[32,256], index: 19, kind: output, shape index: {1}]
  %20 = xla_tuple %s18, %s19
  %s21 = sld [smem:[#allocation0]]
  $region113: #{vae_forward.1} parent=0
    _
  %s23 = ssub.s32 1, %s21
  %s24 = scalar_select 0, %s23, %s21
  $region1: #{vae_forward.1} parent=0
    #allocation2 [shape = 'u8[57344]{0}', space=vmem, size = 0xe000, scoped, tag = 'output window, operand 0']
    #allocation3 [shape = 's32[2]{0}', space=sflag, size = 0x8, scoped, tag = 'scoped memory for vae_forward.1']
    %25 = vsyncpa [#allocation3], 0
    %s26 = scalar_lea.sflag [#allocation3], 1
    %27 = vsyncpa %s26, 0
    loop: start=0, step=1, limit=6
    $region2: #{vae_forward.1} parent=1 // loop_pre_header
      _
    $region3: #{vae_forward.1} parent=1 // loop_header
      %s29 = sphi 0, %s33
      %p30 = scmp.ge.s32.totalorder %s29, 6
      %s39 = sphi 0, %s41
      %s42 = sphi 0, %s39
      %s43 = sphi 0, %s42
      %s59 = sphi 0, %s43
      %s65 = sphi 0, %s67
      %s68 = sphi 0, %s65
      %s69 = sphi 0, %s68
      %s85 = sphi 0, %s69
      %s89 = sphi 0, %s89
      %s91 = sphi 0, %s89
      %s92 = sphi 0, %s91
      %s106 = sphi 0, %s92
      %s110 = sphi 0, %s110
      %s112 = sphi 0, %s110
      %s113 = sphi 0, %s112
      %s127 = sphi 0, %s113
      %s131 = sphi 0, %s131
      %s133 = sphi 0, %s131
      %s134 = sphi 0, %s133
      %s148 = sphi 0, %s134
      %s152 = sphi 0, %s152
      %s154 = sphi 0, %s152
      %s155 = sphi 0, %s154
      %s169 = sphi 0, %s155
      %s173 = sphi 0, %s173
      %s175 = sphi 0, %s173
      %s176 = sphi 0, %s175
      %s190 = sphi 0, %s176
      %s194 = sphi 0, %s194
      %s196 = sphi 0, %s194
      %s197 = sphi 0, %s196
      %s211 = sphi 0, %s197
      %s215 = sphi 0, %s215
      %s217 = sphi 0, %s215
      %s218 = sphi 0, %s217
      %s232 = sphi 0, %s218
      %s236 = sphi 0, %s236
      %s238 = sphi 0, %s236
      %s239 = sphi 0, %s238
      %s253 = sphi 0, %s239
      %s257 = sphi 0, %s257
      %s259 = sphi 0, %s257
      %s260 = sphi 0, %s259
      %s274 = sphi 0, %s260
      %s278 = sphi 0, %s278
      %s280 = sphi 0, %s278
      %s281 = sphi 0, %s280
      %s295 = sphi 0, %s281
      %s299 = sphi 0, %s299
      %s301 = sphi 0, %s299
      %s302 = sphi 0, %s301
      %s316 = sphi 0, %s302
      %s320 = sphi 0, %s320
      %s322 = sphi 0, %s320
      %s323 = sphi 0, %s322
      %s337 = sphi 0, %s323
      %s341 = sphi 0, %s341
      %s343 = sphi 0, %s341
      %s344 = sphi 0, %s343
      %s358 = sphi 0, %s344
      %s362 = sphi 0, %s362
      %s364 = sphi 0, %s362
      %s365 = sphi 0, %s364
      %s379 = sphi 0, %s365
      %s383 = sphi 0, %s383
      %s385 = sphi 0, %s383
      %s386 = sphi 0, %s385
      %s400 = sphi 0, %s386
      %s404 = sphi 0, %s404
      %s406 = sphi 0, %s404
      %s407 = sphi 0, %s406
      %s421 = sphi 0, %s407
      %s427 = sphi 0, %s429
      %s430 = sphi 0, %s427
      %s431 = sphi 0, %s430
      %s447 = sphi 0, %s431
      %s453 = sphi 0, %s455
      %s456 = sphi 0, %s453
      %s457 = sphi 0, %s456
      %s473 = sphi 0, %s457
    $region4: #{vae_forward.1} parent=1 // loop_header_branch
      %32 = sbr.rel (%p30) target = $region8
    $region5: #{vae_forward.1} parent=1 // loop_body
      %s34 = ssub.s32 %s29, 1
      %s35 = ssub.s32 %s29, 2
      %s36 = sadd.s32 %s29, 1
      %s37 = ssub.s32 %s29, %s36
      %p38 = scmp.eq.s32.totalorder %s37, 0
      %s40 = sadd.s32 %s39, 1
      %s41 = scalar_select %p38, %s39, %s40
      %p44 = pneg %p38
      %p45 = scmp.eq.s32.totalorder %s29, 3
      %p46 = por %p44, %p45
      %p47 = scmp.ne.s32.totalorder %s39, %s42
      %p48 = scmp.eq.s32.totalorder %s29, 0
      %p49 = por %p47, %p48
      %p50 = scmp.ne.s32.totalorder %s39, %s42
      %p51 = scmp.eq.s32.totalorder %s34, 3
      %p52 = por %p50, %p51
      %p53 = scmp.ne.s32.totalorder %s42, %s43
      %p54 = scmp.eq.s32.totalorder %s34, 0
      %p55 = por %p53, %p54
      %p56 = scmp.ne.s32.totalorder %s42, %s43
      %p57 = scmp.eq.s32.totalorder %s35, 3
      %p58 = por %p56, %p57
      %p60 = scmp.ne.s32.totalorder %s43, %s59
      %p61 = scmp.eq.s32.totalorder %s35, 0
      %p62 = por %p60, %p61
      %s63 = ssub.s32 %s29, %s36
      %p64 = scmp.eq.s32.totalorder %s63, 0
      %s66 = sadd.s32 %s65, 1
      %s67 = scalar_select %p64, %s65, %s66
      %p70 = pneg %p64
      %p71 = scmp.eq.s32.totalorder %s29, 3
      %p72 = por %p70, %p71
      %p73 = scmp.ne.s32.totalorder %s65, %s68
      %p74 = scmp.eq.s32.totalorder %s29, 0
      %p75 = por %p73, %p74
      %p76 = scmp.ne.s32.totalorder %s65, %s68
      %p77 = scmp.eq.s32.totalorder %s34, 3
      %p78 = por %p76, %p77
      %p79 = scmp.ne.s32.totalorder %s68, %s69
      %p80 = scmp.eq.s32.totalorder %s34, 0
      %p81 = por %p79, %p80
      %p82 = scmp.ne.s32.totalorder %s68, %s69
      %p83 = scmp.eq.s32.totalorder %s35, 3
      %p84 = por %p82, %p83
      %p86 = scmp.ne.s32.totalorder %s69, %s85
      %p87 = scmp.eq.s32.totalorder %s35, 0
      %p88 = por %p86, %p87
      %s90 = sadd.s32 %s89, 1
      %p93 = scmp.eq.s32.totalorder %s29, 3
      %p94 = scmp.ne.s32.totalorder %s89, %s91
      %p95 = scmp.eq.s32.totalorder %s29, 0
      %p96 = por %p94, %p95
      %p97 = scmp.ne.s32.totalorder %s89, %s91
      %p98 = scmp.eq.s32.totalorder %s34, 3
      %p99 = por %p97, %p98
      %p100 = scmp.ne.s32.totalorder %s91, %s92
      %p101 = scmp.eq.s32.totalorder %s34, 0
      %p102 = por %p100, %p101
      %p103 = scmp.ne.s32.totalorder %s91, %s92
      %p104 = scmp.eq.s32.totalorder %s35, 3
      %p105 = por %p103, %p104
      %p107 = scmp.ne.s32.totalorder %s92, %s106
      %p108 = scmp.eq.s32.totalorder %s35, 0
      %p109 = por %p107, %p108
      %s111 = sadd.s32 %s110, 1
      %p114 = scmp.eq.s32.totalorder %s29, 3
      %p115 = scmp.ne.s32.totalorder %s110, %s112
      %p116 = scmp.eq.s32.totalorder %s29, 0
      %p117 = por %p115, %p116
      %p118 = scmp.ne.s32.totalorder %s110, %s112
      %p119 = scmp.eq.s32.totalorder %s34, 3
      %p120 = por %p118, %p119
      %p121 = scmp.ne.s32.totalorder %s112, %s113
      %p122 = scmp.eq.s32.totalorder %s34, 0
      %p123 = por %p121, %p122
      %p124 = scmp.ne.s32.totalorder %s112, %s113
      %p125 = scmp.eq.s32.totalorder %s35, 3
      %p126 = por %p124, %p125
      %p128 = scmp.ne.s32.totalorder %s113, %s127
      %p129 = scmp.eq.s32.totalorder %s35, 0
      %p130 = por %p128, %p129
      %s132 = sadd.s32 %s131, 1
      %p135 = scmp.eq.s32.totalorder %s29, 3
      %p136 = scmp.ne.s32.totalorder %s131, %s133
      %p137 = scmp.eq.s32.totalorder %s29, 0
      %p138 = por %p136, %p137
      %p139 = scmp.ne.s32.totalorder %s131, %s133
      %p140 = scmp.eq.s32.totalorder %s34, 3
      %p141 = por %p139, %p140
      %p142 = scmp.ne.s32.totalorder %s133, %s134
      %p143 = scmp.eq.s32.totalorder %s34, 0
      %p144 = por %p142, %p143
      %p145 = scmp.ne.s32.totalorder %s133, %s134
      %p146 = scmp.eq.s32.totalorder %s35, 3
      %p147 = por %p145, %p146
      %p149 = scmp.ne.s32.totalorder %s134, %s148
      %p150 = scmp.eq.s32.totalorder %s35, 0
      %p151 = por %p149, %p150
      %s153 = sadd.s32 %s152, 1
      %p156 = scmp.eq.s32.totalorder %s29, 3
      %p157 = scmp.ne.s32.totalorder %s152, %s154
      %p158 = scmp.eq.s32.totalorder %s29, 0
      %p159 = por %p157, %p158
      %p160 = scmp.ne.s32.totalorder %s152, %s154
      %p161 = scmp.eq.s32.totalorder %s34, 3
      %p162 = por %p160, %p161
      %p163 = scmp.ne.s32.totalorder %s154, %s155
      %p164 = scmp.eq.s32.totalorder %s34, 0
      %p165 = por %p163, %p164
      %p166 = scmp.ne.s32.totalorder %s154, %s155
      %p167 = scmp.eq.s32.totalorder %s35, 3
      %p168 = por %p166, %p167
      %p170 = scmp.ne.s32.totalorder %s155, %s169
      %p171 = scmp.eq.s32.totalorder %s35, 0
      %p172 = por %p170, %p171
      %s174 = sadd.s32 %s173, 1
      %p177 = scmp.eq.s32.totalorder %s29, 3
      %p178 = scmp.ne.s32.totalorder %s173, %s175
      %p179 = scmp.eq.s32.totalorder %s29, 0
      %p180 = por %p178, %p179
      %p181 = scmp.ne.s32.totalorder %s173, %s175
      %p182 = scmp.eq.s32.totalorder %s34, 3
      %p183 = por %p181, %p182
      %p184 = scmp.ne.s32.totalorder %s175, %s176
      %p185 = scmp.eq.s32.totalorder %s34, 0
      %p186 = por %p184, %p185
      %p187 = scmp.ne.s32.totalorder %s175, %s176
      %p188 = scmp.eq.s32.totalorder %s35, 3
      %p189 = por %p187, %p188
      %p191 = scmp.ne.s32.totalorder %s176, %s190
      %p192 = scmp.eq.s32.totalorder %s35, 0
      %p193 = por %p191, %p192
      %s195 = sadd.s32 %s194, 1
      %p198 = scmp.eq.s32.totalorder %s29, 3
      %p199 = scmp.ne.s32.totalorder %s194, %s196
      %p200 = scmp.eq.s32.totalorder %s29, 0
      %p201 = por %p199, %p200
      %p202 = scmp.ne.s32.totalorder %s194, %s196
      %p203 = scmp.eq.s32.totalorder %s34, 3
      %p204 = por %p202, %p203
      %p205 = scmp.ne.s32.totalorder %s196, %s197
      %p206 = scmp.eq.s32.totalorder %s34, 0
      %p207 = por %p205, %p206
      %p208 = scmp.ne.s32.totalorder %s196, %s197
      %p209 = scmp.eq.s32.totalorder %s35, 3
      %p210 = por %p208, %p209
      %p212 = scmp.ne.s32.totalorder %s197, %s211
      %p213 = scmp.eq.s32.totalorder %s35, 0
      %p214 = por %p212, %p213
      %s216 = sadd.s32 %s215, 1
      %p219 = scmp.eq.s32.totalorder %s29, 3
      %p220 = scmp.ne.s32.totalorder %s215, %s217
      %p221 = scmp.eq.s32.totalorder %s29, 0
      %p222 = por %p220, %p221
      %p223 = scmp.ne.s32.totalorder %s215, %s217
      %p224 = scmp.eq.s32.totalorder %s34, 3
      %p225 = por %p223, %p224
      %p226 = scmp.ne.s32.totalorder %s217, %s218
      %p227 = scmp.eq.s32.totalorder %s34, 0
      %p228 = por %p226, %p227
      %p229 = scmp.ne.s32.totalorder %s217, %s218
      %p230 = scmp.eq.s32.totalorder %s35, 3
      %p231 = por %p229, %p230
      %p233 = scmp.ne.s32.totalorder %s218, %s232
      %p234 = scmp.eq.s32.totalorder %s35, 0
      %p235 = por %p233, %p234
      %s237 = sadd.s32 %s236, 1
      %p240 = scmp.eq.s32.totalorder %s29, 3
      %p241 = scmp.ne.s32.totalorder %s236, %s238
      %p242 = scmp.eq.s32.totalorder %s29, 0
      %p243 = por %p241, %p242
      %p244 = scmp.ne.s32.totalorder %s236, %s238
      %p245 = scmp.eq.s32.totalorder %s34, 3
      %p246 = por %p244, %p245
      %p247 = scmp.ne.s32.totalorder %s238, %s239
      %p248 = scmp.eq.s32.totalorder %s34, 0
      %p249 = por %p247, %p248
      %p250 = scmp.ne.s32.totalorder %s238, %s239
      %p251 = scmp.eq.s32.totalorder %s35, 3
      %p252 = por %p250, %p251
      %p254 = scmp.ne.s32.totalorder %s239, %s253
      %p255 = scmp.eq.s32.totalorder %s35, 0
      %p256 = por %p254, %p255
      %s258 = sadd.s32 %s257, 1
      %p261 = scmp.eq.s32.totalorder %s29, 3
      %p262 = scmp.ne.s32.totalorder %s257, %s259
      %p263 = scmp.eq.s32.totalorder %s29, 0
      %p264 = por %p262, %p263
      %p265 = scmp.ne.s32.totalorder %s257, %s259
      %p266 = scmp.eq.s32.totalorder %s34, 3
      %p267 = por %p265, %p266
      %p268 = scmp.ne.s32.totalorder %s259, %s260
      %p269 = scmp.eq.s32.totalorder %s34, 0
      %p270 = por %p268, %p269
      %p271 = scmp.ne.s32.totalorder %s259, %s260
      %p272 = scmp.eq.s32.totalorder %s35, 3
      %p273 = por %p271, %p272
      %p275 = scmp.ne.s32.totalorder %s260, %s274
      %p276 = scmp.eq.s32.totalorder %s35, 0
      %p277 = por %p275, %p276
      %s279 = sadd.s32 %s278, 1
      %p282 = scmp.eq.s32.totalorder %s29, 3
      %p283 = scmp.ne.s32.totalorder %s278, %s280
      %p284 = scmp.eq.s32.totalorder %s29, 0
      %p285 = por %p283, %p284
      %p286 = scmp.ne.s32.totalorder %s278, %s280
      %p287 = scmp.eq.s32.totalorder %s34, 3
      %p288 = por %p286, %p287
      %p289 = scmp.ne.s32.totalorder %s280, %s281
      %p290 = scmp.eq.s32.totalorder %s34, 0
      %p291 = por %p289, %p290
      %p292 = scmp.ne.s32.totalorder %s280, %s281
      %p293 = scmp.eq.s32.totalorder %s35, 3
      %p294 = por %p292, %p293
      %p296 = scmp.ne.s32.totalorder %s281, %s295
      %p297 = scmp.eq.s32.totalorder %s35, 0
      %p298 = por %p296, %p297
      %s300 = sadd.s32 %s299, 1
      %p303 = scmp.eq.s32.totalorder %s29, 3
      %p304 = scmp.ne.s32.totalorder %s299, %s301
      %p305 = scmp.eq.s32.totalorder %s29, 0
      %p306 = por %p304, %p305
      %p307 = scmp.ne.s32.totalorder %s299, %s301
      %p308 = scmp.eq.s32.totalorder %s34, 3
      %p309 = por %p307, %p308
      %p310 = scmp.ne.s32.totalorder %s301, %s302
      %p311 = scmp.eq.s32.totalorder %s34, 0
      %p312 = por %p310, %p311
      %p313 = scmp.ne.s32.totalorder %s301, %s302
      %p314 = scmp.eq.s32.totalorder %s35, 3
      %p315 = por %p313, %p314
      %p317 = scmp.ne.s32.totalorder %s302, %s316
      %p318 = scmp.eq.s32.totalorder %s35, 0
      %p319 = por %p317, %p318
      %s321 = sadd.s32 %s320, 1
      %p324 = scmp.eq.s32.totalorder %s29, 3
      %p325 = scmp.ne.s32.totalorder %s320, %s322
      %p326 = scmp.eq.s32.totalorder %s29, 0
      %p327 = por %p325, %p326
      %p328 = scmp.ne.s32.totalorder %s320, %s322
      %p329 = scmp.eq.s32.totalorder %s34, 3
      %p330 = por %p328, %p329
      %p331 = scmp.ne.s32.totalorder %s322, %s323
      %p332 = scmp.eq.s32.totalorder %s34, 0
      %p333 = por %p331, %p332
      %p334 = scmp.ne.s32.totalorder %s322, %s323
      %p335 = scmp.eq.s32.totalorder %s35, 3
      %p336 = por %p334, %p335
      %p338 = scmp.ne.s32.totalorder %s323, %s337
      %p339 = scmp.eq.s32.totalorder %s35, 0
      %p340 = por %p338, %p339
      %s342 = sadd.s32 %s341, 1
      %p345 = scmp.eq.s32.totalorder %s29, 3
      %p346 = scmp.ne.s32.totalorder %s341, %s343
      %p347 = scmp.eq.s32.totalorder %s29, 0
      %p348 = por %p346, %p347
      %p349 = scmp.ne.s32.totalorder %s341, %s343
      %p350 = scmp.eq.s32.totalorder %s34, 3
      %p351 = por %p349, %p350
      %p352 = scmp.ne.s32.totalorder %s343, %s344
      %p353 = scmp.eq.s32.totalorder %s34, 0
      %p354 = por %p352, %p353
      %p355 = scmp.ne.s32.totalorder %s343, %s344
      %p356 = scmp.eq.s32.totalorder %s35, 3
      %p357 = por %p355, %p356
      %p359 = scmp.ne.s32.totalorder %s344, %s358
      %p360 = scmp.eq.s32.totalorder %s35, 0
      %p361 = por %p359, %p360
      %s363 = sadd.s32 %s362, 1
      %p366 = scmp.eq.s32.totalorder %s29, 3
      %p367 = scmp.ne.s32.totalorder %s362, %s364
      %p368 = scmp.eq.s32.totalorder %s29, 0
      %p369 = por %p367, %p368
      %p370 = scmp.ne.s32.totalorder %s362, %s364
      %p371 = scmp.eq.s32.totalorder %s34, 3
      %p372 = por %p370, %p371
      %p373 = scmp.ne.s32.totalorder %s364, %s365
      %p374 = scmp.eq.s32.totalorder %s34, 0
      %p375 = por %p373, %p374
      %p376 = scmp.ne.s32.totalorder %s364, %s365
      %p377 = scmp.eq.s32.totalorder %s35, 3
      %p378 = por %p376, %p377
      %p380 = scmp.ne.s32.totalorder %s365, %s379
      %p381 = scmp.eq.s32.totalorder %s35, 0
      %p382 = por %p380, %p381
      %s384 = sadd.s32 %s383, 1
      %p387 = scmp.eq.s32.totalorder %s29, 3
      %p388 = scmp.ne.s32.totalorder %s383, %s385
      %p389 = scmp.eq.s32.totalorder %s29, 0
      %p390 = por %p388, %p389
      %p391 = scmp.ne.s32.totalorder %s383, %s385
      %p392 = scmp.eq.s32.totalorder %s34, 3
      %p393 = por %p391, %p392
      %p394 = scmp.ne.s32.totalorder %s385, %s386
      %p395 = scmp.eq.s32.totalorder %s34, 0
      %p396 = por %p394, %p395
      %p397 = scmp.ne.s32.totalorder %s385, %s386
      %p398 = scmp.eq.s32.totalorder %s35, 3
      %p399 = por %p397, %p398
      %p401 = scmp.ne.s32.totalorder %s386, %s400
      %p402 = scmp.eq.s32.totalorder %s35, 0
      %p403 = por %p401, %p402
      %s405 = sadd.s32 %s404, 1
      %p408 = scmp.eq.s32.totalorder %s29, 3
      %p409 = scmp.ne.s32.totalorder %s404, %s406
      %p410 = scmp.eq.s32.totalorder %s29, 0
      %p411 = por %p409, %p410
      %p412 = scmp.ne.s32.totalorder %s404, %s406
      %p413 = scmp.eq.s32.totalorder %s34, 3
      %p414 = por %p412, %p413
      %p415 = scmp.ne.s32.totalorder %s406, %s407
      %p416 = scmp.eq.s32.totalorder %s34, 0
      %p417 = por %p415, %p416
      %p418 = scmp.ne.s32.totalorder %s406, %s407
      %p419 = scmp.eq.s32.totalorder %s35, 3
      %p420 = por %p418, %p419
      %p422 = scmp.ne.s32.totalorder %s407, %s421
      %p423 = scmp.eq.s32.totalorder %s35, 0
      %p424 = por %p422, %p423
      %s425 = ssub.s32 %s29, %s36
      %p426 = scmp.eq.s32.totalorder %s425, 0
      %s428 = sadd.s32 %s427, 1
      %s429 = scalar_select %p426, %s427, %s428
      %p432 = pneg %p426
      %p433 = scmp.eq.s32.totalorder %s29, 3
      %p434 = por %p432, %p433
      %p435 = scmp.ne.s32.totalorder %s427, %s430
      %p436 = scmp.eq.s32.totalorder %s29, 0
      %p437 = por %p435, %p436
      %p438 = scmp.ne.s32.totalorder %s427, %s430
      %p439 = scmp.eq.s32.totalorder %s34, 3
      %p440 = por %p438, %p439
      %p441 = scmp.ne.s32.totalorder %s430, %s431
      %p442 = scmp.eq.s32.totalorder %s34, 0
      %p443 = por %p441, %p442
      %p444 = scmp.ne.s32.totalorder %s430, %s431
      %p445 = scmp.eq.s32.totalorder %s35, 3
      %p446 = por %p444, %p445
      %p448 = scmp.ne.s32.totalorder %s431, %s447
      %p449 = scmp.eq.s32.totalorder %s35, 0
      %p450 = por %p448, %p449
      %s451 = ssub.s32 %s29, %s36
      %p452 = scmp.eq.s32.totalorder %s451, 0
      %s454 = sadd.s32 %s453, 1
      %s455 = scalar_select %p452, %s453, %s454
      %p458 = pneg %p452
      %p459 = scmp.eq.s32.totalorder %s29, 3
      %p460 = por %p458, %p459
      %p461 = scmp.ne.s32.totalorder %s453, %s456
      %p462 = scmp.eq.s32.totalorder %s29, 0
      %p463 = por %p461, %p462
      %p464 = scmp.ne.s32.totalorder %s453, %s456
      %p465 = scmp.eq.s32.totalorder %s34, 3
      %p466 = por %p464, %p465
      %p467 = scmp.ne.s32.totalorder %s456, %s457
      %p468 = scmp.eq.s32.totalorder %s34, 0
      %p469 = por %p467, %p468
      %p470 = scmp.ne.s32.totalorder %s456, %s457
      %p471 = scmp.eq.s32.totalorder %s35, 3
      %p472 = por %p470, %p471
      %p474 = scmp.ne.s32.totalorder %s457, %s473
      %p475 = scmp.eq.s32.totalorder %s35, 0
      %p476 = por %p474, %p475
      %p477 = scmp.le.s32.totalorder 1, %s29
      %p478 = scmp.lt.s32.totalorder %s29, 5
      %p479 = pnand %p477, %p478
      %p480 = pneg %p479
      // Predicated region
      $region9: #{vae_forward.1} parent=5 // pred_check
        _
      $region10: #{vae_forward.1} parent=5 // pred_check_branch
        %482 = sbr.rel (%p479) target = $region12
      $region11: #{vae_forward.1} parent=5 // pred_region
        %s483 = ssub.s32 %s29, 1
        // Predicated region
        $region13: #{vae_forward.1} parent=11 // pred_check
          %p484 = pneg %p102
        $region14: #{vae_forward.1} parent=11 // pred_check_branch
          %486 = sbr.rel (%p484) target = $region16
        $region15: #{vae_forward.1} parent=11 // pred_region
          _
        $region16: #{vae_forward.1} parent=11 // pred_fallthru
          _
        // Predicated region
        $region17: #{vae_forward.1} parent=11 // pred_check
          %p487 = pneg %p123
        $region18: #{vae_forward.1} parent=11 // pred_check_branch
          %489 = sbr.rel (%p487) target = $region20
        $region19: #{vae_forward.1} parent=11 // pred_region
          _
        $region20: #{vae_forward.1} parent=11 // pred_fallthru
          _
        // Predicated region
        $region21: #{vae_forward.1} parent=11 // pred_check
          %p490 = pneg %p144
        $region22: #{vae_forward.1} parent=11 // pred_check_branch
          %492 = sbr.rel (%p490) target = $region24
        $region23: #{vae_forward.1} parent=11 // pred_region
          _
        $region24: #{vae_forward.1} parent=11 // pred_fallthru
          _
        // Predicated region
        $region25: #{vae_forward.1} parent=11 // pred_check
          %p493 = pneg %p165
        $region26: #{vae_forward.1} parent=11 // pred_check_branch
          %495 = sbr.rel (%p493) target = $region28
        $region27: #{vae_forward.1} parent=11 // pred_region
          _
        $region28: #{vae_forward.1} parent=11 // pred_fallthru
          _
        // Predicated region
        $region29: #{vae_forward.1} parent=11 // pred_check
          %p496 = pneg %p186
        $region30: #{vae_forward.1} parent=11 // pred_check_branch
          %498 = sbr.rel (%p496) target = $region32
        $region31: #{vae_forward.1} parent=11 // pred_region
          _
        $region32: #{vae_forward.1} parent=11 // pred_fallthru
          _
        // Predicated region
        $region33: #{vae_forward.1} parent=11 // pred_check
          %p499 = pneg %p207
        $region34: #{vae_forward.1} parent=11 // pred_check_branch
          %501 = sbr.rel (%p499) target = $region36
        $region35: #{vae_forward.1} parent=11 // pred_region
          _
        $region36: #{vae_forward.1} parent=11 // pred_fallthru
          _
        // Predicated region
        $region37: #{vae_forward.1} parent=11 // pred_check
          %p502 = pneg %p228
        $region38: #{vae_forward.1} parent=11 // pred_check_branch
          %504 = sbr.rel (%p502) target = $region40
        $region39: #{vae_forward.1} parent=11 // pred_region
          _
        $region40: #{vae_forward.1} parent=11 // pred_fallthru
          _
        // Predicated region
        $region41: #{vae_forward.1} parent=11 // pred_check
          %p505 = pneg %p249
        $region42: #{vae_forward.1} parent=11 // pred_check_branch
          %507 = sbr.rel (%p505) target = $region44
        $region43: #{vae_forward.1} parent=11 // pred_region
          _
        $region44: #{vae_forward.1} parent=11 // pred_fallthru
          _
        // Predicated region
        $region45: #{vae_forward.1} parent=11 // pred_check
          %p508 = pneg %p270
        $region46: #{vae_forward.1} parent=11 // pred_check_branch
          %510 = sbr.rel (%p508) target = $region48
        $region47: #{vae_forward.1} parent=11 // pred_region
          _
        $region48: #{vae_forward.1} parent=11 // pred_fallthru
          _
        // Predicated region
        $region49: #{vae_forward.1} parent=11 // pred_check
          %p511 = pneg %p291
        $region50: #{vae_forward.1} parent=11 // pred_check_branch
          %513 = sbr.rel (%p511) target = $region52
        $region51: #{vae_forward.1} parent=11 // pred_region
          _
        $region52: #{vae_forward.1} parent=11 // pred_fallthru
          _
        // Predicated region
        $region53: #{vae_forward.1} parent=11 // pred_check
          %p514 = pneg %p312
        $region54: #{vae_forward.1} parent=11 // pred_check_branch
          %516 = sbr.rel (%p514) target = $region56
        $region55: #{vae_forward.1} parent=11 // pred_region
          _
        $region56: #{vae_forward.1} parent=11 // pred_fallthru
          _
        // Predicated region
        $region57: #{vae_forward.1} parent=11 // pred_check
          %p517 = pneg %p333
        $region58: #{vae_forward.1} parent=11 // pred_check_branch
          %519 = sbr.rel (%p517) target = $region60
        $region59: #{vae_forward.1} parent=11 // pred_region
          _
        $region60: #{vae_forward.1} parent=11 // pred_fallthru
          _
        // Predicated region
        $region61: #{vae_forward.1} parent=11 // pred_check
          %p520 = pneg %p354
        $region62: #{vae_forward.1} parent=11 // pred_check_branch
          %522 = sbr.rel (%p520) target = $region64
        $region63: #{vae_forward.1} parent=11 // pred_region
          _
        $region64: #{vae_forward.1} parent=11 // pred_fallthru
          _
        // Predicated region
        $region65: #{vae_forward.1} parent=11 // pred_check
          %p523 = pneg %p375
        $region66: #{vae_forward.1} parent=11 // pred_check_branch
          %525 = sbr.rel (%p523) target = $region68
        $region67: #{vae_forward.1} parent=11 // pred_region
          _
        $region68: #{vae_forward.1} parent=11 // pred_fallthru
          _
        // Predicated region
        $region69: #{vae_forward.1} parent=11 // pred_check
          %p526 = pneg %p396
        $region70: #{vae_forward.1} parent=11 // pred_check_branch
          %528 = sbr.rel (%p526) target = $region72
        $region71: #{vae_forward.1} parent=11 // pred_region
          _
        $region72: #{vae_forward.1} parent=11 // pred_fallthru
          _
        // Predicated region
        $region73: #{vae_forward.1} parent=11 // pred_check
          %p529 = pneg %p417
        $region74: #{vae_forward.1} parent=11 // pred_check_branch
          %531 = sbr.rel (%p529) target = $region76
        $region75: #{vae_forward.1} parent=11 // pred_region
          _
        $region76: #{vae_forward.1} parent=11 // pred_fallthru
          _
      $region12: #{vae_forward.1} parent=5 // pred_fallthru
        _
      %p532 = scmp.lt.s32.totalorder %s29, 4
      // Predicated region
      $region77: #{vae_forward.1} parent=5 // pred_check
        %p533 = pneg %p532
      $region78: #{vae_forward.1} parent=5 // pred_check_branch
        %535 = sbr.rel (%p533) target = $region80
      $region79: #{vae_forward.1} parent=5 // pred_region
        // Predicated region
        $region81: #{vae_forward.1} parent=79 // pred_check
          %p536 = pneg %p49
        $region82: #{vae_forward.1} parent=79 // pred_check_branch
          %538 = sbr.rel (%p536) target = $region84
        $region83: #{vae_forward.1} parent=79 // pred_region
          %p539 = scmp.lt.s32.totalorder %s29, 3
          %s540 = scalar_select %p539, %s29, 3
          %s541 = smul.addr %s540, 7
          %s542 = smul.addr %s541, 8
          %s543 = scalar_lea.vmem %s0, %s542
        $region84: #{vae_forward.1} parent=79 // pred_fallthru
          _
        // Predicated region
        $region85: #{vae_forward.1} parent=79 // pred_check
          %p544 = pneg %p75
        $region86: #{vae_forward.1} parent=79 // pred_check_branch
          %546 = sbr.rel (%p544) target = $region88
        $region87: #{vae_forward.1} parent=79 // pred_region
          %p547 = scmp.lt.s32.totalorder %s29, 3
          %s548 = scalar_select %p547, %s29, 3
          %s549 = smul.addr %s548, 8
          %s550 = scalar_lea.vmem %s1, %s549
        $region88: #{vae_forward.1} parent=79 // pred_fallthru
          _
      $region80: #{vae_forward.1} parent=5 // pred_fallthru
        _
      %p551 = scmp.le.s32.totalorder 1, %s29
      %p552 = scmp.lt.s32.totalorder %s29, 5
      %p553 = pnand %p551, %p552
      %p554 = pneg %p553
      // Predicated region
      $region89: #{vae_forward.1} parent=5 // pred_check
        _
      $region90: #{vae_forward.1} parent=5 // pred_check_branch
        %556 = sbr.rel (%p553) target = $region92
      $region91: #{vae_forward.1} parent=5 // pred_region
        %s557 = ssub.s32 %s29, 1
        %p558 = scmp.lt.s32.totalorder %s34, 3
        %s559 = scalar_select %p558, %s34, 3
        %s560 = smul.addr %s559, 7
        %s561 = smul.addr %s560, 8
        %s562 = scalar_lea.vmem %s0, %s561
        %p563 = pneg %p55
        %p564 = pneg %p52
        %p565 = scmp.lt.s32.totalorder %s34, 3
        %s566 = scalar_select %p565, %s34, 3
        %s567 = smul.addr %s566, 8
        %s568 = scalar_lea.vmem %s1, %s567
        %p569 = pneg %p81
        %p570 = pneg %p78
        %p571 = pneg %p102
        %p572 = pneg %p99
        %p573 = pneg %p123
        %p574 = pneg %p120
        %p575 = pneg %p144
        %p576 = pneg %p141
        %p577 = pneg %p165
        %p578 = pneg %p162
        %p579 = pneg %p186
        %p580 = pneg %p183
        %p581 = pneg %p207
        %p582 = pneg %p204
        %p583 = pneg %p228
        %p584 = pneg %p225
        %p585 = pneg %p249
        %p586 = pneg %p246
        %p587 = pneg %p270
        %p588 = pneg %p267
        %p589 = pneg %p291
        %p590 = pneg %p288
        %p591 = pneg %p312
        %p592 = pneg %p309
        %p593 = pneg %p333
        %p594 = pneg %p330
        %p595 = pneg %p354
        %p596 = pneg %p351
        %p597 = pneg %p375
        %p598 = pneg %p372
        %p599 = pneg %p396
        %p600 = pneg %p393
        %p601 = pneg %p417
        %p602 = pneg %p414
        %p603 = pneg %p443
        %p604 = pneg %p440
        %s605 = sand.u32 %s430, 1
        %s606 = scalar_lea.sflag [#allocation3], %s605
        %s607 = sand.u32 %s430, 1
        %s608 = smul.addr %s607, 56
        %s609 = scalar_lea.vmem [#allocation2], %s608
        %p610 = pneg %p469
        %p611 = pneg %p466
        %p612 = scmp.lt.s32.totalorder %s34, 3
        %s613 = scalar_select %p612, %s34, 3
        %s614 = smul.addr %s613, 2
        %s615 = smul.addr %s614, 8
        %s616 = scalar_lea.vmem %s19, %s615
        %p617 = scmp.lt.s32.totalorder %s34, 3
        %s618 = scalar_select %p617, %s34, 3
        %s619 = smul.addr %s618, 7
        %s620 = smul.addr %s619, 8
        %s621 = scalar_lea.vmem %s0, %s620
        %p622 = scmp.lt.s32.totalorder %s34, 3
        %s623 = scalar_select %p622, %s34, 3
        %s624 = smul.addr %s623, 8
        %s625 = scalar_lea.vmem %s1, %s624
        %p626 = scmp.lt.s32.totalorder %s34, 3
        %s627 = scalar_select %p626, %s34, 3
        %s628 = smul.addr %s627, 2
        %s629 = smul.addr %s628, 8
        %s630 = scalar_lea.vmem %s19, %s629
        %v631 = vld [vmem:[%s621] sm:$0xff]
        %v632 = vld [vmem:[%s621 + $0x8] sm:$0xff]
        %v633 = vld [vmem:[%s621 + $0x10] sm:$0xff]
        %v634 = vld [vmem:[%s621 + $0x18] sm:$0xff]
        %v635 = vld [vmem:[%s621 + $0x20] sm:$0xff]
        %v636 = vld [vmem:[%s621 + $0x28] sm:$0xff]
        %v637 = vld [vmem:[%s621 + $0x30] sm:$0xff]
        %v638 = vld [vmem:[%s2] sm:$0xff]
        %v639 = vld [vmem:[%s2 + $0x8] sm:$0xff]
        %v640 = vld [vmem:[%s2 + $0x10] sm:$0xff]
        %v641 = vld [vmem:[%s2 + $0x18] sm:$0xff]
        %v642 = vld [vmem:[%s2 + $0x20] sm:$0xff]
        %v643 = vld [vmem:[%s2 + $0x28] sm:$0xff]
        %v644 = vld [vmem:[%s2 + $0x30] sm:$0xff]
        %v645 = vld [vmem:[%s2 + $0x38] sm:$0xff]
        %v646 = vld [vmem:[%s2 + $0x40] sm:$0xff]
        %v647 = vld [vmem:[%s2 + $0x48] sm:$0xff]
        %v648 = vld [vmem:[%s2 + $0x50] sm:$0xff]
        %v649 = vld [vmem:[%s2 + $0x58] sm:$0xff]
        %v650 = vld [vmem:[%s2 + $0x60] sm:$0xff]
        %v651 = vld [vmem:[%s2 + $0x68] sm:$0xff]
        %v652 = vld [vmem:[%s2 + $0x70] sm:$0xff]
        %v653 = vld [vmem:[%s2 + $0x78] sm:$0xff]
        %v654 = vld [vmem:[%s2 + $0x80] sm:$0xff]
        %v655 = vld [vmem:[%s2 + $0x88] sm:$0xff]
        %v656 = vld [vmem:[%s2 + $0x90] sm:$0xff]
        %v657 = vld [vmem:[%s2 + $0x98] sm:$0xff]
        %v658 = vld [vmem:[%s2 + $0xa0] sm:$0xff]
        %v659 = vld [vmem:[%s2 + $0xa8] sm:$0xff]
        %v660 = vld [vmem:[%s2 + $0xb0] sm:$0xff]
        %v661 = vld [vmem:[%s2 + $0xb8] sm:$0xff]
        %v662 = vld [vmem:[%s2 + $0xc0] sm:$0xff]
        %v663 = vld [vmem:[%s2 + $0xc8] sm:$0xff]
        %v664 = vld [vmem:[%s2 + $0xd0] sm:$0xff]
        %v665 = vld [vmem:[%s2 + $0xd8] sm:$0xff]
        %v666 = vld [vmem:[%s2 + $0xe0] sm:$0xff]
        %v667 = vld [vmem:[%s2 + $0xe8] sm:$0xff]
        %v668 = vld [vmem:[%s2 + $0xf0] sm:$0xff]
        %v669 = vld [vmem:[%s2 + $0xf8] sm:$0xff]
        %v670 = vld [vmem:[%s2 + $0x100] sm:$0xff]
        %v671 = vld [vmem:[%s2 + $0x108] sm:$0xff]
        %v672 = vld [vmem:[%s2 + $0x110] sm:$0xff]
        %v673 = vld [vmem:[%s2 + $0x118] sm:$0xff]
        %v674 = vld [vmem:[%s2 + $0x120] sm:$0xff]
        %v675 = vld [vmem:[%s2 + $0x128] sm:$0xff]
        %v676 = vld [vmem:[%s2 + $0x130] sm:$0xff]
        %v677 = vld [vmem:[%s2 + $0x138] sm:$0xff]
        %v678 = vld [vmem:[%s2 + $0x140] sm:$0xff]
        %v679 = vld [vmem:[%s2 + $0x148] sm:$0xff]
        %v680 = vld [vmem:[%s2 + $0x150] sm:$0xff]
        %v681 = vld [vmem:[%s2 + $0x158] sm:$0xff]
        %v682 = vld [vmem:[%s2 + $0x160] sm:$0xff]
        %v683 = vld [vmem:[%s2 + $0x168] sm:$0xff]
        %v684 = vld [vmem:[%s2 + $0x170] sm:$0xff]
        %v685 = vld [vmem:[%s2 + $0x178] sm:$0xff]
        %v686 = vld [vmem:[%s2 + $0x180] sm:$0xff]
        %v687 = vld [vmem:[%s2 + $0x188] sm:$0xff]
        %v688 = vld [vmem:[%s2 + $0x190] sm:$0xff]
        %v689 = vld [vmem:[%s2 + $0x198] sm:$0xff]
        %v690 = vld [vmem:[%s2 + $0x1a0] sm:$0xff]
        %v691 = vld [vmem:[%s2 + $0x1a8] sm:$0xff]
        %v692 = vld [vmem:[%s2 + $0x1b0] sm:$0xff]
        %v693 = vld [vmem:[%s2 + $0x1b8] sm:$0xff]
        %v694 = vld [vmem:[%s2 + $0x1c0] sm:$0xff]
        %v695 = vld [vmem:[%s2 + $0x1c8] sm:$0xff]
        %v696 = vld [vmem:[%s2 + $0x1d0] sm:$0xff]
        %v697 = vld [vmem:[%s2 + $0x1d8] sm:$0xff]
        %v698 = vld [vmem:[%s2 + $0x1e0] sm:$0xff]
        %v699 = vld [vmem:[%s2 + $0x1e8] sm:$0xff]
        %v700 = vld [vmem:[%s2 + $0x1f0] sm:$0xff]
        %v701 = vld [vmem:[%s2 + $0x1f8] sm:$0xff]
        %v702 = vld [vmem:[%s2 + $0x200] sm:$0xff]
        %v703 = vld [vmem:[%s2 + $0x208] sm:$0xff]
        %v704 = vld [vmem:[%s2 + $0x210] sm:$0xff]
        %v705 = vld [vmem:[%s2 + $0x218] sm:$0xff]
        %v706 = vld [vmem:[%s2 + $0x220] sm:$0xff]
        %v707 = vld [vmem:[%s2 + $0x228] sm:$0xff]
        %v708 = vld [vmem:[%s2 + $0x230] sm:$0xff]
        %v709 = vld [vmem:[%s2 + $0x238] sm:$0xff]
        %v710 = vld [vmem:[%s2 + $0x240] sm:$0xff]
        %v711 = vld [vmem:[%s2 + $0x248] sm:$0xff]
        %v712 = vld [vmem:[%s2 + $0x250] sm:$0xff]
        %v713 = vld [vmem:[%s2 + $0x258] sm:$0xff]
        %v714 = vld [vmem:[%s2 + $0x260] sm:$0xff]
        %v715 = vld [vmem:[%s2 + $0x268] sm:$0xff]
        %v716 = vld [vmem:[%s2 + $0x270] sm:$0xff]
        %v717 = vld [vmem:[%s2 + $0x278] sm:$0xff]
        %v718 = vld [vmem:[%s2 + $0x280] sm:$0xff]
        %v719 = vld [vmem:[%s2 + $0x288] sm:$0xff]
        %v720 = vld [vmem:[%s2 + $0x290] sm:$0xff]
        %v721 = vld [vmem:[%s2 + $0x298] sm:$0xff]
        %v722 = vld [vmem:[%s2 + $0x2a0] sm:$0xff]
        %v723 = vld [vmem:[%s2 + $0x2a8] sm:$0xff]
        %v724 = vld [vmem:[%s2 + $0x2b0] sm:$0xff]
        %v725 = vld [vmem:[%s2 + $0x2b8] sm:$0xff]
        %v726 = vld [vmem:[%s2 + $0x2c0] sm:$0xff]
        %v727 = vld [vmem:[%s2 + $0x2c8] sm:$0xff]
        %v728 = vld [vmem:[%s2 + $0x2d0] sm:$0xff]
        %v729 = vld [vmem:[%s2 + $0x2d8] sm:$0xff]
        %v730 = vld [vmem:[%s2 + $0x2e0] sm:$0xff]
        %v731 = vld [vmem:[%s2 + $0x2e8] sm:$0xff]
        %v732 = vld [vmem:[%s2 + $0x2f0] sm:$0xff]
        %v733 = vld [vmem:[%s2 + $0x2f8] sm:$0xff]
        %v734 = vld [vmem:[%s2 + $0x300] sm:$0xff]
        %v735 = vld [vmem:[%s2 + $0x308] sm:$0xff]
        %v736 = vld [vmem:[%s2 + $0x310] sm:$0xff]
        %v737 = vld [vmem:[%s2 + $0x318] sm:$0xff]
        %v738 = vld [vmem:[%s2 + $0x320] sm:$0xff]
        %v739 = vld [vmem:[%s2 + $0x328] sm:$0xff]
        %v740 = vld [vmem:[%s2 + $0x330] sm:$0xff]
        %v741 = vld [vmem:[%s2 + $0x338] sm:$0xff]
        %v742 = vld [vmem:[%s2 + $0x340] sm:$0xff]
        %v743 = vld [vmem:[%s2 + $0x348] sm:$0xff]
        %v744 = vld [vmem:[%s2 + $0x350] sm:$0xff]
        %v745 = vld [vmem:[%s2 + $0x358] sm:$0xff]
        %v746 = vld [vmem:[%s2 + $0x360] sm:$0xff]
        %v747 = vld [vmem:[%s2 + $0x368] sm:$0xff]
        %v748 = vld [vmem:[%s2 + $0x370] sm:$0xff]
        %v749 = vld [vmem:[%s2 + $0x378] sm:$0xff]
        %v750 = vld [vmem:[%s2 + $0x380] sm:$0xff]
        %v751 = vld [vmem:[%s2 + $0x388] sm:$0xff]
        %v752 = vld [vmem:[%s2 + $0x390] sm:$0xff]
        %v753 = vld [vmem:[%s2 + $0x398] sm:$0xff]
        %v754 = vld [vmem:[%s2 + $0x3a0] sm:$0xff]
        %v755 = vld [vmem:[%s2 + $0x3a8] sm:$0xff]
        %v756 = vld [vmem:[%s2 + $0x3b0] sm:$0xff]
        %v757 = vld [vmem:[%s2 + $0x3b8] sm:$0xff]
        %v758 = vld [vmem:[%s2 + $0x3c0] sm:$0xff]
        %v759 = vld [vmem:[%s2 + $0x3c8] sm:$0xff]
        %v760 = vld [vmem:[%s2 + $0x3d0] sm:$0xff]
        %v761 = vld [vmem:[%s2 + $0x3d8] sm:$0xff]
        %v762 = vld [vmem:[%s2 + $0x3e0] sm:$0xff]
        %v763 = vld [vmem:[%s2 + $0x3e8] sm:$0xff]
        %v764 = vld [vmem:[%s2 + $0x3f0] sm:$0xff]
        %v765 = vld [vmem:[%s2 + $0x3f8] sm:$0xff]
        %v766 = vld [vmem:[%s2 + $0x400] sm:$0xff]
        %v767 = vld [vmem:[%s2 + $0x408] sm:$0xff]
        %v768 = vld [vmem:[%s2 + $0x410] sm:$0xff]
        %v769 = vld [vmem:[%s2 + $0x418] sm:$0xff]
        %v770 = vld [vmem:[%s2 + $0x420] sm:$0xff]
        %v771 = vld [vmem:[%s2 + $0x428] sm:$0xff]
        %v772 = vld [vmem:[%s2 + $0x430] sm:$0xff]
        %v773 = vld [vmem:[%s2 + $0x438] sm:$0xff]
        %v774 = vld [vmem:[%s2 + $0x440] sm:$0xff]
        %v775 = vld [vmem:[%s2 + $0x448] sm:$0xff]
        %v776 = vld [vmem:[%s2 + $0x450] sm:$0xff]
        %v777 = vld [vmem:[%s2 + $0x458] sm:$0xff]
        %v778 = vld [vmem:[%s2 + $0x460] sm:$0xff]
        %v779 = vld [vmem:[%s2 + $0x468] sm:$0xff]
        %v780 = vld [vmem:[%s2 + $0x470] sm:$0xff]
        %v781 = vld [vmem:[%s2 + $0x478] sm:$0xff]
        %v782 = vld [vmem:[%s2 + $0x480] sm:$0xff]
        %v783 = vld [vmem:[%s2 + $0x488] sm:$0xff]
        %v784 = vld [vmem:[%s2 + $0x490] sm:$0xff]
        %v785 = vld [vmem:[%s2 + $0x498] sm:$0xff]
        %v786 = vld [vmem:[%s2 + $0x4a0] sm:$0xff]
        %v787 = vld [vmem:[%s2 + $0x4a8] sm:$0xff]
        %v788 = vld [vmem:[%s2 + $0x4b0] sm:$0xff]
        %v789 = vld [vmem:[%s2 + $0x4b8] sm:$0xff]
        %v790 = vld [vmem:[%s2 + $0x4c0] sm:$0xff]
        %v791 = vld [vmem:[%s2 + $0x4c8] sm:$0xff]
        %v792 = vld [vmem:[%s2 + $0x4d0] sm:$0xff]
        %v793 = vld [vmem:[%s2 + $0x4d8] sm:$0xff]
        %v794 = vld [vmem:[%s2 + $0x4e0] sm:$0xff]
        %v795 = vld [vmem:[%s2 + $0x4e8] sm:$0xff]
        %v796 = vld [vmem:[%s2 + $0x4f0] sm:$0xff]
        %v797 = vld [vmem:[%s2 + $0x4f8] sm:$0xff]
        %v798 = vld [vmem:[%s2 + $0x500] sm:$0xff]
        %v799 = vld [vmem:[%s2 + $0x508] sm:$0xff]
        %v800 = vld [vmem:[%s2 + $0x510] sm:$0xff]
        %v801 = vld [vmem:[%s2 + $0x518] sm:$0xff]
        %v802 = vld [vmem:[%s2 + $0x520] sm:$0xff]
        %v803 = vld [vmem:[%s2 + $0x528] sm:$0xff]
        %v804 = vld [vmem:[%s2 + $0x530] sm:$0xff]
        %v805 = vld [vmem:[%s2 + $0x538] sm:$0xff]
        %v806 = vld [vmem:[%s2 + $0x540] sm:$0xff]
        %v807 = vld [vmem:[%s2 + $0x548] sm:$0xff]
        %v808 = vld [vmem:[%s2 + $0x550] sm:$0xff]
        %v809 = vld [vmem:[%s2 + $0x558] sm:$0xff]
        %v810 = vld [vmem:[%s2 + $0x560] sm:$0xff]
        %v811 = vld [vmem:[%s2 + $0x568] sm:$0xff]
        %v812 = vld [vmem:[%s2 + $0x570] sm:$0xff]
        %v813 = vld [vmem:[%s2 + $0x578] sm:$0xff]
        %v814 = vld [vmem:[%s2 + $0x580] sm:$0xff]
        %v815 = vld [vmem:[%s2 + $0x588] sm:$0xff]
        %v816 = vld [vmem:[%s2 + $0x590] sm:$0xff]
        %v817 = vld [vmem:[%s2 + $0x598] sm:$0xff]
        %v818 = vld [vmem:[%s2 + $0x5a0] sm:$0xff]
        %v819 = vld [vmem:[%s2 + $0x5a8] sm:$0xff]
        %v820 = vld [vmem:[%s2 + $0x5b0] sm:$0xff]
        %v821 = vld [vmem:[%s2 + $0x5b8] sm:$0xff]
        %v822 = vld [vmem:[%s2 + $0x5c0] sm:$0xff]
        %v823 = vld [vmem:[%s2 + $0x5c8] sm:$0xff]
        %v824 = vld [vmem:[%s2 + $0x5d0] sm:$0xff]
        %v825 = vld [vmem:[%s2 + $0x5d8] sm:$0xff]
        %v826 = vld [vmem:[%s2 + $0x5e0] sm:$0xff]
        %v827 = vld [vmem:[%s2 + $0x5e8] sm:$0xff]
        %v828 = vld [vmem:[%s2 + $0x5f0] sm:$0xff]
        %v829 = vld [vmem:[%s2 + $0x5f8] sm:$0xff]
        %v830 = vld [vmem:[%s2 + $0x600] sm:$0xff]
        %v831 = vld [vmem:[%s2 + $0x608] sm:$0xff]
        %v832 = vld [vmem:[%s2 + $0x610] sm:$0xff]
        %v833 = vld [vmem:[%s2 + $0x618] sm:$0xff]
        %v834 = vld [vmem:[%s2 + $0x620] sm:$0xff]
        %v835 = vld [vmem:[%s2 + $0x628] sm:$0xff]
        %v836 = vld [vmem:[%s2 + $0x630] sm:$0xff]
        %v837 = vld [vmem:[%s2 + $0x638] sm:$0xff]
        %v838 = vld [vmem:[%s2 + $0x640] sm:$0xff]
        %v839 = vld [vmem:[%s2 + $0x648] sm:$0xff]
        %v840 = vld [vmem:[%s2 + $0x650] sm:$0xff]
        %v841 = vld [vmem:[%s2 + $0x658] sm:$0xff]
        %v842 = vld [vmem:[%s2 + $0x660] sm:$0xff]
        %v843 = vld [vmem:[%s2 + $0x668] sm:$0xff]
        %v844 = vld [vmem:[%s2 + $0x670] sm:$0xff]
        %v845 = vld [vmem:[%s2 + $0x678] sm:$0xff]
        %v846 = vld [vmem:[%s2 + $0x680] sm:$0xff]
        %v847 = vld [vmem:[%s2 + $0x688] sm:$0xff]
        %v848 = vld [vmem:[%s2 + $0x690] sm:$0xff]
        %v849 = vld [vmem:[%s2 + $0x698] sm:$0xff]
        %v850 = vld [vmem:[%s2 + $0x6a0] sm:$0xff]
        %v851 = vld [vmem:[%s2 + $0x6a8] sm:$0xff]
        %v852 = vld [vmem:[%s2 + $0x6b0] sm:$0xff]
        %v853 = vld [vmem:[%s2 + $0x6b8] sm:$0xff]
        %v854 = vld [vmem:[%s2 + $0x6c0] sm:$0xff]
        %v855 = vld [vmem:[%s2 + $0x6c8] sm:$0xff]
        %v856 = vld [vmem:[%s2 + $0x6d0] sm:$0xff]
        %v857 = vld [vmem:[%s2 + $0x6d8] sm:$0xff]
        %v858 = vld [vmem:[%s2 + $0x6e0] sm:$0xff]
        %v859 = vld [vmem:[%s2 + $0x6e8] sm:$0xff]
        %v860 = vld [vmem:[%s2 + $0x6f0] sm:$0xff]
        %v861 = vld [vmem:[%s2 + $0x6f8] sm:$0xff]
        %v862 = vunpack.c.l.bf16 %v638
        %v863 = vunpack.c.h.bf16 %v638
        %v864 = vunpack.c.l.bf16 %v639
        %v865 = vunpack.c.h.bf16 %v639
        %v866 = vunpack.c.l.bf16 %v640
        %v867 = vunpack.c.h.bf16 %v640
        %v868 = vunpack.c.l.bf16 %v641
        %v869 = vunpack.c.h.bf16 %v641
        %v870 = vunpack.c.l.bf16 %v642
        %v871 = vunpack.c.h.bf16 %v642
        %v872 = vunpack.c.l.bf16 %v643
        %v873 = vunpack.c.h.bf16 %v643
        %v874 = vunpack.c.l.bf16 %v644
        %v875 = vunpack.c.h.bf16 %v644
        %v876 = vunpack.c.l.bf16 %v645
        %v877 = vunpack.c.h.bf16 %v645
        %v878 = vunpack.c.l.bf16 %v646
        %v879 = vunpack.c.h.bf16 %v646
        %v880 = vunpack.c.l.bf16 %v647
        %v881 = vunpack.c.h.bf16 %v647
        %v882 = vunpack.c.l.bf16 %v648
        %v883 = vunpack.c.h.bf16 %v648
        %v884 = vunpack.c.l.bf16 %v649
        %v885 = vunpack.c.h.bf16 %v649
        %v886 = vunpack.c.l.bf16 %v650
        %v887 = vunpack.c.h.bf16 %v650
        %v888 = vunpack.c.l.bf16 %v651
        %v889 = vunpack.c.h.bf16 %v651
        %v890 = vunpack.c.l.bf16 %v652
        %v891 = vunpack.c.h.bf16 %v652
        %v892 = vunpack.c.l.bf16 %v653
        %v893 = vunpack.c.h.bf16 %v653
        %v894 = vunpack.c.l.bf16 %v654
        %v895 = vunpack.c.h.bf16 %v654
        %v896 = vunpack.c.l.bf16 %v655
        %v897 = vunpack.c.h.bf16 %v655
        %v898 = vunpack.c.l.bf16 %v656
        %v899 = vunpack.c.h.bf16 %v656
        %v900 = vunpack.c.l.bf16 %v657
        %v901 = vunpack.c.h.bf16 %v657
        %v902 = vunpack.c.l.bf16 %v658
        %v903 = vunpack.c.h.bf16 %v658
        %v904 = vunpack.c.l.bf16 %v659
        %v905 = vunpack.c.h.bf16 %v659
        %v906 = vunpack.c.l.bf16 %v660
        %v907 = vunpack.c.h.bf16 %v660
        %v908 = vunpack.c.l.bf16 %v661
        %v909 = vunpack.c.h.bf16 %v661
        %v910 = vunpack.c.l.bf16 %v662
        %v911 = vunpack.c.h.bf16 %v662
        %v912 = vunpack.c.l.bf16 %v663
        %v913 = vunpack.c.h.bf16 %v663
        %v914 = vunpack.c.l.bf16 %v664
        %v915 = vunpack.c.h.bf16 %v664
        %v916 = vunpack.c.l.bf16 %v665
        %v917 = vunpack.c.h.bf16 %v665
        %v918 = vunpack.c.l.bf16 %v666
        %v919 = vunpack.c.h.bf16 %v666
        %v920 = vunpack.c.l.bf16 %v667
        %v921 = vunpack.c.h.bf16 %v667
        %v922 = vunpack.c.l.bf16 %v668
        %v923 = vunpack.c.h.bf16 %v668
        %v924 = vunpack.c.l.bf16 %v669
        %v925 = vunpack.c.h.bf16 %v669
        %v926 = vunpack.c.l.bf16 %v670
        %v927 = vunpack.c.h.bf16 %v670
        %v928 = vunpack.c.l.bf16 %v671
        %v929 = vunpack.c.h.bf16 %v671
        %v930 = vunpack.c.l.bf16 %v672
        %v931 = vunpack.c.h.bf16 %v672
        %v932 = vunpack.c.l.bf16 %v673
        %v933 = vunpack.c.h.bf16 %v673
        %v934 = vunpack.c.l.bf16 %v674
        %v935 = vunpack.c.h.bf16 %v674
        %v936 = vunpack.c.l.bf16 %v675
        %v937 = vunpack.c.h.bf16 %v675
        %v938 = vunpack.c.l.bf16 %v676
        %v939 = vunpack.c.h.bf16 %v676
        %v940 = vunpack.c.l.bf16 %v677
        %v941 = vunpack.c.h.bf16 %v677
        %v942 = vunpack.c.l.bf16 %v678
        %v943 = vunpack.c.h.bf16 %v678
        %v944 = vunpack.c.l.bf16 %v679
        %v945 = vunpack.c.h.bf16 %v679
        %v946 = vunpack.c.l.bf16 %v680
        %v947 = vunpack.c.h.bf16 %v680
        %v948 = vunpack.c.l.bf16 %v681
        %v949 = vunpack.c.h.bf16 %v681
        %v950 = vunpack.c.l.bf16 %v682
        %v951 = vunpack.c.h.bf16 %v682
        %v952 = vunpack.c.l.bf16 %v683
        %v953 = vunpack.c.h.bf16 %v683
        %v954 = vunpack.c.l.bf16 %v684
        %v955 = vunpack.c.h.bf16 %v684
        %v956 = vunpack.c.l.bf16 %v685
        %v957 = vunpack.c.h.bf16 %v685
        %v958 = vunpack.c.l.bf16 %v686
        %v959 = vunpack.c.h.bf16 %v686
        %v960 = vunpack.c.l.bf16 %v687
        %v961 = vunpack.c.h.bf16 %v687
        %v962 = vunpack.c.l.bf16 %v688
        %v963 = vunpack.c.h.bf16 %v688
        %v964 = vunpack.c.l.bf16 %v689
        %v965 = vunpack.c.h.bf16 %v689
        %v966 = vunpack.c.l.bf16 %v690
        %v967 = vunpack.c.h.bf16 %v690
        %v968 = vunpack.c.l.bf16 %v691
        %v969 = vunpack.c.h.bf16 %v691
        %v970 = vunpack.c.l.bf16 %v692
        %v971 = vunpack.c.h.bf16 %v692
        %v972 = vunpack.c.l.bf16 %v693
        %v973 = vunpack.c.h.bf16 %v693
        %v974 = vunpack.c.l.bf16 %v694
        %v975 = vunpack.c.h.bf16 %v694
        %v976 = vunpack.c.l.bf16 %v695
        %v977 = vunpack.c.h.bf16 %v695
        %v978 = vunpack.c.l.bf16 %v696
        %v979 = vunpack.c.h.bf16 %v696
        %v980 = vunpack.c.l.bf16 %v697
        %v981 = vunpack.c.h.bf16 %v697
        %v982 = vunpack.c.l.bf16 %v698
        %v983 = vunpack.c.h.bf16 %v698
        %v984 = vunpack.c.l.bf16 %v699
        %v985 = vunpack.c.h.bf16 %v699
        %v986 = vunpack.c.l.bf16 %v700
        %v987 = vunpack.c.h.bf16 %v700
        %v988 = vunpack.c.l.bf16 %v701
        %v989 = vunpack.c.h.bf16 %v701
        %v990 = vunpack.c.l.bf16 %v702
        %v991 = vunpack.c.h.bf16 %v702
        %v992 = vunpack.c.l.bf16 %v703
        %v993 = vunpack.c.h.bf16 %v703
        %v994 = vunpack.c.l.bf16 %v704
        %v995 = vunpack.c.h.bf16 %v704
        %v996 = vunpack.c.l.bf16 %v705
        %v997 = vunpack.c.h.bf16 %v705
        %v998 = vunpack.c.l.bf16 %v706
        %v999 = vunpack.c.h.bf16 %v706
        %v1000 = vunpack.c.l.bf16 %v707
        %v1001 = vunpack.c.h.bf16 %v707
        %v1002 = vunpack.c.l.bf16 %v708
        %v1003 = vunpack.c.h.bf16 %v708
        %v1004 = vunpack.c.l.bf16 %v709
        %v1005 = vunpack.c.h.bf16 %v709
        %v1006 = vunpack.c.l.bf16 %v710
        %v1007 = vunpack.c.h.bf16 %v710
        %v1008 = vunpack.c.l.bf16 %v711
        %v1009 = vunpack.c.h.bf16 %v711
        %v1010 = vunpack.c.l.bf16 %v712
        %v1011 = vunpack.c.h.bf16 %v712
        %v1012 = vunpack.c.l.bf16 %v713
        %v1013 = vunpack.c.h.bf16 %v713
        %v1014 = vunpack.c.l.bf16 %v714
        %v1015 = vunpack.c.h.bf16 %v714
        %v1016 = vunpack.c.l.bf16 %v715
        %v1017 = vunpack.c.h.bf16 %v715
        %v1018 = vunpack.c.l.bf16 %v716
        %v1019 = vunpack.c.h.bf16 %v716
        %v1020 = vunpack.c.l.bf16 %v717
        %v1021 = vunpack.c.h.bf16 %v717
        %v1022 = vunpack.c.l.bf16 %v718
        %v1023 = vunpack.c.h.bf16 %v718
        %v1024 = vunpack.c.l.bf16 %v719
        %v1025 = vunpack.c.h.bf16 %v719
        %v1026 = vunpack.c.l.bf16 %v720
        %v1027 = vunpack.c.h.bf16 %v720
        %v1028 = vunpack.c.l.bf16 %v721
        %v1029 = vunpack.c.h.bf16 %v721
        %v1030 = vunpack.c.l.bf16 %v722
        %v1031 = vunpack.c.h.bf16 %v722
        %v1032 = vunpack.c.l.bf16 %v723
        %v1033 = vunpack.c.h.bf16 %v723
        %v1034 = vunpack.c.l.bf16 %v724
        %v1035 = vunpack.c.h.bf16 %v724
        %v1036 = vunpack.c.l.bf16 %v725
        %v1037 = vunpack.c.h.bf16 %v725
        %v1038 = vunpack.c.l.bf16 %v726
        %v1039 = vunpack.c.h.bf16 %v726
        %v1040 = vunpack.c.l.bf16 %v727
        %v1041 = vunpack.c.h.bf16 %v727
        %v1042 = vunpack.c.l.bf16 %v728
        %v1043 = vunpack.c.h.bf16 %v728
        %v1044 = vunpack.c.l.bf16 %v729
        %v1045 = vunpack.c.h.bf16 %v729
        %v1046 = vunpack.c.l.bf16 %v730
        %v1047 = vunpack.c.h.bf16 %v730
        %v1048 = vunpack.c.l.bf16 %v731
        %v1049 = vunpack.c.h.bf16 %v731
        %v1050 = vunpack.c.l.bf16 %v732
        %v1051 = vunpack.c.h.bf16 %v732
        %v1052 = vunpack.c.l.bf16 %v733
        %v1053 = vunpack.c.h.bf16 %v733
        %v1054 = vunpack.c.l.bf16 %v734
        %v1055 = vunpack.c.h.bf16 %v734
        %v1056 = vunpack.c.l.bf16 %v735
        %v1057 = vunpack.c.h.bf16 %v735
        %v1058 = vunpack.c.l.bf16 %v736
        %v1059 = vunpack.c.h.bf16 %v736
        %v1060 = vunpack.c.l.bf16 %v737
        %v1061 = vunpack.c.h.bf16 %v737
        %v1062 = vunpack.c.l.bf16 %v738
        %v1063 = vunpack.c.h.bf16 %v738
        %v1064 = vunpack.c.l.bf16 %v739
        %v1065 = vunpack.c.h.bf16 %v739
        %v1066 = vunpack.c.l.bf16 %v740
        %v1067 = vunpack.c.h.bf16 %v740
        %v1068 = vunpack.c.l.bf16 %v741
        %v1069 = vunpack.c.h.bf16 %v741
        %v1070 = vunpack.c.l.bf16 %v742
        %v1071 = vunpack.c.h.bf16 %v742
        %v1072 = vunpack.c.l.bf16 %v743
        %v1073 = vunpack.c.h.bf16 %v743
        %v1074 = vunpack.c.l.bf16 %v744
        %v1075 = vunpack.c.h.bf16 %v744
        %v1076 = vunpack.c.l.bf16 %v745
        %v1077 = vunpack.c.h.bf16 %v745
        %v1078 = vunpack.c.l.bf16 %v746
        %v1079 = vunpack.c.h.bf16 %v746
        %v1080 = vunpack.c.l.bf16 %v747
        %v1081 = vunpack.c.h.bf16 %v747
        %v1082 = vunpack.c.l.bf16 %v748
        %v1083 = vunpack.c.h.bf16 %v748
        %v1084 = vunpack.c.l.bf16 %v749
        %v1085 = vunpack.c.h.bf16 %v749
        %v1086 = vunpack.c.l.bf16 %v750
        %v1087 = vunpack.c.h.bf16 %v750
        %v1088 = vunpack.c.l.bf16 %v751
        %v1089 = vunpack.c.h.bf16 %v751
        %v1090 = vunpack.c.l.bf16 %v752
        %v1091 = vunpack.c.h.bf16 %v752
        %v1092 = vunpack.c.l.bf16 %v753
        %v1093 = vunpack.c.h.bf16 %v753
        %v1094 = vunpack.c.l.bf16 %v754
        %v1095 = vunpack.c.h.bf16 %v754
        %v1096 = vunpack.c.l.bf16 %v755
        %v1097 = vunpack.c.h.bf16 %v755
        %v1098 = vunpack.c.l.bf16 %v756
        %v1099 = vunpack.c.h.bf16 %v756
        %v1100 = vunpack.c.l.bf16 %v757
        %v1101 = vunpack.c.h.bf16 %v757
        %v1102 = vunpack.c.l.bf16 %v758
        %v1103 = vunpack.c.h.bf16 %v758
        %v1104 = vunpack.c.l.bf16 %v759
        %v1105 = vunpack.c.h.bf16 %v759
        %v1106 = vunpack.c.l.bf16 %v760
        %v1107 = vunpack.c.h.bf16 %v760
        %v1108 = vunpack.c.l.bf16 %v761
        %v1109 = vunpack.c.h.bf16 %v761
        %v1110 = vunpack.c.l.bf16 %v762
        %v1111 = vunpack.c.h.bf16 %v762
        %v1112 = vunpack.c.l.bf16 %v763
        %v1113 = vunpack.c.h.bf16 %v763
        %v1114 = vunpack.c.l.bf16 %v764
        %v1115 = vunpack.c.h.bf16 %v764
        %v1116 = vunpack.c.l.bf16 %v765
        %v1117 = vunpack.c.h.bf16 %v765
        %v1118 = vunpack.c.l.bf16 %v766
        %v1119 = vunpack.c.h.bf16 %v766
        %v1120 = vunpack.c.l.bf16 %v767
        %v1121 = vunpack.c.h.bf16 %v767
        %v1122 = vunpack.c.l.bf16 %v768
        %v1123 = vunpack.c.h.bf16 %v768
        %v1124 = vunpack.c.l.bf16 %v769
        %v1125 = vunpack.c.h.bf16 %v769
        %v1126 = vunpack.c.l.bf16 %v770
        %v1127 = vunpack.c.h.bf16 %v770
        %v1128 = vunpack.c.l.bf16 %v771
        %v1129 = vunpack.c.h.bf16 %v771
        %v1130 = vunpack.c.l.bf16 %v772
        %v1131 = vunpack.c.h.bf16 %v772
        %v1132 = vunpack.c.l.bf16 %v773
        %v1133 = vunpack.c.h.bf16 %v773
        %v1134 = vunpack.c.l.bf16 %v774
        %v1135 = vunpack.c.h.bf16 %v774
        %v1136 = vunpack.c.l.bf16 %v775
        %v1137 = vunpack.c.h.bf16 %v775
        %v1138 = vunpack.c.l.bf16 %v776
        %v1139 = vunpack.c.h.bf16 %v776
        %v1140 = vunpack.c.l.bf16 %v777
        %v1141 = vunpack.c.h.bf16 %v777
        %v1142 = vunpack.c.l.bf16 %v778
        %v1143 = vunpack.c.h.bf16 %v778
        %v1144 = vunpack.c.l.bf16 %v779
        %v1145 = vunpack.c.h.bf16 %v779
        %v1146 = vunpack.c.l.bf16 %v780
        %v1147 = vunpack.c.h.bf16 %v780
        %v1148 = vunpack.c.l.bf16 %v781
        %v1149 = vunpack.c.h.bf16 %v781
        %v1150 = vunpack.c.l.bf16 %v782
        %v1151 = vunpack.c.h.bf16 %v782
        %v1152 = vunpack.c.l.bf16 %v783
        %v1153 = vunpack.c.h.bf16 %v783
        %v1154 = vunpack.c.l.bf16 %v784
        %v1155 = vunpack.c.h.bf16 %v784
        %v1156 = vunpack.c.l.bf16 %v785
        %v1157 = vunpack.c.h.bf16 %v785
        %v1158 = vunpack.c.l.bf16 %v786
        %v1159 = vunpack.c.h.bf16 %v786
        %v1160 = vunpack.c.l.bf16 %v787
        %v1161 = vunpack.c.h.bf16 %v787
        %v1162 = vunpack.c.l.bf16 %v788
        %v1163 = vunpack.c.h.bf16 %v788
        %v1164 = vunpack.c.l.bf16 %v789
        %v1165 = vunpack.c.h.bf16 %v789
        %v1166 = vunpack.c.l.bf16 %v790
        %v1167 = vunpack.c.h.bf16 %v790
        %v1168 = vunpack.c.l.bf16 %v791
        %v1169 = vunpack.c.h.bf16 %v791
        %v1170 = vunpack.c.l.bf16 %v792
        %v1171 = vunpack.c.h.bf16 %v792
        %v1172 = vunpack.c.l.bf16 %v793
        %v1173 = vunpack.c.h.bf16 %v793
        %v1174 = vunpack.c.l.bf16 %v794
        %v1175 = vunpack.c.h.bf16 %v794
        %v1176 = vunpack.c.l.bf16 %v795
        %v1177 = vunpack.c.h.bf16 %v795
        %v1178 = vunpack.c.l.bf16 %v796
        %v1179 = vunpack.c.h.bf16 %v796
        %v1180 = vunpack.c.l.bf16 %v797
        %v1181 = vunpack.c.h.bf16 %v797
        %v1182 = vunpack.c.l.bf16 %v798
        %v1183 = vunpack.c.h.bf16 %v798
        %v1184 = vunpack.c.l.bf16 %v799
        %v1185 = vunpack.c.h.bf16 %v799
        %v1186 = vunpack.c.l.bf16 %v800
        %v1187 = vunpack.c.h.bf16 %v800
        %v1188 = vunpack.c.l.bf16 %v801
        %v1189 = vunpack.c.h.bf16 %v801
        %v1190 = vunpack.c.l.bf16 %v802
        %v1191 = vunpack.c.h.bf16 %v802
        %v1192 = vunpack.c.l.bf16 %v803
        %v1193 = vunpack.c.h.bf16 %v803
        %v1194 = vunpack.c.l.bf16 %v804
        %v1195 = vunpack.c.h.bf16 %v804
        %v1196 = vunpack.c.l.bf16 %v805
        %v1197 = vunpack.c.h.bf16 %v805
        %v1198 = vunpack.c.l.bf16 %v806
        %v1199 = vunpack.c.h.bf16 %v806
        %v1200 = vunpack.c.l.bf16 %v807
        %v1201 = vunpack.c.h.bf16 %v807
        %v1202 = vunpack.c.l.bf16 %v808
        %v1203 = vunpack.c.h.bf16 %v808
        %v1204 = vunpack.c.l.bf16 %v809
        %v1205 = vunpack.c.h.bf16 %v809
        %v1206 = vunpack.c.l.bf16 %v810
        %v1207 = vunpack.c.h.bf16 %v810
        %v1208 = vunpack.c.l.bf16 %v811
        %v1209 = vunpack.c.h.bf16 %v811
        %v1210 = vunpack.c.l.bf16 %v812
        %v1211 = vunpack.c.h.bf16 %v812
        %v1212 = vunpack.c.l.bf16 %v813
        %v1213 = vunpack.c.h.bf16 %v813
        %v1214 = vunpack.c.l.bf16 %v814
        %v1215 = vunpack.c.h.bf16 %v814
        %v1216 = vunpack.c.l.bf16 %v815
        %v1217 = vunpack.c.h.bf16 %v815
        %v1218 = vunpack.c.l.bf16 %v816
        %v1219 = vunpack.c.h.bf16 %v816
        %v1220 = vunpack.c.l.bf16 %v817
        %v1221 = vunpack.c.h.bf16 %v817
        %v1222 = vunpack.c.l.bf16 %v818
        %v1223 = vunpack.c.h.bf16 %v818
        %v1224 = vunpack.c.l.bf16 %v819
        %v1225 = vunpack.c.h.bf16 %v819
        %v1226 = vunpack.c.l.bf16 %v820
        %v1227 = vunpack.c.h.bf16 %v820
        %v1228 = vunpack.c.l.bf16 %v821
        %v1229 = vunpack.c.h.bf16 %v821
        %v1230 = vunpack.c.l.bf16 %v822
        %v1231 = vunpack.c.h.bf16 %v822
        %v1232 = vunpack.c.l.bf16 %v823
        %v1233 = vunpack.c.h.bf16 %v823
        %v1234 = vunpack.c.l.bf16 %v824
        %v1235 = vunpack.c.h.bf16 %v824
        %v1236 = vunpack.c.l.bf16 %v825
        %v1237 = vunpack.c.h.bf16 %v825
        %v1238 = vunpack.c.l.bf16 %v826
        %v1239 = vunpack.c.h.bf16 %v826
        %v1240 = vunpack.c.l.bf16 %v827
        %v1241 = vunpack.c.h.bf16 %v827
        %v1242 = vunpack.c.l.bf16 %v828
        %v1243 = vunpack.c.h.bf16 %v828
        %v1244 = vunpack.c.l.bf16 %v829
        %v1245 = vunpack.c.h.bf16 %v829
        %v1246 = vunpack.c.l.bf16 %v830
        %v1247 = vunpack.c.h.bf16 %v830
        %v1248 = vunpack.c.l.bf16 %v831
        %v1249 = vunpack.c.h.bf16 %v831
        %v1250 = vunpack.c.l.bf16 %v832
        %v1251 = vunpack.c.h.bf16 %v832
        %v1252 = vunpack.c.l.bf16 %v833
        %v1253 = vunpack.c.h.bf16 %v833
        %v1254 = vunpack.c.l.bf16 %v834
        %v1255 = vunpack.c.h.bf16 %v834
        %v1256 = vunpack.c.l.bf16 %v835
        %v1257 = vunpack.c.h.bf16 %v835
        %v1258 = vunpack.c.l.bf16 %v836
        %v1259 = vunpack.c.h.bf16 %v836
        %v1260 = vunpack.c.l.bf16 %v837
        %v1261 = vunpack.c.h.bf16 %v837
        %v1262 = vunpack.c.l.bf16 %v838
        %v1263 = vunpack.c.h.bf16 %v838
        %v1264 = vunpack.c.l.bf16 %v839
        %v1265 = vunpack.c.h.bf16 %v839
        %v1266 = vunpack.c.l.bf16 %v840
        %v1267 = vunpack.c.h.bf16 %v840
        %v1268 = vunpack.c.l.bf16 %v841
        %v1269 = vunpack.c.h.bf16 %v841
        %v1270 = vunpack.c.l.bf16 %v842
        %v1271 = vunpack.c.h.bf16 %v842
        %v1272 = vunpack.c.l.bf16 %v843
        %v1273 = vunpack.c.h.bf16 %v843
        %v1274 = vunpack.c.l.bf16 %v844
        %v1275 = vunpack.c.h.bf16 %v844
        %v1276 = vunpack.c.l.bf16 %v845
        %v1277 = vunpack.c.h.bf16 %v845
        %v1278 = vunpack.c.l.bf16 %v846
        %v1279 = vunpack.c.h.bf16 %v846
        %v1280 = vunpack.c.l.bf16 %v847
        %v1281 = vunpack.c.h.bf16 %v847
        %v1282 = vunpack.c.l.bf16 %v848
        %v1283 = vunpack.c.h.bf16 %v848
        %v1284 = vunpack.c.l.bf16 %v849
        %v1285 = vunpack.c.h.bf16 %v849
        %v1286 = vunpack.c.l.bf16 %v850
        %v1287 = vunpack.c.h.bf16 %v850
        %v1288 = vunpack.c.l.bf16 %v851
        %v1289 = vunpack.c.h.bf16 %v851
        %v1290 = vunpack.c.l.bf16 %v852
        %v1291 = vunpack.c.h.bf16 %v852
        %v1292 = vunpack.c.l.bf16 %v853
        %v1293 = vunpack.c.h.bf16 %v853
        %v1294 = vunpack.c.l.bf16 %v854
        %v1295 = vunpack.c.h.bf16 %v854
        %v1296 = vunpack.c.l.bf16 %v855
        %v1297 = vunpack.c.h.bf16 %v855
        %v1298 = vunpack.c.l.bf16 %v856
        %v1299 = vunpack.c.h.bf16 %v856
        %v1300 = vunpack.c.l.bf16 %v857
        %v1301 = vunpack.c.h.bf16 %v857
        %v1302 = vunpack.c.l.bf16 %v858
        %v1303 = vunpack.c.h.bf16 %v858
        %v1304 = vunpack.c.l.bf16 %v859
        %v1305 = vunpack.c.h.bf16 %v859
        %v1306 = vunpack.c.l.bf16 %v860
        %v1307 = vunpack.c.h.bf16 %v860
        %v1308 = vunpack.c.l.bf16 %v861
        %v1309 = vunpack.c.h.bf16 %v861
        %v1310 = vld [vmem:[%s3] sm:$0xf]
        %v1312 = vlaneseq
        %v1313 = vshrl.u32 %v1312, 7
        %v1314 = vsub.s32 0, %v1313
        %v1315 = vrot.slane %v1310, %v1314
        %v1316 = vlaneseq
        %v1317 = vshrl.u32 %v1316, 7
        %v1318 = vsub.s32 1, %v1317
        %v1319 = vrot.slane %v1310, %v1318
        %v1320 = vlaneseq
        %v1321 = vshrl.u32 %v1320, 7
        %v1322 = vsub.s32 2, %v1321
        %v1323 = vrot.slane %v1310, %v1322
        %v1324 = vlaneseq
        %v1325 = vshrl.u32 %v1324, 7
        %v1326 = vsub.s32 3, %v1325
        %v1327 = vrot.slane %v1310, %v1326
        %1332 = vmatprep.subr.mxu0 %v923
        %1333 = vmatpush1.msra.mxu0 %v922
        %1334 = vmatprep.subr.mxu0 %v919
        %1335 = vmatpush1.msra.mxu0 %v918
        %1336 = vmatprep.subr.mxu0 %v915
        %1337 = vmatpush1.msra.mxu0 %v914
        %1338 = vmatprep.subr.mxu0 %v911
        %1339 = vmatpush1.msra.mxu0 %v910
        %1340 = vmatprep.subr.mxu0 %v907
        %1341 = vmatpush1.msra.mxu0 %v906
        %1342 = vmatprep.subr.mxu0 %v903
        %1343 = vmatpush1.msra.mxu0 %v902
        %1344 = vmatprep.subr.mxu0 %v899
        %1345 = vmatpush1.msra.mxu0 %v898
        %1346 = vmatprep.subr.mxu0 %v895
        %1347 = vmatpush1.msra.mxu0 %v894
        %1348 = vmatprep.subr.mxu0 %v891
        %1349 = vmatpush1.msra.mxu0 %v890
        %1350 = vmatprep.subr.mxu0 %v887
        %1351 = vmatpush1.msra.mxu0 %v886
        %1352 = vmatprep.subr.mxu0 %v883
        %1353 = vmatpush1.msra.mxu0 %v882
        %1354 = vmatprep.subr.mxu0 %v879
        %1355 = vmatpush1.msra.mxu0 %v878
        %1356 = vmatprep.subr.mxu0 %v875
        %1357 = vmatpush1.msra.mxu0 %v874
        %1358 = vmatprep.subr.mxu0 %v871
        %1359 = vmatpush1.msra.mxu0 %v870
        %1360 = vmatprep.subr.mxu0 %v867
        %1361 = vmatpush1.msra.mxu0 %v866
        %1362 = vmatprep.subr.mxu0 %v863
        %1363 = vmatpush1.msra.mxu0 %v862
        %1364 = vmatprep.subr.mxu0 %v987
        %1365 = vmatpush2.msra.mxu0 %v986
        %1366 = vmatprep.subr.mxu0 %v983
        %1367 = vmatpush2.msra.mxu0 %v982
        %1368 = vmatprep.subr.mxu0 %v979
        %1369 = vmatpush2.msra.mxu0 %v978
        %1370 = vmatprep.subr.mxu0 %v975
        %1371 = vmatpush2.msra.mxu0 %v974
        %1372 = vmatprep.subr.mxu0 %v971
        %1373 = vmatpush2.msra.mxu0 %v970
        %1374 = vmatprep.subr.mxu0 %v967
        %1375 = vmatpush2.msra.mxu0 %v966
        %1376 = vmatprep.subr.mxu0 %v963
        %1377 = vmatpush2.msra.mxu0 %v962
        %1378 = vmatprep.subr.mxu0 %v959
        %1379 = vmatpush2.msra.mxu0 %v958
        %1380 = vmatprep.subr.mxu0 %v955
        %1381 = vmatpush2.msra.mxu0 %v954
        %1382 = vmatprep.subr.mxu0 %v951
        %1383 = vmatpush2.msra.mxu0 %v950
        %1384 = vmatprep.subr.mxu0 %v947
        %1385 = vmatpush2.msra.mxu0 %v946
        %1386 = vmatprep.subr.mxu0 %v943
        %1387 = vmatpush2.msra.mxu0 %v942
        %1388 = vmatprep.subr.mxu0 %v939
        %1389 = vmatpush2.msra.mxu0 %v938
        %1390 = vmatprep.subr.mxu0 %v935
        %1391 = vmatpush2.msra.mxu0 %v934
        %1392 = vmatprep.subr.mxu0 %v931
        %1393 = vmatpush2.msra.mxu0 %v930
        %1394 = vmatprep.subr.mxu0 %v927
        %1395 = vmatpush2.msra.mxu0 %v926
        %1396 = vmatprep.mubr.f32.mxu0 %v632
        %1397 = vmatmul.mubr.f32.gmra.mxu0 %v631
        %v1398 = vpop.f32.mrf.mxu0
        %v1399 = vadd.f32 %v1315, %v1398
        %v1400 = vpop.f32.mrf.mxu0
        %v1401 = vadd.f32 %v1319, %v1400
        %1402 = vdwg.mxu0
        %1403 = vmatprep.subr.mxu0 %v1051
        %1404 = vmatpush1.msra.mxu0 %v1050
        %1405 = vmatprep.subr.mxu0 %v1047
        %1406 = vmatpush1.msra.mxu0 %v1046
        %1407 = vmatprep.subr.mxu0 %v1043
        %1408 = vmatpush1.msra.mxu0 %v1042
        %1409 = vmatprep.subr.mxu0 %v1039
        %1410 = vmatpush1.msra.mxu0 %v1038
        %1411 = vmatprep.subr.mxu0 %v1035
        %1412 = vmatpush1.msra.mxu0 %v1034
        %1413 = vmatprep.subr.mxu0 %v1031
        %1414 = vmatpush1.msra.mxu0 %v1030
        %1415 = vmatprep.subr.mxu0 %v1027
        %1416 = vmatpush1.msra.mxu0 %v1026
        %1417 = vmatprep.subr.mxu0 %v1023
        %1418 = vmatpush1.msra.mxu0 %v1022
        %1419 = vmatprep.subr.mxu0 %v1019
        %1420 = vmatpush1.msra.mxu0 %v1018
        %1421 = vmatprep.subr.mxu0 %v1015
        %1422 = vmatpush1.msra.mxu0 %v1014
        %1423 = vmatprep.subr.mxu0 %v1011
        %1424 = vmatpush1.msra.mxu0 %v1010
        %1425 = vmatprep.subr.mxu0 %v1007
        %1426 = vmatpush1.msra.mxu0 %v1006
        %1427 = vmatprep.subr.mxu0 %v1003
        %1428 = vmatpush1.msra.mxu0 %v1002
        %1429 = vmatprep.subr.mxu0 %v999
        %1430 = vmatpush1.msra.mxu0 %v998
        %1431 = vmatprep.subr.mxu0 %v995
        %1432 = vmatpush1.msra.mxu0 %v994
        %1433 = vmatprep.subr.mxu0 %v991
        %1434 = vmatpush1.msra.mxu0 %v990
        %1435 = vmatprep.subr.mxu0 %v1115
        %1436 = vmatpush2.msra.mxu0 %v1114
        %1437 = vmatprep.subr.mxu0 %v1111
        %1438 = vmatpush2.msra.mxu0 %v1110
        %1439 = vmatprep.subr.mxu0 %v1107
        %1440 = vmatpush2.msra.mxu0 %v1106
        %1441 = vmatprep.subr.mxu0 %v1103
        %1442 = vmatpush2.msra.mxu0 %v1102
        %1443 = vmatprep.subr.mxu0 %v1099
        %1444 = vmatpush2.msra.mxu0 %v1098
        %1445 = vmatprep.subr.mxu0 %v1095
        %1446 = vmatpush2.msra.mxu0 %v1094
        %1447 = vmatprep.subr.mxu0 %v1091
        %1448 = vmatpush2.msra.mxu0 %v1090
        %1449 = vmatprep.subr.mxu0 %v1087
        %1450 = vmatpush2.msra.mxu0 %v1086
        %1451 = vmatprep.subr.mxu0 %v1083
        %1452 = vmatpush2.msra.mxu0 %v1082
        %1453 = vmatprep.subr.mxu0 %v1079
        %1454 = vmatpush2.msra.mxu0 %v1078
        %1455 = vmatprep.subr.mxu0 %v1075
        %1456 = vmatpush2.msra.mxu0 %v1074
        %1457 = vmatprep.subr.mxu0 %v1071
        %1458 = vmatpush2.msra.mxu0 %v1070
        %1459 = vmatprep.subr.mxu0 %v1067
        %1460 = vmatpush2.msra.mxu0 %v1066
        %1461 = vmatprep.subr.mxu0 %v1063
        %1462 = vmatpush2.msra.mxu0 %v1062
        %1463 = vmatprep.subr.mxu0 %v1059
        %1464 = vmatpush2.msra.mxu0 %v1058
        %1465 = vmatprep.subr.mxu0 %v1055
        %1466 = vmatpush2.msra.mxu0 %v1054
        %1467 = vmatprep.mubr.f32.mxu0 %v634
        %1468 = vmatmul.mubr.f32.gmra.mxu0 %v633
        %v1469 = vpop.f32.mrf.mxu0
        %v1470 = vadd.f32 %v1399, %v1469
        %v1471 = vpop.f32.mrf.mxu0
        %v1472 = vadd.f32 %v1401, %v1471
        %1473 = vdwg.mxu0
        %1474 = vmatprep.subr.mxu0 %v1179
        %1475 = vmatpush1.msra.mxu0 %v1178
        %1476 = vmatprep.subr.mxu0 %v1175
        %1477 = vmatpush1.msra.mxu0 %v1174
        %1478 = vmatprep.subr.mxu0 %v1171
        %1479 = vmatpush1.msra.mxu0 %v1170
        %1480 = vmatprep.subr.mxu0 %v1167
        %1481 = vmatpush1.msra.mxu0 %v1166
        %1482 = vmatprep.subr.mxu0 %v1163
        %1483 = vmatpush1.msra.mxu0 %v1162
        %1484 = vmatprep.subr.mxu0 %v1159
        %1485 = vmatpush1.msra.mxu0 %v1158
        %1486 = vmatprep.subr.mxu0 %v1155
        %1487 = vmatpush1.msra.mxu0 %v1154
        %1488 = vmatprep.subr.mxu0 %v1151
        %1489 = vmatpush1.msra.mxu0 %v1150
        %1490 = vmatprep.subr.mxu0 %v1147
        %1491 = vmatpush1.msra.mxu0 %v1146
        %1492 = vmatprep.subr.mxu0 %v1143
        %1493 = vmatpush1.msra.mxu0 %v1142
        %1494 = vmatprep.subr.mxu0 %v1139
        %1495 = vmatpush1.msra.mxu0 %v1138
        %1496 = vmatprep.subr.mxu0 %v1135
        %1497 = vmatpush1.msra.mxu0 %v1134
        %1498 = vmatprep.subr.mxu0 %v1131
        %1499 = vmatpush1.msra.mxu0 %v1130
        %1500 = vmatprep.subr.mxu0 %v1127
        %1501 = vmatpush1.msra.mxu0 %v1126
        %1502 = vmatprep.subr.mxu0 %v1123
        %1503 = vmatpush1.msra.mxu0 %v1122
        %1504 = vmatprep.subr.mxu0 %v1119
        %1505 = vmatpush1.msra.mxu0 %v1118
        %1506 = vmatprep.subr.mxu0 %v1243
        %1507 = vmatpush2.msra.mxu0 %v1242
        %1508 = vmatprep.subr.mxu0 %v1239
        %1509 = vmatpush2.msra.mxu0 %v1238
        %1510 = vmatprep.subr.mxu0 %v1235
        %1511 = vmatpush2.msra.mxu0 %v1234
        %1512 = vmatprep.subr.mxu0 %v1231
        %1513 = vmatpush2.msra.mxu0 %v1230
        %1514 = vmatprep.subr.mxu0 %v1227
        %1515 = vmatpush2.msra.mxu0 %v1226
        %1516 = vmatprep.subr.mxu0 %v1223
        %1517 = vmatpush2.msra.mxu0 %v1222
        %1518 = vmatprep.subr.mxu0 %v1219
        %1519 = vmatpush2.msra.mxu0 %v1218
        %1520 = vmatprep.subr.mxu0 %v1215
        %1521 = vmatpush2.msra.mxu0 %v1214
        %1522 = vmatprep.subr.mxu0 %v1211
        %1523 = vmatpush2.msra.mxu0 %v1210
        %1524 = vmatprep.subr.mxu0 %v1207
        %1525 = vmatpush2.msra.mxu0 %v1206
        %1526 = vmatprep.subr.mxu0 %v1203
        %1527 = vmatpush2.msra.mxu0 %v1202
        %1528 = vmatprep.subr.mxu0 %v1199
        %1529 = vmatpush2.msra.mxu0 %v1198
        %1530 = vmatprep.subr.mxu0 %v1195
        %1531 = vmatpush2.msra.mxu0 %v1194
        %1532 = vmatprep.subr.mxu0 %v1191
        %1533 = vmatpush2.msra.mxu0 %v1190
        %1534 = vmatprep.subr.mxu0 %v1187
        %1535 = vmatpush2.msra.mxu0 %v1186
        %1536 = vmatprep.subr.mxu0 %v1183
        %1537 = vmatpush2.msra.mxu0 %v1182
        %1538 = vmatprep.mubr.f32.mxu0 %v636
        %1539 = vmatmul.mubr.f32.gmra.mxu0 %v635
        %v1540 = vpop.f32.mrf.mxu0
        %v1541 = vadd.f32 %v1470, %v1540
        %v1542 = vpop.f32.mrf.mxu0
        %v1543 = vadd.f32 %v1472, %v1542
        %1544 = vdwg.mxu0
        %1545 = vmatprep.subr.mxu0 %v1307
        %1546 = vmatpush1.msra.mxu0 %v1306
        %1547 = vmatprep.subr.mxu0 %v1303
        %1548 = vmatpush1.msra.mxu0 %v1302
        %1549 = vmatprep.subr.mxu0 %v1299
        %1550 = vmatpush1.msra.mxu0 %v1298
        %1551 = vmatprep.subr.mxu0 %v1295
        %1552 = vmatpush1.msra.mxu0 %v1294
        %1553 = vmatprep.subr.mxu0 %v1291
        %1554 = vmatpush1.msra.mxu0 %v1290
        %1555 = vmatprep.subr.mxu0 %v1287
        %1556 = vmatpush1.msra.mxu0 %v1286
        %1557 = vmatprep.subr.mxu0 %v1283
        %1558 = vmatpush1.msra.mxu0 %v1282
        %1559 = vmatprep.subr.mxu0 %v1279
        %1560 = vmatpush1.msra.mxu0 %v1278
        %1561 = vmatprep.subr.mxu0 %v1275
        %1562 = vmatpush1.msra.mxu0 %v1274
        %1563 = vmatprep.subr.mxu0 %v1271
        %1564 = vmatpush1.msra.mxu0 %v1270
        %1565 = vmatprep.subr.mxu0 %v1267
        %1566 = vmatpush1.msra.mxu0 %v1266
        %1567 = vmatprep.subr.mxu0 %v1263
        %1568 = vmatpush1.msra.mxu0 %v1262
        %1569 = vmatprep.subr.mxu0 %v1259
        %1570 = vmatpush1.msra.mxu0 %v1258
        %1571 = vmatprep.subr.mxu0 %v1255
        %1572 = vmatpush1.msra.mxu0 %v1254
        %1573 = vmatprep.subr.mxu0 %v1251
        %1574 = vmatpush1.msra.mxu0 %v1250
        %1575 = vmatprep.subr.mxu0 %v1247
        %1576 = vmatpush1.msra.mxu0 %v1246
        %1577 = vmatprep.subr.mxu0 0.0
        %1578 = vmatpush2.msra.mxu0 0.0
        %1579 = vmatprep.subr.mxu0 0.0
        %1580 = vmatpush2.msra.mxu0 0.0
        %1581 = vmatprep.subr.mxu0 0.0
        %1582 = vmatpush2.msra.mxu0 0.0
        %1583 = vmatprep.subr.mxu0 0.0
        %1584 = vmatpush2.msra.mxu0 0.0
        %1585 = vmatprep.subr.mxu0 0.0
        %1586 = vmatpush2.msra.mxu0 0.0
        %1587 = vmatprep.subr.mxu0 0.0
        %1588 = vmatpush2.msra.mxu0 0.0
        %1589 = vmatprep.subr.mxu0 0.0
        %1590 = vmatpush2.msra.mxu0 0.0
        %1591 = vmatprep.subr.mxu0 0.0
        %1592 = vmatpush2.msra.mxu0 0.0
        %1593 = vmatprep.subr.mxu0 0.0
        %1594 = vmatpush2.msra.mxu0 0.0
        %1595 = vmatprep.subr.mxu0 0.0
        %1596 = vmatpush2.msra.mxu0 0.0
        %1597 = vmatprep.subr.mxu0 0.0
        %1598 = vmatpush2.msra.mxu0 0.0
        %1599 = vmatprep.subr.mxu0 0.0
        %1600 = vmatpush2.msra.mxu0 0.0
        %1601 = vmatprep.subr.mxu0 0.0
        %1602 = vmatpush2.msra.mxu0 0.0
        %1603 = vmatprep.subr.mxu0 0.0
        %1604 = vmatpush2.msra.mxu0 0.0
        %1605 = vmatprep.subr.mxu0 0.0
        %1606 = vmatpush2.msra.mxu0 0.0
        %1607 = vmatprep.subr.mxu0 0.0
        %1608 = vmatpush2.msra.mxu0 0.0
        %1609 = vmatprep.mubr.f32.mxu0 0.0
        %1610 = vmatmul.mubr.f32.gmra.mxu0 %v637
        %v1611 = vpop.f32.mrf.mxu0
        %v1612 = vadd.f32 %v1541, %v1611
        %v1613 = vpop.f32.mrf.mxu0
        %v1614 = vadd.f32 %v1543, %v1613
        %1615 = vdwg.mxu0
        %1616 = vmatprep.subr.mxu0 %v925
        %1617 = vmatpush1.msra.mxu0 %v924
        %1618 = vmatprep.subr.mxu0 %v921
        %1619 = vmatpush1.msra.mxu0 %v920
        %1620 = vmatprep.subr.mxu0 %v917
        %1621 = vmatpush1.msra.mxu0 %v916
        %1622 = vmatprep.subr.mxu0 %v913
        %1623 = vmatpush1.msra.mxu0 %v912
        %1624 = vmatprep.subr.mxu0 %v909
        %1625 = vmatpush1.msra.mxu0 %v908
        %1626 = vmatprep.subr.mxu0 %v905
        %1627 = vmatpush1.msra.mxu0 %v904
        %1628 = vmatprep.subr.mxu0 %v901
        %1629 = vmatpush1.msra.mxu0 %v900
        %1630 = vmatprep.subr.mxu0 %v897
        %1631 = vmatpush1.msra.mxu0 %v896
        %1632 = vmatprep.subr.mxu0 %v893
        %1633 = vmatpush1.msra.mxu0 %v892
        %1634 = vmatprep.subr.mxu0 %v889
        %1635 = vmatpush1.msra.mxu0 %v888
        %1636 = vmatprep.subr.mxu0 %v885
        %1637 = vmatpush1.msra.mxu0 %v884
        %1638 = vmatprep.subr.mxu0 %v881
        %1639 = vmatpush1.msra.mxu0 %v880
        %1640 = vmatprep.subr.mxu0 %v877
        %1641 = vmatpush1.msra.mxu0 %v876
        %1642 = vmatprep.subr.mxu0 %v873
        %1643 = vmatpush1.msra.mxu0 %v872
        %1644 = vmatprep.subr.mxu0 %v869
        %1645 = vmatpush1.msra.mxu0 %v868
        %1646 = vmatprep.subr.mxu0 %v865
        %1647 = vmatpush1.msra.mxu0 %v864
        %1648 = vmatprep.subr.mxu0 %v989
        %1649 = vmatpush2.msra.mxu0 %v988
        %1650 = vmatprep.subr.mxu0 %v985
        %1651 = vmatpush2.msra.mxu0 %v984
        %1652 = vmatprep.subr.mxu0 %v981
        %1653 = vmatpush2.msra.mxu0 %v980
        %1654 = vmatprep.subr.mxu0 %v977
        %1655 = vmatpush2.msra.mxu0 %v976
        %1656 = vmatprep.subr.mxu0 %v973
        %1657 = vmatpush2.msra.mxu0 %v972
        %1658 = vmatprep.subr.mxu0 %v969
        %1659 = vmatpush2.msra.mxu0 %v968
        %1660 = vmatprep.subr.mxu0 %v965
        %1661 = vmatpush2.msra.mxu0 %v964
        %1662 = vmatprep.subr.mxu0 %v961
        %1663 = vmatpush2.msra.mxu0 %v960
        %1664 = vmatprep.subr.mxu0 %v957
        %1665 = vmatpush2.msra.mxu0 %v956
        %1666 = vmatprep.subr.mxu0 %v953
        %1667 = vmatpush2.msra.mxu0 %v952
        %1668 = vmatprep.subr.mxu0 %v949
        %1669 = vmatpush2.msra.mxu0 %v948
        %1670 = vmatprep.subr.mxu0 %v945
        %1671 = vmatpush2.msra.mxu0 %v944
        %1672 = vmatprep.subr.mxu0 %v941
        %1673 = vmatpush2.msra.mxu0 %v940
        %1674 = vmatprep.subr.mxu0 %v937
        %1675 = vmatpush2.msra.mxu0 %v936
        %1676 = vmatprep.subr.mxu0 %v933
        %1677 = vmatpush2.msra.mxu0 %v932
        %1678 = vmatprep.subr.mxu0 %v929
        %1679 = vmatpush2.msra.mxu0 %v928
        %1680 = vmatprep.mubr.f32.mxu0 %v632
        %1681 = vmatmul.mubr.f32.gmra.mxu0 %v631
        %v1682 = vpop.f32.mrf.mxu0
        %v1683 = vadd.f32 %v1323, %v1682
        %v1684 = vpop.f32.mrf.mxu0
        %v1685 = vadd.f32 %v1327, %v1684
        %1686 = vdwg.mxu0
        %1687 = vmatprep.subr.mxu0 %v1053
        %1688 = vmatpush1.msra.mxu0 %v1052
        %1689 = vmatprep.subr.mxu0 %v1049
        %1690 = vmatpush1.msra.mxu0 %v1048
        %1691 = vmatprep.subr.mxu0 %v1045
        %1692 = vmatpush1.msra.mxu0 %v1044
        %1693 = vmatprep.subr.mxu0 %v1041
        %1694 = vmatpush1.msra.mxu0 %v1040
        %1695 = vmatprep.subr.mxu0 %v1037
        %1696 = vmatpush1.msra.mxu0 %v1036
        %1697 = vmatprep.subr.mxu0 %v1033
        %1698 = vmatpush1.msra.mxu0 %v1032
        %1699 = vmatprep.subr.mxu0 %v1029
        %1700 = vmatpush1.msra.mxu0 %v1028
        %1701 = vmatprep.subr.mxu0 %v1025
        %1702 = vmatpush1.msra.mxu0 %v1024
        %1703 = vmatprep.subr.mxu0 %v1021
        %1704 = vmatpush1.msra.mxu0 %v1020
        %1705 = vmatprep.subr.mxu0 %v1017
        %1706 = vmatpush1.msra.mxu0 %v1016
        %1707 = vmatprep.subr.mxu0 %v1013
        %1708 = vmatpush1.msra.mxu0 %v1012
        %1709 = vmatprep.subr.mxu0 %v1009
        %1710 = vmatpush1.msra.mxu0 %v1008
        %1711 = vmatprep.subr.mxu0 %v1005
        %1712 = vmatpush1.msra.mxu0 %v1004
        %1713 = vmatprep.subr.mxu0 %v1001
        %1714 = vmatpush1.msra.mxu0 %v1000
        %1715 = vmatprep.subr.mxu0 %v997
        %1716 = vmatpush1.msra.mxu0 %v996
        %1717 = vmatprep.subr.mxu0 %v993
        %1718 = vmatpush1.msra.mxu0 %v992
        %1719 = vmatprep.subr.mxu0 %v1117
        %1720 = vmatpush2.msra.mxu0 %v1116
        %1721 = vmatprep.subr.mxu0 %v1113
        %1722 = vmatpush2.msra.mxu0 %v1112
        %1723 = vmatprep.subr.mxu0 %v1109
        %1724 = vmatpush2.msra.mxu0 %v1108
        %1725 = vmatprep.subr.mxu0 %v1105
        %1726 = vmatpush2.msra.mxu0 %v1104
        %1727 = vmatprep.subr.mxu0 %v1101
        %1728 = vmatpush2.msra.mxu0 %v1100
        %1729 = vmatprep.subr.mxu0 %v1097
        %1730 = vmatpush2.msra.mxu0 %v1096
        %1731 = vmatprep.subr.mxu0 %v1093
        %1732 = vmatpush2.msra.mxu0 %v1092
        %1733 = vmatprep.subr.mxu0 %v1089
        %1734 = vmatpush2.msra.mxu0 %v1088
        %1735 = vmatprep.subr.mxu0 %v1085
        %1736 = vmatpush2.msra.mxu0 %v1084
        %1737 = vmatprep.subr.mxu0 %v1081
        %1738 = vmatpush2.msra.mxu0 %v1080
        %1739 = vmatprep.subr.mxu0 %v1077
        %1740 = vmatpush2.msra.mxu0 %v1076
        %1741 = vmatprep.subr.mxu0 %v1073
        %1742 = vmatpush2.msra.mxu0 %v1072
        %1743 = vmatprep.subr.mxu0 %v1069
        %1744 = vmatpush2.msra.mxu0 %v1068
        %1745 = vmatprep.subr.mxu0 %v1065
        %1746 = vmatpush2.msra.mxu0 %v1064
        %1747 = vmatprep.subr.mxu0 %v1061
        %1748 = vmatpush2.msra.mxu0 %v1060
        %1749 = vmatprep.subr.mxu0 %v1057
        %1750 = vmatpush2.msra.mxu0 %v1056
        %1751 = vmatprep.mubr.f32.mxu0 %v634
        %1752 = vmatmul.mubr.f32.gmra.mxu0 %v633
        %v1753 = vpop.f32.mrf.mxu0
        %v1754 = vadd.f32 %v1683, %v1753
        %v1755 = vpop.f32.mrf.mxu0
        %v1756 = vadd.f32 %v1685, %v1755
        %1757 = vdwg.mxu0
        %1758 = vmatprep.subr.mxu0 %v1181
        %1759 = vmatpush1.msra.mxu0 %v1180
        %1760 = vmatprep.subr.mxu0 %v1177
        %1761 = vmatpush1.msra.mxu0 %v1176
        %1762 = vmatprep.subr.mxu0 %v1173
        %1763 = vmatpush1.msra.mxu0 %v1172
        %1764 = vmatprep.subr.mxu0 %v1169
        %1765 = vmatpush1.msra.mxu0 %v1168
        %1766 = vmatprep.subr.mxu0 %v1165
        %1767 = vmatpush1.msra.mxu0 %v1164
        %1768 = vmatprep.subr.mxu0 %v1161
        %1769 = vmatpush1.msra.mxu0 %v1160
        %1770 = vmatprep.subr.mxu0 %v1157
        %1771 = vmatpush1.msra.mxu0 %v1156
        %1772 = vmatprep.subr.mxu0 %v1153
        %1773 = vmatpush1.msra.mxu0 %v1152
        %1774 = vmatprep.subr.mxu0 %v1149
        %1775 = vmatpush1.msra.mxu0 %v1148
        %1776 = vmatprep.subr.mxu0 %v1145
        %1777 = vmatpush1.msra.mxu0 %v1144
        %1778 = vmatprep.subr.mxu0 %v1141
        %1779 = vmatpush1.msra.mxu0 %v1140
        %1780 = vmatprep.subr.mxu0 %v1137
        %1781 = vmatpush1.msra.mxu0 %v1136
        %1782 = vmatprep.subr.mxu0 %v1133
        %1783 = vmatpush1.msra.mxu0 %v1132
        %1784 = vmatprep.subr.mxu0 %v1129
        %1785 = vmatpush1.msra.mxu0 %v1128
        %1786 = vmatprep.subr.mxu0 %v1125
        %1787 = vmatpush1.msra.mxu0 %v1124
        %1788 = vmatprep.subr.mxu0 %v1121
        %1789 = vmatpush1.msra.mxu0 %v1120
        %1790 = vmatprep.subr.mxu0 %v1245
        %1791 = vmatpush2.msra.mxu0 %v1244
        %1792 = vmatprep.subr.mxu0 %v1241
        %1793 = vmatpush2.msra.mxu0 %v1240
        %1794 = vmatprep.subr.mxu0 %v1237
        %1795 = vmatpush2.msra.mxu0 %v1236
        %1796 = vmatprep.subr.mxu0 %v1233
        %1797 = vmatpush2.msra.mxu0 %v1232
        %1798 = vmatprep.subr.mxu0 %v1229
        %1799 = vmatpush2.msra.mxu0 %v1228
        %1800 = vmatprep.subr.mxu0 %v1225
        %1801 = vmatpush2.msra.mxu0 %v1224
        %1802 = vmatprep.subr.mxu0 %v1221
        %1803 = vmatpush2.msra.mxu0 %v1220
        %1804 = vmatprep.subr.mxu0 %v1217
        %1805 = vmatpush2.msra.mxu0 %v1216
        %1806 = vmatprep.subr.mxu0 %v1213
        %1807 = vmatpush2.msra.mxu0 %v1212
        %1808 = vmatprep.subr.mxu0 %v1209
        %1809 = vmatpush2.msra.mxu0 %v1208
        %1810 = vmatprep.subr.mxu0 %v1205
        %1811 = vmatpush2.msra.mxu0 %v1204
        %1812 = vmatprep.subr.mxu0 %v1201
        %1813 = vmatpush2.msra.mxu0 %v1200
        %1814 = vmatprep.subr.mxu0 %v1197
        %1815 = vmatpush2.msra.mxu0 %v1196
        %1816 = vmatprep.subr.mxu0 %v1193
        %1817 = vmatpush2.msra.mxu0 %v1192
        %1818 = vmatprep.subr.mxu0 %v1189
        %1819 = vmatpush2.msra.mxu0 %v1188
        %1820 = vmatprep.subr.mxu0 %v1185
        %1821 = vmatpush2.msra.mxu0 %v1184
        %1822 = vmatprep.mubr.f32.mxu0 %v636
        %1823 = vmatmul.mubr.f32.gmra.mxu0 %v635
        %v1824 = vpop.f32.mrf.mxu0
        %v1825 = vadd.f32 %v1754, %v1824
        %v1826 = vpop.f32.mrf.mxu0
        %v1827 = vadd.f32 %v1756, %v1826
        %1828 = vdwg.mxu0
        %1829 = vmatprep.subr.mxu0 %v1309
        %1830 = vmatpush1.msra.mxu0 %v1308
        %1831 = vmatprep.subr.mxu0 %v1305
        %1832 = vmatpush1.msra.mxu0 %v1304
        %1833 = vmatprep.subr.mxu0 %v1301
        %1834 = vmatpush1.msra.mxu0 %v1300
        %1835 = vmatprep.subr.mxu0 %v1297
        %1836 = vmatpush1.msra.mxu0 %v1296
        %1837 = vmatprep.subr.mxu0 %v1293
        %1838 = vmatpush1.msra.mxu0 %v1292
        %1839 = vmatprep.subr.mxu0 %v1289
        %1840 = vmatpush1.msra.mxu0 %v1288
        %1841 = vmatprep.subr.mxu0 %v1285
        %1842 = vmatpush1.msra.mxu0 %v1284
        %1843 = vmatprep.subr.mxu0 %v1281
        %1844 = vmatpush1.msra.mxu0 %v1280
        %1845 = vmatprep.subr.mxu0 %v1277
        %1846 = vmatpush1.msra.mxu0 %v1276
        %1847 = vmatprep.subr.mxu0 %v1273
        %1848 = vmatpush1.msra.mxu0 %v1272
        %1849 = vmatprep.subr.mxu0 %v1269
        %1850 = vmatpush1.msra.mxu0 %v1268
        %1851 = vmatprep.subr.mxu0 %v1265
        %1852 = vmatpush1.msra.mxu0 %v1264
        %1853 = vmatprep.subr.mxu0 %v1261
        %1854 = vmatpush1.msra.mxu0 %v1260
        %1855 = vmatprep.subr.mxu0 %v1257
        %1856 = vmatpush1.msra.mxu0 %v1256
        %1857 = vmatprep.subr.mxu0 %v1253
        %1858 = vmatpush1.msra.mxu0 %v1252
        %1859 = vmatprep.subr.mxu0 %v1249
        %1860 = vmatpush1.msra.mxu0 %v1248
        %1861 = vmatprep.subr.mxu0 0.0
        %1862 = vmatpush2.msra.mxu0 0.0
        %1863 = vmatprep.subr.mxu0 0.0
        %1864 = vmatpush2.msra.mxu0 0.0
        %1865 = vmatprep.subr.mxu0 0.0
        %1866 = vmatpush2.msra.mxu0 0.0
        %1867 = vmatprep.subr.mxu0 0.0
        %1868 = vmatpush2.msra.mxu0 0.0
        %1869 = vmatprep.subr.mxu0 0.0
        %1870 = vmatpush2.msra.mxu0 0.0
        %1871 = vmatprep.subr.mxu0 0.0
        %1872 = vmatpush2.msra.mxu0 0.0
        %1873 = vmatprep.subr.mxu0 0.0
        %1874 = vmatpush2.msra.mxu0 0.0
        %1875 = vmatprep.subr.mxu0 0.0
        %1876 = vmatpush2.msra.mxu0 0.0
        %1877 = vmatprep.subr.mxu0 0.0
        %1878 = vmatpush2.msra.mxu0 0.0
        %1879 = vmatprep.subr.mxu0 0.0
        %1880 = vmatpush2.msra.mxu0 0.0
        %1881 = vmatprep.subr.mxu0 0.0
        %1882 = vmatpush2.msra.mxu0 0.0
        %1883 = vmatprep.subr.mxu0 0.0
        %1884 = vmatpush2.msra.mxu0 0.0
        %1885 = vmatprep.subr.mxu0 0.0
        %1886 = vmatpush2.msra.mxu0 0.0
        %1887 = vmatprep.subr.mxu0 0.0
        %1888 = vmatpush2.msra.mxu0 0.0
        %1889 = vmatprep.subr.mxu0 0.0
        %1890 = vmatpush2.msra.mxu0 0.0
        %1891 = vmatprep.subr.mxu0 0.0
        %1892 = vmatpush2.msra.mxu0 0.0
        %1893 = vmatprep.mubr.f32.mxu0 0.0
        %1894 = vmatmul.mubr.f32.gmra.mxu0 %v637
        %v1895 = vpop.f32.mrf.mxu0
        %v1896 = vadd.f32 %v1825, %v1895
        %v1897 = vpop.f32.mrf.mxu0
        %v1898 = vadd.f32 %v1827, %v1897
        %1899 = vdwg.mxu0
        %v1900 = vmax.f32 %v1612, 0.0
        %v1901 = vmax.f32 %v1614, 0.0
        %v1902 = vmax.f32 %v1896, 0.0
        %v1903 = vmax.f32 %v1898, 0.0
        %v1904 = vld [vmem:[%s4] sm:$0xff]
        %v1905 = vld [vmem:[%s4 + $0x8] sm:$0xff]
        %v1906 = vld [vmem:[%s4 + $0x10] sm:$0xff]
        %v1907 = vld [vmem:[%s4 + $0x18] sm:$0xff]
        %v1908 = vld [vmem:[%s4 + $0x20] sm:$0xff]
        %v1909 = vld [vmem:[%s4 + $0x28] sm:$0xff]
        %v1910 = vld [vmem:[%s4 + $0x30] sm:$0xff]
        %v1911 = vld [vmem:[%s4 + $0x38] sm:$0xff]
        %v1912 = vld [vmem:[%s4 + $0x40] sm:$0xff]
        %v1913 = vld [vmem:[%s4 + $0x48] sm:$0xff]
        %v1914 = vld [vmem:[%s4 + $0x50] sm:$0xff]
        %v1915 = vld [vmem:[%s4 + $0x58] sm:$0xff]
        %v1916 = vld [vmem:[%s4 + $0x60] sm:$0xff]
        %v1917 = vld [vmem:[%s4 + $0x68] sm:$0xff]
        %v1918 = vld [vmem:[%s4 + $0x70] sm:$0xff]
        %v1919 = vld [vmem:[%s4 + $0x78] sm:$0xff]
        %v1920 = vld [vmem:[%s4 + $0x80] sm:$0xff]
        %v1921 = vld [vmem:[%s4 + $0x88] sm:$0xff]
        %v1922 = vld [vmem:[%s4 + $0x90] sm:$0xff]
        %v1923 = vld [vmem:[%s4 + $0x98] sm:$0xff]
        %v1924 = vld [vmem:[%s4 + $0xa0] sm:$0xff]
        %v1925 = vld [vmem:[%s4 + $0xa8] sm:$0xff]
        %v1926 = vld [vmem:[%s4 + $0xb0] sm:$0xff]
        %v1927 = vld [vmem:[%s4 + $0xb8] sm:$0xff]
        %v1928 = vld [vmem:[%s4 + $0xc0] sm:$0xff]
        %v1929 = vld [vmem:[%s4 + $0xc8] sm:$0xff]
        %v1930 = vld [vmem:[%s4 + $0xd0] sm:$0xff]
        %v1931 = vld [vmem:[%s4 + $0xd8] sm:$0xff]
        %v1932 = vld [vmem:[%s4 + $0xe0] sm:$0xff]
        %v1933 = vld [vmem:[%s4 + $0xe8] sm:$0xff]
        %v1934 = vld [vmem:[%s4 + $0xf0] sm:$0xff]
        %v1935 = vld [vmem:[%s4 + $0xf8] sm:$0xff]
        %v1936 = vld [vmem:[%s4 + $0x100] sm:$0xff]
        %v1937 = vld [vmem:[%s4 + $0x108] sm:$0xff]
        %v1938 = vld [vmem:[%s4 + $0x110] sm:$0xff]
        %v1939 = vld [vmem:[%s4 + $0x118] sm:$0xff]
        %v1940 = vld [vmem:[%s4 + $0x120] sm:$0xff]
        %v1941 = vld [vmem:[%s4 + $0x128] sm:$0xff]
        %v1942 = vld [vmem:[%s4 + $0x130] sm:$0xff]
        %v1943 = vld [vmem:[%s4 + $0x138] sm:$0xff]
        %v1944 = vld [vmem:[%s4 + $0x140] sm:$0xff]
        %v1945 = vld [vmem:[%s4 + $0x148] sm:$0xff]
        %v1946 = vld [vmem:[%s4 + $0x150] sm:$0xff]
        %v1947 = vld [vmem:[%s4 + $0x158] sm:$0xff]
        %v1948 = vld [vmem:[%s4 + $0x160] sm:$0xff]
        %v1949 = vld [vmem:[%s4 + $0x168] sm:$0xff]
        %v1950 = vld [vmem:[%s4 + $0x170] sm:$0xff]
        %v1951 = vld [vmem:[%s4 + $0x178] sm:$0xff]
        %v1952 = vld [vmem:[%s4 + $0x180] sm:$0xff]
        %v1953 = vld [vmem:[%s4 + $0x188] sm:$0xff]
        %v1954 = vld [vmem:[%s4 + $0x190] sm:$0xff]
        %v1955 = vld [vmem:[%s4 + $0x198] sm:$0xff]
        %v1956 = vld [vmem:[%s4 + $0x1a0] sm:$0xff]
        %v1957 = vld [vmem:[%s4 + $0x1a8] sm:$0xff]
        %v1958 = vld [vmem:[%s4 + $0x1b0] sm:$0xff]
        %v1959 = vld [vmem:[%s4 + $0x1b8] sm:$0xff]
        %v1960 = vld [vmem:[%s4 + $0x1c0] sm:$0xff]
        %v1961 = vld [vmem:[%s4 + $0x1c8] sm:$0xff]
        %v1962 = vld [vmem:[%s4 + $0x1d0] sm:$0xff]
        %v1963 = vld [vmem:[%s4 + $0x1d8] sm:$0xff]
        %v1964 = vld [vmem:[%s4 + $0x1e0] sm:$0xff]
        %v1965 = vld [vmem:[%s4 + $0x1e8] sm:$0xff]
        %v1966 = vld [vmem:[%s4 + $0x1f0] sm:$0xff]
        %v1967 = vld [vmem:[%s4 + $0x1f8] sm:$0xff]
        %v1968 = vld [vmem:[%s4 + $0x200] sm:$0xff]
        %v1969 = vld [vmem:[%s4 + $0x208] sm:$0xff]
        %v1970 = vld [vmem:[%s4 + $0x210] sm:$0xff]
        %v1971 = vld [vmem:[%s4 + $0x218] sm:$0xff]
        %v1972 = vld [vmem:[%s4 + $0x220] sm:$0xff]
        %v1973 = vld [vmem:[%s4 + $0x228] sm:$0xff]
        %v1974 = vld [vmem:[%s4 + $0x230] sm:$0xff]
        %v1975 = vld [vmem:[%s4 + $0x238] sm:$0xff]
        %v1976 = vld [vmem:[%s4 + $0x240] sm:$0xff]
        %v1977 = vld [vmem:[%s4 + $0x248] sm:$0xff]
        %v1978 = vld [vmem:[%s4 + $0x250] sm:$0xff]
        %v1979 = vld [vmem:[%s4 + $0x258] sm:$0xff]
        %v1980 = vld [vmem:[%s4 + $0x260] sm:$0xff]
        %v1981 = vld [vmem:[%s4 + $0x268] sm:$0xff]
        %v1982 = vld [vmem:[%s4 + $0x270] sm:$0xff]
        %v1983 = vld [vmem:[%s4 + $0x278] sm:$0xff]
        %v1984 = vld [vmem:[%s4 + $0x280] sm:$0xff]
        %v1985 = vld [vmem:[%s4 + $0x288] sm:$0xff]
        %v1986 = vld [vmem:[%s4 + $0x290] sm:$0xff]
        %v1987 = vld [vmem:[%s4 + $0x298] sm:$0xff]
        %v1988 = vld [vmem:[%s4 + $0x2a0] sm:$0xff]
        %v1989 = vld [vmem:[%s4 + $0x2a8] sm:$0xff]
        %v1990 = vld [vmem:[%s4 + $0x2b0] sm:$0xff]
        %v1991 = vld [vmem:[%s4 + $0x2b8] sm:$0xff]
        %v1992 = vld [vmem:[%s4 + $0x2c0] sm:$0xff]
        %v1993 = vld [vmem:[%s4 + $0x2c8] sm:$0xff]
        %v1994 = vld [vmem:[%s4 + $0x2d0] sm:$0xff]
        %v1995 = vld [vmem:[%s4 + $0x2d8] sm:$0xff]
        %v1996 = vld [vmem:[%s4 + $0x2e0] sm:$0xff]
        %v1997 = vld [vmem:[%s4 + $0x2e8] sm:$0xff]
        %v1998 = vld [vmem:[%s4 + $0x2f0] sm:$0xff]
        %v1999 = vld [vmem:[%s4 + $0x2f8] sm:$0xff]
        %v2000 = vld [vmem:[%s4 + $0x300] sm:$0xff]
        %v2001 = vld [vmem:[%s4 + $0x308] sm:$0xff]
        %v2002 = vld [vmem:[%s4 + $0x310] sm:$0xff]
        %v2003 = vld [vmem:[%s4 + $0x318] sm:$0xff]
        %v2004 = vld [vmem:[%s4 + $0x320] sm:$0xff]
        %v2005 = vld [vmem:[%s4 + $0x328] sm:$0xff]
        %v2006 = vld [vmem:[%s4 + $0x330] sm:$0xff]
        %v2007 = vld [vmem:[%s4 + $0x338] sm:$0xff]
        %v2008 = vld [vmem:[%s4 + $0x340] sm:$0xff]
        %v2009 = vld [vmem:[%s4 + $0x348] sm:$0xff]
        %v2010 = vld [vmem:[%s4 + $0x350] sm:$0xff]
        %v2011 = vld [vmem:[%s4 + $0x358] sm:$0xff]
        %v2012 = vld [vmem:[%s4 + $0x360] sm:$0xff]
        %v2013 = vld [vmem:[%s4 + $0x368] sm:$0xff]
        %v2014 = vld [vmem:[%s4 + $0x370] sm:$0xff]
        %v2015 = vld [vmem:[%s4 + $0x378] sm:$0xff]
        %v2016 = vld [vmem:[%s4 + $0x380] sm:$0xff]
        %v2017 = vld [vmem:[%s4 + $0x388] sm:$0xff]
        %v2018 = vld [vmem:[%s4 + $0x390] sm:$0xff]
        %v2019 = vld [vmem:[%s4 + $0x398] sm:$0xff]
        %v2020 = vld [vmem:[%s4 + $0x3a0] sm:$0xff]
        %v2021 = vld [vmem:[%s4 + $0x3a8] sm:$0xff]
        %v2022 = vld [vmem:[%s4 + $0x3b0] sm:$0xff]
        %v2023 = vld [vmem:[%s4 + $0x3b8] sm:$0xff]
        %v2024 = vld [vmem:[%s4 + $0x3c0] sm:$0xff]
        %v2025 = vld [vmem:[%s4 + $0x3c8] sm:$0xff]
        %v2026 = vld [vmem:[%s4 + $0x3d0] sm:$0xff]
        %v2027 = vld [vmem:[%s4 + $0x3d8] sm:$0xff]
        %v2028 = vld [vmem:[%s4 + $0x3e0] sm:$0xff]
        %v2029 = vld [vmem:[%s4 + $0x3e8] sm:$0xff]
        %v2030 = vld [vmem:[%s4 + $0x3f0] sm:$0xff]
        %v2031 = vld [vmem:[%s4 + $0x3f8] sm:$0xff]
        %v2032 = vunpack.c.l.bf16 %v1904
        %v2033 = vunpack.c.h.bf16 %v1904
        %v2034 = vunpack.c.l.bf16 %v1905
        %v2035 = vunpack.c.h.bf16 %v1905
        %v2036 = vunpack.c.l.bf16 %v1906
        %v2037 = vunpack.c.h.bf16 %v1906
        %v2038 = vunpack.c.l.bf16 %v1907
        %v2039 = vunpack.c.h.bf16 %v1907
        %v2040 = vunpack.c.l.bf16 %v1908
        %v2041 = vunpack.c.h.bf16 %v1908
        %v2042 = vunpack.c.l.bf16 %v1909
        %v2043 = vunpack.c.h.bf16 %v1909
        %v2044 = vunpack.c.l.bf16 %v1910
        %v2045 = vunpack.c.h.bf16 %v1910
        %v2046 = vunpack.c.l.bf16 %v1911
        %v2047 = vunpack.c.h.bf16 %v1911
        %v2048 = vunpack.c.l.bf16 %v1912
        %v2049 = vunpack.c.h.bf16 %v1912
        %v2050 = vunpack.c.l.bf16 %v1913
        %v2051 = vunpack.c.h.bf16 %v1913
        %v2052 = vunpack.c.l.bf16 %v1914
        %v2053 = vunpack.c.h.bf16 %v1914
        %v2054 = vunpack.c.l.bf16 %v1915
        %v2055 = vunpack.c.h.bf16 %v1915
        %v2056 = vunpack.c.l.bf16 %v1916
        %v2057 = vunpack.c.h.bf16 %v1916
        %v2058 = vunpack.c.l.bf16 %v1917
        %v2059 = vunpack.c.h.bf16 %v1917
        %v2060 = vunpack.c.l.bf16 %v1918
        %v2061 = vunpack.c.h.bf16 %v1918
        %v2062 = vunpack.c.l.bf16 %v1919
        %v2063 = vunpack.c.h.bf16 %v1919
        %v2064 = vunpack.c.l.bf16 %v1920
        %v2065 = vunpack.c.h.bf16 %v1920
        %v2066 = vunpack.c.l.bf16 %v1921
        %v2067 = vunpack.c.h.bf16 %v1921
        %v2068 = vunpack.c.l.bf16 %v1922
        %v2069 = vunpack.c.h.bf16 %v1922
        %v2070 = vunpack.c.l.bf16 %v1923
        %v2071 = vunpack.c.h.bf16 %v1923
        %v2072 = vunpack.c.l.bf16 %v1924
        %v2073 = vunpack.c.h.bf16 %v1924
        %v2074 = vunpack.c.l.bf16 %v1925
        %v2075 = vunpack.c.h.bf16 %v1925
        %v2076 = vunpack.c.l.bf16 %v1926
        %v2077 = vunpack.c.h.bf16 %v1926
        %v2078 = vunpack.c.l.bf16 %v1927
        %v2079 = vunpack.c.h.bf16 %v1927
        %v2080 = vunpack.c.l.bf16 %v1928
        %v2081 = vunpack.c.h.bf16 %v1928
        %v2082 = vunpack.c.l.bf16 %v1929
        %v2083 = vunpack.c.h.bf16 %v1929
        %v2084 = vunpack.c.l.bf16 %v1930
        %v2085 = vunpack.c.h.bf16 %v1930
        %v2086 = vunpack.c.l.bf16 %v1931
        %v2087 = vunpack.c.h.bf16 %v1931
        %v2088 = vunpack.c.l.bf16 %v1932
        %v2089 = vunpack.c.h.bf16 %v1932
        %v2090 = vunpack.c.l.bf16 %v1933
        %v2091 = vunpack.c.h.bf16 %v1933
        %v2092 = vunpack.c.l.bf16 %v1934
        %v2093 = vunpack.c.h.bf16 %v1934
        %v2094 = vunpack.c.l.bf16 %v1935
        %v2095 = vunpack.c.h.bf16 %v1935
        %v2096 = vunpack.c.l.bf16 %v1936
        %v2097 = vunpack.c.h.bf16 %v1936
        %v2098 = vunpack.c.l.bf16 %v1937
        %v2099 = vunpack.c.h.bf16 %v1937
        %v2100 = vunpack.c.l.bf16 %v1938
        %v2101 = vunpack.c.h.bf16 %v1938
        %v2102 = vunpack.c.l.bf16 %v1939
        %v2103 = vunpack.c.h.bf16 %v1939
        %v2104 = vunpack.c.l.bf16 %v1940
        %v2105 = vunpack.c.h.bf16 %v1940
        %v2106 = vunpack.c.l.bf16 %v1941
        %v2107 = vunpack.c.h.bf16 %v1941
        %v2108 = vunpack.c.l.bf16 %v1942
        %v2109 = vunpack.c.h.bf16 %v1942
        %v2110 = vunpack.c.l.bf16 %v1943
        %v2111 = vunpack.c.h.bf16 %v1943
        %v2112 = vunpack.c.l.bf16 %v1944
        %v2113 = vunpack.c.h.bf16 %v1944
        %v2114 = vunpack.c.l.bf16 %v1945
        %v2115 = vunpack.c.h.bf16 %v1945
        %v2116 = vunpack.c.l.bf16 %v1946
        %v2117 = vunpack.c.h.bf16 %v1946
        %v2118 = vunpack.c.l.bf16 %v1947
        %v2119 = vunpack.c.h.bf16 %v1947
        %v2120 = vunpack.c.l.bf16 %v1948
        %v2121 = vunpack.c.h.bf16 %v1948
        %v2122 = vunpack.c.l.bf16 %v1949
        %v2123 = vunpack.c.h.bf16 %v1949
        %v2124 = vunpack.c.l.bf16 %v1950
        %v2125 = vunpack.c.h.bf16 %v1950
        %v2126 = vunpack.c.l.bf16 %v1951
        %v2127 = vunpack.c.h.bf16 %v1951
        %v2128 = vunpack.c.l.bf16 %v1952
        %v2129 = vunpack.c.h.bf16 %v1952
        %v2130 = vunpack.c.l.bf16 %v1953
        %v2131 = vunpack.c.h.bf16 %v1953
        %v2132 = vunpack.c.l.bf16 %v1954
        %v2133 = vunpack.c.h.bf16 %v1954
        %v2134 = vunpack.c.l.bf16 %v1955
        %v2135 = vunpack.c.h.bf16 %v1955
        %v2136 = vunpack.c.l.bf16 %v1956
        %v2137 = vunpack.c.h.bf16 %v1956
        %v2138 = vunpack.c.l.bf16 %v1957
        %v2139 = vunpack.c.h.bf16 %v1957
        %v2140 = vunpack.c.l.bf16 %v1958
        %v2141 = vunpack.c.h.bf16 %v1958
        %v2142 = vunpack.c.l.bf16 %v1959
        %v2143 = vunpack.c.h.bf16 %v1959
        %v2144 = vunpack.c.l.bf16 %v1960
        %v2145 = vunpack.c.h.bf16 %v1960
        %v2146 = vunpack.c.l.bf16 %v1961
        %v2147 = vunpack.c.h.bf16 %v1961
        %v2148 = vunpack.c.l.bf16 %v1962
        %v2149 = vunpack.c.h.bf16 %v1962
        %v2150 = vunpack.c.l.bf16 %v1963
        %v2151 = vunpack.c.h.bf16 %v1963
        %v2152 = vunpack.c.l.bf16 %v1964
        %v2153 = vunpack.c.h.bf16 %v1964
        %v2154 = vunpack.c.l.bf16 %v1965
        %v2155 = vunpack.c.h.bf16 %v1965
        %v2156 = vunpack.c.l.bf16 %v1966
        %v2157 = vunpack.c.h.bf16 %v1966
        %v2158 = vunpack.c.l.bf16 %v1967
        %v2159 = vunpack.c.h.bf16 %v1967
        %v2160 = vunpack.c.l.bf16 %v1968
        %v2161 = vunpack.c.h.bf16 %v1968
        %v2162 = vunpack.c.l.bf16 %v1969
        %v2163 = vunpack.c.h.bf16 %v1969
        %v2164 = vunpack.c.l.bf16 %v1970
        %v2165 = vunpack.c.h.bf16 %v1970
        %v2166 = vunpack.c.l.bf16 %v1971
        %v2167 = vunpack.c.h.bf16 %v1971
        %v2168 = vunpack.c.l.bf16 %v1972
        %v2169 = vunpack.c.h.bf16 %v1972
        %v2170 = vunpack.c.l.bf16 %v1973
        %v2171 = vunpack.c.h.bf16 %v1973
        %v2172 = vunpack.c.l.bf16 %v1974
        %v2173 = vunpack.c.h.bf16 %v1974
        %v2174 = vunpack.c.l.bf16 %v1975
        %v2175 = vunpack.c.h.bf16 %v1975
        %v2176 = vunpack.c.l.bf16 %v1976
        %v2177 = vunpack.c.h.bf16 %v1976
        %v2178 = vunpack.c.l.bf16 %v1977
        %v2179 = vunpack.c.h.bf16 %v1977
        %v2180 = vunpack.c.l.bf16 %v1978
        %v2181 = vunpack.c.h.bf16 %v1978
        %v2182 = vunpack.c.l.bf16 %v1979
        %v2183 = vunpack.c.h.bf16 %v1979
        %v2184 = vunpack.c.l.bf16 %v1980
        %v2185 = vunpack.c.h.bf16 %v1980
        %v2186 = vunpack.c.l.bf16 %v1981
        %v2187 = vunpack.c.h.bf16 %v1981
        %v2188 = vunpack.c.l.bf16 %v1982
        %v2189 = vunpack.c.h.bf16 %v1982
        %v2190 = vunpack.c.l.bf16 %v1983
        %v2191 = vunpack.c.h.bf16 %v1983
        %v2192 = vunpack.c.l.bf16 %v1984
        %v2193 = vunpack.c.h.bf16 %v1984
        %v2194 = vunpack.c.l.bf16 %v1985
        %v2195 = vunpack.c.h.bf16 %v1985
        %v2196 = vunpack.c.l.bf16 %v1986
        %v2197 = vunpack.c.h.bf16 %v1986
        %v2198 = vunpack.c.l.bf16 %v1987
        %v2199 = vunpack.c.h.bf16 %v1987
        %v2200 = vunpack.c.l.bf16 %v1988
        %v2201 = vunpack.c.h.bf16 %v1988
        %v2202 = vunpack.c.l.bf16 %v1989
        %v2203 = vunpack.c.h.bf16 %v1989
        %v2204 = vunpack.c.l.bf16 %v1990
        %v2205 = vunpack.c.h.bf16 %v1990
        %v2206 = vunpack.c.l.bf16 %v1991
        %v2207 = vunpack.c.h.bf16 %v1991
        %v2208 = vunpack.c.l.bf16 %v1992
        %v2209 = vunpack.c.h.bf16 %v1992
        %v2210 = vunpack.c.l.bf16 %v1993
        %v2211 = vunpack.c.h.bf16 %v1993
        %v2212 = vunpack.c.l.bf16 %v1994
        %v2213 = vunpack.c.h.bf16 %v1994
        %v2214 = vunpack.c.l.bf16 %v1995
        %v2215 = vunpack.c.h.bf16 %v1995
        %v2216 = vunpack.c.l.bf16 %v1996
        %v2217 = vunpack.c.h.bf16 %v1996
        %v2218 = vunpack.c.l.bf16 %v1997
        %v2219 = vunpack.c.h.bf16 %v1997
        %v2220 = vunpack.c.l.bf16 %v1998
        %v2221 = vunpack.c.h.bf16 %v1998
        %v2222 = vunpack.c.l.bf16 %v1999
        %v2223 = vunpack.c.h.bf16 %v1999
        %v2224 = vunpack.c.l.bf16 %v2000
        %v2225 = vunpack.c.h.bf16 %v2000
        %v2226 = vunpack.c.l.bf16 %v2001
        %v2227 = vunpack.c.h.bf16 %v2001
        %v2228 = vunpack.c.l.bf16 %v2002
        %v2229 = vunpack.c.h.bf16 %v2002
        %v2230 = vunpack.c.l.bf16 %v2003
        %v2231 = vunpack.c.h.bf16 %v2003
        %v2232 = vunpack.c.l.bf16 %v2004
        %v2233 = vunpack.c.h.bf16 %v2004
        %v2234 = vunpack.c.l.bf16 %v2005
        %v2235 = vunpack.c.h.bf16 %v2005
        %v2236 = vunpack.c.l.bf16 %v2006
        %v2237 = vunpack.c.h.bf16 %v2006
        %v2238 = vunpack.c.l.bf16 %v2007
        %v2239 = vunpack.c.h.bf16 %v2007
        %v2240 = vunpack.c.l.bf16 %v2008
        %v2241 = vunpack.c.h.bf16 %v2008
        %v2242 = vunpack.c.l.bf16 %v2009
        %v2243 = vunpack.c.h.bf16 %v2009
        %v2244 = vunpack.c.l.bf16 %v2010
        %v2245 = vunpack.c.h.bf16 %v2010
        %v2246 = vunpack.c.l.bf16 %v2011
        %v2247 = vunpack.c.h.bf16 %v2011
        %v2248 = vunpack.c.l.bf16 %v2012
        %v2249 = vunpack.c.h.bf16 %v2012
        %v2250 = vunpack.c.l.bf16 %v2013
        %v2251 = vunpack.c.h.bf16 %v2013
        %v2252 = vunpack.c.l.bf16 %v2014
        %v2253 = vunpack.c.h.bf16 %v2014
        %v2254 = vunpack.c.l.bf16 %v2015
        %v2255 = vunpack.c.h.bf16 %v2015
        %v2256 = vunpack.c.l.bf16 %v2016
        %v2257 = vunpack.c.h.bf16 %v2016
        %v2258 = vunpack.c.l.bf16 %v2017
        %v2259 = vunpack.c.h.bf16 %v2017
        %v2260 = vunpack.c.l.bf16 %v2018
        %v2261 = vunpack.c.h.bf16 %v2018
        %v2262 = vunpack.c.l.bf16 %v2019
        %v2263 = vunpack.c.h.bf16 %v2019
        %v2264 = vunpack.c.l.bf16 %v2020
        %v2265 = vunpack.c.h.bf16 %v2020
        %v2266 = vunpack.c.l.bf16 %v2021
        %v2267 = vunpack.c.h.bf16 %v2021
        %v2268 = vunpack.c.l.bf16 %v2022
        %v2269 = vunpack.c.h.bf16 %v2022
        %v2270 = vunpack.c.l.bf16 %v2023
        %v2271 = vunpack.c.h.bf16 %v2023
        %v2272 = vunpack.c.l.bf16 %v2024
        %v2273 = vunpack.c.h.bf16 %v2024
        %v2274 = vunpack.c.l.bf16 %v2025
        %v2275 = vunpack.c.h.bf16 %v2025
        %v2276 = vunpack.c.l.bf16 %v2026
        %v2277 = vunpack.c.h.bf16 %v2026
        %v2278 = vunpack.c.l.bf16 %v2027
        %v2279 = vunpack.c.h.bf16 %v2027
        %v2280 = vunpack.c.l.bf16 %v2028
        %v2281 = vunpack.c.h.bf16 %v2028
        %v2282 = vunpack.c.l.bf16 %v2029
        %v2283 = vunpack.c.h.bf16 %v2029
        %v2284 = vunpack.c.l.bf16 %v2030
        %v2285 = vunpack.c.h.bf16 %v2030
        %v2286 = vunpack.c.l.bf16 %v2031
        %v2287 = vunpack.c.h.bf16 %v2031
        %v2288 = vld [vmem:[%s5] sm:$0xf]
        %v2290 = vlaneseq
        %v2291 = vshrl.u32 %v2290, 7
        %v2292 = vsub.s32 0, %v2291
        %v2293 = vrot.slane %v2288, %v2292
        %v2294 = vlaneseq
        %v2295 = vshrl.u32 %v2294, 7
        %v2296 = vsub.s32 1, %v2295
        %v2297 = vrot.slane %v2288, %v2296
        %v2298 = vlaneseq
        %v2299 = vshrl.u32 %v2298, 7
        %v2300 = vsub.s32 2, %v2299
        %v2301 = vrot.slane %v2288, %v2300
        %v2302 = vlaneseq
        %v2303 = vshrl.u32 %v2302, 7
        %v2304 = vsub.s32 3, %v2303
        %v2305 = vrot.slane %v2288, %v2304
        %2310 = vmatprep.subr.mxu0 %v2093
        %2311 = vmatpush1.msra.mxu0 %v2092
        %2312 = vmatprep.subr.mxu0 %v2089
        %2313 = vmatpush1.msra.mxu0 %v2088
        %2314 = vmatprep.subr.mxu0 %v2085
        %2315 = vmatpush1.msra.mxu0 %v2084
        %2316 = vmatprep.subr.mxu0 %v2081
        %2317 = vmatpush1.msra.mxu0 %v2080
        %2318 = vmatprep.subr.mxu0 %v2077
        %2319 = vmatpush1.msra.mxu0 %v2076
        %2320 = vmatprep.subr.mxu0 %v2073
        %2321 = vmatpush1.msra.mxu0 %v2072
        %2322 = vmatprep.subr.mxu0 %v2069
        %2323 = vmatpush1.msra.mxu0 %v2068
        %2324 = vmatprep.subr.mxu0 %v2065
        %2325 = vmatpush1.msra.mxu0 %v2064
        %2326 = vmatprep.subr.mxu0 %v2061
        %2327 = vmatpush1.msra.mxu0 %v2060
        %2328 = vmatprep.subr.mxu0 %v2057
        %2329 = vmatpush1.msra.mxu0 %v2056
        %2330 = vmatprep.subr.mxu0 %v2053
        %2331 = vmatpush1.msra.mxu0 %v2052
        %2332 = vmatprep.subr.mxu0 %v2049
        %2333 = vmatpush1.msra.mxu0 %v2048
        %2334 = vmatprep.subr.mxu0 %v2045
        %2335 = vmatpush1.msra.mxu0 %v2044
        %2336 = vmatprep.subr.mxu0 %v2041
        %2337 = vmatpush1.msra.mxu0 %v2040
        %2338 = vmatprep.subr.mxu0 %v2037
        %2339 = vmatpush1.msra.mxu0 %v2036
        %2340 = vmatprep.subr.mxu0 %v2033
        %2341 = vmatpush1.msra.mxu0 %v2032
        %2342 = vmatprep.subr.mxu0 %v2157
        %2343 = vmatpush2.msra.mxu0 %v2156
        %2344 = vmatprep.subr.mxu0 %v2153
        %2345 = vmatpush2.msra.mxu0 %v2152
        %2346 = vmatprep.subr.mxu0 %v2149
        %2347 = vmatpush2.msra.mxu0 %v2148
        %2348 = vmatprep.subr.mxu0 %v2145
        %2349 = vmatpush2.msra.mxu0 %v2144
        %2350 = vmatprep.subr.mxu0 %v2141
        %2351 = vmatpush2.msra.mxu0 %v2140
        %2352 = vmatprep.subr.mxu0 %v2137
        %2353 = vmatpush2.msra.mxu0 %v2136
        %2354 = vmatprep.subr.mxu0 %v2133
        %2355 = vmatpush2.msra.mxu0 %v2132
        %2356 = vmatprep.subr.mxu0 %v2129
        %2357 = vmatpush2.msra.mxu0 %v2128
        %2358 = vmatprep.subr.mxu0 %v2125
        %2359 = vmatpush2.msra.mxu0 %v2124
        %2360 = vmatprep.subr.mxu0 %v2121
        %2361 = vmatpush2.msra.mxu0 %v2120
        %2362 = vmatprep.subr.mxu0 %v2117
        %2363 = vmatpush2.msra.mxu0 %v2116
        %2364 = vmatprep.subr.mxu0 %v2113
        %2365 = vmatpush2.msra.mxu0 %v2112
        %2366 = vmatprep.subr.mxu0 %v2109
        %2367 = vmatpush2.msra.mxu0 %v2108
        %2368 = vmatprep.subr.mxu0 %v2105
        %2369 = vmatpush2.msra.mxu0 %v2104
        %2370 = vmatprep.subr.mxu0 %v2101
        %2371 = vmatpush2.msra.mxu0 %v2100
        %2372 = vmatprep.subr.mxu0 %v2097
        %2373 = vmatpush2.msra.mxu0 %v2096
        %2374 = vmatprep.mubr.f32.mxu0 %v1901
        %2375 = vmatmul.mubr.f32.gmra.mxu0 %v1900
        %v2376 = vpop.f32.mrf.mxu0
        %v2377 = vadd.f32 %v2293, %v2376
        %v2378 = vpop.f32.mrf.mxu0
        %v2379 = vadd.f32 %v2297, %v2378
        %2380 = vdwg.mxu0
        %2381 = vmatprep.subr.mxu0 %v2221
        %2382 = vmatpush1.msra.mxu0 %v2220
        %2383 = vmatprep.subr.mxu0 %v2217
        %2384 = vmatpush1.msra.mxu0 %v2216
        %2385 = vmatprep.subr.mxu0 %v2213
        %2386 = vmatpush1.msra.mxu0 %v2212
        %2387 = vmatprep.subr.mxu0 %v2209
        %2388 = vmatpush1.msra.mxu0 %v2208
        %2389 = vmatprep.subr.mxu0 %v2205
        %2390 = vmatpush1.msra.mxu0 %v2204
        %2391 = vmatprep.subr.mxu0 %v2201
        %2392 = vmatpush1.msra.mxu0 %v2200
        %2393 = vmatprep.subr.mxu0 %v2197
        %2394 = vmatpush1.msra.mxu0 %v2196
        %2395 = vmatprep.subr.mxu0 %v2193
        %2396 = vmatpush1.msra.mxu0 %v2192
        %2397 = vmatprep.subr.mxu0 %v2189
        %2398 = vmatpush1.msra.mxu0 %v2188
        %2399 = vmatprep.subr.mxu0 %v2185
        %2400 = vmatpush1.msra.mxu0 %v2184
        %2401 = vmatprep.subr.mxu0 %v2181
        %2402 = vmatpush1.msra.mxu0 %v2180
        %2403 = vmatprep.subr.mxu0 %v2177
        %2404 = vmatpush1.msra.mxu0 %v2176
        %2405 = vmatprep.subr.mxu0 %v2173
        %2406 = vmatpush1.msra.mxu0 %v2172
        %2407 = vmatprep.subr.mxu0 %v2169
        %2408 = vmatpush1.msra.mxu0 %v2168
        %2409 = vmatprep.subr.mxu0 %v2165
        %2410 = vmatpush1.msra.mxu0 %v2164
        %2411 = vmatprep.subr.mxu0 %v2161
        %2412 = vmatpush1.msra.mxu0 %v2160
        %2413 = vmatprep.subr.mxu0 %v2285
        %2414 = vmatpush2.msra.mxu0 %v2284
        %2415 = vmatprep.subr.mxu0 %v2281
        %2416 = vmatpush2.msra.mxu0 %v2280
        %2417 = vmatprep.subr.mxu0 %v2277
        %2418 = vmatpush2.msra.mxu0 %v2276
        %2419 = vmatprep.subr.mxu0 %v2273
        %2420 = vmatpush2.msra.mxu0 %v2272
        %2421 = vmatprep.subr.mxu0 %v2269
        %2422 = vmatpush2.msra.mxu0 %v2268
        %2423 = vmatprep.subr.mxu0 %v2265
        %2424 = vmatpush2.msra.mxu0 %v2264
        %2425 = vmatprep.subr.mxu0 %v2261
        %2426 = vmatpush2.msra.mxu0 %v2260
        %2427 = vmatprep.subr.mxu0 %v2257
        %2428 = vmatpush2.msra.mxu0 %v2256
        %2429 = vmatprep.subr.mxu0 %v2253
        %2430 = vmatpush2.msra.mxu0 %v2252
        %2431 = vmatprep.subr.mxu0 %v2249
        %2432 = vmatpush2.msra.mxu0 %v2248
        %2433 = vmatprep.subr.mxu0 %v2245
        %2434 = vmatpush2.msra.mxu0 %v2244
        %2435 = vmatprep.subr.mxu0 %v2241
        %2436 = vmatpush2.msra.mxu0 %v2240
        %2437 = vmatprep.subr.mxu0 %v2237
        %2438 = vmatpush2.msra.mxu0 %v2236
        %2439 = vmatprep.subr.mxu0 %v2233
        %2440 = vmatpush2.msra.mxu0 %v2232
        %2441 = vmatprep.subr.mxu0 %v2229
        %2442 = vmatpush2.msra.mxu0 %v2228
        %2443 = vmatprep.subr.mxu0 %v2225
        %2444 = vmatpush2.msra.mxu0 %v2224
        %2445 = vmatprep.mubr.f32.mxu0 %v1903
        %2446 = vmatmul.mubr.f32.gmra.mxu0 %v1902
        %v2447 = vpop.f32.mrf.mxu0
        %v2448 = vadd.f32 %v2377, %v2447
        %v2449 = vpop.f32.mrf.mxu0
        %v2450 = vadd.f32 %v2379, %v2449
        %2451 = vdwg.mxu0
        %2452 = vmatprep.subr.mxu0 %v2095
        %2453 = vmatpush1.msra.mxu0 %v2094
        %2454 = vmatprep.subr.mxu0 %v2091
        %2455 = vmatpush1.msra.mxu0 %v2090
        %2456 = vmatprep.subr.mxu0 %v2087
        %2457 = vmatpush1.msra.mxu0 %v2086
        %2458 = vmatprep.subr.mxu0 %v2083
        %2459 = vmatpush1.msra.mxu0 %v2082
        %2460 = vmatprep.subr.mxu0 %v2079
        %2461 = vmatpush1.msra.mxu0 %v2078
        %2462 = vmatprep.subr.mxu0 %v2075
        %2463 = vmatpush1.msra.mxu0 %v2074
        %2464 = vmatprep.subr.mxu0 %v2071
        %2465 = vmatpush1.msra.mxu0 %v2070
        %2466 = vmatprep.subr.mxu0 %v2067
        %2467 = vmatpush1.msra.mxu0 %v2066
        %2468 = vmatprep.subr.mxu0 %v2063
        %2469 = vmatpush1.msra.mxu0 %v2062
        %2470 = vmatprep.subr.mxu0 %v2059
        %2471 = vmatpush1.msra.mxu0 %v2058
        %2472 = vmatprep.subr.mxu0 %v2055
        %2473 = vmatpush1.msra.mxu0 %v2054
        %2474 = vmatprep.subr.mxu0 %v2051
        %2475 = vmatpush1.msra.mxu0 %v2050
        %2476 = vmatprep.subr.mxu0 %v2047
        %2477 = vmatpush1.msra.mxu0 %v2046
        %2478 = vmatprep.subr.mxu0 %v2043
        %2479 = vmatpush1.msra.mxu0 %v2042
        %2480 = vmatprep.subr.mxu0 %v2039
        %2481 = vmatpush1.msra.mxu0 %v2038
        %2482 = vmatprep.subr.mxu0 %v2035
        %2483 = vmatpush1.msra.mxu0 %v2034
        %2484 = vmatprep.subr.mxu0 %v2159
        %2485 = vmatpush2.msra.mxu0 %v2158
        %2486 = vmatprep.subr.mxu0 %v2155
        %2487 = vmatpush2.msra.mxu0 %v2154
        %2488 = vmatprep.subr.mxu0 %v2151
        %2489 = vmatpush2.msra.mxu0 %v2150
        %2490 = vmatprep.subr.mxu0 %v2147
        %2491 = vmatpush2.msra.mxu0 %v2146
        %2492 = vmatprep.subr.mxu0 %v2143
        %2493 = vmatpush2.msra.mxu0 %v2142
        %2494 = vmatprep.subr.mxu0 %v2139
        %2495 = vmatpush2.msra.mxu0 %v2138
        %2496 = vmatprep.subr.mxu0 %v2135
        %2497 = vmatpush2.msra.mxu0 %v2134
        %2498 = vmatprep.subr.mxu0 %v2131
        %2499 = vmatpush2.msra.mxu0 %v2130
        %2500 = vmatprep.subr.mxu0 %v2127
        %2501 = vmatpush2.msra.mxu0 %v2126
        %2502 = vmatprep.subr.mxu0 %v2123
        %2503 = vmatpush2.msra.mxu0 %v2122
        %2504 = vmatprep.subr.mxu0 %v2119
        %2505 = vmatpush2.msra.mxu0 %v2118
        %2506 = vmatprep.subr.mxu0 %v2115
        %2507 = vmatpush2.msra.mxu0 %v2114
        %2508 = vmatprep.subr.mxu0 %v2111
        %2509 = vmatpush2.msra.mxu0 %v2110
        %2510 = vmatprep.subr.mxu0 %v2107
        %2511 = vmatpush2.msra.mxu0 %v2106
        %2512 = vmatprep.subr.mxu0 %v2103
        %2513 = vmatpush2.msra.mxu0 %v2102
        %2514 = vmatprep.subr.mxu0 %v2099
        %2515 = vmatpush2.msra.mxu0 %v2098
        %2516 = vmatprep.mubr.f32.mxu0 %v1901
        %2517 = vmatmul.mubr.f32.gmra.mxu0 %v1900
        %v2518 = vpop.f32.mrf.mxu0
        %v2519 = vadd.f32 %v2301, %v2518
        %v2520 = vpop.f32.mrf.mxu0
        %v2521 = vadd.f32 %v2305, %v2520
        %2522 = vdwg.mxu0
        %2523 = vmatprep.subr.mxu0 %v2223
        %2524 = vmatpush1.msra.mxu0 %v2222
        %2525 = vmatprep.subr.mxu0 %v2219
        %2526 = vmatpush1.msra.mxu0 %v2218
        %2527 = vmatprep.subr.mxu0 %v2215
        %2528 = vmatpush1.msra.mxu0 %v2214
        %2529 = vmatprep.subr.mxu0 %v2211
        %2530 = vmatpush1.msra.mxu0 %v2210
        %2531 = vmatprep.subr.mxu0 %v2207
        %2532 = vmatpush1.msra.mxu0 %v2206
        %2533 = vmatprep.subr.mxu0 %v2203
        %2534 = vmatpush1.msra.mxu0 %v2202
        %2535 = vmatprep.subr.mxu0 %v2199
        %2536 = vmatpush1.msra.mxu0 %v2198
        %2537 = vmatprep.subr.mxu0 %v2195
        %2538 = vmatpush1.msra.mxu0 %v2194
        %2539 = vmatprep.subr.mxu0 %v2191
        %2540 = vmatpush1.msra.mxu0 %v2190
        %2541 = vmatprep.subr.mxu0 %v2187
        %2542 = vmatpush1.msra.mxu0 %v2186
        %2543 = vmatprep.subr.mxu0 %v2183
        %2544 = vmatpush1.msra.mxu0 %v2182
        %2545 = vmatprep.subr.mxu0 %v2179
        %2546 = vmatpush1.msra.mxu0 %v2178
        %2547 = vmatprep.subr.mxu0 %v2175
        %2548 = vmatpush1.msra.mxu0 %v2174
        %2549 = vmatprep.subr.mxu0 %v2171
        %2550 = vmatpush1.msra.mxu0 %v2170
        %2551 = vmatprep.subr.mxu0 %v2167
        %2552 = vmatpush1.msra.mxu0 %v2166
        %2553 = vmatprep.subr.mxu0 %v2163
        %2554 = vmatpush1.msra.mxu0 %v2162
        %2555 = vmatprep.subr.mxu0 %v2287
        %2556 = vmatpush2.msra.mxu0 %v2286
        %2557 = vmatprep.subr.mxu0 %v2283
        %2558 = vmatpush2.msra.mxu0 %v2282
        %2559 = vmatprep.subr.mxu0 %v2279
        %2560 = vmatpush2.msra.mxu0 %v2278
        %2561 = vmatprep.subr.mxu0 %v2275
        %2562 = vmatpush2.msra.mxu0 %v2274
        %2563 = vmatprep.subr.mxu0 %v2271
        %2564 = vmatpush2.msra.mxu0 %v2270
        %2565 = vmatprep.subr.mxu0 %v2267
        %2566 = vmatpush2.msra.mxu0 %v2266
        %2567 = vmatprep.subr.mxu0 %v2263
        %2568 = vmatpush2.msra.mxu0 %v2262
        %2569 = vmatprep.subr.mxu0 %v2259
        %2570 = vmatpush2.msra.mxu0 %v2258
        %2571 = vmatprep.subr.mxu0 %v2255
        %2572 = vmatpush2.msra.mxu0 %v2254
        %2573 = vmatprep.subr.mxu0 %v2251
        %2574 = vmatpush2.msra.mxu0 %v2250
        %2575 = vmatprep.subr.mxu0 %v2247
        %2576 = vmatpush2.msra.mxu0 %v2246
        %2577 = vmatprep.subr.mxu0 %v2243
        %2578 = vmatpush2.msra.mxu0 %v2242
        %2579 = vmatprep.subr.mxu0 %v2239
        %2580 = vmatpush2.msra.mxu0 %v2238
        %2581 = vmatprep.subr.mxu0 %v2235
        %2582 = vmatpush2.msra.mxu0 %v2234
        %2583 = vmatprep.subr.mxu0 %v2231
        %2584 = vmatpush2.msra.mxu0 %v2230
        %2585 = vmatprep.subr.mxu0 %v2227
        %2586 = vmatpush2.msra.mxu0 %v2226
        %2587 = vmatprep.mubr.f32.mxu0 %v1903
        %2588 = vmatmul.mubr.f32.gmra.mxu0 %v1902
        %v2589 = vpop.f32.mrf.mxu0
        %v2590 = vadd.f32 %v2519, %v2589
        %v2591 = vpop.f32.mrf.mxu0
        %v2592 = vadd.f32 %v2521, %v2591
        %2593 = vdwg.mxu0
        %v2594 = vmax.f32 %v2448, 0.0
        %v2595 = vmax.f32 %v2450, 0.0
        %v2596 = vmax.f32 %v2590, 0.0
        %v2597 = vmax.f32 %v2592, 0.0
        %v2598 = vld [vmem:[%s6] sm:$0xff]
        %v2599 = vld [vmem:[%s6 + $0x8] sm:$0xff]
        %v2600 = vld [vmem:[%s6 + $0x10] sm:$0xff]
        %v2601 = vld [vmem:[%s6 + $0x18] sm:$0xff]
        %v2602 = vld [vmem:[%s6 + $0x20] sm:$0xff]
        %v2603 = vld [vmem:[%s6 + $0x28] sm:$0xff]
        %v2604 = vld [vmem:[%s6 + $0x30] sm:$0xff]
        %v2605 = vld [vmem:[%s6 + $0x38] sm:$0xff]
        %v2606 = vld [vmem:[%s6 + $0x40] sm:$0xff]
        %v2607 = vld [vmem:[%s6 + $0x48] sm:$0xff]
        %v2608 = vld [vmem:[%s6 + $0x50] sm:$0xff]
        %v2609 = vld [vmem:[%s6 + $0x58] sm:$0xff]
        %v2610 = vld [vmem:[%s6 + $0x60] sm:$0xff]
        %v2611 = vld [vmem:[%s6 + $0x68] sm:$0xff]
        %v2612 = vld [vmem:[%s6 + $0x70] sm:$0xff]
        %v2613 = vld [vmem:[%s6 + $0x78] sm:$0xff]
        %v2614 = vld [vmem:[%s6 + $0x80] sm:$0xff]
        %v2615 = vld [vmem:[%s6 + $0x88] sm:$0xff]
        %v2616 = vld [vmem:[%s6 + $0x90] sm:$0xff]
        %v2617 = vld [vmem:[%s6 + $0x98] sm:$0xff]
        %v2618 = vld [vmem:[%s6 + $0xa0] sm:$0xff]
        %v2619 = vld [vmem:[%s6 + $0xa8] sm:$0xff]
        %v2620 = vld [vmem:[%s6 + $0xb0] sm:$0xff]
        %v2621 = vld [vmem:[%s6 + $0xb8] sm:$0xff]
        %v2622 = vld [vmem:[%s6 + $0xc0] sm:$0xff]
        %v2623 = vld [vmem:[%s6 + $0xc8] sm:$0xff]
        %v2624 = vld [vmem:[%s6 + $0xd0] sm:$0xff]
        %v2625 = vld [vmem:[%s6 + $0xd8] sm:$0xff]
        %v2626 = vld [vmem:[%s6 + $0xe0] sm:$0xff]
        %v2627 = vld [vmem:[%s6 + $0xe8] sm:$0xff]
        %v2628 = vld [vmem:[%s6 + $0xf0] sm:$0xff]
        %v2629 = vld [vmem:[%s6 + $0xf8] sm:$0xff]
        %v2630 = vld [vmem:[%s6 + $0x100] sm:$0xff]
        %v2631 = vld [vmem:[%s6 + $0x108] sm:$0xff]
        %v2632 = vld [vmem:[%s6 + $0x110] sm:$0xff]
        %v2633 = vld [vmem:[%s6 + $0x118] sm:$0xff]
        %v2634 = vld [vmem:[%s6 + $0x120] sm:$0xff]
        %v2635 = vld [vmem:[%s6 + $0x128] sm:$0xff]
        %v2636 = vld [vmem:[%s6 + $0x130] sm:$0xff]
        %v2637 = vld [vmem:[%s6 + $0x138] sm:$0xff]
        %v2638 = vld [vmem:[%s6 + $0x140] sm:$0xff]
        %v2639 = vld [vmem:[%s6 + $0x148] sm:$0xff]
        %v2640 = vld [vmem:[%s6 + $0x150] sm:$0xff]
        %v2641 = vld [vmem:[%s6 + $0x158] sm:$0xff]
        %v2642 = vld [vmem:[%s6 + $0x160] sm:$0xff]
        %v2643 = vld [vmem:[%s6 + $0x168] sm:$0xff]
        %v2644 = vld [vmem:[%s6 + $0x170] sm:$0xff]
        %v2645 = vld [vmem:[%s6 + $0x178] sm:$0xff]
        %v2646 = vld [vmem:[%s6 + $0x180] sm:$0xff]
        %v2647 = vld [vmem:[%s6 + $0x188] sm:$0xff]
        %v2648 = vld [vmem:[%s6 + $0x190] sm:$0xff]
        %v2649 = vld [vmem:[%s6 + $0x198] sm:$0xff]
        %v2650 = vld [vmem:[%s6 + $0x1a0] sm:$0xff]
        %v2651 = vld [vmem:[%s6 + $0x1a8] sm:$0xff]
        %v2652 = vld [vmem:[%s6 + $0x1b0] sm:$0xff]
        %v2653 = vld [vmem:[%s6 + $0x1b8] sm:$0xff]
        %v2654 = vld [vmem:[%s6 + $0x1c0] sm:$0xff]
        %v2655 = vld [vmem:[%s6 + $0x1c8] sm:$0xff]
        %v2656 = vld [vmem:[%s6 + $0x1d0] sm:$0xff]
        %v2657 = vld [vmem:[%s6 + $0x1d8] sm:$0xff]
        %v2658 = vld [vmem:[%s6 + $0x1e0] sm:$0xff]
        %v2659 = vld [vmem:[%s6 + $0x1e8] sm:$0xff]
        %v2660 = vld [vmem:[%s6 + $0x1f0] sm:$0xff]
        %v2661 = vld [vmem:[%s6 + $0x1f8] sm:$0xff]
        %v2662 = vld [vmem:[%s6 + $0x200] sm:$0xff]
        %v2663 = vld [vmem:[%s6 + $0x208] sm:$0xff]
        %v2664 = vld [vmem:[%s6 + $0x210] sm:$0xff]
        %v2665 = vld [vmem:[%s6 + $0x218] sm:$0xff]
        %v2666 = vld [vmem:[%s6 + $0x220] sm:$0xff]
        %v2667 = vld [vmem:[%s6 + $0x228] sm:$0xff]
        %v2668 = vld [vmem:[%s6 + $0x230] sm:$0xff]
        %v2669 = vld [vmem:[%s6 + $0x238] sm:$0xff]
        %v2670 = vld [vmem:[%s6 + $0x240] sm:$0xff]
        %v2671 = vld [vmem:[%s6 + $0x248] sm:$0xff]
        %v2672 = vld [vmem:[%s6 + $0x250] sm:$0xff]
        %v2673 = vld [vmem:[%s6 + $0x258] sm:$0xff]
        %v2674 = vld [vmem:[%s6 + $0x260] sm:$0xff]
        %v2675 = vld [vmem:[%s6 + $0x268] sm:$0xff]
        %v2676 = vld [vmem:[%s6 + $0x270] sm:$0xff]
        %v2677 = vld [vmem:[%s6 + $0x278] sm:$0xff]
        %v2678 = vld [vmem:[%s6 + $0x280] sm:$0xff]
        %v2679 = vld [vmem:[%s6 + $0x288] sm:$0xff]
        %v2680 = vld [vmem:[%s6 + $0x290] sm:$0xff]
        %v2681 = vld [vmem:[%s6 + $0x298] sm:$0xff]
        %v2682 = vld [vmem:[%s6 + $0x2a0] sm:$0xff]
        %v2683 = vld [vmem:[%s6 + $0x2a8] sm:$0xff]
        %v2684 = vld [vmem:[%s6 + $0x2b0] sm:$0xff]
        %v2685 = vld [vmem:[%s6 + $0x2b8] sm:$0xff]
        %v2686 = vld [vmem:[%s6 + $0x2c0] sm:$0xff]
        %v2687 = vld [vmem:[%s6 + $0x2c8] sm:$0xff]
        %v2688 = vld [vmem:[%s6 + $0x2d0] sm:$0xff]
        %v2689 = vld [vmem:[%s6 + $0x2d8] sm:$0xff]
        %v2690 = vld [vmem:[%s6 + $0x2e0] sm:$0xff]
        %v2691 = vld [vmem:[%s6 + $0x2e8] sm:$0xff]
        %v2692 = vld [vmem:[%s6 + $0x2f0] sm:$0xff]
        %v2693 = vld [vmem:[%s6 + $0x2f8] sm:$0xff]
        %v2694 = vld [vmem:[%s6 + $0x300] sm:$0xff]
        %v2695 = vld [vmem:[%s6 + $0x308] sm:$0xff]
        %v2696 = vld [vmem:[%s6 + $0x310] sm:$0xff]
        %v2697 = vld [vmem:[%s6 + $0x318] sm:$0xff]
        %v2698 = vld [vmem:[%s6 + $0x320] sm:$0xff]
        %v2699 = vld [vmem:[%s6 + $0x328] sm:$0xff]
        %v2700 = vld [vmem:[%s6 + $0x330] sm:$0xff]
        %v2701 = vld [vmem:[%s6 + $0x338] sm:$0xff]
        %v2702 = vld [vmem:[%s6 + $0x340] sm:$0xff]
        %v2703 = vld [vmem:[%s6 + $0x348] sm:$0xff]
        %v2704 = vld [vmem:[%s6 + $0x350] sm:$0xff]
        %v2705 = vld [vmem:[%s6 + $0x358] sm:$0xff]
        %v2706 = vld [vmem:[%s6 + $0x360] sm:$0xff]
        %v2707 = vld [vmem:[%s6 + $0x368] sm:$0xff]
        %v2708 = vld [vmem:[%s6 + $0x370] sm:$0xff]
        %v2709 = vld [vmem:[%s6 + $0x378] sm:$0xff]
        %v2710 = vld [vmem:[%s6 + $0x380] sm:$0xff]
        %v2711 = vld [vmem:[%s6 + $0x388] sm:$0xff]
        %v2712 = vld [vmem:[%s6 + $0x390] sm:$0xff]
        %v2713 = vld [vmem:[%s6 + $0x398] sm:$0xff]
        %v2714 = vld [vmem:[%s6 + $0x3a0] sm:$0xff]
        %v2715 = vld [vmem:[%s6 + $0x3a8] sm:$0xff]
        %v2716 = vld [vmem:[%s6 + $0x3b0] sm:$0xff]
        %v2717 = vld [vmem:[%s6 + $0x3b8] sm:$0xff]
        %v2718 = vld [vmem:[%s6 + $0x3c0] sm:$0xff]
        %v2719 = vld [vmem:[%s6 + $0x3c8] sm:$0xff]
        %v2720 = vld [vmem:[%s6 + $0x3d0] sm:$0xff]
        %v2721 = vld [vmem:[%s6 + $0x3d8] sm:$0xff]
        %v2722 = vld [vmem:[%s6 + $0x3e0] sm:$0xff]
        %v2723 = vld [vmem:[%s6 + $0x3e8] sm:$0xff]
        %v2724 = vld [vmem:[%s6 + $0x3f0] sm:$0xff]
        %v2725 = vld [vmem:[%s6 + $0x3f8] sm:$0xff]
        %v2726 = vunpack.c.l.bf16 %v2598
        %v2727 = vunpack.c.h.bf16 %v2598
        %v2728 = vunpack.c.l.bf16 %v2599
        %v2729 = vunpack.c.h.bf16 %v2599
        %v2730 = vunpack.c.l.bf16 %v2600
        %v2731 = vunpack.c.h.bf16 %v2600
        %v2732 = vunpack.c.l.bf16 %v2601
        %v2733 = vunpack.c.h.bf16 %v2601
        %v2734 = vunpack.c.l.bf16 %v2602
        %v2735 = vunpack.c.h.bf16 %v2602
        %v2736 = vunpack.c.l.bf16 %v2603
        %v2737 = vunpack.c.h.bf16 %v2603
        %v2738 = vunpack.c.l.bf16 %v2604
        %v2739 = vunpack.c.h.bf16 %v2604
        %v2740 = vunpack.c.l.bf16 %v2605
        %v2741 = vunpack.c.h.bf16 %v2605
        %v2742 = vunpack.c.l.bf16 %v2606
        %v2743 = vunpack.c.h.bf16 %v2606
        %v2744 = vunpack.c.l.bf16 %v2607
        %v2745 = vunpack.c.h.bf16 %v2607
        %v2746 = vunpack.c.l.bf16 %v2608
        %v2747 = vunpack.c.h.bf16 %v2608
        %v2748 = vunpack.c.l.bf16 %v2609
        %v2749 = vunpack.c.h.bf16 %v2609
        %v2750 = vunpack.c.l.bf16 %v2610
        %v2751 = vunpack.c.h.bf16 %v2610
        %v2752 = vunpack.c.l.bf16 %v2611
        %v2753 = vunpack.c.h.bf16 %v2611
        %v2754 = vunpack.c.l.bf16 %v2612
        %v2755 = vunpack.c.h.bf16 %v2612
        %v2756 = vunpack.c.l.bf16 %v2613
        %v2757 = vunpack.c.h.bf16 %v2613
        %v2758 = vunpack.c.l.bf16 %v2614
        %v2759 = vunpack.c.h.bf16 %v2614
        %v2760 = vunpack.c.l.bf16 %v2615
        %v2761 = vunpack.c.h.bf16 %v2615
        %v2762 = vunpack.c.l.bf16 %v2616
        %v2763 = vunpack.c.h.bf16 %v2616
        %v2764 = vunpack.c.l.bf16 %v2617
        %v2765 = vunpack.c.h.bf16 %v2617
        %v2766 = vunpack.c.l.bf16 %v2618
        %v2767 = vunpack.c.h.bf16 %v2618
        %v2768 = vunpack.c.l.bf16 %v2619
        %v2769 = vunpack.c.h.bf16 %v2619
        %v2770 = vunpack.c.l.bf16 %v2620
        %v2771 = vunpack.c.h.bf16 %v2620
        %v2772 = vunpack.c.l.bf16 %v2621
        %v2773 = vunpack.c.h.bf16 %v2621
        %v2774 = vunpack.c.l.bf16 %v2622
        %v2775 = vunpack.c.h.bf16 %v2622
        %v2776 = vunpack.c.l.bf16 %v2623
        %v2777 = vunpack.c.h.bf16 %v2623
        %v2778 = vunpack.c.l.bf16 %v2624
        %v2779 = vunpack.c.h.bf16 %v2624
        %v2780 = vunpack.c.l.bf16 %v2625
        %v2781 = vunpack.c.h.bf16 %v2625
        %v2782 = vunpack.c.l.bf16 %v2626
        %v2783 = vunpack.c.h.bf16 %v2626
        %v2784 = vunpack.c.l.bf16 %v2627
        %v2785 = vunpack.c.h.bf16 %v2627
        %v2786 = vunpack.c.l.bf16 %v2628
        %v2787 = vunpack.c.h.bf16 %v2628
        %v2788 = vunpack.c.l.bf16 %v2629
        %v2789 = vunpack.c.h.bf16 %v2629
        %v2790 = vunpack.c.l.bf16 %v2630
        %v2791 = vunpack.c.h.bf16 %v2630
        %v2792 = vunpack.c.l.bf16 %v2631
        %v2793 = vunpack.c.h.bf16 %v2631
        %v2794 = vunpack.c.l.bf16 %v2632
        %v2795 = vunpack.c.h.bf16 %v2632
        %v2796 = vunpack.c.l.bf16 %v2633
        %v2797 = vunpack.c.h.bf16 %v2633
        %v2798 = vunpack.c.l.bf16 %v2634
        %v2799 = vunpack.c.h.bf16 %v2634
        %v2800 = vunpack.c.l.bf16 %v2635
        %v2801 = vunpack.c.h.bf16 %v2635
        %v2802 = vunpack.c.l.bf16 %v2636
        %v2803 = vunpack.c.h.bf16 %v2636
        %v2804 = vunpack.c.l.bf16 %v2637
        %v2805 = vunpack.c.h.bf16 %v2637
        %v2806 = vunpack.c.l.bf16 %v2638
        %v2807 = vunpack.c.h.bf16 %v2638
        %v2808 = vunpack.c.l.bf16 %v2639
        %v2809 = vunpack.c.h.bf16 %v2639
        %v2810 = vunpack.c.l.bf16 %v2640
        %v2811 = vunpack.c.h.bf16 %v2640
        %v2812 = vunpack.c.l.bf16 %v2641
        %v2813 = vunpack.c.h.bf16 %v2641
        %v2814 = vunpack.c.l.bf16 %v2642
        %v2815 = vunpack.c.h.bf16 %v2642
        %v2816 = vunpack.c.l.bf16 %v2643
        %v2817 = vunpack.c.h.bf16 %v2643
        %v2818 = vunpack.c.l.bf16 %v2644
        %v2819 = vunpack.c.h.bf16 %v2644
        %v2820 = vunpack.c.l.bf16 %v2645
        %v2821 = vunpack.c.h.bf16 %v2645
        %v2822 = vunpack.c.l.bf16 %v2646
        %v2823 = vunpack.c.h.bf16 %v2646
        %v2824 = vunpack.c.l.bf16 %v2647
        %v2825 = vunpack.c.h.bf16 %v2647
        %v2826 = vunpack.c.l.bf16 %v2648
        %v2827 = vunpack.c.h.bf16 %v2648
        %v2828 = vunpack.c.l.bf16 %v2649
        %v2829 = vunpack.c.h.bf16 %v2649
        %v2830 = vunpack.c.l.bf16 %v2650
        %v2831 = vunpack.c.h.bf16 %v2650
        %v2832 = vunpack.c.l.bf16 %v2651
        %v2833 = vunpack.c.h.bf16 %v2651
        %v2834 = vunpack.c.l.bf16 %v2652
        %v2835 = vunpack.c.h.bf16 %v2652
        %v2836 = vunpack.c.l.bf16 %v2653
        %v2837 = vunpack.c.h.bf16 %v2653
        %v2838 = vunpack.c.l.bf16 %v2654
        %v2839 = vunpack.c.h.bf16 %v2654
        %v2840 = vunpack.c.l.bf16 %v2655
        %v2841 = vunpack.c.h.bf16 %v2655
        %v2842 = vunpack.c.l.bf16 %v2656
        %v2843 = vunpack.c.h.bf16 %v2656
        %v2844 = vunpack.c.l.bf16 %v2657
        %v2845 = vunpack.c.h.bf16 %v2657
        %v2846 = vunpack.c.l.bf16 %v2658
        %v2847 = vunpack.c.h.bf16 %v2658
        %v2848 = vunpack.c.l.bf16 %v2659
        %v2849 = vunpack.c.h.bf16 %v2659
        %v2850 = vunpack.c.l.bf16 %v2660
        %v2851 = vunpack.c.h.bf16 %v2660
        %v2852 = vunpack.c.l.bf16 %v2661
        %v2853 = vunpack.c.h.bf16 %v2661
        %v2854 = vunpack.c.l.bf16 %v2662
        %v2855 = vunpack.c.h.bf16 %v2662
        %v2856 = vunpack.c.l.bf16 %v2663
        %v2857 = vunpack.c.h.bf16 %v2663
        %v2858 = vunpack.c.l.bf16 %v2664
        %v2859 = vunpack.c.h.bf16 %v2664
        %v2860 = vunpack.c.l.bf16 %v2665
        %v2861 = vunpack.c.h.bf16 %v2665
        %v2862 = vunpack.c.l.bf16 %v2666
        %v2863 = vunpack.c.h.bf16 %v2666
        %v2864 = vunpack.c.l.bf16 %v2667
        %v2865 = vunpack.c.h.bf16 %v2667
        %v2866 = vunpack.c.l.bf16 %v2668
        %v2867 = vunpack.c.h.bf16 %v2668
        %v2868 = vunpack.c.l.bf16 %v2669
        %v2869 = vunpack.c.h.bf16 %v2669
        %v2870 = vunpack.c.l.bf16 %v2670
        %v2871 = vunpack.c.h.bf16 %v2670
        %v2872 = vunpack.c.l.bf16 %v2671
        %v2873 = vunpack.c.h.bf16 %v2671
        %v2874 = vunpack.c.l.bf16 %v2672
        %v2875 = vunpack.c.h.bf16 %v2672
        %v2876 = vunpack.c.l.bf16 %v2673
        %v2877 = vunpack.c.h.bf16 %v2673
        %v2878 = vunpack.c.l.bf16 %v2674
        %v2879 = vunpack.c.h.bf16 %v2674
        %v2880 = vunpack.c.l.bf16 %v2675
        %v2881 = vunpack.c.h.bf16 %v2675
        %v2882 = vunpack.c.l.bf16 %v2676
        %v2883 = vunpack.c.h.bf16 %v2676
        %v2884 = vunpack.c.l.bf16 %v2677
        %v2885 = vunpack.c.h.bf16 %v2677
        %v2886 = vunpack.c.l.bf16 %v2678
        %v2887 = vunpack.c.h.bf16 %v2678
        %v2888 = vunpack.c.l.bf16 %v2679
        %v2889 = vunpack.c.h.bf16 %v2679
        %v2890 = vunpack.c.l.bf16 %v2680
        %v2891 = vunpack.c.h.bf16 %v2680
        %v2892 = vunpack.c.l.bf16 %v2681
        %v2893 = vunpack.c.h.bf16 %v2681
        %v2894 = vunpack.c.l.bf16 %v2682
        %v2895 = vunpack.c.h.bf16 %v2682
        %v2896 = vunpack.c.l.bf16 %v2683
        %v2897 = vunpack.c.h.bf16 %v2683
        %v2898 = vunpack.c.l.bf16 %v2684
        %v2899 = vunpack.c.h.bf16 %v2684
        %v2900 = vunpack.c.l.bf16 %v2685
        %v2901 = vunpack.c.h.bf16 %v2685
        %v2902 = vunpack.c.l.bf16 %v2686
        %v2903 = vunpack.c.h.bf16 %v2686
        %v2904 = vunpack.c.l.bf16 %v2687
        %v2905 = vunpack.c.h.bf16 %v2687
        %v2906 = vunpack.c.l.bf16 %v2688
        %v2907 = vunpack.c.h.bf16 %v2688
        %v2908 = vunpack.c.l.bf16 %v2689
        %v2909 = vunpack.c.h.bf16 %v2689
        %v2910 = vunpack.c.l.bf16 %v2690
        %v2911 = vunpack.c.h.bf16 %v2690
        %v2912 = vunpack.c.l.bf16 %v2691
        %v2913 = vunpack.c.h.bf16 %v2691
        %v2914 = vunpack.c.l.bf16 %v2692
        %v2915 = vunpack.c.h.bf16 %v2692
        %v2916 = vunpack.c.l.bf16 %v2693
        %v2917 = vunpack.c.h.bf16 %v2693
        %v2918 = vunpack.c.l.bf16 %v2694
        %v2919 = vunpack.c.h.bf16 %v2694
        %v2920 = vunpack.c.l.bf16 %v2695
        %v2921 = vunpack.c.h.bf16 %v2695
        %v2922 = vunpack.c.l.bf16 %v2696
        %v2923 = vunpack.c.h.bf16 %v2696
        %v2924 = vunpack.c.l.bf16 %v2697
        %v2925 = vunpack.c.h.bf16 %v2697
        %v2926 = vunpack.c.l.bf16 %v2698
        %v2927 = vunpack.c.h.bf16 %v2698
        %v2928 = vunpack.c.l.bf16 %v2699
        %v2929 = vunpack.c.h.bf16 %v2699
        %v2930 = vunpack.c.l.bf16 %v2700
        %v2931 = vunpack.c.h.bf16 %v2700
        %v2932 = vunpack.c.l.bf16 %v2701
        %v2933 = vunpack.c.h.bf16 %v2701
        %v2934 = vunpack.c.l.bf16 %v2702
        %v2935 = vunpack.c.h.bf16 %v2702
        %v2936 = vunpack.c.l.bf16 %v2703
        %v2937 = vunpack.c.h.bf16 %v2703
        %v2938 = vunpack.c.l.bf16 %v2704
        %v2939 = vunpack.c.h.bf16 %v2704
        %v2940 = vunpack.c.l.bf16 %v2705
        %v2941 = vunpack.c.h.bf16 %v2705
        %v2942 = vunpack.c.l.bf16 %v2706
        %v2943 = vunpack.c.h.bf16 %v2706
        %v2944 = vunpack.c.l.bf16 %v2707
        %v2945 = vunpack.c.h.bf16 %v2707
        %v2946 = vunpack.c.l.bf16 %v2708
        %v2947 = vunpack.c.h.bf16 %v2708
        %v2948 = vunpack.c.l.bf16 %v2709
        %v2949 = vunpack.c.h.bf16 %v2709
        %v2950 = vunpack.c.l.bf16 %v2710
        %v2951 = vunpack.c.h.bf16 %v2710
        %v2952 = vunpack.c.l.bf16 %v2711
        %v2953 = vunpack.c.h.bf16 %v2711
        %v2954 = vunpack.c.l.bf16 %v2712
        %v2955 = vunpack.c.h.bf16 %v2712
        %v2956 = vunpack.c.l.bf16 %v2713
        %v2957 = vunpack.c.h.bf16 %v2713
        %v2958 = vunpack.c.l.bf16 %v2714
        %v2959 = vunpack.c.h.bf16 %v2714
        %v2960 = vunpack.c.l.bf16 %v2715
        %v2961 = vunpack.c.h.bf16 %v2715
        %v2962 = vunpack.c.l.bf16 %v2716
        %v2963 = vunpack.c.h.bf16 %v2716
        %v2964 = vunpack.c.l.bf16 %v2717
        %v2965 = vunpack.c.h.bf16 %v2717
        %v2966 = vunpack.c.l.bf16 %v2718
        %v2967 = vunpack.c.h.bf16 %v2718
        %v2968 = vunpack.c.l.bf16 %v2719
        %v2969 = vunpack.c.h.bf16 %v2719
        %v2970 = vunpack.c.l.bf16 %v2720
        %v2971 = vunpack.c.h.bf16 %v2720
        %v2972 = vunpack.c.l.bf16 %v2721
        %v2973 = vunpack.c.h.bf16 %v2721
        %v2974 = vunpack.c.l.bf16 %v2722
        %v2975 = vunpack.c.h.bf16 %v2722
        %v2976 = vunpack.c.l.bf16 %v2723
        %v2977 = vunpack.c.h.bf16 %v2723
        %v2978 = vunpack.c.l.bf16 %v2724
        %v2979 = vunpack.c.h.bf16 %v2724
        %v2980 = vunpack.c.l.bf16 %v2725
        %v2981 = vunpack.c.h.bf16 %v2725
        %v2982 = vld [vmem:[%s7] sm:$0xf]
        %v2984 = vlaneseq
        %v2985 = vshrl.u32 %v2984, 7
        %v2986 = vsub.s32 0, %v2985
        %v2987 = vrot.slane %v2982, %v2986
        %v2988 = vlaneseq
        %v2989 = vshrl.u32 %v2988, 7
        %v2990 = vsub.s32 1, %v2989
        %v2991 = vrot.slane %v2982, %v2990
        %v2992 = vlaneseq
        %v2993 = vshrl.u32 %v2992, 7
        %v2994 = vsub.s32 2, %v2993
        %v2995 = vrot.slane %v2982, %v2994
        %v2996 = vlaneseq
        %v2997 = vshrl.u32 %v2996, 7
        %v2998 = vsub.s32 3, %v2997
        %v2999 = vrot.slane %v2982, %v2998
        %3004 = vmatprep.subr.mxu0 %v2787
        %3005 = vmatpush1.msra.mxu0 %v2786
        %3006 = vmatprep.subr.mxu0 %v2783
        %3007 = vmatpush1.msra.mxu0 %v2782
        %3008 = vmatprep.subr.mxu0 %v2779
        %3009 = vmatpush1.msra.mxu0 %v2778
        %3010 = vmatprep.subr.mxu0 %v2775
        %3011 = vmatpush1.msra.mxu0 %v2774
        %3012 = vmatprep.subr.mxu0 %v2771
        %3013 = vmatpush1.msra.mxu0 %v2770
        %3014 = vmatprep.subr.mxu0 %v2767
        %3015 = vmatpush1.msra.mxu0 %v2766
        %3016 = vmatprep.subr.mxu0 %v2763
        %3017 = vmatpush1.msra.mxu0 %v2762
        %3018 = vmatprep.subr.mxu0 %v2759
        %3019 = vmatpush1.msra.mxu0 %v2758
        %3020 = vmatprep.subr.mxu0 %v2755
        %3021 = vmatpush1.msra.mxu0 %v2754
        %3022 = vmatprep.subr.mxu0 %v2751
        %3023 = vmatpush1.msra.mxu0 %v2750
        %3024 = vmatprep.subr.mxu0 %v2747
        %3025 = vmatpush1.msra.mxu0 %v2746
        %3026 = vmatprep.subr.mxu0 %v2743
        %3027 = vmatpush1.msra.mxu0 %v2742
        %3028 = vmatprep.subr.mxu0 %v2739
        %3029 = vmatpush1.msra.mxu0 %v2738
        %3030 = vmatprep.subr.mxu0 %v2735
        %3031 = vmatpush1.msra.mxu0 %v2734
        %3032 = vmatprep.subr.mxu0 %v2731
        %3033 = vmatpush1.msra.mxu0 %v2730
        %3034 = vmatprep.subr.mxu0 %v2727
        %3035 = vmatpush1.msra.mxu0 %v2726
        %3036 = vmatprep.subr.mxu0 %v2851
        %3037 = vmatpush2.msra.mxu0 %v2850
        %3038 = vmatprep.subr.mxu0 %v2847
        %3039 = vmatpush2.msra.mxu0 %v2846
        %3040 = vmatprep.subr.mxu0 %v2843
        %3041 = vmatpush2.msra.mxu0 %v2842
        %3042 = vmatprep.subr.mxu0 %v2839
        %3043 = vmatpush2.msra.mxu0 %v2838
        %3044 = vmatprep.subr.mxu0 %v2835
        %3045 = vmatpush2.msra.mxu0 %v2834
        %3046 = vmatprep.subr.mxu0 %v2831
        %3047 = vmatpush2.msra.mxu0 %v2830
        %3048 = vmatprep.subr.mxu0 %v2827
        %3049 = vmatpush2.msra.mxu0 %v2826
        %3050 = vmatprep.subr.mxu0 %v2823
        %3051 = vmatpush2.msra.mxu0 %v2822
        %3052 = vmatprep.subr.mxu0 %v2819
        %3053 = vmatpush2.msra.mxu0 %v2818
        %3054 = vmatprep.subr.mxu0 %v2815
        %3055 = vmatpush2.msra.mxu0 %v2814
        %3056 = vmatprep.subr.mxu0 %v2811
        %3057 = vmatpush2.msra.mxu0 %v2810
        %3058 = vmatprep.subr.mxu0 %v2807
        %3059 = vmatpush2.msra.mxu0 %v2806
        %3060 = vmatprep.subr.mxu0 %v2803
        %3061 = vmatpush2.msra.mxu0 %v2802
        %3062 = vmatprep.subr.mxu0 %v2799
        %3063 = vmatpush2.msra.mxu0 %v2798
        %3064 = vmatprep.subr.mxu0 %v2795
        %3065 = vmatpush2.msra.mxu0 %v2794
        %3066 = vmatprep.subr.mxu0 %v2791
        %3067 = vmatpush2.msra.mxu0 %v2790
        %3068 = vmatprep.mubr.f32.mxu0 %v2595
        %3069 = vmatmul.mubr.f32.gmra.mxu0 %v2594
        %v3070 = vpop.f32.mrf.mxu0
        %v3071 = vadd.f32 %v2987, %v3070
        %v3072 = vpop.f32.mrf.mxu0
        %v3073 = vadd.f32 %v2991, %v3072
        %3074 = vdwg.mxu0
        %3075 = vmatprep.subr.mxu0 %v2915
        %3076 = vmatpush1.msra.mxu0 %v2914
        %3077 = vmatprep.subr.mxu0 %v2911
        %3078 = vmatpush1.msra.mxu0 %v2910
        %3079 = vmatprep.subr.mxu0 %v2907
        %3080 = vmatpush1.msra.mxu0 %v2906
        %3081 = vmatprep.subr.mxu0 %v2903
        %3082 = vmatpush1.msra.mxu0 %v2902
        %3083 = vmatprep.subr.mxu0 %v2899
        %3084 = vmatpush1.msra.mxu0 %v2898
        %3085 = vmatprep.subr.mxu0 %v2895
        %3086 = vmatpush1.msra.mxu0 %v2894
        %3087 = vmatprep.subr.mxu0 %v2891
        %3088 = vmatpush1.msra.mxu0 %v2890
        %3089 = vmatprep.subr.mxu0 %v2887
        %3090 = vmatpush1.msra.mxu0 %v2886
        %3091 = vmatprep.subr.mxu0 %v2883
        %3092 = vmatpush1.msra.mxu0 %v2882
        %3093 = vmatprep.subr.mxu0 %v2879
        %3094 = vmatpush1.msra.mxu0 %v2878
        %3095 = vmatprep.subr.mxu0 %v2875
        %3096 = vmatpush1.msra.mxu0 %v2874
        %3097 = vmatprep.subr.mxu0 %v2871
        %3098 = vmatpush1.msra.mxu0 %v2870
        %3099 = vmatprep.subr.mxu0 %v2867
        %3100 = vmatpush1.msra.mxu0 %v2866
        %3101 = vmatprep.subr.mxu0 %v2863
        %3102 = vmatpush1.msra.mxu0 %v2862
        %3103 = vmatprep.subr.mxu0 %v2859
        %3104 = vmatpush1.msra.mxu0 %v2858
        %3105 = vmatprep.subr.mxu0 %v2855
        %3106 = vmatpush1.msra.mxu0 %v2854
        %3107 = vmatprep.subr.mxu0 %v2979
        %3108 = vmatpush2.msra.mxu0 %v2978
        %3109 = vmatprep.subr.mxu0 %v2975
        %3110 = vmatpush2.msra.mxu0 %v2974
        %3111 = vmatprep.subr.mxu0 %v2971
        %3112 = vmatpush2.msra.mxu0 %v2970
        %3113 = vmatprep.subr.mxu0 %v2967
        %3114 = vmatpush2.msra.mxu0 %v2966
        %3115 = vmatprep.subr.mxu0 %v2963
        %3116 = vmatpush2.msra.mxu0 %v2962
        %3117 = vmatprep.subr.mxu0 %v2959
        %3118 = vmatpush2.msra.mxu0 %v2958
        %3119 = vmatprep.subr.mxu0 %v2955
        %3120 = vmatpush2.msra.mxu0 %v2954
        %3121 = vmatprep.subr.mxu0 %v2951
        %3122 = vmatpush2.msra.mxu0 %v2950
        %3123 = vmatprep.subr.mxu0 %v2947
        %3124 = vmatpush2.msra.mxu0 %v2946
        %3125 = vmatprep.subr.mxu0 %v2943
        %3126 = vmatpush2.msra.mxu0 %v2942
        %3127 = vmatprep.subr.mxu0 %v2939
        %3128 = vmatpush2.msra.mxu0 %v2938
        %3129 = vmatprep.subr.mxu0 %v2935
        %3130 = vmatpush2.msra.mxu0 %v2934
        %3131 = vmatprep.subr.mxu0 %v2931
        %3132 = vmatpush2.msra.mxu0 %v2930
        %3133 = vmatprep.subr.mxu0 %v2927
        %3134 = vmatpush2.msra.mxu0 %v2926
        %3135 = vmatprep.subr.mxu0 %v2923
        %3136 = vmatpush2.msra.mxu0 %v2922
        %3137 = vmatprep.subr.mxu0 %v2919
        %3138 = vmatpush2.msra.mxu0 %v2918
        %3139 = vmatprep.mubr.f32.mxu0 %v2597
        %3140 = vmatmul.mubr.f32.gmra.mxu0 %v2596
        %v3141 = vpop.f32.mrf.mxu0
        %v3142 = vadd.f32 %v3071, %v3141
        %v3143 = vpop.f32.mrf.mxu0
        %v3144 = vadd.f32 %v3073, %v3143
        %3145 = vdwg.mxu0
        %3146 = vmatprep.subr.mxu0 %v2789
        %3147 = vmatpush1.msra.mxu0 %v2788
        %3148 = vmatprep.subr.mxu0 %v2785
        %3149 = vmatpush1.msra.mxu0 %v2784
        %3150 = vmatprep.subr.mxu0 %v2781
        %3151 = vmatpush1.msra.mxu0 %v2780
        %3152 = vmatprep.subr.mxu0 %v2777
        %3153 = vmatpush1.msra.mxu0 %v2776
        %3154 = vmatprep.subr.mxu0 %v2773
        %3155 = vmatpush1.msra.mxu0 %v2772
        %3156 = vmatprep.subr.mxu0 %v2769
        %3157 = vmatpush1.msra.mxu0 %v2768
        %3158 = vmatprep.subr.mxu0 %v2765
        %3159 = vmatpush1.msra.mxu0 %v2764
        %3160 = vmatprep.subr.mxu0 %v2761
        %3161 = vmatpush1.msra.mxu0 %v2760
        %3162 = vmatprep.subr.mxu0 %v2757
        %3163 = vmatpush1.msra.mxu0 %v2756
        %3164 = vmatprep.subr.mxu0 %v2753
        %3165 = vmatpush1.msra.mxu0 %v2752
        %3166 = vmatprep.subr.mxu0 %v2749
        %3167 = vmatpush1.msra.mxu0 %v2748
        %3168 = vmatprep.subr.mxu0 %v2745
        %3169 = vmatpush1.msra.mxu0 %v2744
        %3170 = vmatprep.subr.mxu0 %v2741
        %3171 = vmatpush1.msra.mxu0 %v2740
        %3172 = vmatprep.subr.mxu0 %v2737
        %3173 = vmatpush1.msra.mxu0 %v2736
        %3174 = vmatprep.subr.mxu0 %v2733
        %3175 = vmatpush1.msra.mxu0 %v2732
        %3176 = vmatprep.subr.mxu0 %v2729
        %3177 = vmatpush1.msra.mxu0 %v2728
        %3178 = vmatprep.subr.mxu0 %v2853
        %3179 = vmatpush2.msra.mxu0 %v2852
        %3180 = vmatprep.subr.mxu0 %v2849
        %3181 = vmatpush2.msra.mxu0 %v2848
        %3182 = vmatprep.subr.mxu0 %v2845
        %3183 = vmatpush2.msra.mxu0 %v2844
        %3184 = vmatprep.subr.mxu0 %v2841
        %3185 = vmatpush2.msra.mxu0 %v2840
        %3186 = vmatprep.subr.mxu0 %v2837
        %3187 = vmatpush2.msra.mxu0 %v2836
        %3188 = vmatprep.subr.mxu0 %v2833
        %3189 = vmatpush2.msra.mxu0 %v2832
        %3190 = vmatprep.subr.mxu0 %v2829
        %3191 = vmatpush2.msra.mxu0 %v2828
        %3192 = vmatprep.subr.mxu0 %v2825
        %3193 = vmatpush2.msra.mxu0 %v2824
        %3194 = vmatprep.subr.mxu0 %v2821
        %3195 = vmatpush2.msra.mxu0 %v2820
        %3196 = vmatprep.subr.mxu0 %v2817
        %3197 = vmatpush2.msra.mxu0 %v2816
        %3198 = vmatprep.subr.mxu0 %v2813
        %3199 = vmatpush2.msra.mxu0 %v2812
        %3200 = vmatprep.subr.mxu0 %v2809
        %3201 = vmatpush2.msra.mxu0 %v2808
        %3202 = vmatprep.subr.mxu0 %v2805
        %3203 = vmatpush2.msra.mxu0 %v2804
        %3204 = vmatprep.subr.mxu0 %v2801
        %3205 = vmatpush2.msra.mxu0 %v2800
        %3206 = vmatprep.subr.mxu0 %v2797
        %3207 = vmatpush2.msra.mxu0 %v2796
        %3208 = vmatprep.subr.mxu0 %v2793
        %3209 = vmatpush2.msra.mxu0 %v2792
        %3210 = vmatprep.mubr.f32.mxu0 %v2595
        %3211 = vmatmul.mubr.f32.gmra.mxu0 %v2594
        %v3212 = vpop.f32.mrf.mxu0
        %v3213 = vadd.f32 %v2995, %v3212
        %v3214 = vpop.f32.mrf.mxu0
        %v3215 = vadd.f32 %v2999, %v3214
        %3216 = vdwg.mxu0
        %3217 = vmatprep.subr.mxu0 %v2917
        %3218 = vmatpush1.msra.mxu0 %v2916
        %3219 = vmatprep.subr.mxu0 %v2913
        %3220 = vmatpush1.msra.mxu0 %v2912
        %3221 = vmatprep.subr.mxu0 %v2909
        %3222 = vmatpush1.msra.mxu0 %v2908
        %3223 = vmatprep.subr.mxu0 %v2905
        %3224 = vmatpush1.msra.mxu0 %v2904
        %3225 = vmatprep.subr.mxu0 %v2901
        %3226 = vmatpush1.msra.mxu0 %v2900
        %3227 = vmatprep.subr.mxu0 %v2897
        %3228 = vmatpush1.msra.mxu0 %v2896
        %3229 = vmatprep.subr.mxu0 %v2893
        %3230 = vmatpush1.msra.mxu0 %v2892
        %3231 = vmatprep.subr.mxu0 %v2889
        %3232 = vmatpush1.msra.mxu0 %v2888
        %3233 = vmatprep.subr.mxu0 %v2885
        %3234 = vmatpush1.msra.mxu0 %v2884
        %3235 = vmatprep.subr.mxu0 %v2881
        %3236 = vmatpush1.msra.mxu0 %v2880
        %3237 = vmatprep.subr.mxu0 %v2877
        %3238 = vmatpush1.msra.mxu0 %v2876
        %3239 = vmatprep.subr.mxu0 %v2873
        %3240 = vmatpush1.msra.mxu0 %v2872
        %3241 = vmatprep.subr.mxu0 %v2869
        %3242 = vmatpush1.msra.mxu0 %v2868
        %3243 = vmatprep.subr.mxu0 %v2865
        %3244 = vmatpush1.msra.mxu0 %v2864
        %3245 = vmatprep.subr.mxu0 %v2861
        %3246 = vmatpush1.msra.mxu0 %v2860
        %3247 = vmatprep.subr.mxu0 %v2857
        %3248 = vmatpush1.msra.mxu0 %v2856
        %3249 = vmatprep.subr.mxu0 %v2981
        %3250 = vmatpush2.msra.mxu0 %v2980
        %3251 = vmatprep.subr.mxu0 %v2977
        %3252 = vmatpush2.msra.mxu0 %v2976
        %3253 = vmatprep.subr.mxu0 %v2973
        %3254 = vmatpush2.msra.mxu0 %v2972
        %3255 = vmatprep.subr.mxu0 %v2969
        %3256 = vmatpush2.msra.mxu0 %v2968
        %3257 = vmatprep.subr.mxu0 %v2965
        %3258 = vmatpush2.msra.mxu0 %v2964
        %3259 = vmatprep.subr.mxu0 %v2961
        %3260 = vmatpush2.msra.mxu0 %v2960
        %3261 = vmatprep.subr.mxu0 %v2957
        %3262 = vmatpush2.msra.mxu0 %v2956
        %3263 = vmatprep.subr.mxu0 %v2953
        %3264 = vmatpush2.msra.mxu0 %v2952
        %3265 = vmatprep.subr.mxu0 %v2949
        %3266 = vmatpush2.msra.mxu0 %v2948
        %3267 = vmatprep.subr.mxu0 %v2945
        %3268 = vmatpush2.msra.mxu0 %v2944
        %3269 = vmatprep.subr.mxu0 %v2941
        %3270 = vmatpush2.msra.mxu0 %v2940
        %3271 = vmatprep.subr.mxu0 %v2937
        %3272 = vmatpush2.msra.mxu0 %v2936
        %3273 = vmatprep.subr.mxu0 %v2933
        %3274 = vmatpush2.msra.mxu0 %v2932
        %3275 = vmatprep.subr.mxu0 %v2929
        %3276 = vmatpush2.msra.mxu0 %v2928
        %3277 = vmatprep.subr.mxu0 %v2925
        %3278 = vmatpush2.msra.mxu0 %v2924
        %3279 = vmatprep.subr.mxu0 %v2921
        %3280 = vmatpush2.msra.mxu0 %v2920
        %3281 = vmatprep.mubr.f32.mxu0 %v2597
        %3282 = vmatmul.mubr.f32.gmra.mxu0 %v2596
        %v3283 = vpop.f32.mrf.mxu0
        %v3284 = vadd.f32 %v3213, %v3283
        %v3285 = vpop.f32.mrf.mxu0
        %v3286 = vadd.f32 %v3215, %v3285
        %3287 = vdwg.mxu0
        %v3288 = vadd.f32 %v3142, %v1900
        %v3289 = vadd.f32 %v3144, %v1901
        %v3290 = vadd.f32 %v3284, %v1902
        %v3291 = vadd.f32 %v3286, %v1903
        %v3292 = vmax.f32 %v3288, 0.0
        %v3293 = vmax.f32 %v3289, 0.0
        %v3294 = vmax.f32 %v3290, 0.0
        %v3295 = vmax.f32 %v3291, 0.0
        %v3296 = vld [vmem:[%s8] sm:$0xff]
        %v3297 = vld [vmem:[%s8 + $0x8] sm:$0xff]
        %v3298 = vld [vmem:[%s8 + $0x10] sm:$0xff]
        %v3299 = vld [vmem:[%s8 + $0x18] sm:$0xff]
        %v3300 = vld [vmem:[%s8 + $0x20] sm:$0xff]
        %v3301 = vld [vmem:[%s8 + $0x28] sm:$0xff]
        %v3302 = vld [vmem:[%s8 + $0x30] sm:$0xff]
        %v3303 = vld [vmem:[%s8 + $0x38] sm:$0xff]
        %v3304 = vld [vmem:[%s8 + $0x40] sm:$0xff]
        %v3305 = vld [vmem:[%s8 + $0x48] sm:$0xff]
        %v3306 = vld [vmem:[%s8 + $0x50] sm:$0xff]
        %v3307 = vld [vmem:[%s8 + $0x58] sm:$0xff]
        %v3308 = vld [vmem:[%s8 + $0x60] sm:$0xff]
        %v3309 = vld [vmem:[%s8 + $0x68] sm:$0xff]
        %v3310 = vld [vmem:[%s8 + $0x70] sm:$0xff]
        %v3311 = vld [vmem:[%s8 + $0x78] sm:$0xff]
        %v3312 = vld [vmem:[%s8 + $0x80] sm:$0xff]
        %v3313 = vld [vmem:[%s8 + $0x88] sm:$0xff]
        %v3314 = vld [vmem:[%s8 + $0x90] sm:$0xff]
        %v3315 = vld [vmem:[%s8 + $0x98] sm:$0xff]
        %v3316 = vld [vmem:[%s8 + $0xa0] sm:$0xff]
        %v3317 = vld [vmem:[%s8 + $0xa8] sm:$0xff]
        %v3318 = vld [vmem:[%s8 + $0xb0] sm:$0xff]
        %v3319 = vld [vmem:[%s8 + $0xb8] sm:$0xff]
        %v3320 = vld [vmem:[%s8 + $0xc0] sm:$0xff]
        %v3321 = vld [vmem:[%s8 + $0xc8] sm:$0xff]
        %v3322 = vld [vmem:[%s8 + $0xd0] sm:$0xff]
        %v3323 = vld [vmem:[%s8 + $0xd8] sm:$0xff]
        %v3324 = vld [vmem:[%s8 + $0xe0] sm:$0xff]
        %v3325 = vld [vmem:[%s8 + $0xe8] sm:$0xff]
        %v3326 = vld [vmem:[%s8 + $0xf0] sm:$0xff]
        %v3327 = vld [vmem:[%s8 + $0xf8] sm:$0xff]
        %v3328 = vld [vmem:[%s8 + $0x100] sm:$0xff]
        %v3329 = vld [vmem:[%s8 + $0x108] sm:$0xff]
        %v3330 = vld [vmem:[%s8 + $0x110] sm:$0xff]
        %v3331 = vld [vmem:[%s8 + $0x118] sm:$0xff]
        %v3332 = vld [vmem:[%s8 + $0x120] sm:$0xff]
        %v3333 = vld [vmem:[%s8 + $0x128] sm:$0xff]
        %v3334 = vld [vmem:[%s8 + $0x130] sm:$0xff]
        %v3335 = vld [vmem:[%s8 + $0x138] sm:$0xff]
        %v3336 = vld [vmem:[%s8 + $0x140] sm:$0xff]
        %v3337 = vld [vmem:[%s8 + $0x148] sm:$0xff]
        %v3338 = vld [vmem:[%s8 + $0x150] sm:$0xff]
        %v3339 = vld [vmem:[%s8 + $0x158] sm:$0xff]
        %v3340 = vld [vmem:[%s8 + $0x160] sm:$0xff]
        %v3341 = vld [vmem:[%s8 + $0x168] sm:$0xff]
        %v3342 = vld [vmem:[%s8 + $0x170] sm:$0xff]
        %v3343 = vld [vmem:[%s8 + $0x178] sm:$0xff]
        %v3344 = vld [vmem:[%s8 + $0x180] sm:$0xff]
        %v3345 = vld [vmem:[%s8 + $0x188] sm:$0xff]
        %v3346 = vld [vmem:[%s8 + $0x190] sm:$0xff]
        %v3347 = vld [vmem:[%s8 + $0x198] sm:$0xff]
        %v3348 = vld [vmem:[%s8 + $0x1a0] sm:$0xff]
        %v3349 = vld [vmem:[%s8 + $0x1a8] sm:$0xff]
        %v3350 = vld [vmem:[%s8 + $0x1b0] sm:$0xff]
        %v3351 = vld [vmem:[%s8 + $0x1b8] sm:$0xff]
        %v3352 = vld [vmem:[%s8 + $0x1c0] sm:$0xff]
        %v3353 = vld [vmem:[%s8 + $0x1c8] sm:$0xff]
        %v3354 = vld [vmem:[%s8 + $0x1d0] sm:$0xff]
        %v3355 = vld [vmem:[%s8 + $0x1d8] sm:$0xff]
        %v3356 = vld [vmem:[%s8 + $0x1e0] sm:$0xff]
        %v3357 = vld [vmem:[%s8 + $0x1e8] sm:$0xff]
        %v3358 = vld [vmem:[%s8 + $0x1f0] sm:$0xff]
        %v3359 = vld [vmem:[%s8 + $0x1f8] sm:$0xff]
        %v3360 = vunpack.c.l.bf16 %v3296
        %v3361 = vunpack.c.h.bf16 %v3296
        %v3362 = vunpack.c.l.bf16 %v3297
        %v3363 = vunpack.c.h.bf16 %v3297
        %v3364 = vunpack.c.l.bf16 %v3298
        %v3365 = vunpack.c.h.bf16 %v3298
        %v3366 = vunpack.c.l.bf16 %v3299
        %v3367 = vunpack.c.h.bf16 %v3299
        %v3368 = vunpack.c.l.bf16 %v3300
        %v3369 = vunpack.c.h.bf16 %v3300
        %v3370 = vunpack.c.l.bf16 %v3301
        %v3371 = vunpack.c.h.bf16 %v3301
        %v3372 = vunpack.c.l.bf16 %v3302
        %v3373 = vunpack.c.h.bf16 %v3302
        %v3374 = vunpack.c.l.bf16 %v3303
        %v3375 = vunpack.c.h.bf16 %v3303
        %v3376 = vunpack.c.l.bf16 %v3304
        %v3377 = vunpack.c.h.bf16 %v3304
        %v3378 = vunpack.c.l.bf16 %v3305
        %v3379 = vunpack.c.h.bf16 %v3305
        %v3380 = vunpack.c.l.bf16 %v3306
        %v3381 = vunpack.c.h.bf16 %v3306
        %v3382 = vunpack.c.l.bf16 %v3307
        %v3383 = vunpack.c.h.bf16 %v3307
        %v3384 = vunpack.c.l.bf16 %v3308
        %v3385 = vunpack.c.h.bf16 %v3308
        %v3386 = vunpack.c.l.bf16 %v3309
        %v3387 = vunpack.c.h.bf16 %v3309
        %v3388 = vunpack.c.l.bf16 %v3310
        %v3389 = vunpack.c.h.bf16 %v3310
        %v3390 = vunpack.c.l.bf16 %v3311
        %v3391 = vunpack.c.h.bf16 %v3311
        %v3392 = vunpack.c.l.bf16 %v3312
        %v3393 = vunpack.c.h.bf16 %v3312
        %v3394 = vunpack.c.l.bf16 %v3313
        %v3395 = vunpack.c.h.bf16 %v3313
        %v3396 = vunpack.c.l.bf16 %v3314
        %v3397 = vunpack.c.h.bf16 %v3314
        %v3398 = vunpack.c.l.bf16 %v3315
        %v3399 = vunpack.c.h.bf16 %v3315
        %v3400 = vunpack.c.l.bf16 %v3316
        %v3401 = vunpack.c.h.bf16 %v3316
        %v3402 = vunpack.c.l.bf16 %v3317
        %v3403 = vunpack.c.h.bf16 %v3317
        %v3404 = vunpack.c.l.bf16 %v3318
        %v3405 = vunpack.c.h.bf16 %v3318
        %v3406 = vunpack.c.l.bf16 %v3319
        %v3407 = vunpack.c.h.bf16 %v3319
        %v3408 = vunpack.c.l.bf16 %v3320
        %v3409 = vunpack.c.h.bf16 %v3320
        %v3410 = vunpack.c.l.bf16 %v3321
        %v3411 = vunpack.c.h.bf16 %v3321
        %v3412 = vunpack.c.l.bf16 %v3322
        %v3413 = vunpack.c.h.bf16 %v3322
        %v3414 = vunpack.c.l.bf16 %v3323
        %v3415 = vunpack.c.h.bf16 %v3323
        %v3416 = vunpack.c.l.bf16 %v3324
        %v3417 = vunpack.c.h.bf16 %v3324
        %v3418 = vunpack.c.l.bf16 %v3325
        %v3419 = vunpack.c.h.bf16 %v3325
        %v3420 = vunpack.c.l.bf16 %v3326
        %v3421 = vunpack.c.h.bf16 %v3326
        %v3422 = vunpack.c.l.bf16 %v3327
        %v3423 = vunpack.c.h.bf16 %v3327
        %v3424 = vunpack.c.l.bf16 %v3328
        %v3425 = vunpack.c.h.bf16 %v3328
        %v3426 = vunpack.c.l.bf16 %v3329
        %v3427 = vunpack.c.h.bf16 %v3329
        %v3428 = vunpack.c.l.bf16 %v3330
        %v3429 = vunpack.c.h.bf16 %v3330
        %v3430 = vunpack.c.l.bf16 %v3331
        %v3431 = vunpack.c.h.bf16 %v3331
        %v3432 = vunpack.c.l.bf16 %v3332
        %v3433 = vunpack.c.h.bf16 %v3332
        %v3434 = vunpack.c.l.bf16 %v3333
        %v3435 = vunpack.c.h.bf16 %v3333
        %v3436 = vunpack.c.l.bf16 %v3334
        %v3437 = vunpack.c.h.bf16 %v3334
        %v3438 = vunpack.c.l.bf16 %v3335
        %v3439 = vunpack.c.h.bf16 %v3335
        %v3440 = vunpack.c.l.bf16 %v3336
        %v3441 = vunpack.c.h.bf16 %v3336
        %v3442 = vunpack.c.l.bf16 %v3337
        %v3443 = vunpack.c.h.bf16 %v3337
        %v3444 = vunpack.c.l.bf16 %v3338
        %v3445 = vunpack.c.h.bf16 %v3338
        %v3446 = vunpack.c.l.bf16 %v3339
        %v3447 = vunpack.c.h.bf16 %v3339
        %v3448 = vunpack.c.l.bf16 %v3340
        %v3449 = vunpack.c.h.bf16 %v3340
        %v3450 = vunpack.c.l.bf16 %v3341
        %v3451 = vunpack.c.h.bf16 %v3341
        %v3452 = vunpack.c.l.bf16 %v3342
        %v3453 = vunpack.c.h.bf16 %v3342
        %v3454 = vunpack.c.l.bf16 %v3343
        %v3455 = vunpack.c.h.bf16 %v3343
        %v3456 = vunpack.c.l.bf16 %v3344
        %v3457 = vunpack.c.h.bf16 %v3344
        %v3458 = vunpack.c.l.bf16 %v3345
        %v3459 = vunpack.c.h.bf16 %v3345
        %v3460 = vunpack.c.l.bf16 %v3346
        %v3461 = vunpack.c.h.bf16 %v3346
        %v3462 = vunpack.c.l.bf16 %v3347
        %v3463 = vunpack.c.h.bf16 %v3347
        %v3464 = vunpack.c.l.bf16 %v3348
        %v3465 = vunpack.c.h.bf16 %v3348
        %v3466 = vunpack.c.l.bf16 %v3349
        %v3467 = vunpack.c.h.bf16 %v3349
        %v3468 = vunpack.c.l.bf16 %v3350
        %v3469 = vunpack.c.h.bf16 %v3350
        %v3470 = vunpack.c.l.bf16 %v3351
        %v3471 = vunpack.c.h.bf16 %v3351
        %v3472 = vunpack.c.l.bf16 %v3352
        %v3473 = vunpack.c.h.bf16 %v3352
        %v3474 = vunpack.c.l.bf16 %v3353
        %v3475 = vunpack.c.h.bf16 %v3353
        %v3476 = vunpack.c.l.bf16 %v3354
        %v3477 = vunpack.c.h.bf16 %v3354
        %v3478 = vunpack.c.l.bf16 %v3355
        %v3479 = vunpack.c.h.bf16 %v3355
        %v3480 = vunpack.c.l.bf16 %v3356
        %v3481 = vunpack.c.h.bf16 %v3356
        %v3482 = vunpack.c.l.bf16 %v3357
        %v3483 = vunpack.c.h.bf16 %v3357
        %v3484 = vunpack.c.l.bf16 %v3358
        %v3485 = vunpack.c.h.bf16 %v3358
        %v3486 = vunpack.c.l.bf16 %v3359
        %v3487 = vunpack.c.h.bf16 %v3359
        %v3488 = vld [vmem:[%s9] sm:$0x3]
        %v3490 = vlaneseq
        %v3491 = vshrl.u32 %v3490, 7
        %v3492 = vsub.s32 0, %v3491
        %v3493 = vrot.slane %v3488, %v3492
        %v3494 = vlaneseq
        %v3495 = vshrl.u32 %v3494, 7
        %v3496 = vsub.s32 1, %v3495
        %v3497 = vrot.slane %v3488, %v3496
        %3500 = vmatprep.subr.mxu0 %v3391
        %3501 = vmatpush1.msra.mxu0 %v3390
        %3502 = vmatprep.subr.mxu0 %v3389
        %3503 = vmatpush1.msra.mxu0 %v3388
        %3504 = vmatprep.subr.mxu0 %v3387
        %3505 = vmatpush1.msra.mxu0 %v3386
        %3506 = vmatprep.subr.mxu0 %v3385
        %3507 = vmatpush1.msra.mxu0 %v3384
        %3508 = vmatprep.subr.mxu0 %v3383
        %3509 = vmatpush1.msra.mxu0 %v3382
        %3510 = vmatprep.subr.mxu0 %v3381
        %3511 = vmatpush1.msra.mxu0 %v3380
        %3512 = vmatprep.subr.mxu0 %v3379
        %3513 = vmatpush1.msra.mxu0 %v3378
        %3514 = vmatprep.subr.mxu0 %v3377
        %3515 = vmatpush1.msra.mxu0 %v3376
        %3516 = vmatprep.subr.mxu0 %v3375
        %3517 = vmatpush1.msra.mxu0 %v3374
        %3518 = vmatprep.subr.mxu0 %v3373
        %3519 = vmatpush1.msra.mxu0 %v3372
        %3520 = vmatprep.subr.mxu0 %v3371
        %3521 = vmatpush1.msra.mxu0 %v3370
        %3522 = vmatprep.subr.mxu0 %v3369
        %3523 = vmatpush1.msra.mxu0 %v3368
        %3524 = vmatprep.subr.mxu0 %v3367
        %3525 = vmatpush1.msra.mxu0 %v3366
        %3526 = vmatprep.subr.mxu0 %v3365
        %3527 = vmatpush1.msra.mxu0 %v3364
        %3528 = vmatprep.subr.mxu0 %v3363
        %3529 = vmatpush1.msra.mxu0 %v3362
        %3530 = vmatprep.subr.mxu0 %v3361
        %3531 = vmatpush1.msra.mxu0 %v3360
        %3532 = vmatprep.subr.mxu0 %v3423
        %3533 = vmatpush2.msra.mxu0 %v3422
        %3534 = vmatprep.subr.mxu0 %v3421
        %3535 = vmatpush2.msra.mxu0 %v3420
        %3536 = vmatprep.subr.mxu0 %v3419
        %3537 = vmatpush2.msra.mxu0 %v3418
        %3538 = vmatprep.subr.mxu0 %v3417
        %3539 = vmatpush2.msra.mxu0 %v3416
        %3540 = vmatprep.subr.mxu0 %v3415
        %3541 = vmatpush2.msra.mxu0 %v3414
        %3542 = vmatprep.subr.mxu0 %v3413
        %3543 = vmatpush2.msra.mxu0 %v3412
        %3544 = vmatprep.subr.mxu0 %v3411
        %3545 = vmatpush2.msra.mxu0 %v3410
        %3546 = vmatprep.subr.mxu0 %v3409
        %3547 = vmatpush2.msra.mxu0 %v3408
        %3548 = vmatprep.subr.mxu0 %v3407
        %3549 = vmatpush2.msra.mxu0 %v3406
        %3550 = vmatprep.subr.mxu0 %v3405
        %3551 = vmatpush2.msra.mxu0 %v3404
        %3552 = vmatprep.subr.mxu0 %v3403
        %3553 = vmatpush2.msra.mxu0 %v3402
        %3554 = vmatprep.subr.mxu0 %v3401
        %3555 = vmatpush2.msra.mxu0 %v3400
        %3556 = vmatprep.subr.mxu0 %v3399
        %3557 = vmatpush2.msra.mxu0 %v3398
        %3558 = vmatprep.subr.mxu0 %v3397
        %3559 = vmatpush2.msra.mxu0 %v3396
        %3560 = vmatprep.subr.mxu0 %v3395
        %3561 = vmatpush2.msra.mxu0 %v3394
        %3562 = vmatprep.subr.mxu0 %v3393
        %3563 = vmatpush2.msra.mxu0 %v3392
        %3564 = vmatprep.mubr.f32.mxu0 %v3293
        %3565 = vmatmul.mubr.f32.gmra.mxu0 %v3292
        %v3566 = vpop.f32.mrf.mxu0
        %v3567 = vadd.f32 %v3493, %v3566
        %v3568 = vpop.f32.mrf.mxu0
        %v3569 = vadd.f32 %v3497, %v3568
        %3570 = vdwg.mxu0
        %3571 = vmatprep.subr.mxu0 %v3455
        %3572 = vmatpush1.msra.mxu0 %v3454
        %3573 = vmatprep.subr.mxu0 %v3453
        %3574 = vmatpush1.msra.mxu0 %v3452
        %3575 = vmatprep.subr.mxu0 %v3451
        %3576 = vmatpush1.msra.mxu0 %v3450
        %3577 = vmatprep.subr.mxu0 %v3449
        %3578 = vmatpush1.msra.mxu0 %v3448
        %3579 = vmatprep.subr.mxu0 %v3447
        %3580 = vmatpush1.msra.mxu0 %v3446
        %3581 = vmatprep.subr.mxu0 %v3445
        %3582 = vmatpush1.msra.mxu0 %v3444
        %3583 = vmatprep.subr.mxu0 %v3443
        %3584 = vmatpush1.msra.mxu0 %v3442
        %3585 = vmatprep.subr.mxu0 %v3441
        %3586 = vmatpush1.msra.mxu0 %v3440
        %3587 = vmatprep.subr.mxu0 %v3439
        %3588 = vmatpush1.msra.mxu0 %v3438
        %3589 = vmatprep.subr.mxu0 %v3437
        %3590 = vmatpush1.msra.mxu0 %v3436
        %3591 = vmatprep.subr.mxu0 %v3435
        %3592 = vmatpush1.msra.mxu0 %v3434
        %3593 = vmatprep.subr.mxu0 %v3433
        %3594 = vmatpush1.msra.mxu0 %v3432
        %3595 = vmatprep.subr.mxu0 %v3431
        %3596 = vmatpush1.msra.mxu0 %v3430
        %3597 = vmatprep.subr.mxu0 %v3429
        %3598 = vmatpush1.msra.mxu0 %v3428
        %3599 = vmatprep.subr.mxu0 %v3427
        %3600 = vmatpush1.msra.mxu0 %v3426
        %3601 = vmatprep.subr.mxu0 %v3425
        %3602 = vmatpush1.msra.mxu0 %v3424
        %3603 = vmatprep.subr.mxu0 %v3487
        %3604 = vmatpush2.msra.mxu0 %v3486
        %3605 = vmatprep.subr.mxu0 %v3485
        %3606 = vmatpush2.msra.mxu0 %v3484
        %3607 = vmatprep.subr.mxu0 %v3483
        %3608 = vmatpush2.msra.mxu0 %v3482
        %3609 = vmatprep.subr.mxu0 %v3481
        %3610 = vmatpush2.msra.mxu0 %v3480
        %3611 = vmatprep.subr.mxu0 %v3479
        %3612 = vmatpush2.msra.mxu0 %v3478
        %3613 = vmatprep.subr.mxu0 %v3477
        %3614 = vmatpush2.msra.mxu0 %v3476
        %3615 = vmatprep.subr.mxu0 %v3475
        %3616 = vmatpush2.msra.mxu0 %v3474
        %3617 = vmatprep.subr.mxu0 %v3473
        %3618 = vmatpush2.msra.mxu0 %v3472
        %3619 = vmatprep.subr.mxu0 %v3471
        %3620 = vmatpush2.msra.mxu0 %v3470
        %3621 = vmatprep.subr.mxu0 %v3469
        %3622 = vmatpush2.msra.mxu0 %v3468
        %3623 = vmatprep.subr.mxu0 %v3467
        %3624 = vmatpush2.msra.mxu0 %v3466
        %3625 = vmatprep.subr.mxu0 %v3465
        %3626 = vmatpush2.msra.mxu0 %v3464
        %3627 = vmatprep.subr.mxu0 %v3463
        %3628 = vmatpush2.msra.mxu0 %v3462
        %3629 = vmatprep.subr.mxu0 %v3461
        %3630 = vmatpush2.msra.mxu0 %v3460
        %3631 = vmatprep.subr.mxu0 %v3459
        %3632 = vmatpush2.msra.mxu0 %v3458
        %3633 = vmatprep.subr.mxu0 %v3457
        %3634 = vmatpush2.msra.mxu0 %v3456
        %3635 = vmatprep.mubr.f32.mxu0 %v3295
        %3636 = vmatmul.mubr.f32.gmra.mxu0 %v3294
        %v3637 = vpop.f32.mrf.mxu0
        %v3638 = vadd.f32 %v3567, %v3637
        %v3639 = vpop.f32.mrf.mxu0
        %v3640 = vadd.f32 %v3569, %v3639
        %3641 = vdwg.mxu0
        %v3642 = vmul.f32 %v3640, 0.5
        %v3643 = vmul.f32 %v3642, 1.442695
        %v3644 = vpow.pop %v3643
        %v3645 = vld [vmem:[%s625] sm:$0xff]
        %v3646 = vmul.f32 %v3645, %v3644
        %v3647 = vadd.f32 %v3638, %v3646
        %v3648 = vld [vmem:[%s10] sm:$0xff]
        %v3649 = vld [vmem:[%s10 + $0x8] sm:$0xff]
        %v3650 = vld [vmem:[%s10 + $0x10] sm:$0xff]
        %v3651 = vld [vmem:[%s10 + $0x18] sm:$0xff]
        %v3652 = vld [vmem:[%s10 + $0x20] sm:$0xff]
        %v3653 = vld [vmem:[%s10 + $0x28] sm:$0xff]
        %v3654 = vld [vmem:[%s10 + $0x30] sm:$0xff]
        %v3655 = vld [vmem:[%s10 + $0x38] sm:$0xff]
        %v3656 = vld [vmem:[%s10 + $0x40] sm:$0xff]
        %v3657 = vld [vmem:[%s10 + $0x48] sm:$0xff]
        %v3658 = vld [vmem:[%s10 + $0x50] sm:$0xff]
        %v3659 = vld [vmem:[%s10 + $0x58] sm:$0xff]
        %v3660 = vld [vmem:[%s10 + $0x60] sm:$0xff]
        %v3661 = vld [vmem:[%s10 + $0x68] sm:$0xff]
        %v3662 = vld [vmem:[%s10 + $0x70] sm:$0xff]
        %v3663 = vld [vmem:[%s10 + $0x78] sm:$0xff]
        %v3664 = vld [vmem:[%s10 + $0x80] sm:$0xff]
        %v3665 = vld [vmem:[%s10 + $0x88] sm:$0xff]
        %v3666 = vld [vmem:[%s10 + $0x90] sm:$0xff]
        %v3667 = vld [vmem:[%s10 + $0x98] sm:$0xff]
        %v3668 = vld [vmem:[%s10 + $0xa0] sm:$0xff]
        %v3669 = vld [vmem:[%s10 + $0xa8] sm:$0xff]
        %v3670 = vld [vmem:[%s10 + $0xb0] sm:$0xff]
        %v3671 = vld [vmem:[%s10 + $0xb8] sm:$0xff]
        %v3672 = vld [vmem:[%s10 + $0xc0] sm:$0xff]
        %v3673 = vld [vmem:[%s10 + $0xc8] sm:$0xff]
        %v3674 = vld [vmem:[%s10 + $0xd0] sm:$0xff]
        %v3675 = vld [vmem:[%s10 + $0xd8] sm:$0xff]
        %v3676 = vld [vmem:[%s10 + $0xe0] sm:$0xff]
        %v3677 = vld [vmem:[%s10 + $0xe8] sm:$0xff]
        %v3678 = vld [vmem:[%s10 + $0xf0] sm:$0xff]
        %v3679 = vld [vmem:[%s10 + $0xf8] sm:$0xff]
        %v3680 = vunpack.c.l.bf16 %v3648
        %v3681 = vunpack.c.h.bf16 %v3648
        %v3682 = vunpack.c.l.bf16 %v3649
        %v3683 = vunpack.c.h.bf16 %v3649
        %v3684 = vunpack.c.l.bf16 %v3650
        %v3685 = vunpack.c.h.bf16 %v3650
        %v3686 = vunpack.c.l.bf16 %v3651
        %v3687 = vunpack.c.h.bf16 %v3651
        %v3688 = vunpack.c.l.bf16 %v3652
        %v3689 = vunpack.c.h.bf16 %v3652
        %v3690 = vunpack.c.l.bf16 %v3653
        %v3691 = vunpack.c.h.bf16 %v3653
        %v3692 = vunpack.c.l.bf16 %v3654
        %v3693 = vunpack.c.h.bf16 %v3654
        %v3694 = vunpack.c.l.bf16 %v3655
        %v3695 = vunpack.c.h.bf16 %v3655
        %v3696 = vunpack.c.l.bf16 %v3656
        %v3697 = vunpack.c.h.bf16 %v3656
        %v3698 = vunpack.c.l.bf16 %v3657
        %v3699 = vunpack.c.h.bf16 %v3657
        %v3700 = vunpack.c.l.bf16 %v3658
        %v3701 = vunpack.c.h.bf16 %v3658
        %v3702 = vunpack.c.l.bf16 %v3659
        %v3703 = vunpack.c.h.bf16 %v3659
        %v3704 = vunpack.c.l.bf16 %v3660
        %v3705 = vunpack.c.h.bf16 %v3660
        %v3706 = vunpack.c.l.bf16 %v3661
        %v3707 = vunpack.c.h.bf16 %v3661
        %v3708 = vunpack.c.l.bf16 %v3662
        %v3709 = vunpack.c.h.bf16 %v3662
        %v3710 = vunpack.c.l.bf16 %v3663
        %v3711 = vunpack.c.h.bf16 %v3663
        %v3712 = vunpack.c.l.bf16 %v3664
        %v3713 = vunpack.c.h.bf16 %v3664
        %v3714 = vunpack.c.l.bf16 %v3665
        %v3715 = vunpack.c.h.bf16 %v3665
        %v3716 = vunpack.c.l.bf16 %v3666
        %v3717 = vunpack.c.h.bf16 %v3666
        %v3718 = vunpack.c.l.bf16 %v3667
        %v3719 = vunpack.c.h.bf16 %v3667
        %v3720 = vunpack.c.l.bf16 %v3668
        %v3721 = vunpack.c.h.bf16 %v3668
        %v3722 = vunpack.c.l.bf16 %v3669
        %v3723 = vunpack.c.h.bf16 %v3669
        %v3724 = vunpack.c.l.bf16 %v3670
        %v3725 = vunpack.c.h.bf16 %v3670
        %v3726 = vunpack.c.l.bf16 %v3671
        %v3727 = vunpack.c.h.bf16 %v3671
        %v3728 = vunpack.c.l.bf16 %v3672
        %v3729 = vunpack.c.h.bf16 %v3672
        %v3730 = vunpack.c.l.bf16 %v3673
        %v3731 = vunpack.c.h.bf16 %v3673
        %v3732 = vunpack.c.l.bf16 %v3674
        %v3733 = vunpack.c.h.bf16 %v3674
        %v3734 = vunpack.c.l.bf16 %v3675
        %v3735 = vunpack.c.h.bf16 %v3675
        %v3736 = vunpack.c.l.bf16 %v3676
        %v3737 = vunpack.c.h.bf16 %v3676
        %v3738 = vunpack.c.l.bf16 %v3677
        %v3739 = vunpack.c.h.bf16 %v3677
        %v3740 = vunpack.c.l.bf16 %v3678
        %v3741 = vunpack.c.h.bf16 %v3678
        %v3742 = vunpack.c.l.bf16 %v3679
        %v3743 = vunpack.c.h.bf16 %v3679
        %v3744 = vld [vmem:[%s11] sm:$0xf]
        %v3746 = vlaneseq
        %v3747 = vshrl.u32 %v3746, 7
        %v3748 = vsub.s32 0, %v3747
        %v3749 = vrot.slane %v3744, %v3748
        %v3750 = vlaneseq
        %v3751 = vshrl.u32 %v3750, 7
        %v3752 = vsub.s32 1, %v3751
        %v3753 = vrot.slane %v3744, %v3752
        %v3754 = vlaneseq
        %v3755 = vshrl.u32 %v3754, 7
        %v3756 = vsub.s32 2, %v3755
        %v3757 = vrot.slane %v3744, %v3756
        %v3758 = vlaneseq
        %v3759 = vshrl.u32 %v3758, 7
        %v3760 = vsub.s32 3, %v3759
        %v3761 = vrot.slane %v3744, %v3760
        %3766 = vmatprep.subr.mxu0 %v3741
        %3767 = vmatpush1.msra.mxu0 %v3740
        %3768 = vmatprep.subr.mxu0 %v3737
        %3769 = vmatpush1.msra.mxu0 %v3736
        %3770 = vmatprep.subr.mxu0 %v3733
        %3771 = vmatpush1.msra.mxu0 %v3732
        %3772 = vmatprep.subr.mxu0 %v3729
        %3773 = vmatpush1.msra.mxu0 %v3728
        %3774 = vmatprep.subr.mxu0 %v3725
        %3775 = vmatpush1.msra.mxu0 %v3724
        %3776 = vmatprep.subr.mxu0 %v3721
        %3777 = vmatpush1.msra.mxu0 %v3720
        %3778 = vmatprep.subr.mxu0 %v3717
        %3779 = vmatpush1.msra.mxu0 %v3716
        %3780 = vmatprep.subr.mxu0 %v3713
        %3781 = vmatpush1.msra.mxu0 %v3712
        %3782 = vmatprep.subr.mxu0 %v3709
        %3783 = vmatpush1.msra.mxu0 %v3708
        %3784 = vmatprep.subr.mxu0 %v3705
        %3785 = vmatpush1.msra.mxu0 %v3704
        %3786 = vmatprep.subr.mxu0 %v3701
        %3787 = vmatpush1.msra.mxu0 %v3700
        %3788 = vmatprep.subr.mxu0 %v3697
        %3789 = vmatpush1.msra.mxu0 %v3696
        %3790 = vmatprep.subr.mxu0 %v3693
        %3791 = vmatpush1.msra.mxu0 %v3692
        %3792 = vmatprep.subr.mxu0 %v3689
        %3793 = vmatpush1.msra.mxu0 %v3688
        %3794 = vmatprep.subr.mxu0 %v3685
        %3795 = vmatpush1.msra.mxu0 %v3684
        %3796 = vmatprep.subr.mxu0 %v3681
        %3797 = vmatpush1.msra.mxu0 %v3680
        %3798 = vmatprep.subr.mxu0 0.0
        %3799 = vmatpush2.msra.mxu0 0.0
        %3800 = vmatprep.subr.mxu0 0.0
        %3801 = vmatpush2.msra.mxu0 0.0
        %3802 = vmatprep.subr.mxu0 0.0
        %3803 = vmatpush2.msra.mxu0 0.0
        %3804 = vmatprep.subr.mxu0 0.0
        %3805 = vmatpush2.msra.mxu0 0.0
        %3806 = vmatprep.subr.mxu0 0.0
        %3807 = vmatpush2.msra.mxu0 0.0
        %3808 = vmatprep.subr.mxu0 0.0
        %3809 = vmatpush2.msra.mxu0 0.0
        %3810 = vmatprep.subr.mxu0 0.0
        %3811 = vmatpush2.msra.mxu0 0.0
        %3812 = vmatprep.subr.mxu0 0.0
        %3813 = vmatpush2.msra.mxu0 0.0
        %3814 = vmatprep.subr.mxu0 0.0
        %3815 = vmatpush2.msra.mxu0 0.0
        %3816 = vmatprep.subr.mxu0 0.0
        %3817 = vmatpush2.msra.mxu0 0.0
        %3818 = vmatprep.subr.mxu0 0.0
        %3819 = vmatpush2.msra.mxu0 0.0
        %3820 = vmatprep.subr.mxu0 0.0
        %3821 = vmatpush2.msra.mxu0 0.0
        %3822 = vmatprep.subr.mxu0 0.0
        %3823 = vmatpush2.msra.mxu0 0.0
        %3824 = vmatprep.subr.mxu0 0.0
        %3825 = vmatpush2.msra.mxu0 0.0
        %3826 = vmatprep.subr.mxu0 0.0
        %3827 = vmatpush2.msra.mxu0 0.0
        %3828 = vmatprep.subr.mxu0 0.0
        %3829 = vmatpush2.msra.mxu0 0.0
        %3830 = vmatprep.mubr.f32.mxu0 0.0
        %3831 = vmatmul.mubr.f32.gmra.mxu0 %v3647
        %v3832 = vpop.f32.mrf.mxu0
        %v3833 = vadd.f32 %v3749, %v3832
        %v3834 = vpop.f32.mrf.mxu0
        %v3835 = vadd.f32 %v3753, %v3834
        %3836 = vdwg.mxu0
        %3837 = vmatprep.subr.mxu0 %v3743
        %3838 = vmatpush1.msra.mxu0 %v3742
        %3839 = vmatprep.subr.mxu0 %v3739
        %3840 = vmatpush1.msra.mxu0 %v3738
        %3841 = vmatprep.subr.mxu0 %v3735
        %3842 = vmatpush1.msra.mxu0 %v3734
        %3843 = vmatprep.subr.mxu0 %v3731
        %3844 = vmatpush1.msra.mxu0 %v3730
        %3845 = vmatprep.subr.mxu0 %v3727
        %3846 = vmatpush1.msra.mxu0 %v3726
        %3847 = vmatprep.subr.mxu0 %v3723
        %3848 = vmatpush1.msra.mxu0 %v3722
        %3849 = vmatprep.subr.mxu0 %v3719
        %3850 = vmatpush1.msra.mxu0 %v3718
        %3851 = vmatprep.subr.mxu0 %v3715
        %3852 = vmatpush1.msra.mxu0 %v3714
        %3853 = vmatprep.subr.mxu0 %v3711
        %3854 = vmatpush1.msra.mxu0 %v3710
        %3855 = vmatprep.subr.mxu0 %v3707
        %3856 = vmatpush1.msra.mxu0 %v3706
        %3857 = vmatprep.subr.mxu0 %v3703
        %3858 = vmatpush1.msra.mxu0 %v3702
        %3859 = vmatprep.subr.mxu0 %v3699
        %3860 = vmatpush1.msra.mxu0 %v3698
        %3861 = vmatprep.subr.mxu0 %v3695
        %3862 = vmatpush1.msra.mxu0 %v3694
        %3863 = vmatprep.subr.mxu0 %v3691
        %3864 = vmatpush1.msra.mxu0 %v3690
        %3865 = vmatprep.subr.mxu0 %v3687
        %3866 = vmatpush1.msra.mxu0 %v3686
        %3867 = vmatprep.subr.mxu0 %v3683
        %3868 = vmatpush1.msra.mxu0 %v3682
        %3869 = vmatprep.subr.mxu0 0.0
        %3870 = vmatpush2.msra.mxu0 0.0
        %3871 = vmatprep.subr.mxu0 0.0
        %3872 = vmatpush2.msra.mxu0 0.0
        %3873 = vmatprep.subr.mxu0 0.0
        %3874 = vmatpush2.msra.mxu0 0.0
        %3875 = vmatprep.subr.mxu0 0.0
        %3876 = vmatpush2.msra.mxu0 0.0
        %3877 = vmatprep.subr.mxu0 0.0
        %3878 = vmatpush2.msra.mxu0 0.0
        %3879 = vmatprep.subr.mxu0 0.0
        %3880 = vmatpush2.msra.mxu0 0.0
        %3881 = vmatprep.subr.mxu0 0.0
        %3882 = vmatpush2.msra.mxu0 0.0
        %3883 = vmatprep.subr.mxu0 0.0
        %3884 = vmatpush2.msra.mxu0 0.0
        %3885 = vmatprep.subr.mxu0 0.0
        %3886 = vmatpush2.msra.mxu0 0.0
        %3887 = vmatprep.subr.mxu0 0.0
        %3888 = vmatpush2.msra.mxu0 0.0
        %3889 = vmatprep.subr.mxu0 0.0
        %3890 = vmatpush2.msra.mxu0 0.0
        %3891 = vmatprep.subr.mxu0 0.0
        %3892 = vmatpush2.msra.mxu0 0.0
        %3893 = vmatprep.subr.mxu0 0.0
        %3894 = vmatpush2.msra.mxu0 0.0
        %3895 = vmatprep.subr.mxu0 0.0
        %3896 = vmatpush2.msra.mxu0 0.0
        %3897 = vmatprep.subr.mxu0 0.0
        %3898 = vmatpush2.msra.mxu0 0.0
        %3899 = vmatprep.subr.mxu0 0.0
        %3900 = vmatpush2.msra.mxu0 0.0
        %3901 = vmatprep.mubr.f32.mxu0 0.0
        %3902 = vmatmul.mubr.f32.gmra.mxu0 %v3647
        %v3903 = vpop.f32.mrf.mxu0
        %v3904 = vadd.f32 %v3757, %v3903
        %v3905 = vpop.f32.mrf.mxu0
        %v3906 = vadd.f32 %v3761, %v3905
        %3907 = vdwg.mxu0
        %v3908 = vmax.f32 %v3833, 0.0
        %v3909 = vmax.f32 %v3835, 0.0
        %v3910 = vmax.f32 %v3904, 0.0
        %v3911 = vmax.f32 %v3906, 0.0
        %v3912 = vld [vmem:[%s12] sm:$0xff]
        %v3913 = vld [vmem:[%s12 + $0x8] sm:$0xff]
        %v3914 = vld [vmem:[%s12 + $0x10] sm:$0xff]
        %v3915 = vld [vmem:[%s12 + $0x18] sm:$0xff]
        %v3916 = vld [vmem:[%s12 + $0x20] sm:$0xff]
        %v3917 = vld [vmem:[%s12 + $0x28] sm:$0xff]
        %v3918 = vld [vmem:[%s12 + $0x30] sm:$0xff]
        %v3919 = vld [vmem:[%s12 + $0x38] sm:$0xff]
        %v3920 = vld [vmem:[%s12 + $0x40] sm:$0xff]
        %v3921 = vld [vmem:[%s12 + $0x48] sm:$0xff]
        %v3922 = vld [vmem:[%s12 + $0x50] sm:$0xff]
        %v3923 = vld [vmem:[%s12 + $0x58] sm:$0xff]
        %v3924 = vld [vmem:[%s12 + $0x60] sm:$0xff]
        %v3925 = vld [vmem:[%s12 + $0x68] sm:$0xff]
        %v3926 = vld [vmem:[%s12 + $0x70] sm:$0xff]
        %v3927 = vld [vmem:[%s12 + $0x78] sm:$0xff]
        %v3928 = vld [vmem:[%s12 + $0x80] sm:$0xff]
        %v3929 = vld [vmem:[%s12 + $0x88] sm:$0xff]
        %v3930 = vld [vmem:[%s12 + $0x90] sm:$0xff]
        %v3931 = vld [vmem:[%s12 + $0x98] sm:$0xff]
        %v3932 = vld [vmem:[%s12 + $0xa0] sm:$0xff]
        %v3933 = vld [vmem:[%s12 + $0xa8] sm:$0xff]
        %v3934 = vld [vmem:[%s12 + $0xb0] sm:$0xff]
        %v3935 = vld [vmem:[%s12 + $0xb8] sm:$0xff]
        %v3936 = vld [vmem:[%s12 + $0xc0] sm:$0xff]
        %v3937 = vld [vmem:[%s12 + $0xc8] sm:$0xff]
        %v3938 = vld [vmem:[%s12 + $0xd0] sm:$0xff]
        %v3939 = vld [vmem:[%s12 + $0xd8] sm:$0xff]
        %v3940 = vld [vmem:[%s12 + $0xe0] sm:$0xff]
        %v3941 = vld [vmem:[%s12 + $0xe8] sm:$0xff]
        %v3942 = vld [vmem:[%s12 + $0xf0] sm:$0xff]
        %v3943 = vld [vmem:[%s12 + $0xf8] sm:$0xff]
        %v3944 = vld [vmem:[%s12 + $0x100] sm:$0xff]
        %v3945 = vld [vmem:[%s12 + $0x108] sm:$0xff]
        %v3946 = vld [vmem:[%s12 + $0x110] sm:$0xff]
        %v3947 = vld [vmem:[%s12 + $0x118] sm:$0xff]
        %v3948 = vld [vmem:[%s12 + $0x120] sm:$0xff]
        %v3949 = vld [vmem:[%s12 + $0x128] sm:$0xff]
        %v3950 = vld [vmem:[%s12 + $0x130] sm:$0xff]
        %v3951 = vld [vmem:[%s12 + $0x138] sm:$0xff]
        %v3952 = vld [vmem:[%s12 + $0x140] sm:$0xff]
        %v3953 = vld [vmem:[%s12 + $0x148] sm:$0xff]
        %v3954 = vld [vmem:[%s12 + $0x150] sm:$0xff]
        %v3955 = vld [vmem:[%s12 + $0x158] sm:$0xff]
        %v3956 = vld [vmem:[%s12 + $0x160] sm:$0xff]
        %v3957 = vld [vmem:[%s12 + $0x168] sm:$0xff]
        %v3958 = vld [vmem:[%s12 + $0x170] sm:$0xff]
        %v3959 = vld [vmem:[%s12 + $0x178] sm:$0xff]
        %v3960 = vld [vmem:[%s12 + $0x180] sm:$0xff]
        %v3961 = vld [vmem:[%s12 + $0x188] sm:$0xff]
        %v3962 = vld [vmem:[%s12 + $0x190] sm:$0xff]
        %v3963 = vld [vmem:[%s12 + $0x198] sm:$0xff]
        %v3964 = vld [vmem:[%s12 + $0x1a0] sm:$0xff]
        %v3965 = vld [vmem:[%s12 + $0x1a8] sm:$0xff]
        %v3966 = vld [vmem:[%s12 + $0x1b0] sm:$0xff]
        %v3967 = vld [vmem:[%s12 + $0x1b8] sm:$0xff]
        %v3968 = vld [vmem:[%s12 + $0x1c0] sm:$0xff]
        %v3969 = vld [vmem:[%s12 + $0x1c8] sm:$0xff]
        %v3970 = vld [vmem:[%s12 + $0x1d0] sm:$0xff]
        %v3971 = vld [vmem:[%s12 + $0x1d8] sm:$0xff]
        %v3972 = vld [vmem:[%s12 + $0x1e0] sm:$0xff]
        %v3973 = vld [vmem:[%s12 + $0x1e8] sm:$0xff]
        %v3974 = vld [vmem:[%s12 + $0x1f0] sm:$0xff]
        %v3975 = vld [vmem:[%s12 + $0x1f8] sm:$0xff]
        %v3976 = vld [vmem:[%s12 + $0x200] sm:$0xff]
        %v3977 = vld [vmem:[%s12 + $0x208] sm:$0xff]
        %v3978 = vld [vmem:[%s12 + $0x210] sm:$0xff]
        %v3979 = vld [vmem:[%s12 + $0x218] sm:$0xff]
        %v3980 = vld [vmem:[%s12 + $0x220] sm:$0xff]
        %v3981 = vld [vmem:[%s12 + $0x228] sm:$0xff]
        %v3982 = vld [vmem:[%s12 + $0x230] sm:$0xff]
        %v3983 = vld [vmem:[%s12 + $0x238] sm:$0xff]
        %v3984 = vld [vmem:[%s12 + $0x240] sm:$0xff]
        %v3985 = vld [vmem:[%s12 + $0x248] sm:$0xff]
        %v3986 = vld [vmem:[%s12 + $0x250] sm:$0xff]
        %v3987 = vld [vmem:[%s12 + $0x258] sm:$0xff]
        %v3988 = vld [vmem:[%s12 + $0x260] sm:$0xff]
        %v3989 = vld [vmem:[%s12 + $0x268] sm:$0xff]
        %v3990 = vld [vmem:[%s12 + $0x270] sm:$0xff]
        %v3991 = vld [vmem:[%s12 + $0x278] sm:$0xff]
        %v3992 = vld [vmem:[%s12 + $0x280] sm:$0xff]
        %v3993 = vld [vmem:[%s12 + $0x288] sm:$0xff]
        %v3994 = vld [vmem:[%s12 + $0x290] sm:$0xff]
        %v3995 = vld [vmem:[%s12 + $0x298] sm:$0xff]
        %v3996 = vld [vmem:[%s12 + $0x2a0] sm:$0xff]
        %v3997 = vld [vmem:[%s12 + $0x2a8] sm:$0xff]
        %v3998 = vld [vmem:[%s12 + $0x2b0] sm:$0xff]
        %v3999 = vld [vmem:[%s12 + $0x2b8] sm:$0xff]
        %v4000 = vld [vmem:[%s12 + $0x2c0] sm:$0xff]
        %v4001 = vld [vmem:[%s12 + $0x2c8] sm:$0xff]
        %v4002 = vld [vmem:[%s12 + $0x2d0] sm:$0xff]
        %v4003 = vld [vmem:[%s12 + $0x2d8] sm:$0xff]
        %v4004 = vld [vmem:[%s12 + $0x2e0] sm:$0xff]
        %v4005 = vld [vmem:[%s12 + $0x2e8] sm:$0xff]
        %v4006 = vld [vmem:[%s12 + $0x2f0] sm:$0xff]
        %v4007 = vld [vmem:[%s12 + $0x2f8] sm:$0xff]
        %v4008 = vld [vmem:[%s12 + $0x300] sm:$0xff]
        %v4009 = vld [vmem:[%s12 + $0x308] sm:$0xff]
        %v4010 = vld [vmem:[%s12 + $0x310] sm:$0xff]
        %v4011 = vld [vmem:[%s12 + $0x318] sm:$0xff]
        %v4012 = vld [vmem:[%s12 + $0x320] sm:$0xff]
        %v4013 = vld [vmem:[%s12 + $0x328] sm:$0xff]
        %v4014 = vld [vmem:[%s12 + $0x330] sm:$0xff]
        %v4015 = vld [vmem:[%s12 + $0x338] sm:$0xff]
        %v4016 = vld [vmem:[%s12 + $0x340] sm:$0xff]
        %v4017 = vld [vmem:[%s12 + $0x348] sm:$0xff]
        %v4018 = vld [vmem:[%s12 + $0x350] sm:$0xff]
        %v4019 = vld [vmem:[%s12 + $0x358] sm:$0xff]
        %v4020 = vld [vmem:[%s12 + $0x360] sm:$0xff]
        %v4021 = vld [vmem:[%s12 + $0x368] sm:$0xff]
        %v4022 = vld [vmem:[%s12 + $0x370] sm:$0xff]
        %v4023 = vld [vmem:[%s12 + $0x378] sm:$0xff]
        %v4024 = vld [vmem:[%s12 + $0x380] sm:$0xff]
        %v4025 = vld [vmem:[%s12 + $0x388] sm:$0xff]
        %v4026 = vld [vmem:[%s12 + $0x390] sm:$0xff]
        %v4027 = vld [vmem:[%s12 + $0x398] sm:$0xff]
        %v4028 = vld [vmem:[%s12 + $0x3a0] sm:$0xff]
        %v4029 = vld [vmem:[%s12 + $0x3a8] sm:$0xff]
        %v4030 = vld [vmem:[%s12 + $0x3b0] sm:$0xff]
        %v4031 = vld [vmem:[%s12 + $0x3b8] sm:$0xff]
        %v4032 = vld [vmem:[%s12 + $0x3c0] sm:$0xff]
        %v4033 = vld [vmem:[%s12 + $0x3c8] sm:$0xff]
        %v4034 = vld [vmem:[%s12 + $0x3d0] sm:$0xff]
        %v4035 = vld [vmem:[%s12 + $0x3d8] sm:$0xff]
        %v4036 = vld [vmem:[%s12 + $0x3e0] sm:$0xff]
        %v4037 = vld [vmem:[%s12 + $0x3e8] sm:$0xff]
        %v4038 = vld [vmem:[%s12 + $0x3f0] sm:$0xff]
        %v4039 = vld [vmem:[%s12 + $0x3f8] sm:$0xff]
        %v4040 = vunpack.c.l.bf16 %v3912
        %v4041 = vunpack.c.h.bf16 %v3912
        %v4042 = vunpack.c.l.bf16 %v3913
        %v4043 = vunpack.c.h.bf16 %v3913
        %v4044 = vunpack.c.l.bf16 %v3914
        %v4045 = vunpack.c.h.bf16 %v3914
        %v4046 = vunpack.c.l.bf16 %v3915
        %v4047 = vunpack.c.h.bf16 %v3915
        %v4048 = vunpack.c.l.bf16 %v3916
        %v4049 = vunpack.c.h.bf16 %v3916
        %v4050 = vunpack.c.l.bf16 %v3917
        %v4051 = vunpack.c.h.bf16 %v3917
        %v4052 = vunpack.c.l.bf16 %v3918
        %v4053 = vunpack.c.h.bf16 %v3918
        %v4054 = vunpack.c.l.bf16 %v3919
        %v4055 = vunpack.c.h.bf16 %v3919
        %v4056 = vunpack.c.l.bf16 %v3920
        %v4057 = vunpack.c.h.bf16 %v3920
        %v4058 = vunpack.c.l.bf16 %v3921
        %v4059 = vunpack.c.h.bf16 %v3921
        %v4060 = vunpack.c.l.bf16 %v3922
        %v4061 = vunpack.c.h.bf16 %v3922
        %v4062 = vunpack.c.l.bf16 %v3923
        %v4063 = vunpack.c.h.bf16 %v3923
        %v4064 = vunpack.c.l.bf16 %v3924
        %v4065 = vunpack.c.h.bf16 %v3924
        %v4066 = vunpack.c.l.bf16 %v3925
        %v4067 = vunpack.c.h.bf16 %v3925
        %v4068 = vunpack.c.l.bf16 %v3926
        %v4069 = vunpack.c.h.bf16 %v3926
        %v4070 = vunpack.c.l.bf16 %v3927
        %v4071 = vunpack.c.h.bf16 %v3927
        %v4072 = vunpack.c.l.bf16 %v3928
        %v4073 = vunpack.c.h.bf16 %v3928
        %v4074 = vunpack.c.l.bf16 %v3929
        %v4075 = vunpack.c.h.bf16 %v3929
        %v4076 = vunpack.c.l.bf16 %v3930
        %v4077 = vunpack.c.h.bf16 %v3930
        %v4078 = vunpack.c.l.bf16 %v3931
        %v4079 = vunpack.c.h.bf16 %v3931
        %v4080 = vunpack.c.l.bf16 %v3932
        %v4081 = vunpack.c.h.bf16 %v3932
        %v4082 = vunpack.c.l.bf16 %v3933
        %v4083 = vunpack.c.h.bf16 %v3933
        %v4084 = vunpack.c.l.bf16 %v3934
        %v4085 = vunpack.c.h.bf16 %v3934
        %v4086 = vunpack.c.l.bf16 %v3935
        %v4087 = vunpack.c.h.bf16 %v3935
        %v4088 = vunpack.c.l.bf16 %v3936
        %v4089 = vunpack.c.h.bf16 %v3936
        %v4090 = vunpack.c.l.bf16 %v3937
        %v4091 = vunpack.c.h.bf16 %v3937
        %v4092 = vunpack.c.l.bf16 %v3938
        %v4093 = vunpack.c.h.bf16 %v3938
        %v4094 = vunpack.c.l.bf16 %v3939
        %v4095 = vunpack.c.h.bf16 %v3939
        %v4096 = vunpack.c.l.bf16 %v3940
        %v4097 = vunpack.c.h.bf16 %v3940
        %v4098 = vunpack.c.l.bf16 %v3941
        %v4099 = vunpack.c.h.bf16 %v3941
        %v4100 = vunpack.c.l.bf16 %v3942
        %v4101 = vunpack.c.h.bf16 %v3942
        %v4102 = vunpack.c.l.bf16 %v3943
        %v4103 = vunpack.c.h.bf16 %v3943
        %v4104 = vunpack.c.l.bf16 %v3944
        %v4105 = vunpack.c.h.bf16 %v3944
        %v4106 = vunpack.c.l.bf16 %v3945
        %v4107 = vunpack.c.h.bf16 %v3945
        %v4108 = vunpack.c.l.bf16 %v3946
        %v4109 = vunpack.c.h.bf16 %v3946
        %v4110 = vunpack.c.l.bf16 %v3947
        %v4111 = vunpack.c.h.bf16 %v3947
        %v4112 = vunpack.c.l.bf16 %v3948
        %v4113 = vunpack.c.h.bf16 %v3948
        %v4114 = vunpack.c.l.bf16 %v3949
        %v4115 = vunpack.c.h.bf16 %v3949
        %v4116 = vunpack.c.l.bf16 %v3950
        %v4117 = vunpack.c.h.bf16 %v3950
        %v4118 = vunpack.c.l.bf16 %v3951
        %v4119 = vunpack.c.h.bf16 %v3951
        %v4120 = vunpack.c.l.bf16 %v3952
        %v4121 = vunpack.c.h.bf16 %v3952
        %v4122 = vunpack.c.l.bf16 %v3953
        %v4123 = vunpack.c.h.bf16 %v3953
        %v4124 = vunpack.c.l.bf16 %v3954
        %v4125 = vunpack.c.h.bf16 %v3954
        %v4126 = vunpack.c.l.bf16 %v3955
        %v4127 = vunpack.c.h.bf16 %v3955
        %v4128 = vunpack.c.l.bf16 %v3956
        %v4129 = vunpack.c.h.bf16 %v3956
        %v4130 = vunpack.c.l.bf16 %v3957
        %v4131 = vunpack.c.h.bf16 %v3957
        %v4132 = vunpack.c.l.bf16 %v3958
        %v4133 = vunpack.c.h.bf16 %v3958
        %v4134 = vunpack.c.l.bf16 %v3959
        %v4135 = vunpack.c.h.bf16 %v3959
        %v4136 = vunpack.c.l.bf16 %v3960
        %v4137 = vunpack.c.h.bf16 %v3960
        %v4138 = vunpack.c.l.bf16 %v3961
        %v4139 = vunpack.c.h.bf16 %v3961
        %v4140 = vunpack.c.l.bf16 %v3962
        %v4141 = vunpack.c.h.bf16 %v3962
        %v4142 = vunpack.c.l.bf16 %v3963
        %v4143 = vunpack.c.h.bf16 %v3963
        %v4144 = vunpack.c.l.bf16 %v3964
        %v4145 = vunpack.c.h.bf16 %v3964
        %v4146 = vunpack.c.l.bf16 %v3965
        %v4147 = vunpack.c.h.bf16 %v3965
        %v4148 = vunpack.c.l.bf16 %v3966
        %v4149 = vunpack.c.h.bf16 %v3966
        %v4150 = vunpack.c.l.bf16 %v3967
        %v4151 = vunpack.c.h.bf16 %v3967
        %v4152 = vunpack.c.l.bf16 %v3968
        %v4153 = vunpack.c.h.bf16 %v3968
        %v4154 = vunpack.c.l.bf16 %v3969
        %v4155 = vunpack.c.h.bf16 %v3969
        %v4156 = vunpack.c.l.bf16 %v3970
        %v4157 = vunpack.c.h.bf16 %v3970
        %v4158 = vunpack.c.l.bf16 %v3971
        %v4159 = vunpack.c.h.bf16 %v3971
        %v4160 = vunpack.c.l.bf16 %v3972
        %v4161 = vunpack.c.h.bf16 %v3972
        %v4162 = vunpack.c.l.bf16 %v3973
        %v4163 = vunpack.c.h.bf16 %v3973
        %v4164 = vunpack.c.l.bf16 %v3974
        %v4165 = vunpack.c.h.bf16 %v3974
        %v4166 = vunpack.c.l.bf16 %v3975
        %v4167 = vunpack.c.h.bf16 %v3975
        %v4168 = vunpack.c.l.bf16 %v3976
        %v4169 = vunpack.c.h.bf16 %v3976
        %v4170 = vunpack.c.l.bf16 %v3977
        %v4171 = vunpack.c.h.bf16 %v3977
        %v4172 = vunpack.c.l.bf16 %v3978
        %v4173 = vunpack.c.h.bf16 %v3978
        %v4174 = vunpack.c.l.bf16 %v3979
        %v4175 = vunpack.c.h.bf16 %v3979
        %v4176 = vunpack.c.l.bf16 %v3980
        %v4177 = vunpack.c.h.bf16 %v3980
        %v4178 = vunpack.c.l.bf16 %v3981
        %v4179 = vunpack.c.h.bf16 %v3981
        %v4180 = vunpack.c.l.bf16 %v3982
        %v4181 = vunpack.c.h.bf16 %v3982
        %v4182 = vunpack.c.l.bf16 %v3983
        %v4183 = vunpack.c.h.bf16 %v3983
        %v4184 = vunpack.c.l.bf16 %v3984
        %v4185 = vunpack.c.h.bf16 %v3984
        %v4186 = vunpack.c.l.bf16 %v3985
        %v4187 = vunpack.c.h.bf16 %v3985
        %v4188 = vunpack.c.l.bf16 %v3986
        %v4189 = vunpack.c.h.bf16 %v3986
        %v4190 = vunpack.c.l.bf16 %v3987
        %v4191 = vunpack.c.h.bf16 %v3987
        %v4192 = vunpack.c.l.bf16 %v3988
        %v4193 = vunpack.c.h.bf16 %v3988
        %v4194 = vunpack.c.l.bf16 %v3989
        %v4195 = vunpack.c.h.bf16 %v3989
        %v4196 = vunpack.c.l.bf16 %v3990
        %v4197 = vunpack.c.h.bf16 %v3990
        %v4198 = vunpack.c.l.bf16 %v3991
        %v4199 = vunpack.c.h.bf16 %v3991
        %v4200 = vunpack.c.l.bf16 %v3992
        %v4201 = vunpack.c.h.bf16 %v3992
        %v4202 = vunpack.c.l.bf16 %v3993
        %v4203 = vunpack.c.h.bf16 %v3993
        %v4204 = vunpack.c.l.bf16 %v3994
        %v4205 = vunpack.c.h.bf16 %v3994
        %v4206 = vunpack.c.l.bf16 %v3995
        %v4207 = vunpack.c.h.bf16 %v3995
        %v4208 = vunpack.c.l.bf16 %v3996
        %v4209 = vunpack.c.h.bf16 %v3996
        %v4210 = vunpack.c.l.bf16 %v3997
        %v4211 = vunpack.c.h.bf16 %v3997
        %v4212 = vunpack.c.l.bf16 %v3998
        %v4213 = vunpack.c.h.bf16 %v3998
        %v4214 = vunpack.c.l.bf16 %v3999
        %v4215 = vunpack.c.h.bf16 %v3999
        %v4216 = vunpack.c.l.bf16 %v4000
        %v4217 = vunpack.c.h.bf16 %v4000
        %v4218 = vunpack.c.l.bf16 %v4001
        %v4219 = vunpack.c.h.bf16 %v4001
        %v4220 = vunpack.c.l.bf16 %v4002
        %v4221 = vunpack.c.h.bf16 %v4002
        %v4222 = vunpack.c.l.bf16 %v4003
        %v4223 = vunpack.c.h.bf16 %v4003
        %v4224 = vunpack.c.l.bf16 %v4004
        %v4225 = vunpack.c.h.bf16 %v4004
        %v4226 = vunpack.c.l.bf16 %v4005
        %v4227 = vunpack.c.h.bf16 %v4005
        %v4228 = vunpack.c.l.bf16 %v4006
        %v4229 = vunpack.c.h.bf16 %v4006
        %v4230 = vunpack.c.l.bf16 %v4007
        %v4231 = vunpack.c.h.bf16 %v4007
        %v4232 = vunpack.c.l.bf16 %v4008
        %v4233 = vunpack.c.h.bf16 %v4008
        %v4234 = vunpack.c.l.bf16 %v4009
        %v4235 = vunpack.c.h.bf16 %v4009
        %v4236 = vunpack.c.l.bf16 %v4010
        %v4237 = vunpack.c.h.bf16 %v4010
        %v4238 = vunpack.c.l.bf16 %v4011
        %v4239 = vunpack.c.h.bf16 %v4011
        %v4240 = vunpack.c.l.bf16 %v4012
        %v4241 = vunpack.c.h.bf16 %v4012
        %v4242 = vunpack.c.l.bf16 %v4013
        %v4243 = vunpack.c.h.bf16 %v4013
        %v4244 = vunpack.c.l.bf16 %v4014
        %v4245 = vunpack.c.h.bf16 %v4014
        %v4246 = vunpack.c.l.bf16 %v4015
        %v4247 = vunpack.c.h.bf16 %v4015
        %v4248 = vunpack.c.l.bf16 %v4016
        %v4249 = vunpack.c.h.bf16 %v4016
        %v4250 = vunpack.c.l.bf16 %v4017
        %v4251 = vunpack.c.h.bf16 %v4017
        %v4252 = vunpack.c.l.bf16 %v4018
        %v4253 = vunpack.c.h.bf16 %v4018
        %v4254 = vunpack.c.l.bf16 %v4019
        %v4255 = vunpack.c.h.bf16 %v4019
        %v4256 = vunpack.c.l.bf16 %v4020
        %v4257 = vunpack.c.h.bf16 %v4020
        %v4258 = vunpack.c.l.bf16 %v4021
        %v4259 = vunpack.c.h.bf16 %v4021
        %v4260 = vunpack.c.l.bf16 %v4022
        %v4261 = vunpack.c.h.bf16 %v4022
        %v4262 = vunpack.c.l.bf16 %v4023
        %v4263 = vunpack.c.h.bf16 %v4023
        %v4264 = vunpack.c.l.bf16 %v4024
        %v4265 = vunpack.c.h.bf16 %v4024
        %v4266 = vunpack.c.l.bf16 %v4025
        %v4267 = vunpack.c.h.bf16 %v4025
        %v4268 = vunpack.c.l.bf16 %v4026
        %v4269 = vunpack.c.h.bf16 %v4026
        %v4270 = vunpack.c.l.bf16 %v4027
        %v4271 = vunpack.c.h.bf16 %v4027
        %v4272 = vunpack.c.l.bf16 %v4028
        %v4273 = vunpack.c.h.bf16 %v4028
        %v4274 = vunpack.c.l.bf16 %v4029
        %v4275 = vunpack.c.h.bf16 %v4029
        %v4276 = vunpack.c.l.bf16 %v4030
        %v4277 = vunpack.c.h.bf16 %v4030
        %v4278 = vunpack.c.l.bf16 %v4031
        %v4279 = vunpack.c.h.bf16 %v4031
        %v4280 = vunpack.c.l.bf16 %v4032
        %v4281 = vunpack.c.h.bf16 %v4032
        %v4282 = vunpack.c.l.bf16 %v4033
        %v4283 = vunpack.c.h.bf16 %v4033
        %v4284 = vunpack.c.l.bf16 %v4034
        %v4285 = vunpack.c.h.bf16 %v4034
        %v4286 = vunpack.c.l.bf16 %v4035
        %v4287 = vunpack.c.h.bf16 %v4035
        %v4288 = vunpack.c.l.bf16 %v4036
        %v4289 = vunpack.c.h.bf16 %v4036
        %v4290 = vunpack.c.l.bf16 %v4037
        %v4291 = vunpack.c.h.bf16 %v4037
        %v4292 = vunpack.c.l.bf16 %v4038
        %v4293 = vunpack.c.h.bf16 %v4038
        %v4294 = vunpack.c.l.bf16 %v4039
        %v4295 = vunpack.c.h.bf16 %v4039
        %v4296 = vld [vmem:[%s13] sm:$0xf]
        %v4298 = vlaneseq
        %v4299 = vshrl.u32 %v4298, 7
        %v4300 = vsub.s32 0, %v4299
        %v4301 = vrot.slane %v4296, %v4300
        %v4302 = vlaneseq
        %v4303 = vshrl.u32 %v4302, 7
        %v4304 = vsub.s32 1, %v4303
        %v4305 = vrot.slane %v4296, %v4304
        %v4306 = vlaneseq
        %v4307 = vshrl.u32 %v4306, 7
        %v4308 = vsub.s32 2, %v4307
        %v4309 = vrot.slane %v4296, %v4308
        %v4310 = vlaneseq
        %v4311 = vshrl.u32 %v4310, 7
        %v4312 = vsub.s32 3, %v4311
        %v4313 = vrot.slane %v4296, %v4312
        %4318 = vmatprep.subr.mxu0 %v4101
        %4319 = vmatpush1.msra.mxu0 %v4100
        %4320 = vmatprep.subr.mxu0 %v4097
        %4321 = vmatpush1.msra.mxu0 %v4096
        %4322 = vmatprep.subr.mxu0 %v4093
        %4323 = vmatpush1.msra.mxu0 %v4092
        %4324 = vmatprep.subr.mxu0 %v4089
        %4325 = vmatpush1.msra.mxu0 %v4088
        %4326 = vmatprep.subr.mxu0 %v4085
        %4327 = vmatpush1.msra.mxu0 %v4084
        %4328 = vmatprep.subr.mxu0 %v4081
        %4329 = vmatpush1.msra.mxu0 %v4080
        %4330 = vmatprep.subr.mxu0 %v4077
        %4331 = vmatpush1.msra.mxu0 %v4076
        %4332 = vmatprep.subr.mxu0 %v4073
        %4333 = vmatpush1.msra.mxu0 %v4072
        %4334 = vmatprep.subr.mxu0 %v4069
        %4335 = vmatpush1.msra.mxu0 %v4068
        %4336 = vmatprep.subr.mxu0 %v4065
        %4337 = vmatpush1.msra.mxu0 %v4064
        %4338 = vmatprep.subr.mxu0 %v4061
        %4339 = vmatpush1.msra.mxu0 %v4060
        %4340 = vmatprep.subr.mxu0 %v4057
        %4341 = vmatpush1.msra.mxu0 %v4056
        %4342 = vmatprep.subr.mxu0 %v4053
        %4343 = vmatpush1.msra.mxu0 %v4052
        %4344 = vmatprep.subr.mxu0 %v4049
        %4345 = vmatpush1.msra.mxu0 %v4048
        %4346 = vmatprep.subr.mxu0 %v4045
        %4347 = vmatpush1.msra.mxu0 %v4044
        %4348 = vmatprep.subr.mxu0 %v4041
        %4349 = vmatpush1.msra.mxu0 %v4040
        %4350 = vmatprep.subr.mxu0 %v4165
        %4351 = vmatpush2.msra.mxu0 %v4164
        %4352 = vmatprep.subr.mxu0 %v4161
        %4353 = vmatpush2.msra.mxu0 %v4160
        %4354 = vmatprep.subr.mxu0 %v4157
        %4355 = vmatpush2.msra.mxu0 %v4156
        %4356 = vmatprep.subr.mxu0 %v4153
        %4357 = vmatpush2.msra.mxu0 %v4152
        %4358 = vmatprep.subr.mxu0 %v4149
        %4359 = vmatpush2.msra.mxu0 %v4148
        %4360 = vmatprep.subr.mxu0 %v4145
        %4361 = vmatpush2.msra.mxu0 %v4144
        %4362 = vmatprep.subr.mxu0 %v4141
        %4363 = vmatpush2.msra.mxu0 %v4140
        %4364 = vmatprep.subr.mxu0 %v4137
        %4365 = vmatpush2.msra.mxu0 %v4136
        %4366 = vmatprep.subr.mxu0 %v4133
        %4367 = vmatpush2.msra.mxu0 %v4132
        %4368 = vmatprep.subr.mxu0 %v4129
        %4369 = vmatpush2.msra.mxu0 %v4128
        %4370 = vmatprep.subr.mxu0 %v4125
        %4371 = vmatpush2.msra.mxu0 %v4124
        %4372 = vmatprep.subr.mxu0 %v4121
        %4373 = vmatpush2.msra.mxu0 %v4120
        %4374 = vmatprep.subr.mxu0 %v4117
        %4375 = vmatpush2.msra.mxu0 %v4116
        %4376 = vmatprep.subr.mxu0 %v4113
        %4377 = vmatpush2.msra.mxu0 %v4112
        %4378 = vmatprep.subr.mxu0 %v4109
        %4379 = vmatpush2.msra.mxu0 %v4108
        %4380 = vmatprep.subr.mxu0 %v4105
        %4381 = vmatpush2.msra.mxu0 %v4104
        %4382 = vmatprep.mubr.f32.mxu0 %v3909
        %4383 = vmatmul.mubr.f32.gmra.mxu0 %v3908
        %v4384 = vpop.f32.mrf.mxu0
        %v4385 = vadd.f32 %v4301, %v4384
        %v4386 = vpop.f32.mrf.mxu0
        %v4387 = vadd.f32 %v4305, %v4386
        %4388 = vdwg.mxu0
        %4389 = vmatprep.subr.mxu0 %v4229
        %4390 = vmatpush1.msra.mxu0 %v4228
        %4391 = vmatprep.subr.mxu0 %v4225
        %4392 = vmatpush1.msra.mxu0 %v4224
        %4393 = vmatprep.subr.mxu0 %v4221
        %4394 = vmatpush1.msra.mxu0 %v4220
        %4395 = vmatprep.subr.mxu0 %v4217
        %4396 = vmatpush1.msra.mxu0 %v4216
        %4397 = vmatprep.subr.mxu0 %v4213
        %4398 = vmatpush1.msra.mxu0 %v4212
        %4399 = vmatprep.subr.mxu0 %v4209
        %4400 = vmatpush1.msra.mxu0 %v4208
        %4401 = vmatprep.subr.mxu0 %v4205
        %4402 = vmatpush1.msra.mxu0 %v4204
        %4403 = vmatprep.subr.mxu0 %v4201
        %4404 = vmatpush1.msra.mxu0 %v4200
        %4405 = vmatprep.subr.mxu0 %v4197
        %4406 = vmatpush1.msra.mxu0 %v4196
        %4407 = vmatprep.subr.mxu0 %v4193
        %4408 = vmatpush1.msra.mxu0 %v4192
        %4409 = vmatprep.subr.mxu0 %v4189
        %4410 = vmatpush1.msra.mxu0 %v4188
        %4411 = vmatprep.subr.mxu0 %v4185
        %4412 = vmatpush1.msra.mxu0 %v4184
        %4413 = vmatprep.subr.mxu0 %v4181
        %4414 = vmatpush1.msra.mxu0 %v4180
        %4415 = vmatprep.subr.mxu0 %v4177
        %4416 = vmatpush1.msra.mxu0 %v4176
        %4417 = vmatprep.subr.mxu0 %v4173
        %4418 = vmatpush1.msra.mxu0 %v4172
        %4419 = vmatprep.subr.mxu0 %v4169
        %4420 = vmatpush1.msra.mxu0 %v4168
        %4421 = vmatprep.subr.mxu0 %v4293
        %4422 = vmatpush2.msra.mxu0 %v4292
        %4423 = vmatprep.subr.mxu0 %v4289
        %4424 = vmatpush2.msra.mxu0 %v4288
        %4425 = vmatprep.subr.mxu0 %v4285
        %4426 = vmatpush2.msra.mxu0 %v4284
        %4427 = vmatprep.subr.mxu0 %v4281
        %4428 = vmatpush2.msra.mxu0 %v4280
        %4429 = vmatprep.subr.mxu0 %v4277
        %4430 = vmatpush2.msra.mxu0 %v4276
        %4431 = vmatprep.subr.mxu0 %v4273
        %4432 = vmatpush2.msra.mxu0 %v4272
        %4433 = vmatprep.subr.mxu0 %v4269
        %4434 = vmatpush2.msra.mxu0 %v4268
        %4435 = vmatprep.subr.mxu0 %v4265
        %4436 = vmatpush2.msra.mxu0 %v4264
        %4437 = vmatprep.subr.mxu0 %v4261
        %4438 = vmatpush2.msra.mxu0 %v4260
        %4439 = vmatprep.subr.mxu0 %v4257
        %4440 = vmatpush2.msra.mxu0 %v4256
        %4441 = vmatprep.subr.mxu0 %v4253
        %4442 = vmatpush2.msra.mxu0 %v4252
        %4443 = vmatprep.subr.mxu0 %v4249
        %4444 = vmatpush2.msra.mxu0 %v4248
        %4445 = vmatprep.subr.mxu0 %v4245
        %4446 = vmatpush2.msra.mxu0 %v4244
        %4447 = vmatprep.subr.mxu0 %v4241
        %4448 = vmatpush2.msra.mxu0 %v4240
        %4449 = vmatprep.subr.mxu0 %v4237
        %4450 = vmatpush2.msra.mxu0 %v4236
        %4451 = vmatprep.subr.mxu0 %v4233
        %4452 = vmatpush2.msra.mxu0 %v4232
        %4453 = vmatprep.mubr.f32.mxu0 %v3911
        %4454 = vmatmul.mubr.f32.gmra.mxu0 %v3910
        %v4455 = vpop.f32.mrf.mxu0
        %v4456 = vadd.f32 %v4385, %v4455
        %v4457 = vpop.f32.mrf.mxu0
        %v4458 = vadd.f32 %v4387, %v4457
        %4459 = vdwg.mxu0
        %4460 = vmatprep.subr.mxu0 %v4103
        %4461 = vmatpush1.msra.mxu0 %v4102
        %4462 = vmatprep.subr.mxu0 %v4099
        %4463 = vmatpush1.msra.mxu0 %v4098
        %4464 = vmatprep.subr.mxu0 %v4095
        %4465 = vmatpush1.msra.mxu0 %v4094
        %4466 = vmatprep.subr.mxu0 %v4091
        %4467 = vmatpush1.msra.mxu0 %v4090
        %4468 = vmatprep.subr.mxu0 %v4087
        %4469 = vmatpush1.msra.mxu0 %v4086
        %4470 = vmatprep.subr.mxu0 %v4083
        %4471 = vmatpush1.msra.mxu0 %v4082
        %4472 = vmatprep.subr.mxu0 %v4079
        %4473 = vmatpush1.msra.mxu0 %v4078
        %4474 = vmatprep.subr.mxu0 %v4075
        %4475 = vmatpush1.msra.mxu0 %v4074
        %4476 = vmatprep.subr.mxu0 %v4071
        %4477 = vmatpush1.msra.mxu0 %v4070
        %4478 = vmatprep.subr.mxu0 %v4067
        %4479 = vmatpush1.msra.mxu0 %v4066
        %4480 = vmatprep.subr.mxu0 %v4063
        %4481 = vmatpush1.msra.mxu0 %v4062
        %4482 = vmatprep.subr.mxu0 %v4059
        %4483 = vmatpush1.msra.mxu0 %v4058
        %4484 = vmatprep.subr.mxu0 %v4055
        %4485 = vmatpush1.msra.mxu0 %v4054
        %4486 = vmatprep.subr.mxu0 %v4051
        %4487 = vmatpush1.msra.mxu0 %v4050
        %4488 = vmatprep.subr.mxu0 %v4047
        %4489 = vmatpush1.msra.mxu0 %v4046
        %4490 = vmatprep.subr.mxu0 %v4043
        %4491 = vmatpush1.msra.mxu0 %v4042
        %4492 = vmatprep.subr.mxu0 %v4167
        %4493 = vmatpush2.msra.mxu0 %v4166
        %4494 = vmatprep.subr.mxu0 %v4163
        %4495 = vmatpush2.msra.mxu0 %v4162
        %4496 = vmatprep.subr.mxu0 %v4159
        %4497 = vmatpush2.msra.mxu0 %v4158
        %4498 = vmatprep.subr.mxu0 %v4155
        %4499 = vmatpush2.msra.mxu0 %v4154
        %4500 = vmatprep.subr.mxu0 %v4151
        %4501 = vmatpush2.msra.mxu0 %v4150
        %4502 = vmatprep.subr.mxu0 %v4147
        %4503 = vmatpush2.msra.mxu0 %v4146
        %4504 = vmatprep.subr.mxu0 %v4143
        %4505 = vmatpush2.msra.mxu0 %v4142
        %4506 = vmatprep.subr.mxu0 %v4139
        %4507 = vmatpush2.msra.mxu0 %v4138
        %4508 = vmatprep.subr.mxu0 %v4135
        %4509 = vmatpush2.msra.mxu0 %v4134
        %4510 = vmatprep.subr.mxu0 %v4131
        %4511 = vmatpush2.msra.mxu0 %v4130
        %4512 = vmatprep.subr.mxu0 %v4127
        %4513 = vmatpush2.msra.mxu0 %v4126
        %4514 = vmatprep.subr.mxu0 %v4123
        %4515 = vmatpush2.msra.mxu0 %v4122
        %4516 = vmatprep.subr.mxu0 %v4119
        %4517 = vmatpush2.msra.mxu0 %v4118
        %4518 = vmatprep.subr.mxu0 %v4115
        %4519 = vmatpush2.msra.mxu0 %v4114
        %4520 = vmatprep.subr.mxu0 %v4111
        %4521 = vmatpush2.msra.mxu0 %v4110
        %4522 = vmatprep.subr.mxu0 %v4107
        %4523 = vmatpush2.msra.mxu0 %v4106
        %4524 = vmatprep.mubr.f32.mxu0 %v3909
        %4525 = vmatmul.mubr.f32.gmra.mxu0 %v3908
        %v4526 = vpop.f32.mrf.mxu0
        %v4527 = vadd.f32 %v4309, %v4526
        %v4528 = vpop.f32.mrf.mxu0
        %v4529 = vadd.f32 %v4313, %v4528
        %4530 = vdwg.mxu0
        %4531 = vmatprep.subr.mxu0 %v4231
        %4532 = vmatpush1.msra.mxu0 %v4230
        %4533 = vmatprep.subr.mxu0 %v4227
        %4534 = vmatpush1.msra.mxu0 %v4226
        %4535 = vmatprep.subr.mxu0 %v4223
        %4536 = vmatpush1.msra.mxu0 %v4222
        %4537 = vmatprep.subr.mxu0 %v4219
        %4538 = vmatpush1.msra.mxu0 %v4218
        %4539 = vmatprep.subr.mxu0 %v4215
        %4540 = vmatpush1.msra.mxu0 %v4214
        %4541 = vmatprep.subr.mxu0 %v4211
        %4542 = vmatpush1.msra.mxu0 %v4210
        %4543 = vmatprep.subr.mxu0 %v4207
        %4544 = vmatpush1.msra.mxu0 %v4206
        %4545 = vmatprep.subr.mxu0 %v4203
        %4546 = vmatpush1.msra.mxu0 %v4202
        %4547 = vmatprep.subr.mxu0 %v4199
        %4548 = vmatpush1.msra.mxu0 %v4198
        %4549 = vmatprep.subr.mxu0 %v4195
        %4550 = vmatpush1.msra.mxu0 %v4194
        %4551 = vmatprep.subr.mxu0 %v4191
        %4552 = vmatpush1.msra.mxu0 %v4190
        %4553 = vmatprep.subr.mxu0 %v4187
        %4554 = vmatpush1.msra.mxu0 %v4186
        %4555 = vmatprep.subr.mxu0 %v4183
        %4556 = vmatpush1.msra.mxu0 %v4182
        %4557 = vmatprep.subr.mxu0 %v4179
        %4558 = vmatpush1.msra.mxu0 %v4178
        %4559 = vmatprep.subr.mxu0 %v4175
        %4560 = vmatpush1.msra.mxu0 %v4174
        %4561 = vmatprep.subr.mxu0 %v4171
        %4562 = vmatpush1.msra.mxu0 %v4170
        %4563 = vmatprep.subr.mxu0 %v4295
        %4564 = vmatpush2.msra.mxu0 %v4294
        %4565 = vmatprep.subr.mxu0 %v4291
        %4566 = vmatpush2.msra.mxu0 %v4290
        %4567 = vmatprep.subr.mxu0 %v4287
        %4568 = vmatpush2.msra.mxu0 %v4286
        %4569 = vmatprep.subr.mxu0 %v4283
        %4570 = vmatpush2.msra.mxu0 %v4282
        %4571 = vmatprep.subr.mxu0 %v4279
        %4572 = vmatpush2.msra.mxu0 %v4278
        %4573 = vmatprep.subr.mxu0 %v4275
        %4574 = vmatpush2.msra.mxu0 %v4274
        %4575 = vmatprep.subr.mxu0 %v4271
        %4576 = vmatpush2.msra.mxu0 %v4270
        %4577 = vmatprep.subr.mxu0 %v4267
        %4578 = vmatpush2.msra.mxu0 %v4266
        %4579 = vmatprep.subr.mxu0 %v4263
        %4580 = vmatpush2.msra.mxu0 %v4262
        %4581 = vmatprep.subr.mxu0 %v4259
        %4582 = vmatpush2.msra.mxu0 %v4258
        %4583 = vmatprep.subr.mxu0 %v4255
        %4584 = vmatpush2.msra.mxu0 %v4254
        %4585 = vmatprep.subr.mxu0 %v4251
        %4586 = vmatpush2.msra.mxu0 %v4250
        %4587 = vmatprep.subr.mxu0 %v4247
        %4588 = vmatpush2.msra.mxu0 %v4246
        %4589 = vmatprep.subr.mxu0 %v4243
        %4590 = vmatpush2.msra.mxu0 %v4242
        %4591 = vmatprep.subr.mxu0 %v4239
        %4592 = vmatpush2.msra.mxu0 %v4238
        %4593 = vmatprep.subr.mxu0 %v4235
        %4594 = vmatpush2.msra.mxu0 %v4234
        %4595 = vmatprep.mubr.f32.mxu0 %v3911
        %4596 = vmatmul.mubr.f32.gmra.mxu0 %v3910
        %v4597 = vpop.f32.mrf.mxu0
        %v4598 = vadd.f32 %v4527, %v4597
        %v4599 = vpop.f32.mrf.mxu0
        %v4600 = vadd.f32 %v4529, %v4599
        %4601 = vdwg.mxu0
        %v4602 = vmax.f32 %v4456, 0.0
        %v4603 = vmax.f32 %v4458, 0.0
        %v4604 = vmax.f32 %v4598, 0.0
        %v4605 = vmax.f32 %v4600, 0.0
        %v4606 = vld [vmem:[%s14] sm:$0xff]
        %v4607 = vld [vmem:[%s14 + $0x8] sm:$0xff]
        %v4608 = vld [vmem:[%s14 + $0x10] sm:$0xff]
        %v4609 = vld [vmem:[%s14 + $0x18] sm:$0xff]
        %v4610 = vld [vmem:[%s14 + $0x20] sm:$0xff]
        %v4611 = vld [vmem:[%s14 + $0x28] sm:$0xff]
        %v4612 = vld [vmem:[%s14 + $0x30] sm:$0xff]
        %v4613 = vld [vmem:[%s14 + $0x38] sm:$0xff]
        %v4614 = vld [vmem:[%s14 + $0x40] sm:$0xff]
        %v4615 = vld [vmem:[%s14 + $0x48] sm:$0xff]
        %v4616 = vld [vmem:[%s14 + $0x50] sm:$0xff]
        %v4617 = vld [vmem:[%s14 + $0x58] sm:$0xff]
        %v4618 = vld [vmem:[%s14 + $0x60] sm:$0xff]
        %v4619 = vld [vmem:[%s14 + $0x68] sm:$0xff]
        %v4620 = vld [vmem:[%s14 + $0x70] sm:$0xff]
        %v4621 = vld [vmem:[%s14 + $0x78] sm:$0xff]
        %v4622 = vld [vmem:[%s14 + $0x80] sm:$0xff]
        %v4623 = vld [vmem:[%s14 + $0x88] sm:$0xff]
        %v4624 = vld [vmem:[%s14 + $0x90] sm:$0xff]
        %v4625 = vld [vmem:[%s14 + $0x98] sm:$0xff]
        %v4626 = vld [vmem:[%s14 + $0xa0] sm:$0xff]
        %v4627 = vld [vmem:[%s14 + $0xa8] sm:$0xff]
        %v4628 = vld [vmem:[%s14 + $0xb0] sm:$0xff]
        %v4629 = vld [vmem:[%s14 + $0xb8] sm:$0xff]
        %v4630 = vld [vmem:[%s14 + $0xc0] sm:$0xff]
        %v4631 = vld [vmem:[%s14 + $0xc8] sm:$0xff]
        %v4632 = vld [vmem:[%s14 + $0xd0] sm:$0xff]
        %v4633 = vld [vmem:[%s14 + $0xd8] sm:$0xff]
        %v4634 = vld [vmem:[%s14 + $0xe0] sm:$0xff]
        %v4635 = vld [vmem:[%s14 + $0xe8] sm:$0xff]
        %v4636 = vld [vmem:[%s14 + $0xf0] sm:$0xff]
        %v4637 = vld [vmem:[%s14 + $0xf8] sm:$0xff]
        %v4638 = vld [vmem:[%s14 + $0x100] sm:$0xff]
        %v4639 = vld [vmem:[%s14 + $0x108] sm:$0xff]
        %v4640 = vld [vmem:[%s14 + $0x110] sm:$0xff]
        %v4641 = vld [vmem:[%s14 + $0x118] sm:$0xff]
        %v4642 = vld [vmem:[%s14 + $0x120] sm:$0xff]
        %v4643 = vld [vmem:[%s14 + $0x128] sm:$0xff]
        %v4644 = vld [vmem:[%s14 + $0x130] sm:$0xff]
        %v4645 = vld [vmem:[%s14 + $0x138] sm:$0xff]
        %v4646 = vld [vmem:[%s14 + $0x140] sm:$0xff]
        %v4647 = vld [vmem:[%s14 + $0x148] sm:$0xff]
        %v4648 = vld [vmem:[%s14 + $0x150] sm:$0xff]
        %v4649 = vld [vmem:[%s14 + $0x158] sm:$0xff]
        %v4650 = vld [vmem:[%s14 + $0x160] sm:$0xff]
        %v4651 = vld [vmem:[%s14 + $0x168] sm:$0xff]
        %v4652 = vld [vmem:[%s14 + $0x170] sm:$0xff]
        %v4653 = vld [vmem:[%s14 + $0x178] sm:$0xff]
        %v4654 = vld [vmem:[%s14 + $0x180] sm:$0xff]
        %v4655 = vld [vmem:[%s14 + $0x188] sm:$0xff]
        %v4656 = vld [vmem:[%s14 + $0x190] sm:$0xff]
        %v4657 = vld [vmem:[%s14 + $0x198] sm:$0xff]
        %v4658 = vld [vmem:[%s14 + $0x1a0] sm:$0xff]
        %v4659 = vld [vmem:[%s14 + $0x1a8] sm:$0xff]
        %v4660 = vld [vmem:[%s14 + $0x1b0] sm:$0xff]
        %v4661 = vld [vmem:[%s14 + $0x1b8] sm:$0xff]
        %v4662 = vld [vmem:[%s14 + $0x1c0] sm:$0xff]
        %v4663 = vld [vmem:[%s14 + $0x1c8] sm:$0xff]
        %v4664 = vld [vmem:[%s14 + $0x1d0] sm:$0xff]
        %v4665 = vld [vmem:[%s14 + $0x1d8] sm:$0xff]
        %v4666 = vld [vmem:[%s14 + $0x1e0] sm:$0xff]
        %v4667 = vld [vmem:[%s14 + $0x1e8] sm:$0xff]
        %v4668 = vld [vmem:[%s14 + $0x1f0] sm:$0xff]
        %v4669 = vld [vmem:[%s14 + $0x1f8] sm:$0xff]
        %v4670 = vld [vmem:[%s14 + $0x200] sm:$0xff]
        %v4671 = vld [vmem:[%s14 + $0x208] sm:$0xff]
        %v4672 = vld [vmem:[%s14 + $0x210] sm:$0xff]
        %v4673 = vld [vmem:[%s14 + $0x218] sm:$0xff]
        %v4674 = vld [vmem:[%s14 + $0x220] sm:$0xff]
        %v4675 = vld [vmem:[%s14 + $0x228] sm:$0xff]
        %v4676 = vld [vmem:[%s14 + $0x230] sm:$0xff]
        %v4677 = vld [vmem:[%s14 + $0x238] sm:$0xff]
        %v4678 = vld [vmem:[%s14 + $0x240] sm:$0xff]
        %v4679 = vld [vmem:[%s14 + $0x248] sm:$0xff]
        %v4680 = vld [vmem:[%s14 + $0x250] sm:$0xff]
        %v4681 = vld [vmem:[%s14 + $0x258] sm:$0xff]
        %v4682 = vld [vmem:[%s14 + $0x260] sm:$0xff]
        %v4683 = vld [vmem:[%s14 + $0x268] sm:$0xff]
        %v4684 = vld [vmem:[%s14 + $0x270] sm:$0xff]
        %v4685 = vld [vmem:[%s14 + $0x278] sm:$0xff]
        %v4686 = vld [vmem:[%s14 + $0x280] sm:$0xff]
        %v4687 = vld [vmem:[%s14 + $0x288] sm:$0xff]
        %v4688 = vld [vmem:[%s14 + $0x290] sm:$0xff]
        %v4689 = vld [vmem:[%s14 + $0x298] sm:$0xff]
        %v4690 = vld [vmem:[%s14 + $0x2a0] sm:$0xff]
        %v4691 = vld [vmem:[%s14 + $0x2a8] sm:$0xff]
        %v4692 = vld [vmem:[%s14 + $0x2b0] sm:$0xff]
        %v4693 = vld [vmem:[%s14 + $0x2b8] sm:$0xff]
        %v4694 = vld [vmem:[%s14 + $0x2c0] sm:$0xff]
        %v4695 = vld [vmem:[%s14 + $0x2c8] sm:$0xff]
        %v4696 = vld [vmem:[%s14 + $0x2d0] sm:$0xff]
        %v4697 = vld [vmem:[%s14 + $0x2d8] sm:$0xff]
        %v4698 = vld [vmem:[%s14 + $0x2e0] sm:$0xff]
        %v4699 = vld [vmem:[%s14 + $0x2e8] sm:$0xff]
        %v4700 = vld [vmem:[%s14 + $0x2f0] sm:$0xff]
        %v4701 = vld [vmem:[%s14 + $0x2f8] sm:$0xff]
        %v4702 = vld [vmem:[%s14 + $0x300] sm:$0xff]
        %v4703 = vld [vmem:[%s14 + $0x308] sm:$0xff]
        %v4704 = vld [vmem:[%s14 + $0x310] sm:$0xff]
        %v4705 = vld [vmem:[%s14 + $0x318] sm:$0xff]
        %v4706 = vld [vmem:[%s14 + $0x320] sm:$0xff]
        %v4707 = vld [vmem:[%s14 + $0x328] sm:$0xff]
        %v4708 = vld [vmem:[%s14 + $0x330] sm:$0xff]
        %v4709 = vld [vmem:[%s14 + $0x338] sm:$0xff]
        %v4710 = vld [vmem:[%s14 + $0x340] sm:$0xff]
        %v4711 = vld [vmem:[%s14 + $0x348] sm:$0xff]
        %v4712 = vld [vmem:[%s14 + $0x350] sm:$0xff]
        %v4713 = vld [vmem:[%s14 + $0x358] sm:$0xff]
        %v4714 = vld [vmem:[%s14 + $0x360] sm:$0xff]
        %v4715 = vld [vmem:[%s14 + $0x368] sm:$0xff]
        %v4716 = vld [vmem:[%s14 + $0x370] sm:$0xff]
        %v4717 = vld [vmem:[%s14 + $0x378] sm:$0xff]
        %v4718 = vld [vmem:[%s14 + $0x380] sm:$0xff]
        %v4719 = vld [vmem:[%s14 + $0x388] sm:$0xff]
        %v4720 = vld [vmem:[%s14 + $0x390] sm:$0xff]
        %v4721 = vld [vmem:[%s14 + $0x398] sm:$0xff]
        %v4722 = vld [vmem:[%s14 + $0x3a0] sm:$0xff]
        %v4723 = vld [vmem:[%s14 + $0x3a8] sm:$0xff]
        %v4724 = vld [vmem:[%s14 + $0x3b0] sm:$0xff]
        %v4725 = vld [vmem:[%s14 + $0x3b8] sm:$0xff]
        %v4726 = vld [vmem:[%s14 + $0x3c0] sm:$0xff]
        %v4727 = vld [vmem:[%s14 + $0x3c8] sm:$0xff]
        %v4728 = vld [vmem:[%s14 + $0x3d0] sm:$0xff]
        %v4729 = vld [vmem:[%s14 + $0x3d8] sm:$0xff]
        %v4730 = vld [vmem:[%s14 + $0x3e0] sm:$0xff]
        %v4731 = vld [vmem:[%s14 + $0x3e8] sm:$0xff]
        %v4732 = vld [vmem:[%s14 + $0x3f0] sm:$0xff]
        %v4733 = vld [vmem:[%s14 + $0x3f8] sm:$0xff]
        %v4734 = vunpack.c.l.bf16 %v4606
        %v4735 = vunpack.c.h.bf16 %v4606
        %v4736 = vunpack.c.l.bf16 %v4607
        %v4737 = vunpack.c.h.bf16 %v4607
        %v4738 = vunpack.c.l.bf16 %v4608
        %v4739 = vunpack.c.h.bf16 %v4608
        %v4740 = vunpack.c.l.bf16 %v4609
        %v4741 = vunpack.c.h.bf16 %v4609
        %v4742 = vunpack.c.l.bf16 %v4610
        %v4743 = vunpack.c.h.bf16 %v4610
        %v4744 = vunpack.c.l.bf16 %v4611
        %v4745 = vunpack.c.h.bf16 %v4611
        %v4746 = vunpack.c.l.bf16 %v4612
        %v4747 = vunpack.c.h.bf16 %v4612
        %v4748 = vunpack.c.l.bf16 %v4613
        %v4749 = vunpack.c.h.bf16 %v4613
        %v4750 = vunpack.c.l.bf16 %v4614
        %v4751 = vunpack.c.h.bf16 %v4614
        %v4752 = vunpack.c.l.bf16 %v4615
        %v4753 = vunpack.c.h.bf16 %v4615
        %v4754 = vunpack.c.l.bf16 %v4616
        %v4755 = vunpack.c.h.bf16 %v4616
        %v4756 = vunpack.c.l.bf16 %v4617
        %v4757 = vunpack.c.h.bf16 %v4617
        %v4758 = vunpack.c.l.bf16 %v4618
        %v4759 = vunpack.c.h.bf16 %v4618
        %v4760 = vunpack.c.l.bf16 %v4619
        %v4761 = vunpack.c.h.bf16 %v4619
        %v4762 = vunpack.c.l.bf16 %v4620
        %v4763 = vunpack.c.h.bf16 %v4620
        %v4764 = vunpack.c.l.bf16 %v4621
        %v4765 = vunpack.c.h.bf16 %v4621
        %v4766 = vunpack.c.l.bf16 %v4622
        %v4767 = vunpack.c.h.bf16 %v4622
        %v4768 = vunpack.c.l.bf16 %v4623
        %v4769 = vunpack.c.h.bf16 %v4623
        %v4770 = vunpack.c.l.bf16 %v4624
        %v4771 = vunpack.c.h.bf16 %v4624
        %v4772 = vunpack.c.l.bf16 %v4625
        %v4773 = vunpack.c.h.bf16 %v4625
        %v4774 = vunpack.c.l.bf16 %v4626
        %v4775 = vunpack.c.h.bf16 %v4626
        %v4776 = vunpack.c.l.bf16 %v4627
        %v4777 = vunpack.c.h.bf16 %v4627
        %v4778 = vunpack.c.l.bf16 %v4628
        %v4779 = vunpack.c.h.bf16 %v4628
        %v4780 = vunpack.c.l.bf16 %v4629
        %v4781 = vunpack.c.h.bf16 %v4629
        %v4782 = vunpack.c.l.bf16 %v4630
        %v4783 = vunpack.c.h.bf16 %v4630
        %v4784 = vunpack.c.l.bf16 %v4631
        %v4785 = vunpack.c.h.bf16 %v4631
        %v4786 = vunpack.c.l.bf16 %v4632
        %v4787 = vunpack.c.h.bf16 %v4632
        %v4788 = vunpack.c.l.bf16 %v4633
        %v4789 = vunpack.c.h.bf16 %v4633
        %v4790 = vunpack.c.l.bf16 %v4634
        %v4791 = vunpack.c.h.bf16 %v4634
        %v4792 = vunpack.c.l.bf16 %v4635
        %v4793 = vunpack.c.h.bf16 %v4635
        %v4794 = vunpack.c.l.bf16 %v4636
        %v4795 = vunpack.c.h.bf16 %v4636
        %v4796 = vunpack.c.l.bf16 %v4637
        %v4797 = vunpack.c.h.bf16 %v4637
        %v4798 = vunpack.c.l.bf16 %v4638
        %v4799 = vunpack.c.h.bf16 %v4638
        %v4800 = vunpack.c.l.bf16 %v4639
        %v4801 = vunpack.c.h.bf16 %v4639
        %v4802 = vunpack.c.l.bf16 %v4640
        %v4803 = vunpack.c.h.bf16 %v4640
        %v4804 = vunpack.c.l.bf16 %v4641
        %v4805 = vunpack.c.h.bf16 %v4641
        %v4806 = vunpack.c.l.bf16 %v4642
        %v4807 = vunpack.c.h.bf16 %v4642
        %v4808 = vunpack.c.l.bf16 %v4643
        %v4809 = vunpack.c.h.bf16 %v4643
        %v4810 = vunpack.c.l.bf16 %v4644
        %v4811 = vunpack.c.h.bf16 %v4644
        %v4812 = vunpack.c.l.bf16 %v4645
        %v4813 = vunpack.c.h.bf16 %v4645
        %v4814 = vunpack.c.l.bf16 %v4646
        %v4815 = vunpack.c.h.bf16 %v4646
        %v4816 = vunpack.c.l.bf16 %v4647
        %v4817 = vunpack.c.h.bf16 %v4647
        %v4818 = vunpack.c.l.bf16 %v4648
        %v4819 = vunpack.c.h.bf16 %v4648
        %v4820 = vunpack.c.l.bf16 %v4649
        %v4821 = vunpack.c.h.bf16 %v4649
        %v4822 = vunpack.c.l.bf16 %v4650
        %v4823 = vunpack.c.h.bf16 %v4650
        %v4824 = vunpack.c.l.bf16 %v4651
        %v4825 = vunpack.c.h.bf16 %v4651
        %v4826 = vunpack.c.l.bf16 %v4652
        %v4827 = vunpack.c.h.bf16 %v4652
        %v4828 = vunpack.c.l.bf16 %v4653
        %v4829 = vunpack.c.h.bf16 %v4653
        %v4830 = vunpack.c.l.bf16 %v4654
        %v4831 = vunpack.c.h.bf16 %v4654
        %v4832 = vunpack.c.l.bf16 %v4655
        %v4833 = vunpack.c.h.bf16 %v4655
        %v4834 = vunpack.c.l.bf16 %v4656
        %v4835 = vunpack.c.h.bf16 %v4656
        %v4836 = vunpack.c.l.bf16 %v4657
        %v4837 = vunpack.c.h.bf16 %v4657
        %v4838 = vunpack.c.l.bf16 %v4658
        %v4839 = vunpack.c.h.bf16 %v4658
        %v4840 = vunpack.c.l.bf16 %v4659
        %v4841 = vunpack.c.h.bf16 %v4659
        %v4842 = vunpack.c.l.bf16 %v4660
        %v4843 = vunpack.c.h.bf16 %v4660
        %v4844 = vunpack.c.l.bf16 %v4661
        %v4845 = vunpack.c.h.bf16 %v4661
        %v4846 = vunpack.c.l.bf16 %v4662
        %v4847 = vunpack.c.h.bf16 %v4662
        %v4848 = vunpack.c.l.bf16 %v4663
        %v4849 = vunpack.c.h.bf16 %v4663
        %v4850 = vunpack.c.l.bf16 %v4664
        %v4851 = vunpack.c.h.bf16 %v4664
        %v4852 = vunpack.c.l.bf16 %v4665
        %v4853 = vunpack.c.h.bf16 %v4665
        %v4854 = vunpack.c.l.bf16 %v4666
        %v4855 = vunpack.c.h.bf16 %v4666
        %v4856 = vunpack.c.l.bf16 %v4667
        %v4857 = vunpack.c.h.bf16 %v4667
        %v4858 = vunpack.c.l.bf16 %v4668
        %v4859 = vunpack.c.h.bf16 %v4668
        %v4860 = vunpack.c.l.bf16 %v4669
        %v4861 = vunpack.c.h.bf16 %v4669
        %v4862 = vunpack.c.l.bf16 %v4670
        %v4863 = vunpack.c.h.bf16 %v4670
        %v4864 = vunpack.c.l.bf16 %v4671
        %v4865 = vunpack.c.h.bf16 %v4671
        %v4866 = vunpack.c.l.bf16 %v4672
        %v4867 = vunpack.c.h.bf16 %v4672
        %v4868 = vunpack.c.l.bf16 %v4673
        %v4869 = vunpack.c.h.bf16 %v4673
        %v4870 = vunpack.c.l.bf16 %v4674
        %v4871 = vunpack.c.h.bf16 %v4674
        %v4872 = vunpack.c.l.bf16 %v4675
        %v4873 = vunpack.c.h.bf16 %v4675
        %v4874 = vunpack.c.l.bf16 %v4676
        %v4875 = vunpack.c.h.bf16 %v4676
        %v4876 = vunpack.c.l.bf16 %v4677
        %v4877 = vunpack.c.h.bf16 %v4677
        %v4878 = vunpack.c.l.bf16 %v4678
        %v4879 = vunpack.c.h.bf16 %v4678
        %v4880 = vunpack.c.l.bf16 %v4679
        %v4881 = vunpack.c.h.bf16 %v4679
        %v4882 = vunpack.c.l.bf16 %v4680
        %v4883 = vunpack.c.h.bf16 %v4680
        %v4884 = vunpack.c.l.bf16 %v4681
        %v4885 = vunpack.c.h.bf16 %v4681
        %v4886 = vunpack.c.l.bf16 %v4682
        %v4887 = vunpack.c.h.bf16 %v4682
        %v4888 = vunpack.c.l.bf16 %v4683
        %v4889 = vunpack.c.h.bf16 %v4683
        %v4890 = vunpack.c.l.bf16 %v4684
        %v4891 = vunpack.c.h.bf16 %v4684
        %v4892 = vunpack.c.l.bf16 %v4685
        %v4893 = vunpack.c.h.bf16 %v4685
        %v4894 = vunpack.c.l.bf16 %v4686
        %v4895 = vunpack.c.h.bf16 %v4686
        %v4896 = vunpack.c.l.bf16 %v4687
        %v4897 = vunpack.c.h.bf16 %v4687
        %v4898 = vunpack.c.l.bf16 %v4688
        %v4899 = vunpack.c.h.bf16 %v4688
        %v4900 = vunpack.c.l.bf16 %v4689
        %v4901 = vunpack.c.h.bf16 %v4689
        %v4902 = vunpack.c.l.bf16 %v4690
        %v4903 = vunpack.c.h.bf16 %v4690
        %v4904 = vunpack.c.l.bf16 %v4691
        %v4905 = vunpack.c.h.bf16 %v4691
        %v4906 = vunpack.c.l.bf16 %v4692
        %v4907 = vunpack.c.h.bf16 %v4692
        %v4908 = vunpack.c.l.bf16 %v4693
        %v4909 = vunpack.c.h.bf16 %v4693
        %v4910 = vunpack.c.l.bf16 %v4694
        %v4911 = vunpack.c.h.bf16 %v4694
        %v4912 = vunpack.c.l.bf16 %v4695
        %v4913 = vunpack.c.h.bf16 %v4695
        %v4914 = vunpack.c.l.bf16 %v4696
        %v4915 = vunpack.c.h.bf16 %v4696
        %v4916 = vunpack.c.l.bf16 %v4697
        %v4917 = vunpack.c.h.bf16 %v4697
        %v4918 = vunpack.c.l.bf16 %v4698
        %v4919 = vunpack.c.h.bf16 %v4698
        %v4920 = vunpack.c.l.bf16 %v4699
        %v4921 = vunpack.c.h.bf16 %v4699
        %v4922 = vunpack.c.l.bf16 %v4700
        %v4923 = vunpack.c.h.bf16 %v4700
        %v4924 = vunpack.c.l.bf16 %v4701
        %v4925 = vunpack.c.h.bf16 %v4701
        %v4926 = vunpack.c.l.bf16 %v4702
        %v4927 = vunpack.c.h.bf16 %v4702
        %v4928 = vunpack.c.l.bf16 %v4703
        %v4929 = vunpack.c.h.bf16 %v4703
        %v4930 = vunpack.c.l.bf16 %v4704
        %v4931 = vunpack.c.h.bf16 %v4704
        %v4932 = vunpack.c.l.bf16 %v4705
        %v4933 = vunpack.c.h.bf16 %v4705
        %v4934 = vunpack.c.l.bf16 %v4706
        %v4935 = vunpack.c.h.bf16 %v4706
        %v4936 = vunpack.c.l.bf16 %v4707
        %v4937 = vunpack.c.h.bf16 %v4707
        %v4938 = vunpack.c.l.bf16 %v4708
        %v4939 = vunpack.c.h.bf16 %v4708
        %v4940 = vunpack.c.l.bf16 %v4709
        %v4941 = vunpack.c.h.bf16 %v4709
        %v4942 = vunpack.c.l.bf16 %v4710
        %v4943 = vunpack.c.h.bf16 %v4710
        %v4944 = vunpack.c.l.bf16 %v4711
        %v4945 = vunpack.c.h.bf16 %v4711
        %v4946 = vunpack.c.l.bf16 %v4712
        %v4947 = vunpack.c.h.bf16 %v4712
        %v4948 = vunpack.c.l.bf16 %v4713
        %v4949 = vunpack.c.h.bf16 %v4713
        %v4950 = vunpack.c.l.bf16 %v4714
        %v4951 = vunpack.c.h.bf16 %v4714
        %v4952 = vunpack.c.l.bf16 %v4715
        %v4953 = vunpack.c.h.bf16 %v4715
        %v4954 = vunpack.c.l.bf16 %v4716
        %v4955 = vunpack.c.h.bf16 %v4716
        %v4956 = vunpack.c.l.bf16 %v4717
        %v4957 = vunpack.c.h.bf16 %v4717
        %v4958 = vunpack.c.l.bf16 %v4718
        %v4959 = vunpack.c.h.bf16 %v4718
        %v4960 = vunpack.c.l.bf16 %v4719
        %v4961 = vunpack.c.h.bf16 %v4719
        %v4962 = vunpack.c.l.bf16 %v4720
        %v4963 = vunpack.c.h.bf16 %v4720
        %v4964 = vunpack.c.l.bf16 %v4721
        %v4965 = vunpack.c.h.bf16 %v4721
        %v4966 = vunpack.c.l.bf16 %v4722
        %v4967 = vunpack.c.h.bf16 %v4722
        %v4968 = vunpack.c.l.bf16 %v4723
        %v4969 = vunpack.c.h.bf16 %v4723
        %v4970 = vunpack.c.l.bf16 %v4724
        %v4971 = vunpack.c.h.bf16 %v4724
        %v4972 = vunpack.c.l.bf16 %v4725
        %v4973 = vunpack.c.h.bf16 %v4725
        %v4974 = vunpack.c.l.bf16 %v4726
        %v4975 = vunpack.c.h.bf16 %v4726
        %v4976 = vunpack.c.l.bf16 %v4727
        %v4977 = vunpack.c.h.bf16 %v4727
        %v4978 = vunpack.c.l.bf16 %v4728
        %v4979 = vunpack.c.h.bf16 %v4728
        %v4980 = vunpack.c.l.bf16 %v4729
        %v4981 = vunpack.c.h.bf16 %v4729
        %v4982 = vunpack.c.l.bf16 %v4730
        %v4983 = vunpack.c.h.bf16 %v4730
        %v4984 = vunpack.c.l.bf16 %v4731
        %v4985 = vunpack.c.h.bf16 %v4731
        %v4986 = vunpack.c.l.bf16 %v4732
        %v4987 = vunpack.c.h.bf16 %v4732
        %v4988 = vunpack.c.l.bf16 %v4733
        %v4989 = vunpack.c.h.bf16 %v4733
        %v4990 = vld [vmem:[%s15] sm:$0xf]
        %v4992 = vlaneseq
        %v4993 = vshrl.u32 %v4992, 7
        %v4994 = vsub.s32 0, %v4993
        %v4995 = vrot.slane %v4990, %v4994
        %v4996 = vlaneseq
        %v4997 = vshrl.u32 %v4996, 7
        %v4998 = vsub.s32 1, %v4997
        %v4999 = vrot.slane %v4990, %v4998
        %v5000 = vlaneseq
        %v5001 = vshrl.u32 %v5000, 7
        %v5002 = vsub.s32 2, %v5001
        %v5003 = vrot.slane %v4990, %v5002
        %v5004 = vlaneseq
        %v5005 = vshrl.u32 %v5004, 7
        %v5006 = vsub.s32 3, %v5005
        %v5007 = vrot.slane %v4990, %v5006
        %5012 = vmatprep.subr.mxu0 %v4795
        %5013 = vmatpush1.msra.mxu0 %v4794
        %5014 = vmatprep.subr.mxu0 %v4791
        %5015 = vmatpush1.msra.mxu0 %v4790
        %5016 = vmatprep.subr.mxu0 %v4787
        %5017 = vmatpush1.msra.mxu0 %v4786
        %5018 = vmatprep.subr.mxu0 %v4783
        %5019 = vmatpush1.msra.mxu0 %v4782
        %5020 = vmatprep.subr.mxu0 %v4779
        %5021 = vmatpush1.msra.mxu0 %v4778
        %5022 = vmatprep.subr.mxu0 %v4775
        %5023 = vmatpush1.msra.mxu0 %v4774
        %5024 = vmatprep.subr.mxu0 %v4771
        %5025 = vmatpush1.msra.mxu0 %v4770
        %5026 = vmatprep.subr.mxu0 %v4767
        %5027 = vmatpush1.msra.mxu0 %v4766
        %5028 = vmatprep.subr.mxu0 %v4763
        %5029 = vmatpush1.msra.mxu0 %v4762
        %5030 = vmatprep.subr.mxu0 %v4759
        %5031 = vmatpush1.msra.mxu0 %v4758
        %5032 = vmatprep.subr.mxu0 %v4755
        %5033 = vmatpush1.msra.mxu0 %v4754
        %5034 = vmatprep.subr.mxu0 %v4751
        %5035 = vmatpush1.msra.mxu0 %v4750
        %5036 = vmatprep.subr.mxu0 %v4747
        %5037 = vmatpush1.msra.mxu0 %v4746
        %5038 = vmatprep.subr.mxu0 %v4743
        %5039 = vmatpush1.msra.mxu0 %v4742
        %5040 = vmatprep.subr.mxu0 %v4739
        %5041 = vmatpush1.msra.mxu0 %v4738
        %5042 = vmatprep.subr.mxu0 %v4735
        %5043 = vmatpush1.msra.mxu0 %v4734
        %5044 = vmatprep.subr.mxu0 %v4859
        %5045 = vmatpush2.msra.mxu0 %v4858
        %5046 = vmatprep.subr.mxu0 %v4855
        %5047 = vmatpush2.msra.mxu0 %v4854
        %5048 = vmatprep.subr.mxu0 %v4851
        %5049 = vmatpush2.msra.mxu0 %v4850
        %5050 = vmatprep.subr.mxu0 %v4847
        %5051 = vmatpush2.msra.mxu0 %v4846
        %5052 = vmatprep.subr.mxu0 %v4843
        %5053 = vmatpush2.msra.mxu0 %v4842
        %5054 = vmatprep.subr.mxu0 %v4839
        %5055 = vmatpush2.msra.mxu0 %v4838
        %5056 = vmatprep.subr.mxu0 %v4835
        %5057 = vmatpush2.msra.mxu0 %v4834
        %5058 = vmatprep.subr.mxu0 %v4831
        %5059 = vmatpush2.msra.mxu0 %v4830
        %5060 = vmatprep.subr.mxu0 %v4827
        %5061 = vmatpush2.msra.mxu0 %v4826
        %5062 = vmatprep.subr.mxu0 %v4823
        %5063 = vmatpush2.msra.mxu0 %v4822
        %5064 = vmatprep.subr.mxu0 %v4819
        %5065 = vmatpush2.msra.mxu0 %v4818
        %5066 = vmatprep.subr.mxu0 %v4815
        %5067 = vmatpush2.msra.mxu0 %v4814
        %5068 = vmatprep.subr.mxu0 %v4811
        %5069 = vmatpush2.msra.mxu0 %v4810
        %5070 = vmatprep.subr.mxu0 %v4807
        %5071 = vmatpush2.msra.mxu0 %v4806
        %5072 = vmatprep.subr.mxu0 %v4803
        %5073 = vmatpush2.msra.mxu0 %v4802
        %5074 = vmatprep.subr.mxu0 %v4799
        %5075 = vmatpush2.msra.mxu0 %v4798
        %5076 = vmatprep.mubr.f32.mxu0 %v4603
        %5077 = vmatmul.mubr.f32.gmra.mxu0 %v4602
        %v5078 = vpop.f32.mrf.mxu0
        %v5079 = vadd.f32 %v4995, %v5078
        %v5080 = vpop.f32.mrf.mxu0
        %v5081 = vadd.f32 %v4999, %v5080
        %5082 = vdwg.mxu0
        %5083 = vmatprep.subr.mxu0 %v4923
        %5084 = vmatpush1.msra.mxu0 %v4922
        %5085 = vmatprep.subr.mxu0 %v4919
        %5086 = vmatpush1.msra.mxu0 %v4918
        %5087 = vmatprep.subr.mxu0 %v4915
        %5088 = vmatpush1.msra.mxu0 %v4914
        %5089 = vmatprep.subr.mxu0 %v4911
        %5090 = vmatpush1.msra.mxu0 %v4910
        %5091 = vmatprep.subr.mxu0 %v4907
        %5092 = vmatpush1.msra.mxu0 %v4906
        %5093 = vmatprep.subr.mxu0 %v4903
        %5094 = vmatpush1.msra.mxu0 %v4902
        %5095 = vmatprep.subr.mxu0 %v4899
        %5096 = vmatpush1.msra.mxu0 %v4898
        %5097 = vmatprep.subr.mxu0 %v4895
        %5098 = vmatpush1.msra.mxu0 %v4894
        %5099 = vmatprep.subr.mxu0 %v4891
        %5100 = vmatpush1.msra.mxu0 %v4890
        %5101 = vmatprep.subr.mxu0 %v4887
        %5102 = vmatpush1.msra.mxu0 %v4886
        %5103 = vmatprep.subr.mxu0 %v4883
        %5104 = vmatpush1.msra.mxu0 %v4882
        %5105 = vmatprep.subr.mxu0 %v4879
        %5106 = vmatpush1.msra.mxu0 %v4878
        %5107 = vmatprep.subr.mxu0 %v4875
        %5108 = vmatpush1.msra.mxu0 %v4874
        %5109 = vmatprep.subr.mxu0 %v4871
        %5110 = vmatpush1.msra.mxu0 %v4870
        %5111 = vmatprep.subr.mxu0 %v4867
        %5112 = vmatpush1.msra.mxu0 %v4866
        %5113 = vmatprep.subr.mxu0 %v4863
        %5114 = vmatpush1.msra.mxu0 %v4862
        %5115 = vmatprep.subr.mxu0 %v4987
        %5116 = vmatpush2.msra.mxu0 %v4986
        %5117 = vmatprep.subr.mxu0 %v4983
        %5118 = vmatpush2.msra.mxu0 %v4982
        %5119 = vmatprep.subr.mxu0 %v4979
        %5120 = vmatpush2.msra.mxu0 %v4978
        %5121 = vmatprep.subr.mxu0 %v4975
        %5122 = vmatpush2.msra.mxu0 %v4974
        %5123 = vmatprep.subr.mxu0 %v4971
        %5124 = vmatpush2.msra.mxu0 %v4970
        %5125 = vmatprep.subr.mxu0 %v4967
        %5126 = vmatpush2.msra.mxu0 %v4966
        %5127 = vmatprep.subr.mxu0 %v4963
        %5128 = vmatpush2.msra.mxu0 %v4962
        %5129 = vmatprep.subr.mxu0 %v4959
        %5130 = vmatpush2.msra.mxu0 %v4958
        %5131 = vmatprep.subr.mxu0 %v4955
        %5132 = vmatpush2.msra.mxu0 %v4954
        %5133 = vmatprep.subr.mxu0 %v4951
        %5134 = vmatpush2.msra.mxu0 %v4950
        %5135 = vmatprep.subr.mxu0 %v4947
        %5136 = vmatpush2.msra.mxu0 %v4946
        %5137 = vmatprep.subr.mxu0 %v4943
        %5138 = vmatpush2.msra.mxu0 %v4942
        %5139 = vmatprep.subr.mxu0 %v4939
        %5140 = vmatpush2.msra.mxu0 %v4938
        %5141 = vmatprep.subr.mxu0 %v4935
        %5142 = vmatpush2.msra.mxu0 %v4934
        %5143 = vmatprep.subr.mxu0 %v4931
        %5144 = vmatpush2.msra.mxu0 %v4930
        %5145 = vmatprep.subr.mxu0 %v4927
        %5146 = vmatpush2.msra.mxu0 %v4926
        %5147 = vmatprep.mubr.f32.mxu0 %v4605
        %5148 = vmatmul.mubr.f32.gmra.mxu0 %v4604
        %v5149 = vpop.f32.mrf.mxu0
        %v5150 = vadd.f32 %v5079, %v5149
        %v5151 = vpop.f32.mrf.mxu0
        %v5152 = vadd.f32 %v5081, %v5151
        %5153 = vdwg.mxu0
        %5154 = vmatprep.subr.mxu0 %v4797
        %5155 = vmatpush1.msra.mxu0 %v4796
        %5156 = vmatprep.subr.mxu0 %v4793
        %5157 = vmatpush1.msra.mxu0 %v4792
        %5158 = vmatprep.subr.mxu0 %v4789
        %5159 = vmatpush1.msra.mxu0 %v4788
        %5160 = vmatprep.subr.mxu0 %v4785
        %5161 = vmatpush1.msra.mxu0 %v4784
        %5162 = vmatprep.subr.mxu0 %v4781
        %5163 = vmatpush1.msra.mxu0 %v4780
        %5164 = vmatprep.subr.mxu0 %v4777
        %5165 = vmatpush1.msra.mxu0 %v4776
        %5166 = vmatprep.subr.mxu0 %v4773
        %5167 = vmatpush1.msra.mxu0 %v4772
        %5168 = vmatprep.subr.mxu0 %v4769
        %5169 = vmatpush1.msra.mxu0 %v4768
        %5170 = vmatprep.subr.mxu0 %v4765
        %5171 = vmatpush1.msra.mxu0 %v4764
        %5172 = vmatprep.subr.mxu0 %v4761
        %5173 = vmatpush1.msra.mxu0 %v4760
        %5174 = vmatprep.subr.mxu0 %v4757
        %5175 = vmatpush1.msra.mxu0 %v4756
        %5176 = vmatprep.subr.mxu0 %v4753
        %5177 = vmatpush1.msra.mxu0 %v4752
        %5178 = vmatprep.subr.mxu0 %v4749
        %5179 = vmatpush1.msra.mxu0 %v4748
        %5180 = vmatprep.subr.mxu0 %v4745
        %5181 = vmatpush1.msra.mxu0 %v4744
        %5182 = vmatprep.subr.mxu0 %v4741
        %5183 = vmatpush1.msra.mxu0 %v4740
        %5184 = vmatprep.subr.mxu0 %v4737
        %5185 = vmatpush1.msra.mxu0 %v4736
        %5186 = vmatprep.subr.mxu0 %v4861
        %5187 = vmatpush2.msra.mxu0 %v4860
        %5188 = vmatprep.subr.mxu0 %v4857
        %5189 = vmatpush2.msra.mxu0 %v4856
        %5190 = vmatprep.subr.mxu0 %v4853
        %5191 = vmatpush2.msra.mxu0 %v4852
        %5192 = vmatprep.subr.mxu0 %v4849
        %5193 = vmatpush2.msra.mxu0 %v4848
        %5194 = vmatprep.subr.mxu0 %v4845
        %5195 = vmatpush2.msra.mxu0 %v4844
        %5196 = vmatprep.subr.mxu0 %v4841
        %5197 = vmatpush2.msra.mxu0 %v4840
        %5198 = vmatprep.subr.mxu0 %v4837
        %5199 = vmatpush2.msra.mxu0 %v4836
        %5200 = vmatprep.subr.mxu0 %v4833
        %5201 = vmatpush2.msra.mxu0 %v4832
        %5202 = vmatprep.subr.mxu0 %v4829
        %5203 = vmatpush2.msra.mxu0 %v4828
        %5204 = vmatprep.subr.mxu0 %v4825
        %5205 = vmatpush2.msra.mxu0 %v4824
        %5206 = vmatprep.subr.mxu0 %v4821
        %5207 = vmatpush2.msra.mxu0 %v4820
        %5208 = vmatprep.subr.mxu0 %v4817
        %5209 = vmatpush2.msra.mxu0 %v4816
        %5210 = vmatprep.subr.mxu0 %v4813
        %5211 = vmatpush2.msra.mxu0 %v4812
        %5212 = vmatprep.subr.mxu0 %v4809
        %5213 = vmatpush2.msra.mxu0 %v4808
        %5214 = vmatprep.subr.mxu0 %v4805
        %5215 = vmatpush2.msra.mxu0 %v4804
        %5216 = vmatprep.subr.mxu0 %v4801
        %5217 = vmatpush2.msra.mxu0 %v4800
        %5218 = vmatprep.mubr.f32.mxu0 %v4603
        %5219 = vmatmul.mubr.f32.gmra.mxu0 %v4602
        %v5220 = vpop.f32.mrf.mxu0
        %v5221 = vadd.f32 %v5003, %v5220
        %v5222 = vpop.f32.mrf.mxu0
        %v5223 = vadd.f32 %v5007, %v5222
        %5224 = vdwg.mxu0
        %5225 = vmatprep.subr.mxu0 %v4925
        %5226 = vmatpush1.msra.mxu0 %v4924
        %5227 = vmatprep.subr.mxu0 %v4921
        %5228 = vmatpush1.msra.mxu0 %v4920
        %5229 = vmatprep.subr.mxu0 %v4917
        %5230 = vmatpush1.msra.mxu0 %v4916
        %5231 = vmatprep.subr.mxu0 %v4913
        %5232 = vmatpush1.msra.mxu0 %v4912
        %5233 = vmatprep.subr.mxu0 %v4909
        %5234 = vmatpush1.msra.mxu0 %v4908
        %5235 = vmatprep.subr.mxu0 %v4905
        %5236 = vmatpush1.msra.mxu0 %v4904
        %5237 = vmatprep.subr.mxu0 %v4901
        %5238 = vmatpush1.msra.mxu0 %v4900
        %5239 = vmatprep.subr.mxu0 %v4897
        %5240 = vmatpush1.msra.mxu0 %v4896
        %5241 = vmatprep.subr.mxu0 %v4893
        %5242 = vmatpush1.msra.mxu0 %v4892
        %5243 = vmatprep.subr.mxu0 %v4889
        %5244 = vmatpush1.msra.mxu0 %v4888
        %5245 = vmatprep.subr.mxu0 %v4885
        %5246 = vmatpush1.msra.mxu0 %v4884
        %5247 = vmatprep.subr.mxu0 %v4881
        %5248 = vmatpush1.msra.mxu0 %v4880
        %5249 = vmatprep.subr.mxu0 %v4877
        %5250 = vmatpush1.msra.mxu0 %v4876
        %5251 = vmatprep.subr.mxu0 %v4873
        %5252 = vmatpush1.msra.mxu0 %v4872
        %5253 = vmatprep.subr.mxu0 %v4869
        %5254 = vmatpush1.msra.mxu0 %v4868
        %5255 = vmatprep.subr.mxu0 %v4865
        %5256 = vmatpush1.msra.mxu0 %v4864
        %5257 = vmatprep.subr.mxu0 %v4989
        %5258 = vmatpush2.msra.mxu0 %v4988
        %5259 = vmatprep.subr.mxu0 %v4985
        %5260 = vmatpush2.msra.mxu0 %v4984
        %5261 = vmatprep.subr.mxu0 %v4981
        %5262 = vmatpush2.msra.mxu0 %v4980
        %5263 = vmatprep.subr.mxu0 %v4977
        %5264 = vmatpush2.msra.mxu0 %v4976
        %5265 = vmatprep.subr.mxu0 %v4973
        %5266 = vmatpush2.msra.mxu0 %v4972
        %5267 = vmatprep.subr.mxu0 %v4969
        %5268 = vmatpush2.msra.mxu0 %v4968
        %5269 = vmatprep.subr.mxu0 %v4965
        %5270 = vmatpush2.msra.mxu0 %v4964
        %5271 = vmatprep.subr.mxu0 %v4961
        %5272 = vmatpush2.msra.mxu0 %v4960
        %5273 = vmatprep.subr.mxu0 %v4957
        %5274 = vmatpush2.msra.mxu0 %v4956
        %5275 = vmatprep.subr.mxu0 %v4953
        %5276 = vmatpush2.msra.mxu0 %v4952
        %5277 = vmatprep.subr.mxu0 %v4949
        %5278 = vmatpush2.msra.mxu0 %v4948
        %5279 = vmatprep.subr.mxu0 %v4945
        %5280 = vmatpush2.msra.mxu0 %v4944
        %5281 = vmatprep.subr.mxu0 %v4941
        %5282 = vmatpush2.msra.mxu0 %v4940
        %5283 = vmatprep.subr.mxu0 %v4937
        %5284 = vmatpush2.msra.mxu0 %v4936
        %5285 = vmatprep.subr.mxu0 %v4933
        %5286 = vmatpush2.msra.mxu0 %v4932
        %5287 = vmatprep.subr.mxu0 %v4929
        %5288 = vmatpush2.msra.mxu0 %v4928
        %5289 = vmatprep.mubr.f32.mxu0 %v4605
        %5290 = vmatmul.mubr.f32.gmra.mxu0 %v4604
        %v5291 = vpop.f32.mrf.mxu0
        %v5292 = vadd.f32 %v5221, %v5291
        %v5293 = vpop.f32.mrf.mxu0
        %v5294 = vadd.f32 %v5223, %v5293
        %5295 = vdwg.mxu0
        %v5296 = vadd.f32 %v5150, %v3908
        %v5297 = vadd.f32 %v5152, %v3909
        %v5298 = vadd.f32 %v5292, %v3910
        %v5299 = vadd.f32 %v5294, %v3911
        %v5300 = vmax.f32 %v5296, 0.0
        %v5301 = vmax.f32 %v5297, 0.0
        %v5302 = vmax.f32 %v5298, 0.0
        %v5303 = vmax.f32 %v5299, 0.0
        %v5304 = vld [vmem:[%s16] sm:$0xff]
        %v5305 = vld [vmem:[%s16 + $0x8] sm:$0xff]
        %v5306 = vld [vmem:[%s16 + $0x10] sm:$0xff]
        %v5307 = vld [vmem:[%s16 + $0x18] sm:$0xf]
        %v5308 = vld [vmem:[%s16 + $0x1c] sm:$0xff]
        %v5309 = vld [vmem:[%s16 + $0x24] sm:$0xff]
        %v5310 = vld [vmem:[%s16 + $0x2c] sm:$0xff]
        %v5311 = vld [vmem:[%s16 + $0x34] sm:$0xf]
        %v5312 = vld [vmem:[%s16 + $0x38] sm:$0xff]
        %v5313 = vld [vmem:[%s16 + $0x40] sm:$0xff]
        %v5314 = vld [vmem:[%s16 + $0x48] sm:$0xff]
        %v5315 = vld [vmem:[%s16 + $0x50] sm:$0xf]
        %v5316 = vld [vmem:[%s16 + $0x54] sm:$0xff]
        %v5317 = vld [vmem:[%s16 + $0x5c] sm:$0xff]
        %v5318 = vld [vmem:[%s16 + $0x64] sm:$0xff]
        %v5319 = vld [vmem:[%s16 + $0x6c] sm:$0xf]
        %v5320 = vld [vmem:[%s16 + $0x70] sm:$0xff]
        %v5321 = vld [vmem:[%s16 + $0x78] sm:$0xff]
        %v5322 = vld [vmem:[%s16 + $0x80] sm:$0xff]
        %v5323 = vld [vmem:[%s16 + $0x88] sm:$0xf]
        %v5324 = vld [vmem:[%s16 + $0x8c] sm:$0xff]
        %v5325 = vld [vmem:[%s16 + $0x94] sm:$0xff]
        %v5326 = vld [vmem:[%s16 + $0x9c] sm:$0xff]
        %v5327 = vld [vmem:[%s16 + $0xa4] sm:$0xf]
        %v5328 = vld [vmem:[%s16 + $0xa8] sm:$0xff]
        %v5329 = vld [vmem:[%s16 + $0xb0] sm:$0xff]
        %v5330 = vld [vmem:[%s16 + $0xb8] sm:$0xff]
        %v5331 = vld [vmem:[%s16 + $0xc0] sm:$0xf]
        %v5332 = vld [vmem:[%s16 + $0xc4] sm:$0xff]
        %v5333 = vld [vmem:[%s16 + $0xcc] sm:$0xff]
        %v5334 = vld [vmem:[%s16 + $0xd4] sm:$0xff]
        %v5335 = vld [vmem:[%s16 + $0xdc] sm:$0xf]
        %v5336 = vld [vmem:[%s16 + $0xe0] sm:$0xff]
        %v5337 = vld [vmem:[%s16 + $0xe8] sm:$0xff]
        %v5338 = vld [vmem:[%s16 + $0xf0] sm:$0xff]
        %v5339 = vld [vmem:[%s16 + $0xf8] sm:$0xf]
        %v5340 = vld [vmem:[%s16 + $0xfc] sm:$0xff]
        %v5341 = vld [vmem:[%s16 + $0x104] sm:$0xff]
        %v5342 = vld [vmem:[%s16 + $0x10c] sm:$0xff]
        %v5343 = vld [vmem:[%s16 + $0x114] sm:$0xf]
        %v5344 = vld [vmem:[%s16 + $0x118] sm:$0xff]
        %v5345 = vld [vmem:[%s16 + $0x120] sm:$0xff]
        %v5346 = vld [vmem:[%s16 + $0x128] sm:$0xff]
        %v5347 = vld [vmem:[%s16 + $0x130] sm:$0xf]
        %v5348 = vld [vmem:[%s16 + $0x134] sm:$0xff]
        %v5349 = vld [vmem:[%s16 + $0x13c] sm:$0xff]
        %v5350 = vld [vmem:[%s16 + $0x144] sm:$0xff]
        %v5351 = vld [vmem:[%s16 + $0x14c] sm:$0xf]
        %v5352 = vld [vmem:[%s16 + $0x150] sm:$0xff]
        %v5353 = vld [vmem:[%s16 + $0x158] sm:$0xff]
        %v5354 = vld [vmem:[%s16 + $0x160] sm:$0xff]
        %v5355 = vld [vmem:[%s16 + $0x168] sm:$0xf]
        %v5356 = vld [vmem:[%s16 + $0x16c] sm:$0xff]
        %v5357 = vld [vmem:[%s16 + $0x174] sm:$0xff]
        %v5358 = vld [vmem:[%s16 + $0x17c] sm:$0xff]
        %v5359 = vld [vmem:[%s16 + $0x184] sm:$0xf]
        %v5360 = vld [vmem:[%s16 + $0x188] sm:$0xff]
        %v5361 = vld [vmem:[%s16 + $0x190] sm:$0xff]
        %v5362 = vld [vmem:[%s16 + $0x198] sm:$0xff]
        %v5363 = vld [vmem:[%s16 + $0x1a0] sm:$0xf]
        %v5364 = vld [vmem:[%s16 + $0x1a4] sm:$0xff]
        %v5365 = vld [vmem:[%s16 + $0x1ac] sm:$0xff]
        %v5366 = vld [vmem:[%s16 + $0x1b4] sm:$0xff]
        %v5367 = vld [vmem:[%s16 + $0x1bc] sm:$0xf]
        %v5368 = vld [vmem:[%s16 + $0x1c0] sm:$0xff]
        %v5369 = vld [vmem:[%s16 + $0x1c8] sm:$0xff]
        %v5370 = vld [vmem:[%s16 + $0x1d0] sm:$0xff]
        %v5371 = vld [vmem:[%s16 + $0x1d8] sm:$0xf]
        %v5372 = vld [vmem:[%s16 + $0x1dc] sm:$0xff]
        %v5373 = vld [vmem:[%s16 + $0x1e4] sm:$0xff]
        %v5374 = vld [vmem:[%s16 + $0x1ec] sm:$0xff]
        %v5375 = vld [vmem:[%s16 + $0x1f4] sm:$0xf]
        %v5376 = vld [vmem:[%s16 + $0x1f8] sm:$0xff]
        %v5377 = vld [vmem:[%s16 + $0x200] sm:$0xff]
        %v5378 = vld [vmem:[%s16 + $0x208] sm:$0xff]
        %v5379 = vld [vmem:[%s16 + $0x210] sm:$0xf]
        %v5380 = vld [vmem:[%s16 + $0x214] sm:$0xff]
        %v5381 = vld [vmem:[%s16 + $0x21c] sm:$0xff]
        %v5382 = vld [vmem:[%s16 + $0x224] sm:$0xff]
        %v5383 = vld [vmem:[%s16 + $0x22c] sm:$0xf]
        %v5384 = vld [vmem:[%s16 + $0x230] sm:$0xff]
        %v5385 = vld [vmem:[%s16 + $0x238] sm:$0xff]
        %v5386 = vld [vmem:[%s16 + $0x240] sm:$0xff]
        %v5387 = vld [vmem:[%s16 + $0x248] sm:$0xf]
        %v5388 = vld [vmem:[%s16 + $0x24c] sm:$0xff]
        %v5389 = vld [vmem:[%s16 + $0x254] sm:$0xff]
        %v5390 = vld [vmem:[%s16 + $0x25c] sm:$0xff]
        %v5391 = vld [vmem:[%s16 + $0x264] sm:$0xf]
        %v5392 = vld [vmem:[%s16 + $0x268] sm:$0xff]
        %v5393 = vld [vmem:[%s16 + $0x270] sm:$0xff]
        %v5394 = vld [vmem:[%s16 + $0x278] sm:$0xff]
        %v5395 = vld [vmem:[%s16 + $0x280] sm:$0xf]
        %v5396 = vld [vmem:[%s16 + $0x284] sm:$0xff]
        %v5397 = vld [vmem:[%s16 + $0x28c] sm:$0xff]
        %v5398 = vld [vmem:[%s16 + $0x294] sm:$0xff]
        %v5399 = vld [vmem:[%s16 + $0x29c] sm:$0xf]
        %v5400 = vld [vmem:[%s16 + $0x2a0] sm:$0xff]
        %v5401 = vld [vmem:[%s16 + $0x2a8] sm:$0xff]
        %v5402 = vld [vmem:[%s16 + $0x2b0] sm:$0xff]
        %v5403 = vld [vmem:[%s16 + $0x2b8] sm:$0xf]
        %v5404 = vld [vmem:[%s16 + $0x2bc] sm:$0xff]
        %v5405 = vld [vmem:[%s16 + $0x2c4] sm:$0xff]
        %v5406 = vld [vmem:[%s16 + $0x2cc] sm:$0xff]
        %v5407 = vld [vmem:[%s16 + $0x2d4] sm:$0xf]
        %v5408 = vld [vmem:[%s16 + $0x2d8] sm:$0xff]
        %v5409 = vld [vmem:[%s16 + $0x2e0] sm:$0xff]
        %v5410 = vld [vmem:[%s16 + $0x2e8] sm:$0xff]
        %v5411 = vld [vmem:[%s16 + $0x2f0] sm:$0xf]
        %v5412 = vld [vmem:[%s16 + $0x2f4] sm:$0xff]
        %v5413 = vld [vmem:[%s16 + $0x2fc] sm:$0xff]
        %v5414 = vld [vmem:[%s16 + $0x304] sm:$0xff]
        %v5415 = vld [vmem:[%s16 + $0x30c] sm:$0xf]
        %v5416 = vld [vmem:[%s16 + $0x310] sm:$0xff]
        %v5417 = vld [vmem:[%s16 + $0x318] sm:$0xff]
        %v5418 = vld [vmem:[%s16 + $0x320] sm:$0xff]
        %v5419 = vld [vmem:[%s16 + $0x328] sm:$0xf]
        %v5420 = vld [vmem:[%s16 + $0x32c] sm:$0xff]
        %v5421 = vld [vmem:[%s16 + $0x334] sm:$0xff]
        %v5422 = vld [vmem:[%s16 + $0x33c] sm:$0xff]
        %v5423 = vld [vmem:[%s16 + $0x344] sm:$0xf]
        %v5424 = vld [vmem:[%s16 + $0x348] sm:$0xff]
        %v5425 = vld [vmem:[%s16 + $0x350] sm:$0xff]
        %v5426 = vld [vmem:[%s16 + $0x358] sm:$0xff]
        %v5427 = vld [vmem:[%s16 + $0x360] sm:$0xf]
        %v5428 = vld [vmem:[%s16 + $0x364] sm:$0xff]
        %v5429 = vld [vmem:[%s16 + $0x36c] sm:$0xff]
        %v5430 = vld [vmem:[%s16 + $0x374] sm:$0xff]
        %v5431 = vld [vmem:[%s16 + $0x37c] sm:$0xf]
        %v5432 = vld [vmem:[%s16 + $0x380] sm:$0xff]
        %v5433 = vld [vmem:[%s16 + $0x388] sm:$0xff]
        %v5434 = vld [vmem:[%s16 + $0x390] sm:$0xff]
        %v5435 = vld [vmem:[%s16 + $0x398] sm:$0xf]
        %v5436 = vld [vmem:[%s16 + $0x39c] sm:$0xff]
        %v5437 = vld [vmem:[%s16 + $0x3a4] sm:$0xff]
        %v5438 = vld [vmem:[%s16 + $0x3ac] sm:$0xff]
        %v5439 = vld [vmem:[%s16 + $0x3b4] sm:$0xf]
        %v5440 = vld [vmem:[%s16 + $0x3b8] sm:$0xff]
        %v5441 = vld [vmem:[%s16 + $0x3c0] sm:$0xff]
        %v5442 = vld [vmem:[%s16 + $0x3c8] sm:$0xff]
        %v5443 = vld [vmem:[%s16 + $0x3d0] sm:$0xf]
        %v5444 = vld [vmem:[%s16 + $0x3d4] sm:$0xff]
        %v5445 = vld [vmem:[%s16 + $0x3dc] sm:$0xff]
        %v5446 = vld [vmem:[%s16 + $0x3e4] sm:$0xff]
        %v5447 = vld [vmem:[%s16 + $0x3ec] sm:$0xf]
        %v5448 = vld [vmem:[%s16 + $0x3f0] sm:$0xff]
        %v5449 = vld [vmem:[%s16 + $0x3f8] sm:$0xff]
        %v5450 = vld [vmem:[%s16 + $0x400] sm:$0xff]
        %v5451 = vld [vmem:[%s16 + $0x408] sm:$0xf]
        %v5452 = vld [vmem:[%s16 + $0x40c] sm:$0xff]
        %v5453 = vld [vmem:[%s16 + $0x414] sm:$0xff]
        %v5454 = vld [vmem:[%s16 + $0x41c] sm:$0xff]
        %v5455 = vld [vmem:[%s16 + $0x424] sm:$0xf]
        %v5456 = vld [vmem:[%s16 + $0x428] sm:$0xff]
        %v5457 = vld [vmem:[%s16 + $0x430] sm:$0xff]
        %v5458 = vld [vmem:[%s16 + $0x438] sm:$0xff]
        %v5459 = vld [vmem:[%s16 + $0x440] sm:$0xf]
        %v5460 = vld [vmem:[%s16 + $0x444] sm:$0xff]
        %v5461 = vld [vmem:[%s16 + $0x44c] sm:$0xff]
        %v5462 = vld [vmem:[%s16 + $0x454] sm:$0xff]
        %v5463 = vld [vmem:[%s16 + $0x45c] sm:$0xf]
        %v5464 = vld [vmem:[%s16 + $0x460] sm:$0xff]
        %v5465 = vld [vmem:[%s16 + $0x468] sm:$0xff]
        %v5466 = vld [vmem:[%s16 + $0x470] sm:$0xff]
        %v5467 = vld [vmem:[%s16 + $0x478] sm:$0xf]
        %v5468 = vld [vmem:[%s16 + $0x47c] sm:$0xff]
        %v5469 = vld [vmem:[%s16 + $0x484] sm:$0xff]
        %v5470 = vld [vmem:[%s16 + $0x48c] sm:$0xff]
        %v5471 = vld [vmem:[%s16 + $0x494] sm:$0xf]
        %v5472 = vld [vmem:[%s16 + $0x498] sm:$0xff]
        %v5473 = vld [vmem:[%s16 + $0x4a0] sm:$0xff]
        %v5474 = vld [vmem:[%s16 + $0x4a8] sm:$0xff]
        %v5475 = vld [vmem:[%s16 + $0x4b0] sm:$0xf]
        %v5476 = vld [vmem:[%s16 + $0x4b4] sm:$0xff]
        %v5477 = vld [vmem:[%s16 + $0x4bc] sm:$0xff]
        %v5478 = vld [vmem:[%s16 + $0x4c4] sm:$0xff]
        %v5479 = vld [vmem:[%s16 + $0x4cc] sm:$0xf]
        %v5480 = vld [vmem:[%s16 + $0x4d0] sm:$0xff]
        %v5481 = vld [vmem:[%s16 + $0x4d8] sm:$0xff]
        %v5482 = vld [vmem:[%s16 + $0x4e0] sm:$0xff]
        %v5483 = vld [vmem:[%s16 + $0x4e8] sm:$0xf]
        %v5484 = vld [vmem:[%s16 + $0x4ec] sm:$0xff]
        %v5485 = vld [vmem:[%s16 + $0x4f4] sm:$0xff]
        %v5486 = vld [vmem:[%s16 + $0x4fc] sm:$0xff]
        %v5487 = vld [vmem:[%s16 + $0x504] sm:$0xf]
        %v5488 = vld [vmem:[%s16 + $0x508] sm:$0xff]
        %v5489 = vld [vmem:[%s16 + $0x510] sm:$0xff]
        %v5490 = vld [vmem:[%s16 + $0x518] sm:$0xff]
        %v5491 = vld [vmem:[%s16 + $0x520] sm:$0xf]
        %v5492 = vld [vmem:[%s16 + $0x524] sm:$0xff]
        %v5493 = vld [vmem:[%s16 + $0x52c] sm:$0xff]
        %v5494 = vld [vmem:[%s16 + $0x534] sm:$0xff]
        %v5495 = vld [vmem:[%s16 + $0x53c] sm:$0xf]
        %v5496 = vld [vmem:[%s16 + $0x540] sm:$0xff]
        %v5497 = vld [vmem:[%s16 + $0x548] sm:$0xff]
        %v5498 = vld [vmem:[%s16 + $0x550] sm:$0xff]
        %v5499 = vld [vmem:[%s16 + $0x558] sm:$0xf]
        %v5500 = vld [vmem:[%s16 + $0x55c] sm:$0xff]
        %v5501 = vld [vmem:[%s16 + $0x564] sm:$0xff]
        %v5502 = vld [vmem:[%s16 + $0x56c] sm:$0xff]
        %v5503 = vld [vmem:[%s16 + $0x574] sm:$0xf]
        %v5504 = vld [vmem:[%s16 + $0x578] sm:$0xff]
        %v5505 = vld [vmem:[%s16 + $0x580] sm:$0xff]
        %v5506 = vld [vmem:[%s16 + $0x588] sm:$0xff]
        %v5507 = vld [vmem:[%s16 + $0x590] sm:$0xf]
        %v5508 = vld [vmem:[%s16 + $0x594] sm:$0xff]
        %v5509 = vld [vmem:[%s16 + $0x59c] sm:$0xff]
        %v5510 = vld [vmem:[%s16 + $0x5a4] sm:$0xff]
        %v5511 = vld [vmem:[%s16 + $0x5ac] sm:$0xf]
        %v5512 = vld [vmem:[%s16 + $0x5b0] sm:$0xff]
        %v5513 = vld [vmem:[%s16 + $0x5b8] sm:$0xff]
        %v5514 = vld [vmem:[%s16 + $0x5c0] sm:$0xff]
        %v5515 = vld [vmem:[%s16 + $0x5c8] sm:$0xf]
        %v5516 = vld [vmem:[%s16 + $0x5cc] sm:$0xff]
        %v5517 = vld [vmem:[%s16 + $0x5d4] sm:$0xff]
        %v5518 = vld [vmem:[%s16 + $0x5dc] sm:$0xff]
        %v5519 = vld [vmem:[%s16 + $0x5e4] sm:$0xf]
        %v5520 = vld [vmem:[%s16 + $0x5e8] sm:$0xff]
        %v5521 = vld [vmem:[%s16 + $0x5f0] sm:$0xff]
        %v5522 = vld [vmem:[%s16 + $0x5f8] sm:$0xff]
        %v5523 = vld [vmem:[%s16 + $0x600] sm:$0xf]
        %v5524 = vld [vmem:[%s16 + $0x604] sm:$0xff]
        %v5525 = vld [vmem:[%s16 + $0x60c] sm:$0xff]
        %v5526 = vld [vmem:[%s16 + $0x614] sm:$0xff]
        %v5527 = vld [vmem:[%s16 + $0x61c] sm:$0xf]
        %v5528 = vld [vmem:[%s16 + $0x620] sm:$0xff]
        %v5529 = vld [vmem:[%s16 + $0x628] sm:$0xff]
        %v5530 = vld [vmem:[%s16 + $0x630] sm:$0xff]
        %v5531 = vld [vmem:[%s16 + $0x638] sm:$0xf]
        %v5532 = vld [vmem:[%s16 + $0x63c] sm:$0xff]
        %v5533 = vld [vmem:[%s16 + $0x644] sm:$0xff]
        %v5534 = vld [vmem:[%s16 + $0x64c] sm:$0xff]
        %v5535 = vld [vmem:[%s16 + $0x654] sm:$0xf]
        %v5536 = vld [vmem:[%s16 + $0x658] sm:$0xff]
        %v5537 = vld [vmem:[%s16 + $0x660] sm:$0xff]
        %v5538 = vld [vmem:[%s16 + $0x668] sm:$0xff]
        %v5539 = vld [vmem:[%s16 + $0x670] sm:$0xf]
        %v5540 = vld [vmem:[%s16 + $0x674] sm:$0xff]
        %v5541 = vld [vmem:[%s16 + $0x67c] sm:$0xff]
        %v5542 = vld [vmem:[%s16 + $0x684] sm:$0xff]
        %v5543 = vld [vmem:[%s16 + $0x68c] sm:$0xf]
        %v5544 = vld [vmem:[%s16 + $0x690] sm:$0xff]
        %v5545 = vld [vmem:[%s16 + $0x698] sm:$0xff]
        %v5546 = vld [vmem:[%s16 + $0x6a0] sm:$0xff]
        %v5547 = vld [vmem:[%s16 + $0x6a8] sm:$0xf]
        %v5548 = vld [vmem:[%s16 + $0x6ac] sm:$0xff]
        %v5549 = vld [vmem:[%s16 + $0x6b4] sm:$0xff]
        %v5550 = vld [vmem:[%s16 + $0x6bc] sm:$0xff]
        %v5551 = vld [vmem:[%s16 + $0x6c4] sm:$0xf]
        %v5552 = vld [vmem:[%s16 + $0x6c8] sm:$0xff]
        %v5553 = vld [vmem:[%s16 + $0x6d0] sm:$0xff]
        %v5554 = vld [vmem:[%s16 + $0x6d8] sm:$0xff]
        %v5555 = vld [vmem:[%s16 + $0x6e0] sm:$0xf]
        %v5556 = vld [vmem:[%s16 + $0x6e4] sm:$0xff]
        %v5557 = vld [vmem:[%s16 + $0x6ec] sm:$0xff]
        %v5558 = vld [vmem:[%s16 + $0x6f4] sm:$0xff]
        %v5559 = vld [vmem:[%s16 + $0x6fc] sm:$0xf]
        %v5560 = vunpack.c.l.bf16 %v5304
        %v5561 = vunpack.c.h.bf16 %v5304
        %v5562 = vunpack.c.l.bf16 %v5305
        %v5563 = vunpack.c.h.bf16 %v5305
        %v5564 = vunpack.c.l.bf16 %v5306
        %v5565 = vunpack.c.h.bf16 %v5306
        %v5566 = vunpack.c.l.bf16 %v5307
        %v5567 = vunpack.c.l.bf16 %v5308
        %v5568 = vunpack.c.h.bf16 %v5308
        %v5569 = vunpack.c.l.bf16 %v5309
        %v5570 = vunpack.c.h.bf16 %v5309
        %v5571 = vunpack.c.l.bf16 %v5310
        %v5572 = vunpack.c.h.bf16 %v5310
        %v5573 = vunpack.c.l.bf16 %v5311
        %v5574 = vunpack.c.l.bf16 %v5312
        %v5575 = vunpack.c.h.bf16 %v5312
        %v5576 = vunpack.c.l.bf16 %v5313
        %v5577 = vunpack.c.h.bf16 %v5313
        %v5578 = vunpack.c.l.bf16 %v5314
        %v5579 = vunpack.c.h.bf16 %v5314
        %v5580 = vunpack.c.l.bf16 %v5315
        %v5581 = vunpack.c.l.bf16 %v5316
        %v5582 = vunpack.c.h.bf16 %v5316
        %v5583 = vunpack.c.l.bf16 %v5317
        %v5584 = vunpack.c.h.bf16 %v5317
        %v5585 = vunpack.c.l.bf16 %v5318
        %v5586 = vunpack.c.h.bf16 %v5318
        %v5587 = vunpack.c.l.bf16 %v5319
        %v5588 = vunpack.c.l.bf16 %v5320
        %v5589 = vunpack.c.h.bf16 %v5320
        %v5590 = vunpack.c.l.bf16 %v5321
        %v5591 = vunpack.c.h.bf16 %v5321
        %v5592 = vunpack.c.l.bf16 %v5322
        %v5593 = vunpack.c.h.bf16 %v5322
        %v5594 = vunpack.c.l.bf16 %v5323
        %v5595 = vunpack.c.l.bf16 %v5324
        %v5596 = vunpack.c.h.bf16 %v5324
        %v5597 = vunpack.c.l.bf16 %v5325
        %v5598 = vunpack.c.h.bf16 %v5325
        %v5599 = vunpack.c.l.bf16 %v5326
        %v5600 = vunpack.c.h.bf16 %v5326
        %v5601 = vunpack.c.l.bf16 %v5327
        %v5602 = vunpack.c.l.bf16 %v5328
        %v5603 = vunpack.c.h.bf16 %v5328
        %v5604 = vunpack.c.l.bf16 %v5329
        %v5605 = vunpack.c.h.bf16 %v5329
        %v5606 = vunpack.c.l.bf16 %v5330
        %v5607 = vunpack.c.h.bf16 %v5330
        %v5608 = vunpack.c.l.bf16 %v5331
        %v5609 = vunpack.c.l.bf16 %v5332
        %v5610 = vunpack.c.h.bf16 %v5332
        %v5611 = vunpack.c.l.bf16 %v5333
        %v5612 = vunpack.c.h.bf16 %v5333
        %v5613 = vunpack.c.l.bf16 %v5334
        %v5614 = vunpack.c.h.bf16 %v5334
        %v5615 = vunpack.c.l.bf16 %v5335
        %v5616 = vunpack.c.l.bf16 %v5336
        %v5617 = vunpack.c.h.bf16 %v5336
        %v5618 = vunpack.c.l.bf16 %v5337
        %v5619 = vunpack.c.h.bf16 %v5337
        %v5620 = vunpack.c.l.bf16 %v5338
        %v5621 = vunpack.c.h.bf16 %v5338
        %v5622 = vunpack.c.l.bf16 %v5339
        %v5623 = vunpack.c.l.bf16 %v5340
        %v5624 = vunpack.c.h.bf16 %v5340
        %v5625 = vunpack.c.l.bf16 %v5341
        %v5626 = vunpack.c.h.bf16 %v5341
        %v5627 = vunpack.c.l.bf16 %v5342
        %v5628 = vunpack.c.h.bf16 %v5342
        %v5629 = vunpack.c.l.bf16 %v5343
        %v5630 = vunpack.c.l.bf16 %v5344
        %v5631 = vunpack.c.h.bf16 %v5344
        %v5632 = vunpack.c.l.bf16 %v5345
        %v5633 = vunpack.c.h.bf16 %v5345
        %v5634 = vunpack.c.l.bf16 %v5346
        %v5635 = vunpack.c.h.bf16 %v5346
        %v5636 = vunpack.c.l.bf16 %v5347
        %v5637 = vunpack.c.l.bf16 %v5348
        %v5638 = vunpack.c.h.bf16 %v5348
        %v5639 = vunpack.c.l.bf16 %v5349
        %v5640 = vunpack.c.h.bf16 %v5349
        %v5641 = vunpack.c.l.bf16 %v5350
        %v5642 = vunpack.c.h.bf16 %v5350
        %v5643 = vunpack.c.l.bf16 %v5351
        %v5644 = vunpack.c.l.bf16 %v5352
        %v5645 = vunpack.c.h.bf16 %v5352
        %v5646 = vunpack.c.l.bf16 %v5353
        %v5647 = vunpack.c.h.bf16 %v5353
        %v5648 = vunpack.c.l.bf16 %v5354
        %v5649 = vunpack.c.h.bf16 %v5354
        %v5650 = vunpack.c.l.bf16 %v5355
        %v5651 = vunpack.c.l.bf16 %v5356
        %v5652 = vunpack.c.h.bf16 %v5356
        %v5653 = vunpack.c.l.bf16 %v5357
        %v5654 = vunpack.c.h.bf16 %v5357
        %v5655 = vunpack.c.l.bf16 %v5358
        %v5656 = vunpack.c.h.bf16 %v5358
        %v5657 = vunpack.c.l.bf16 %v5359
        %v5658 = vunpack.c.l.bf16 %v5360
        %v5659 = vunpack.c.h.bf16 %v5360
        %v5660 = vunpack.c.l.bf16 %v5361
        %v5661 = vunpack.c.h.bf16 %v5361
        %v5662 = vunpack.c.l.bf16 %v5362
        %v5663 = vunpack.c.h.bf16 %v5362
        %v5664 = vunpack.c.l.bf16 %v5363
        %v5665 = vunpack.c.l.bf16 %v5364
        %v5666 = vunpack.c.h.bf16 %v5364
        %v5667 = vunpack.c.l.bf16 %v5365
        %v5668 = vunpack.c.h.bf16 %v5365
        %v5669 = vunpack.c.l.bf16 %v5366
        %v5670 = vunpack.c.h.bf16 %v5366
        %v5671 = vunpack.c.l.bf16 %v5367
        %v5672 = vunpack.c.l.bf16 %v5368
        %v5673 = vunpack.c.h.bf16 %v5368
        %v5674 = vunpack.c.l.bf16 %v5369
        %v5675 = vunpack.c.h.bf16 %v5369
        %v5676 = vunpack.c.l.bf16 %v5370
        %v5677 = vunpack.c.h.bf16 %v5370
        %v5678 = vunpack.c.l.bf16 %v5371
        %v5679 = vunpack.c.l.bf16 %v5372
        %v5680 = vunpack.c.h.bf16 %v5372
        %v5681 = vunpack.c.l.bf16 %v5373
        %v5682 = vunpack.c.h.bf16 %v5373
        %v5683 = vunpack.c.l.bf16 %v5374
        %v5684 = vunpack.c.h.bf16 %v5374
        %v5685 = vunpack.c.l.bf16 %v5375
        %v5686 = vunpack.c.l.bf16 %v5376
        %v5687 = vunpack.c.h.bf16 %v5376
        %v5688 = vunpack.c.l.bf16 %v5377
        %v5689 = vunpack.c.h.bf16 %v5377
        %v5690 = vunpack.c.l.bf16 %v5378
        %v5691 = vunpack.c.h.bf16 %v5378
        %v5692 = vunpack.c.l.bf16 %v5379
        %v5693 = vunpack.c.l.bf16 %v5380
        %v5694 = vunpack.c.h.bf16 %v5380
        %v5695 = vunpack.c.l.bf16 %v5381
        %v5696 = vunpack.c.h.bf16 %v5381
        %v5697 = vunpack.c.l.bf16 %v5382
        %v5698 = vunpack.c.h.bf16 %v5382
        %v5699 = vunpack.c.l.bf16 %v5383
        %v5700 = vunpack.c.l.bf16 %v5384
        %v5701 = vunpack.c.h.bf16 %v5384
        %v5702 = vunpack.c.l.bf16 %v5385
        %v5703 = vunpack.c.h.bf16 %v5385
        %v5704 = vunpack.c.l.bf16 %v5386
        %v5705 = vunpack.c.h.bf16 %v5386
        %v5706 = vunpack.c.l.bf16 %v5387
        %v5707 = vunpack.c.l.bf16 %v5388
        %v5708 = vunpack.c.h.bf16 %v5388
        %v5709 = vunpack.c.l.bf16 %v5389
        %v5710 = vunpack.c.h.bf16 %v5389
        %v5711 = vunpack.c.l.bf16 %v5390
        %v5712 = vunpack.c.h.bf16 %v5390
        %v5713 = vunpack.c.l.bf16 %v5391
        %v5714 = vunpack.c.l.bf16 %v5392
        %v5715 = vunpack.c.h.bf16 %v5392
        %v5716 = vunpack.c.l.bf16 %v5393
        %v5717 = vunpack.c.h.bf16 %v5393
        %v5718 = vunpack.c.l.bf16 %v5394
        %v5719 = vunpack.c.h.bf16 %v5394
        %v5720 = vunpack.c.l.bf16 %v5395
        %v5721 = vunpack.c.l.bf16 %v5396
        %v5722 = vunpack.c.h.bf16 %v5396
        %v5723 = vunpack.c.l.bf16 %v5397
        %v5724 = vunpack.c.h.bf16 %v5397
        %v5725 = vunpack.c.l.bf16 %v5398
        %v5726 = vunpack.c.h.bf16 %v5398
        %v5727 = vunpack.c.l.bf16 %v5399
        %v5728 = vunpack.c.l.bf16 %v5400
        %v5729 = vunpack.c.h.bf16 %v5400
        %v5730 = vunpack.c.l.bf16 %v5401
        %v5731 = vunpack.c.h.bf16 %v5401
        %v5732 = vunpack.c.l.bf16 %v5402
        %v5733 = vunpack.c.h.bf16 %v5402
        %v5734 = vunpack.c.l.bf16 %v5403
        %v5735 = vunpack.c.l.bf16 %v5404
        %v5736 = vunpack.c.h.bf16 %v5404
        %v5737 = vunpack.c.l.bf16 %v5405
        %v5738 = vunpack.c.h.bf16 %v5405
        %v5739 = vunpack.c.l.bf16 %v5406
        %v5740 = vunpack.c.h.bf16 %v5406
        %v5741 = vunpack.c.l.bf16 %v5407
        %v5742 = vunpack.c.l.bf16 %v5408
        %v5743 = vunpack.c.h.bf16 %v5408
        %v5744 = vunpack.c.l.bf16 %v5409
        %v5745 = vunpack.c.h.bf16 %v5409
        %v5746 = vunpack.c.l.bf16 %v5410
        %v5747 = vunpack.c.h.bf16 %v5410
        %v5748 = vunpack.c.l.bf16 %v5411
        %v5749 = vunpack.c.l.bf16 %v5412
        %v5750 = vunpack.c.h.bf16 %v5412
        %v5751 = vunpack.c.l.bf16 %v5413
        %v5752 = vunpack.c.h.bf16 %v5413
        %v5753 = vunpack.c.l.bf16 %v5414
        %v5754 = vunpack.c.h.bf16 %v5414
        %v5755 = vunpack.c.l.bf16 %v5415
        %v5756 = vunpack.c.l.bf16 %v5416
        %v5757 = vunpack.c.h.bf16 %v5416
        %v5758 = vunpack.c.l.bf16 %v5417
        %v5759 = vunpack.c.h.bf16 %v5417
        %v5760 = vunpack.c.l.bf16 %v5418
        %v5761 = vunpack.c.h.bf16 %v5418
        %v5762 = vunpack.c.l.bf16 %v5419
        %v5763 = vunpack.c.l.bf16 %v5420
        %v5764 = vunpack.c.h.bf16 %v5420
        %v5765 = vunpack.c.l.bf16 %v5421
        %v5766 = vunpack.c.h.bf16 %v5421
        %v5767 = vunpack.c.l.bf16 %v5422
        %v5768 = vunpack.c.h.bf16 %v5422
        %v5769 = vunpack.c.l.bf16 %v5423
        %v5770 = vunpack.c.l.bf16 %v5424
        %v5771 = vunpack.c.h.bf16 %v5424
        %v5772 = vunpack.c.l.bf16 %v5425
        %v5773 = vunpack.c.h.bf16 %v5425
        %v5774 = vunpack.c.l.bf16 %v5426
        %v5775 = vunpack.c.h.bf16 %v5426
        %v5776 = vunpack.c.l.bf16 %v5427
        %v5777 = vunpack.c.l.bf16 %v5428
        %v5778 = vunpack.c.h.bf16 %v5428
        %v5779 = vunpack.c.l.bf16 %v5429
        %v5780 = vunpack.c.h.bf16 %v5429
        %v5781 = vunpack.c.l.bf16 %v5430
        %v5782 = vunpack.c.h.bf16 %v5430
        %v5783 = vunpack.c.l.bf16 %v5431
        %v5784 = vunpack.c.l.bf16 %v5432
        %v5785 = vunpack.c.h.bf16 %v5432
        %v5786 = vunpack.c.l.bf16 %v5433
        %v5787 = vunpack.c.h.bf16 %v5433
        %v5788 = vunpack.c.l.bf16 %v5434
        %v5789 = vunpack.c.h.bf16 %v5434
        %v5790 = vunpack.c.l.bf16 %v5435
        %v5791 = vunpack.c.l.bf16 %v5436
        %v5792 = vunpack.c.h.bf16 %v5436
        %v5793 = vunpack.c.l.bf16 %v5437
        %v5794 = vunpack.c.h.bf16 %v5437
        %v5795 = vunpack.c.l.bf16 %v5438
        %v5796 = vunpack.c.h.bf16 %v5438
        %v5797 = vunpack.c.l.bf16 %v5439
        %v5798 = vunpack.c.l.bf16 %v5440
        %v5799 = vunpack.c.h.bf16 %v5440
        %v5800 = vunpack.c.l.bf16 %v5441
        %v5801 = vunpack.c.h.bf16 %v5441
        %v5802 = vunpack.c.l.bf16 %v5442
        %v5803 = vunpack.c.h.bf16 %v5442
        %v5804 = vunpack.c.l.bf16 %v5443
        %v5805 = vunpack.c.l.bf16 %v5444
        %v5806 = vunpack.c.h.bf16 %v5444
        %v5807 = vunpack.c.l.bf16 %v5445
        %v5808 = vunpack.c.h.bf16 %v5445
        %v5809 = vunpack.c.l.bf16 %v5446
        %v5810 = vunpack.c.h.bf16 %v5446
        %v5811 = vunpack.c.l.bf16 %v5447
        %v5812 = vunpack.c.l.bf16 %v5448
        %v5813 = vunpack.c.h.bf16 %v5448
        %v5814 = vunpack.c.l.bf16 %v5449
        %v5815 = vunpack.c.h.bf16 %v5449
        %v5816 = vunpack.c.l.bf16 %v5450
        %v5817 = vunpack.c.h.bf16 %v5450
        %v5818 = vunpack.c.l.bf16 %v5451
        %v5819 = vunpack.c.l.bf16 %v5452
        %v5820 = vunpack.c.h.bf16 %v5452
        %v5821 = vunpack.c.l.bf16 %v5453
        %v5822 = vunpack.c.h.bf16 %v5453
        %v5823 = vunpack.c.l.bf16 %v5454
        %v5824 = vunpack.c.h.bf16 %v5454
        %v5825 = vunpack.c.l.bf16 %v5455
        %v5826 = vunpack.c.l.bf16 %v5456
        %v5827 = vunpack.c.h.bf16 %v5456
        %v5828 = vunpack.c.l.bf16 %v5457
        %v5829 = vunpack.c.h.bf16 %v5457
        %v5830 = vunpack.c.l.bf16 %v5458
        %v5831 = vunpack.c.h.bf16 %v5458
        %v5832 = vunpack.c.l.bf16 %v5459
        %v5833 = vunpack.c.l.bf16 %v5460
        %v5834 = vunpack.c.h.bf16 %v5460
        %v5835 = vunpack.c.l.bf16 %v5461
        %v5836 = vunpack.c.h.bf16 %v5461
        %v5837 = vunpack.c.l.bf16 %v5462
        %v5838 = vunpack.c.h.bf16 %v5462
        %v5839 = vunpack.c.l.bf16 %v5463
        %v5840 = vunpack.c.l.bf16 %v5464
        %v5841 = vunpack.c.h.bf16 %v5464
        %v5842 = vunpack.c.l.bf16 %v5465
        %v5843 = vunpack.c.h.bf16 %v5465
        %v5844 = vunpack.c.l.bf16 %v5466
        %v5845 = vunpack.c.h.bf16 %v5466
        %v5846 = vunpack.c.l.bf16 %v5467
        %v5847 = vunpack.c.l.bf16 %v5468
        %v5848 = vunpack.c.h.bf16 %v5468
        %v5849 = vunpack.c.l.bf16 %v5469
        %v5850 = vunpack.c.h.bf16 %v5469
        %v5851 = vunpack.c.l.bf16 %v5470
        %v5852 = vunpack.c.h.bf16 %v5470
        %v5853 = vunpack.c.l.bf16 %v5471
        %v5854 = vunpack.c.l.bf16 %v5472
        %v5855 = vunpack.c.h.bf16 %v5472
        %v5856 = vunpack.c.l.bf16 %v5473
        %v5857 = vunpack.c.h.bf16 %v5473
        %v5858 = vunpack.c.l.bf16 %v5474
        %v5859 = vunpack.c.h.bf16 %v5474
        %v5860 = vunpack.c.l.bf16 %v5475
        %v5861 = vunpack.c.l.bf16 %v5476
        %v5862 = vunpack.c.h.bf16 %v5476
        %v5863 = vunpack.c.l.bf16 %v5477
        %v5864 = vunpack.c.h.bf16 %v5477
        %v5865 = vunpack.c.l.bf16 %v5478
        %v5866 = vunpack.c.h.bf16 %v5478
        %v5867 = vunpack.c.l.bf16 %v5479
        %v5868 = vunpack.c.l.bf16 %v5480
        %v5869 = vunpack.c.h.bf16 %v5480
        %v5870 = vunpack.c.l.bf16 %v5481
        %v5871 = vunpack.c.h.bf16 %v5481
        %v5872 = vunpack.c.l.bf16 %v5482
        %v5873 = vunpack.c.h.bf16 %v5482
        %v5874 = vunpack.c.l.bf16 %v5483
        %v5875 = vunpack.c.l.bf16 %v5484
        %v5876 = vunpack.c.h.bf16 %v5484
        %v5877 = vunpack.c.l.bf16 %v5485
        %v5878 = vunpack.c.h.bf16 %v5485
        %v5879 = vunpack.c.l.bf16 %v5486
        %v5880 = vunpack.c.h.bf16 %v5486
        %v5881 = vunpack.c.l.bf16 %v5487
        %v5882 = vunpack.c.l.bf16 %v5488
        %v5883 = vunpack.c.h.bf16 %v5488
        %v5884 = vunpack.c.l.bf16 %v5489
        %v5885 = vunpack.c.h.bf16 %v5489
        %v5886 = vunpack.c.l.bf16 %v5490
        %v5887 = vunpack.c.h.bf16 %v5490
        %v5888 = vunpack.c.l.bf16 %v5491
        %v5889 = vunpack.c.l.bf16 %v5492
        %v5890 = vunpack.c.h.bf16 %v5492
        %v5891 = vunpack.c.l.bf16 %v5493
        %v5892 = vunpack.c.h.bf16 %v5493
        %v5893 = vunpack.c.l.bf16 %v5494
        %v5894 = vunpack.c.h.bf16 %v5494
        %v5895 = vunpack.c.l.bf16 %v5495
        %v5896 = vunpack.c.l.bf16 %v5496
        %v5897 = vunpack.c.h.bf16 %v5496
        %v5898 = vunpack.c.l.bf16 %v5497
        %v5899 = vunpack.c.h.bf16 %v5497
        %v5900 = vunpack.c.l.bf16 %v5498
        %v5901 = vunpack.c.h.bf16 %v5498
        %v5902 = vunpack.c.l.bf16 %v5499
        %v5903 = vunpack.c.l.bf16 %v5500
        %v5904 = vunpack.c.h.bf16 %v5500
        %v5905 = vunpack.c.l.bf16 %v5501
        %v5906 = vunpack.c.h.bf16 %v5501
        %v5907 = vunpack.c.l.bf16 %v5502
        %v5908 = vunpack.c.h.bf16 %v5502
        %v5909 = vunpack.c.l.bf16 %v5503
        %v5910 = vunpack.c.l.bf16 %v5504
        %v5911 = vunpack.c.h.bf16 %v5504
        %v5912 = vunpack.c.l.bf16 %v5505
        %v5913 = vunpack.c.h.bf16 %v5505
        %v5914 = vunpack.c.l.bf16 %v5506
        %v5915 = vunpack.c.h.bf16 %v5506
        %v5916 = vunpack.c.l.bf16 %v5507
        %v5917 = vunpack.c.l.bf16 %v5508
        %v5918 = vunpack.c.h.bf16 %v5508
        %v5919 = vunpack.c.l.bf16 %v5509
        %v5920 = vunpack.c.h.bf16 %v5509
        %v5921 = vunpack.c.l.bf16 %v5510
        %v5922 = vunpack.c.h.bf16 %v5510
        %v5923 = vunpack.c.l.bf16 %v5511
        %v5924 = vunpack.c.l.bf16 %v5512
        %v5925 = vunpack.c.h.bf16 %v5512
        %v5926 = vunpack.c.l.bf16 %v5513
        %v5927 = vunpack.c.h.bf16 %v5513
        %v5928 = vunpack.c.l.bf16 %v5514
        %v5929 = vunpack.c.h.bf16 %v5514
        %v5930 = vunpack.c.l.bf16 %v5515
        %v5931 = vunpack.c.l.bf16 %v5516
        %v5932 = vunpack.c.h.bf16 %v5516
        %v5933 = vunpack.c.l.bf16 %v5517
        %v5934 = vunpack.c.h.bf16 %v5517
        %v5935 = vunpack.c.l.bf16 %v5518
        %v5936 = vunpack.c.h.bf16 %v5518
        %v5937 = vunpack.c.l.bf16 %v5519
        %v5938 = vunpack.c.l.bf16 %v5520
        %v5939 = vunpack.c.h.bf16 %v5520
        %v5940 = vunpack.c.l.bf16 %v5521
        %v5941 = vunpack.c.h.bf16 %v5521
        %v5942 = vunpack.c.l.bf16 %v5522
        %v5943 = vunpack.c.h.bf16 %v5522
        %v5944 = vunpack.c.l.bf16 %v5523
        %v5945 = vunpack.c.l.bf16 %v5524
        %v5946 = vunpack.c.h.bf16 %v5524
        %v5947 = vunpack.c.l.bf16 %v5525
        %v5948 = vunpack.c.h.bf16 %v5525
        %v5949 = vunpack.c.l.bf16 %v5526
        %v5950 = vunpack.c.h.bf16 %v5526
        %v5951 = vunpack.c.l.bf16 %v5527
        %v5952 = vunpack.c.l.bf16 %v5528
        %v5953 = vunpack.c.h.bf16 %v5528
        %v5954 = vunpack.c.l.bf16 %v5529
        %v5955 = vunpack.c.h.bf16 %v5529
        %v5956 = vunpack.c.l.bf16 %v5530
        %v5957 = vunpack.c.h.bf16 %v5530
        %v5958 = vunpack.c.l.bf16 %v5531
        %v5959 = vunpack.c.l.bf16 %v5532
        %v5960 = vunpack.c.h.bf16 %v5532
        %v5961 = vunpack.c.l.bf16 %v5533
        %v5962 = vunpack.c.h.bf16 %v5533
        %v5963 = vunpack.c.l.bf16 %v5534
        %v5964 = vunpack.c.h.bf16 %v5534
        %v5965 = vunpack.c.l.bf16 %v5535
        %v5966 = vunpack.c.l.bf16 %v5536
        %v5967 = vunpack.c.h.bf16 %v5536
        %v5968 = vunpack.c.l.bf16 %v5537
        %v5969 = vunpack.c.h.bf16 %v5537
        %v5970 = vunpack.c.l.bf16 %v5538
        %v5971 = vunpack.c.h.bf16 %v5538
        %v5972 = vunpack.c.l.bf16 %v5539
        %v5973 = vunpack.c.l.bf16 %v5540
        %v5974 = vunpack.c.h.bf16 %v5540
        %v5975 = vunpack.c.l.bf16 %v5541
        %v5976 = vunpack.c.h.bf16 %v5541
        %v5977 = vunpack.c.l.bf16 %v5542
        %v5978 = vunpack.c.h.bf16 %v5542
        %v5979 = vunpack.c.l.bf16 %v5543
        %v5980 = vunpack.c.l.bf16 %v5544
        %v5981 = vunpack.c.h.bf16 %v5544
        %v5982 = vunpack.c.l.bf16 %v5545
        %v5983 = vunpack.c.h.bf16 %v5545
        %v5984 = vunpack.c.l.bf16 %v5546
        %v5985 = vunpack.c.h.bf16 %v5546
        %v5986 = vunpack.c.l.bf16 %v5547
        %v5987 = vunpack.c.l.bf16 %v5548
        %v5988 = vunpack.c.h.bf16 %v5548
        %v5989 = vunpack.c.l.bf16 %v5549
        %v5990 = vunpack.c.h.bf16 %v5549
        %v5991 = vunpack.c.l.bf16 %v5550
        %v5992 = vunpack.c.h.bf16 %v5550
        %v5993 = vunpack.c.l.bf16 %v5551
        %v5994 = vunpack.c.l.bf16 %v5552
        %v5995 = vunpack.c.h.bf16 %v5552
        %v5996 = vunpack.c.l.bf16 %v5553
        %v5997 = vunpack.c.h.bf16 %v5553
        %v5998 = vunpack.c.l.bf16 %v5554
        %v5999 = vunpack.c.h.bf16 %v5554
        %v6000 = vunpack.c.l.bf16 %v5555
        %v6001 = vunpack.c.l.bf16 %v5556
        %v6002 = vunpack.c.h.bf16 %v5556
        %v6003 = vunpack.c.l.bf16 %v5557
        %v6004 = vunpack.c.h.bf16 %v5557
        %v6005 = vunpack.c.l.bf16 %v5558
        %v6006 = vunpack.c.h.bf16 %v5558
        %v6007 = vunpack.c.l.bf16 %v5559
        %v6008 = vld [vmem:[%s17] sm:$0xff]
        %v6010 = vlaneseq
        %v6011 = vshrl.u32 %v6010, 7
        %v6012 = vsub.s32 0, %v6011
        %v6013 = vrot.slane %v6008, %v6012
        %v6014 = vlaneseq
        %v6015 = vshrl.u32 %v6014, 7
        %v6016 = vsub.s32 1, %v6015
        %v6017 = vrot.slane %v6008, %v6016
        %v6018 = vlaneseq
        %v6019 = vshrl.u32 %v6018, 7
        %v6020 = vsub.s32 2, %v6019
        %v6021 = vrot.slane %v6008, %v6020
        %v6022 = vlaneseq
        %v6023 = vshrl.u32 %v6022, 7
        %v6024 = vsub.s32 3, %v6023
        %v6025 = vrot.slane %v6008, %v6024
        %v6026 = vlaneseq
        %v6027 = vshrl.u32 %v6026, 7
        %v6028 = vsub.s32 4, %v6027
        %v6029 = vrot.slane %v6008, %v6028
        %v6030 = vlaneseq
        %v6031 = vshrl.u32 %v6030, 7
        %v6032 = vsub.s32 5, %v6031
        %v6033 = vrot.slane %v6008, %v6032
        %v6034 = vlaneseq
        %v6035 = vshrl.u32 %v6034, 7
        %v6036 = vsub.s32 6, %v6035
        %v6037 = vrot.slane %v6008, %v6036
        %6045 = vmatprep.subr.mxu0 %v5666
        %6046 = vmatpush1.msra.mxu0 %v5665
        %6047 = vmatprep.subr.mxu0 %v5659
        %6048 = vmatpush1.msra.mxu0 %v5658
        %6049 = vmatprep.subr.mxu0 %v5652
        %6050 = vmatpush1.msra.mxu0 %v5651
        %6051 = vmatprep.subr.mxu0 %v5645
        %6052 = vmatpush1.msra.mxu0 %v5644
        %6053 = vmatprep.subr.mxu0 %v5638
        %6054 = vmatpush1.msra.mxu0 %v5637
        %6055 = vmatprep.subr.mxu0 %v5631
        %6056 = vmatpush1.msra.mxu0 %v5630
        %6057 = vmatprep.subr.mxu0 %v5624
        %6058 = vmatpush1.msra.mxu0 %v5623
        %6059 = vmatprep.subr.mxu0 %v5617
        %6060 = vmatpush1.msra.mxu0 %v5616
        %6061 = vmatprep.subr.mxu0 %v5610
        %6062 = vmatpush1.msra.mxu0 %v5609
        %6063 = vmatprep.subr.mxu0 %v5603
        %6064 = vmatpush1.msra.mxu0 %v5602
        %6065 = vmatprep.subr.mxu0 %v5596
        %6066 = vmatpush1.msra.mxu0 %v5595
        %6067 = vmatprep.subr.mxu0 %v5589
        %6068 = vmatpush1.msra.mxu0 %v5588
        %6069 = vmatprep.subr.mxu0 %v5582
        %6070 = vmatpush1.msra.mxu0 %v5581
        %6071 = vmatprep.subr.mxu0 %v5575
        %6072 = vmatpush1.msra.mxu0 %v5574
        %6073 = vmatprep.subr.mxu0 %v5568
        %6074 = vmatpush1.msra.mxu0 %v5567
        %6075 = vmatprep.subr.mxu0 %v5561
        %6076 = vmatpush1.msra.mxu0 %v5560
        %6077 = vmatprep.subr.mxu0 %v5778
        %6078 = vmatpush2.msra.mxu0 %v5777
        %6079 = vmatprep.subr.mxu0 %v5771
        %6080 = vmatpush2.msra.mxu0 %v5770
        %6081 = vmatprep.subr.mxu0 %v5764
        %6082 = vmatpush2.msra.mxu0 %v5763
        %6083 = vmatprep.subr.mxu0 %v5757
        %6084 = vmatpush2.msra.mxu0 %v5756
        %6085 = vmatprep.subr.mxu0 %v5750
        %6086 = vmatpush2.msra.mxu0 %v5749
        %6087 = vmatprep.subr.mxu0 %v5743
        %6088 = vmatpush2.msra.mxu0 %v5742
        %6089 = vmatprep.subr.mxu0 %v5736
        %6090 = vmatpush2.msra.mxu0 %v5735
        %6091 = vmatprep.subr.mxu0 %v5729
        %6092 = vmatpush2.msra.mxu0 %v5728
        %6093 = vmatprep.subr.mxu0 %v5722
        %6094 = vmatpush2.msra.mxu0 %v5721
        %6095 = vmatprep.subr.mxu0 %v5715
        %6096 = vmatpush2.msra.mxu0 %v5714
        %6097 = vmatprep.subr.mxu0 %v5708
        %6098 = vmatpush2.msra.mxu0 %v5707
        %6099 = vmatprep.subr.mxu0 %v5701
        %6100 = vmatpush2.msra.mxu0 %v5700
        %6101 = vmatprep.subr.mxu0 %v5694
        %6102 = vmatpush2.msra.mxu0 %v5693
        %6103 = vmatprep.subr.mxu0 %v5687
        %6104 = vmatpush2.msra.mxu0 %v5686
        %6105 = vmatprep.subr.mxu0 %v5680
        %6106 = vmatpush2.msra.mxu0 %v5679
        %6107 = vmatprep.subr.mxu0 %v5673
        %6108 = vmatpush2.msra.mxu0 %v5672
        %6109 = vmatprep.mubr.f32.mxu0 %v5301
        %6110 = vmatmul.mubr.f32.gmra.mxu0 %v5300
        %v6111 = vpop.f32.mrf.mxu0
        %v6112 = vadd.f32 %v6013, %v6111
        %v6113 = vpop.f32.mrf.mxu0
        %v6114 = vadd.f32 %v6017, %v6113
        %6115 = vdwg.mxu0
        %6116 = vmatprep.subr.mxu0 %v5890
        %6117 = vmatpush1.msra.mxu0 %v5889
        %6118 = vmatprep.subr.mxu0 %v5883
        %6119 = vmatpush1.msra.mxu0 %v5882
        %6120 = vmatprep.subr.mxu0 %v5876
        %6121 = vmatpush1.msra.mxu0 %v5875
        %6122 = vmatprep.subr.mxu0 %v5869
        %6123 = vmatpush1.msra.mxu0 %v5868
        %6124 = vmatprep.subr.mxu0 %v5862
        %6125 = vmatpush1.msra.mxu0 %v5861
        %6126 = vmatprep.subr.mxu0 %v5855
        %6127 = vmatpush1.msra.mxu0 %v5854
        %6128 = vmatprep.subr.mxu0 %v5848
        %6129 = vmatpush1.msra.mxu0 %v5847
        %6130 = vmatprep.subr.mxu0 %v5841
        %6131 = vmatpush1.msra.mxu0 %v5840
        %6132 = vmatprep.subr.mxu0 %v5834
        %6133 = vmatpush1.msra.mxu0 %v5833
        %6134 = vmatprep.subr.mxu0 %v5827
        %6135 = vmatpush1.msra.mxu0 %v5826
        %6136 = vmatprep.subr.mxu0 %v5820
        %6137 = vmatpush1.msra.mxu0 %v5819
        %6138 = vmatprep.subr.mxu0 %v5813
        %6139 = vmatpush1.msra.mxu0 %v5812
        %6140 = vmatprep.subr.mxu0 %v5806
        %6141 = vmatpush1.msra.mxu0 %v5805
        %6142 = vmatprep.subr.mxu0 %v5799
        %6143 = vmatpush1.msra.mxu0 %v5798
        %6144 = vmatprep.subr.mxu0 %v5792
        %6145 = vmatpush1.msra.mxu0 %v5791
        %6146 = vmatprep.subr.mxu0 %v5785
        %6147 = vmatpush1.msra.mxu0 %v5784
        %6148 = vmatprep.subr.mxu0 %v6002
        %6149 = vmatpush2.msra.mxu0 %v6001
        %6150 = vmatprep.subr.mxu0 %v5995
        %6151 = vmatpush2.msra.mxu0 %v5994
        %6152 = vmatprep.subr.mxu0 %v5988
        %6153 = vmatpush2.msra.mxu0 %v5987
        %6154 = vmatprep.subr.mxu0 %v5981
        %6155 = vmatpush2.msra.mxu0 %v5980
        %6156 = vmatprep.subr.mxu0 %v5974
        %6157 = vmatpush2.msra.mxu0 %v5973
        %6158 = vmatprep.subr.mxu0 %v5967
        %6159 = vmatpush2.msra.mxu0 %v5966
        %6160 = vmatprep.subr.mxu0 %v5960
        %6161 = vmatpush2.msra.mxu0 %v5959
        %6162 = vmatprep.subr.mxu0 %v5953
        %6163 = vmatpush2.msra.mxu0 %v5952
        %6164 = vmatprep.subr.mxu0 %v5946
        %6165 = vmatpush2.msra.mxu0 %v5945
        %6166 = vmatprep.subr.mxu0 %v5939
        %6167 = vmatpush2.msra.mxu0 %v5938
        %6168 = vmatprep.subr.mxu0 %v5932
        %6169 = vmatpush2.msra.mxu0 %v5931
        %6170 = vmatprep.subr.mxu0 %v5925
        %6171 = vmatpush2.msra.mxu0 %v5924
        %6172 = vmatprep.subr.mxu0 %v5918
        %6173 = vmatpush2.msra.mxu0 %v5917
        %6174 = vmatprep.subr.mxu0 %v5911
        %6175 = vmatpush2.msra.mxu0 %v5910
        %6176 = vmatprep.subr.mxu0 %v5904
        %6177 = vmatpush2.msra.mxu0 %v5903
        %6178 = vmatprep.subr.mxu0 %v5897
        %6179 = vmatpush2.msra.mxu0 %v5896
        %6180 = vmatprep.mubr.f32.mxu0 %v5303
        %6181 = vmatmul.mubr.f32.gmra.mxu0 %v5302
        %v6182 = vpop.f32.mrf.mxu0
        %v6183 = vadd.f32 %v6112, %v6182
        %v6184 = vpop.f32.mrf.mxu0
        %v6185 = vadd.f32 %v6114, %v6184
        %6186 = vdwg.mxu0
        %6187 = vmatprep.subr.mxu0 %v5668
        %6188 = vmatpush1.msra.mxu0 %v5667
        %6189 = vmatprep.subr.mxu0 %v5661
        %6190 = vmatpush1.msra.mxu0 %v5660
        %6191 = vmatprep.subr.mxu0 %v5654
        %6192 = vmatpush1.msra.mxu0 %v5653
        %6193 = vmatprep.subr.mxu0 %v5647
        %6194 = vmatpush1.msra.mxu0 %v5646
        %6195 = vmatprep.subr.mxu0 %v5640
        %6196 = vmatpush1.msra.mxu0 %v5639
        %6197 = vmatprep.subr.mxu0 %v5633
        %6198 = vmatpush1.msra.mxu0 %v5632
        %6199 = vmatprep.subr.mxu0 %v5626
        %6200 = vmatpush1.msra.mxu0 %v5625
        %6201 = vmatprep.subr.mxu0 %v5619
        %6202 = vmatpush1.msra.mxu0 %v5618
        %6203 = vmatprep.subr.mxu0 %v5612
        %6204 = vmatpush1.msra.mxu0 %v5611
        %6205 = vmatprep.subr.mxu0 %v5605
        %6206 = vmatpush1.msra.mxu0 %v5604
        %6207 = vmatprep.subr.mxu0 %v5598
        %6208 = vmatpush1.msra.mxu0 %v5597
        %6209 = vmatprep.subr.mxu0 %v5591
        %6210 = vmatpush1.msra.mxu0 %v5590
        %6211 = vmatprep.subr.mxu0 %v5584
        %6212 = vmatpush1.msra.mxu0 %v5583
        %6213 = vmatprep.subr.mxu0 %v5577
        %6214 = vmatpush1.msra.mxu0 %v5576
        %6215 = vmatprep.subr.mxu0 %v5570
        %6216 = vmatpush1.msra.mxu0 %v5569
        %6217 = vmatprep.subr.mxu0 %v5563
        %6218 = vmatpush1.msra.mxu0 %v5562
        %6219 = vmatprep.subr.mxu0 %v5780
        %6220 = vmatpush2.msra.mxu0 %v5779
        %6221 = vmatprep.subr.mxu0 %v5773
        %6222 = vmatpush2.msra.mxu0 %v5772
        %6223 = vmatprep.subr.mxu0 %v5766
        %6224 = vmatpush2.msra.mxu0 %v5765
        %6225 = vmatprep.subr.mxu0 %v5759
        %6226 = vmatpush2.msra.mxu0 %v5758
        %6227 = vmatprep.subr.mxu0 %v5752
        %6228 = vmatpush2.msra.mxu0 %v5751
        %6229 = vmatprep.subr.mxu0 %v5745
        %6230 = vmatpush2.msra.mxu0 %v5744
        %6231 = vmatprep.subr.mxu0 %v5738
        %6232 = vmatpush2.msra.mxu0 %v5737
        %6233 = vmatprep.subr.mxu0 %v5731
        %6234 = vmatpush2.msra.mxu0 %v5730
        %6235 = vmatprep.subr.mxu0 %v5724
        %6236 = vmatpush2.msra.mxu0 %v5723
        %6237 = vmatprep.subr.mxu0 %v5717
        %6238 = vmatpush2.msra.mxu0 %v5716
        %6239 = vmatprep.subr.mxu0 %v5710
        %6240 = vmatpush2.msra.mxu0 %v5709
        %6241 = vmatprep.subr.mxu0 %v5703
        %6242 = vmatpush2.msra.mxu0 %v5702
        %6243 = vmatprep.subr.mxu0 %v5696
        %6244 = vmatpush2.msra.mxu0 %v5695
        %6245 = vmatprep.subr.mxu0 %v5689
        %6246 = vmatpush2.msra.mxu0 %v5688
        %6247 = vmatprep.subr.mxu0 %v5682
        %6248 = vmatpush2.msra.mxu0 %v5681
        %6249 = vmatprep.subr.mxu0 %v5675
        %6250 = vmatpush2.msra.mxu0 %v5674
        %6251 = vmatprep.mubr.f32.mxu0 %v5301
        %6252 = vmatmul.mubr.f32.gmra.mxu0 %v5300
        %v6253 = vpop.f32.mrf.mxu0
        %v6254 = vadd.f32 %v6021, %v6253
        %v6255 = vpop.f32.mrf.mxu0
        %v6256 = vadd.f32 %v6025, %v6255
        %6257 = vdwg.mxu0
        %6258 = vmatprep.subr.mxu0 %v5892
        %6259 = vmatpush1.msra.mxu0 %v5891
        %6260 = vmatprep.subr.mxu0 %v5885
        %6261 = vmatpush1.msra.mxu0 %v5884
        %6262 = vmatprep.subr.mxu0 %v5878
        %6263 = vmatpush1.msra.mxu0 %v5877
        %6264 = vmatprep.subr.mxu0 %v5871
        %6265 = vmatpush1.msra.mxu0 %v5870
        %6266 = vmatprep.subr.mxu0 %v5864
        %6267 = vmatpush1.msra.mxu0 %v5863
        %6268 = vmatprep.subr.mxu0 %v5857
        %6269 = vmatpush1.msra.mxu0 %v5856
        %6270 = vmatprep.subr.mxu0 %v5850
        %6271 = vmatpush1.msra.mxu0 %v5849
        %6272 = vmatprep.subr.mxu0 %v5843
        %6273 = vmatpush1.msra.mxu0 %v5842
        %6274 = vmatprep.subr.mxu0 %v5836
        %6275 = vmatpush1.msra.mxu0 %v5835
        %6276 = vmatprep.subr.mxu0 %v5829
        %6277 = vmatpush1.msra.mxu0 %v5828
        %6278 = vmatprep.subr.mxu0 %v5822
        %6279 = vmatpush1.msra.mxu0 %v5821
        %6280 = vmatprep.subr.mxu0 %v5815
        %6281 = vmatpush1.msra.mxu0 %v5814
        %6282 = vmatprep.subr.mxu0 %v5808
        %6283 = vmatpush1.msra.mxu0 %v5807
        %6284 = vmatprep.subr.mxu0 %v5801
        %6285 = vmatpush1.msra.mxu0 %v5800
        %6286 = vmatprep.subr.mxu0 %v5794
        %6287 = vmatpush1.msra.mxu0 %v5793
        %6288 = vmatprep.subr.mxu0 %v5787
        %6289 = vmatpush1.msra.mxu0 %v5786
        %6290 = vmatprep.subr.mxu0 %v6004
        %6291 = vmatpush2.msra.mxu0 %v6003
        %6292 = vmatprep.subr.mxu0 %v5997
        %6293 = vmatpush2.msra.mxu0 %v5996
        %6294 = vmatprep.subr.mxu0 %v5990
        %6295 = vmatpush2.msra.mxu0 %v5989
        %6296 = vmatprep.subr.mxu0 %v5983
        %6297 = vmatpush2.msra.mxu0 %v5982
        %6298 = vmatprep.subr.mxu0 %v5976
        %6299 = vmatpush2.msra.mxu0 %v5975
        %6300 = vmatprep.subr.mxu0 %v5969
        %6301 = vmatpush2.msra.mxu0 %v5968
        %6302 = vmatprep.subr.mxu0 %v5962
        %6303 = vmatpush2.msra.mxu0 %v5961
        %6304 = vmatprep.subr.mxu0 %v5955
        %6305 = vmatpush2.msra.mxu0 %v5954
        %6306 = vmatprep.subr.mxu0 %v5948
        %6307 = vmatpush2.msra.mxu0 %v5947
        %6308 = vmatprep.subr.mxu0 %v5941
        %6309 = vmatpush2.msra.mxu0 %v5940
        %6310 = vmatprep.subr.mxu0 %v5934
        %6311 = vmatpush2.msra.mxu0 %v5933
        %6312 = vmatprep.subr.mxu0 %v5927
        %6313 = vmatpush2.msra.mxu0 %v5926
        %6314 = vmatprep.subr.mxu0 %v5920
        %6315 = vmatpush2.msra.mxu0 %v5919
        %6316 = vmatprep.subr.mxu0 %v5913
        %6317 = vmatpush2.msra.mxu0 %v5912
        %6318 = vmatprep.subr.mxu0 %v5906
        %6319 = vmatpush2.msra.mxu0 %v5905
        %6320 = vmatprep.subr.mxu0 %v5899
        %6321 = vmatpush2.msra.mxu0 %v5898
        %6322 = vmatprep.mubr.f32.mxu0 %v5303
        %6323 = vmatmul.mubr.f32.gmra.mxu0 %v5302
        %v6324 = vpop.f32.mrf.mxu0
        %v6325 = vadd.f32 %v6254, %v6324
        %v6326 = vpop.f32.mrf.mxu0
        %v6327 = vadd.f32 %v6256, %v6326
        %6328 = vdwg.mxu0
        %6329 = vmatprep.subr.mxu0 %v5670
        %6330 = vmatpush1.msra.mxu0 %v5669
        %6331 = vmatprep.subr.mxu0 %v5663
        %6332 = vmatpush1.msra.mxu0 %v5662
        %6333 = vmatprep.subr.mxu0 %v5656
        %6334 = vmatpush1.msra.mxu0 %v5655
        %6335 = vmatprep.subr.mxu0 %v5649
        %6336 = vmatpush1.msra.mxu0 %v5648
        %6337 = vmatprep.subr.mxu0 %v5642
        %6338 = vmatpush1.msra.mxu0 %v5641
        %6339 = vmatprep.subr.mxu0 %v5635
        %6340 = vmatpush1.msra.mxu0 %v5634
        %6341 = vmatprep.subr.mxu0 %v5628
        %6342 = vmatpush1.msra.mxu0 %v5627
        %6343 = vmatprep.subr.mxu0 %v5621
        %6344 = vmatpush1.msra.mxu0 %v5620
        %6345 = vmatprep.subr.mxu0 %v5614
        %6346 = vmatpush1.msra.mxu0 %v5613
        %6347 = vmatprep.subr.mxu0 %v5607
        %6348 = vmatpush1.msra.mxu0 %v5606
        %6349 = vmatprep.subr.mxu0 %v5600
        %6350 = vmatpush1.msra.mxu0 %v5599
        %6351 = vmatprep.subr.mxu0 %v5593
        %6352 = vmatpush1.msra.mxu0 %v5592
        %6353 = vmatprep.subr.mxu0 %v5586
        %6354 = vmatpush1.msra.mxu0 %v5585
        %6355 = vmatprep.subr.mxu0 %v5579
        %6356 = vmatpush1.msra.mxu0 %v5578
        %6357 = vmatprep.subr.mxu0 %v5572
        %6358 = vmatpush1.msra.mxu0 %v5571
        %6359 = vmatprep.subr.mxu0 %v5565
        %6360 = vmatpush1.msra.mxu0 %v5564
        %6361 = vmatprep.subr.mxu0 %v5782
        %6362 = vmatpush2.msra.mxu0 %v5781
        %6363 = vmatprep.subr.mxu0 %v5775
        %6364 = vmatpush2.msra.mxu0 %v5774
        %6365 = vmatprep.subr.mxu0 %v5768
        %6366 = vmatpush2.msra.mxu0 %v5767
        %6367 = vmatprep.subr.mxu0 %v5761
        %6368 = vmatpush2.msra.mxu0 %v5760
        %6369 = vmatprep.subr.mxu0 %v5754
        %6370 = vmatpush2.msra.mxu0 %v5753
        %6371 = vmatprep.subr.mxu0 %v5747
        %6372 = vmatpush2.msra.mxu0 %v5746
        %6373 = vmatprep.subr.mxu0 %v5740
        %6374 = vmatpush2.msra.mxu0 %v5739
        %6375 = vmatprep.subr.mxu0 %v5733
        %6376 = vmatpush2.msra.mxu0 %v5732
        %6377 = vmatprep.subr.mxu0 %v5726
        %6378 = vmatpush2.msra.mxu0 %v5725
        %6379 = vmatprep.subr.mxu0 %v5719
        %6380 = vmatpush2.msra.mxu0 %v5718
        %6381 = vmatprep.subr.mxu0 %v5712
        %6382 = vmatpush2.msra.mxu0 %v5711
        %6383 = vmatprep.subr.mxu0 %v5705
        %6384 = vmatpush2.msra.mxu0 %v5704
        %6385 = vmatprep.subr.mxu0 %v5698
        %6386 = vmatpush2.msra.mxu0 %v5697
        %6387 = vmatprep.subr.mxu0 %v5691
        %6388 = vmatpush2.msra.mxu0 %v5690
        %6389 = vmatprep.subr.mxu0 %v5684
        %6390 = vmatpush2.msra.mxu0 %v5683
        %6391 = vmatprep.subr.mxu0 %v5677
        %6392 = vmatpush2.msra.mxu0 %v5676
        %6393 = vmatprep.mubr.f32.mxu0 %v5301
        %6394 = vmatmul.mubr.f32.gmra.mxu0 %v5300
        %v6395 = vpop.f32.mrf.mxu0
        %v6396 = vadd.f32 %v6029, %v6395
        %v6397 = vpop.f32.mrf.mxu0
        %v6398 = vadd.f32 %v6033, %v6397
        %6399 = vdwg.mxu0
        %6400 = vmatprep.subr.mxu0 %v5894
        %6401 = vmatpush1.msra.mxu0 %v5893
        %6402 = vmatprep.subr.mxu0 %v5887
        %6403 = vmatpush1.msra.mxu0 %v5886
        %6404 = vmatprep.subr.mxu0 %v5880
        %6405 = vmatpush1.msra.mxu0 %v5879
        %6406 = vmatprep.subr.mxu0 %v5873
        %6407 = vmatpush1.msra.mxu0 %v5872
        %6408 = vmatprep.subr.mxu0 %v5866
        %6409 = vmatpush1.msra.mxu0 %v5865
        %6410 = vmatprep.subr.mxu0 %v5859
        %6411 = vmatpush1.msra.mxu0 %v5858
        %6412 = vmatprep.subr.mxu0 %v5852
        %6413 = vmatpush1.msra.mxu0 %v5851
        %6414 = vmatprep.subr.mxu0 %v5845
        %6415 = vmatpush1.msra.mxu0 %v5844
        %6416 = vmatprep.subr.mxu0 %v5838
        %6417 = vmatpush1.msra.mxu0 %v5837
        %6418 = vmatprep.subr.mxu0 %v5831
        %6419 = vmatpush1.msra.mxu0 %v5830
        %6420 = vmatprep.subr.mxu0 %v5824
        %6421 = vmatpush1.msra.mxu0 %v5823
        %6422 = vmatprep.subr.mxu0 %v5817
        %6423 = vmatpush1.msra.mxu0 %v5816
        %6424 = vmatprep.subr.mxu0 %v5810
        %6425 = vmatpush1.msra.mxu0 %v5809
        %6426 = vmatprep.subr.mxu0 %v5803
        %6427 = vmatpush1.msra.mxu0 %v5802
        %6428 = vmatprep.subr.mxu0 %v5796
        %6429 = vmatpush1.msra.mxu0 %v5795
        %6430 = vmatprep.subr.mxu0 %v5789
        %6431 = vmatpush1.msra.mxu0 %v5788
        %6432 = vmatprep.subr.mxu0 %v6006
        %6433 = vmatpush2.msra.mxu0 %v6005
        %6434 = vmatprep.subr.mxu0 %v5999
        %6435 = vmatpush2.msra.mxu0 %v5998
        %6436 = vmatprep.subr.mxu0 %v5992
        %6437 = vmatpush2.msra.mxu0 %v5991
        %6438 = vmatprep.subr.mxu0 %v5985
        %6439 = vmatpush2.msra.mxu0 %v5984
        %6440 = vmatprep.subr.mxu0 %v5978
        %6441 = vmatpush2.msra.mxu0 %v5977
        %6442 = vmatprep.subr.mxu0 %v5971
        %6443 = vmatpush2.msra.mxu0 %v5970
        %6444 = vmatprep.subr.mxu0 %v5964
        %6445 = vmatpush2.msra.mxu0 %v5963
        %6446 = vmatprep.subr.mxu0 %v5957
        %6447 = vmatpush2.msra.mxu0 %v5956
        %6448 = vmatprep.subr.mxu0 %v5950
        %6449 = vmatpush2.msra.mxu0 %v5949
        %6450 = vmatprep.subr.mxu0 %v5943
        %6451 = vmatpush2.msra.mxu0 %v5942
        %6452 = vmatprep.subr.mxu0 %v5936
        %6453 = vmatpush2.msra.mxu0 %v5935
        %6454 = vmatprep.subr.mxu0 %v5929
        %6455 = vmatpush2.msra.mxu0 %v5928
        %6456 = vmatprep.subr.mxu0 %v5922
        %6457 = vmatpush2.msra.mxu0 %v5921
        %6458 = vmatprep.subr.mxu0 %v5915
        %6459 = vmatpush2.msra.mxu0 %v5914
        %6460 = vmatprep.subr.mxu0 %v5908
        %6461 = vmatpush2.msra.mxu0 %v5907
        %6462 = vmatprep.subr.mxu0 %v5901
        %6463 = vmatpush2.msra.mxu0 %v5900
        %6464 = vmatprep.mubr.f32.mxu0 %v5303
        %6465 = vmatmul.mubr.f32.gmra.mxu0 %v5302
        %v6466 = vpop.f32.mrf.mxu0
        %v6467 = vadd.f32 %v6396, %v6466
        %v6468 = vpop.f32.mrf.mxu0
        %v6469 = vadd.f32 %v6398, %v6468
        %6470 = vdwg.mxu0
        %6471 = vmatprep.subr.mxu0 0.0
        %6472 = vmatpush1.msra.mxu0 %v5671
        %6473 = vmatprep.subr.mxu0 0.0
        %6474 = vmatpush1.msra.mxu0 %v5664
        %6475 = vmatprep.subr.mxu0 0.0
        %6476 = vmatpush1.msra.mxu0 %v5657
        %6477 = vmatprep.subr.mxu0 0.0
        %6478 = vmatpush1.msra.mxu0 %v5650
        %6479 = vmatprep.subr.mxu0 0.0
        %6480 = vmatpush1.msra.mxu0 %v5643
        %6481 = vmatprep.subr.mxu0 0.0
        %6482 = vmatpush1.msra.mxu0 %v5636
        %6483 = vmatprep.subr.mxu0 0.0
        %6484 = vmatpush1.msra.mxu0 %v5629
        %6485 = vmatprep.subr.mxu0 0.0
        %6486 = vmatpush1.msra.mxu0 %v5622
        %6487 = vmatprep.subr.mxu0 0.0
        %6488 = vmatpush1.msra.mxu0 %v5615
        %6489 = vmatprep.subr.mxu0 0.0
        %6490 = vmatpush1.msra.mxu0 %v5608
        %6491 = vmatprep.subr.mxu0 0.0
        %6492 = vmatpush1.msra.mxu0 %v5601
        %6493 = vmatprep.subr.mxu0 0.0
        %6494 = vmatpush1.msra.mxu0 %v5594
        %6495 = vmatprep.subr.mxu0 0.0
        %6496 = vmatpush1.msra.mxu0 %v5587
        %6497 = vmatprep.subr.mxu0 0.0
        %6498 = vmatpush1.msra.mxu0 %v5580
        %6499 = vmatprep.subr.mxu0 0.0
        %6500 = vmatpush1.msra.mxu0 %v5573
        %6501 = vmatprep.subr.mxu0 0.0
        %6502 = vmatpush1.msra.mxu0 %v5566
        %6503 = vmatprep.subr.mxu0 0.0
        %6504 = vmatpush2.msra.mxu0 %v5783
        %6505 = vmatprep.subr.mxu0 0.0
        %6506 = vmatpush2.msra.mxu0 %v5776
        %6507 = vmatprep.subr.mxu0 0.0
        %6508 = vmatpush2.msra.mxu0 %v5769
        %6509 = vmatprep.subr.mxu0 0.0
        %6510 = vmatpush2.msra.mxu0 %v5762
        %6511 = vmatprep.subr.mxu0 0.0
        %6512 = vmatpush2.msra.mxu0 %v5755
        %6513 = vmatprep.subr.mxu0 0.0
        %6514 = vmatpush2.msra.mxu0 %v5748
        %6515 = vmatprep.subr.mxu0 0.0
        %6516 = vmatpush2.msra.mxu0 %v5741
        %6517 = vmatprep.subr.mxu0 0.0
        %6518 = vmatpush2.msra.mxu0 %v5734
        %6519 = vmatprep.subr.mxu0 0.0
        %6520 = vmatpush2.msra.mxu0 %v5727
        %6521 = vmatprep.subr.mxu0 0.0
        %6522 = vmatpush2.msra.mxu0 %v5720
        %6523 = vmatprep.subr.mxu0 0.0
        %6524 = vmatpush2.msra.mxu0 %v5713
        %6525 = vmatprep.subr.mxu0 0.0
        %6526 = vmatpush2.msra.mxu0 %v5706
        %6527 = vmatprep.subr.mxu0 0.0
        %6528 = vmatpush2.msra.mxu0 %v5699
        %6529 = vmatprep.subr.mxu0 0.0
        %6530 = vmatpush2.msra.mxu0 %v5692
        %6531 = vmatprep.subr.mxu0 0.0
        %6532 = vmatpush2.msra.mxu0 %v5685
        %6533 = vmatprep.subr.mxu0 0.0
        %6534 = vmatpush2.msra.mxu0 %v5678
        %6535 = vmatprep.mubr.f32.mxu0 %v5301
        %6536 = vmatmul.mubr.f32.gmra.mxu0 %v5300
        %v6537 = vpop.f32.mrf.mxu0
        %v6538 = vadd.f32 %v6037, %v6537
        %v6539 = vpop.f32.mrf.mxu0
        %6540 = vdwg.mxu0
        %6541 = vmatprep.subr.mxu0 0.0
        %6542 = vmatpush1.msra.mxu0 %v5895
        %6543 = vmatprep.subr.mxu0 0.0
        %6544 = vmatpush1.msra.mxu0 %v5888
        %6545 = vmatprep.subr.mxu0 0.0
        %6546 = vmatpush1.msra.mxu0 %v5881
        %6547 = vmatprep.subr.mxu0 0.0
        %6548 = vmatpush1.msra.mxu0 %v5874
        %6549 = vmatprep.subr.mxu0 0.0
        %6550 = vmatpush1.msra.mxu0 %v5867
        %6551 = vmatprep.subr.mxu0 0.0
        %6552 = vmatpush1.msra.mxu0 %v5860
        %6553 = vmatprep.subr.mxu0 0.0
        %6554 = vmatpush1.msra.mxu0 %v5853
        %6555 = vmatprep.subr.mxu0 0.0
        %6556 = vmatpush1.msra.mxu0 %v5846
        %6557 = vmatprep.subr.mxu0 0.0
        %6558 = vmatpush1.msra.mxu0 %v5839
        %6559 = vmatprep.subr.mxu0 0.0
        %6560 = vmatpush1.msra.mxu0 %v5832
        %6561 = vmatprep.subr.mxu0 0.0
        %6562 = vmatpush1.msra.mxu0 %v5825
        %6563 = vmatprep.subr.mxu0 0.0
        %6564 = vmatpush1.msra.mxu0 %v5818
        %6565 = vmatprep.subr.mxu0 0.0
        %6566 = vmatpush1.msra.mxu0 %v5811
        %6567 = vmatprep.subr.mxu0 0.0
        %6568 = vmatpush1.msra.mxu0 %v5804
        %6569 = vmatprep.subr.mxu0 0.0
        %6570 = vmatpush1.msra.mxu0 %v5797
        %6571 = vmatprep.subr.mxu0 0.0
        %6572 = vmatpush1.msra.mxu0 %v5790
        %6573 = vmatprep.subr.mxu0 0.0
        %6574 = vmatpush2.msra.mxu0 %v6007
        %6575 = vmatprep.subr.mxu0 0.0
        %6576 = vmatpush2.msra.mxu0 %v6000
        %6577 = vmatprep.subr.mxu0 0.0
        %6578 = vmatpush2.msra.mxu0 %v5993
        %6579 = vmatprep.subr.mxu0 0.0
        %6580 = vmatpush2.msra.mxu0 %v5986
        %6581 = vmatprep.subr.mxu0 0.0
        %6582 = vmatpush2.msra.mxu0 %v5979
        %6583 = vmatprep.subr.mxu0 0.0
        %6584 = vmatpush2.msra.mxu0 %v5972
        %6585 = vmatprep.subr.mxu0 0.0
        %6586 = vmatpush2.msra.mxu0 %v5965
        %6587 = vmatprep.subr.mxu0 0.0
        %6588 = vmatpush2.msra.mxu0 %v5958
        %6589 = vmatprep.subr.mxu0 0.0
        %6590 = vmatpush2.msra.mxu0 %v5951
        %6591 = vmatprep.subr.mxu0 0.0
        %6592 = vmatpush2.msra.mxu0 %v5944
        %6593 = vmatprep.subr.mxu0 0.0
        %6594 = vmatpush2.msra.mxu0 %v5937
        %6595 = vmatprep.subr.mxu0 0.0
        %6596 = vmatpush2.msra.mxu0 %v5930
        %6597 = vmatprep.subr.mxu0 0.0
        %6598 = vmatpush2.msra.mxu0 %v5923
        %6599 = vmatprep.subr.mxu0 0.0
        %6600 = vmatpush2.msra.mxu0 %v5916
        %6601 = vmatprep.subr.mxu0 0.0
        %6602 = vmatpush2.msra.mxu0 %v5909
        %6603 = vmatprep.subr.mxu0 0.0
        %6604 = vmatpush2.msra.mxu0 %v5902
        %6605 = vmatprep.mubr.f32.mxu0 %v5303
        %6606 = vmatmul.mubr.f32.gmra.mxu0 %v5302
        %v6607 = vpop.f32.mrf.mxu0
        %v6608 = vadd.f32 %v6538, %v6607
        %v6609 = vpop.f32.mrf.mxu0
        %6610 = vdwg.mxu0
        %v6611 = vxor.u32 %v6183, 2147483648
        %v6612 = vxor.u32 %v6185, 2147483648
        %v6613 = vxor.u32 %v6325, 2147483648
        %v6614 = vxor.u32 %v6327, 2147483648
        %v6615 = vxor.u32 %v6467, 2147483648
        %v6616 = vxor.u32 %v6469, 2147483648
        %v6617 = vxor.u32 %v6608, 2147483648
        %v6618 = vmul.f32 %v6611, 1.442695
        %v6619 = vpow.pop %v6618
        %v6620 = vmul.f32 %v6612, 1.442695
        %v6621 = vpow.pop %v6620
        %v6622 = vmul.f32 %v6613, 1.442695
        %v6623 = vpow.pop %v6622
        %v6624 = vmul.f32 %v6614, 1.442695
        %v6625 = vpow.pop %v6624
        %v6626 = vmul.f32 %v6615, 1.442695
        %v6627 = vpow.pop %v6626
        %v6628 = vmul.f32 %v6616, 1.442695
        %v6629 = vpow.pop %v6628
        %v6630 = vmul.f32 %v6617, 1.442695
        %v6631 = vpow.pop %v6630
        %v6632 = vadd.f32 %v6619, 1.0
        %v6633 = vadd.f32 %v6621, 1.0
        %v6634 = vadd.f32 %v6623, 1.0
        %v6635 = vadd.f32 %v6625, 1.0
        %v6636 = vadd.f32 %v6627, 1.0
        %v6637 = vadd.f32 %v6629, 1.0
        %v6638 = vadd.f32 %v6631, 1.0
        %v6639 = vrcp.pop %v6632
        %v6640 = vmul.f32 1.0, %v6639
        %v6641 = vrcp.pop %v6633
        %v6642 = vmul.f32 1.0, %v6641
        %v6643 = vrcp.pop %v6634
        %v6644 = vmul.f32 1.0, %v6643
        %v6645 = vrcp.pop %v6635
        %v6646 = vmul.f32 1.0, %v6645
        %v6647 = vrcp.pop %v6636
        %v6648 = vmul.f32 1.0, %v6647
        %v6649 = vrcp.pop %v6637
        %v6650 = vmul.f32 1.0, %v6649
        %v6651 = vrcp.pop %v6638
        %v6652 = vmul.f32 1.0, %v6651
        %6653 = vst [vmem:[%s609] sm:$0xff] %v6640
        %6654 = vst [vmem:[%s609 + $0x8] sm:$0xff] %v6642
        %6655 = vst [vmem:[%s609 + $0x10] sm:$0xff] %v6644
        %6656 = vst [vmem:[%s609 + $0x18] sm:$0xff] %v6646
        %6657 = vst [vmem:[%s609 + $0x20] sm:$0xff] %v6648
        %6658 = vst [vmem:[%s609 + $0x28] sm:$0xff] %v6650
        %6659 = vst [vmem:[%s609 + $0x30] sm:$0xff] %v6652
        %6660 = vst [vmem:[%s630] sm:$0xff] %v3638
        %6661 = vst [vmem:[%s630 + $0x8] sm:$0xff] %v3640
        %s6662 = sand.u32 %s430, 1
        %s6663 = scalar_lea.sflag [#allocation3], %s6662
        %s6664 = sand.u32 %s430, 1
        %s6665 = smul.addr %s6664, 56
        %s6666 = scalar_lea.vmem [#allocation2], %s6665
        %p6667 = scmp.lt.s32.totalorder %s34, 3
        %s6668 = scalar_select %p6667, %s34, 3
        %s6669 = smul.addr %s6668, 2
        %s6670 = smul.addr %s6669, 8
        %s6671 = scalar_lea.vmem %s19, %s6670
        // Predicated region
        $region93: #{vae_forward.1} parent=91 // pred_check
          %p6672 = pneg %p440
        $region94: #{vae_forward.1} parent=91 // pred_check_branch
          %6674 = sbr.rel (%p6672) target = $region96
        $region95: #{vae_forward.1} parent=91 // pred_region
          %s6676 = ssub.s32 896, 896
          %6677 = vsyncadd %s6663, %s6676
          %s6678 = smul.addr %s34, 7
          %s6679 = smul.addr %s6678, 128
          %s6680 = scalar_lea.hbm %s18, %s6679
          %s6682 = sshll.u32 %s6666, 4
          %s6683 = int_to_ptr.vmem [resolvable:$true] %s6682
          %6685 = dma.vmem_to_hbm [thread:$0]  %s6683, 896, %s6680, %s6663
        $region96: #{vae_forward.1} parent=91 // pred_fallthru
          _
        // Predicated region
        $region97: #{vae_forward.1} parent=91 // pred_check
          %p6686 = pneg %p466
        $region98: #{vae_forward.1} parent=91 // pred_check_branch
          %6688 = sbr.rel (%p6686) target = $region100
        $region99: #{vae_forward.1} parent=91 // pred_region
          _
        $region100: #{vae_forward.1} parent=91 // pred_fallthru
          _
      $region92: #{vae_forward.1} parent=5 // pred_fallthru
        _
      %p6689 = scmp.le.s32.totalorder 2, %s29
      // Predicated region
      $region101: #{vae_forward.1} parent=5 // pred_check
        %p6690 = pneg %p6689
      $region102: #{vae_forward.1} parent=5 // pred_check_branch
        %6692 = sbr.rel (%p6690) target = $region104
      $region103: #{vae_forward.1} parent=5 // pred_region
        %s6693 = ssub.s32 %s29, 2
        // Predicated region
        $region105: #{vae_forward.1} parent=103 // pred_check
          %p6694 = pneg %p446
        $region106: #{vae_forward.1} parent=103 // pred_check_branch
          %6696 = sbr.rel (%p6694) target = $region108
        $region107: #{vae_forward.1} parent=103 // pred_region
          %s6697 = sand.u32 %s431, 1
          %s6698 = scalar_lea.sflag [#allocation3], %s6697
          %s6699 = sand.u32 %s431, 1
          %s6700 = smul.addr %s6699, 56
          %s6701 = scalar_lea.vmem [#allocation2], %s6700
          %6702 = dma.done %s6698, 896
        $region108: #{vae_forward.1} parent=103 // pred_fallthru
          _
        // Predicated region
        $region109: #{vae_forward.1} parent=103 // pred_check
          %p6703 = pneg %p472
        $region110: #{vae_forward.1} parent=103 // pred_check_branch
          %6705 = sbr.rel (%p6703) target = $region112
        $region111: #{vae_forward.1} parent=103 // pred_region
          %p6706 = scmp.lt.s32.totalorder %s35, 3
          %s6707 = scalar_select %p6706, %s35, 3
          %s6708 = smul.addr %s6707, 2
          %s6709 = smul.addr %s6708, 8
          %s6710 = scalar_lea.vmem %s19, %s6709
        $region112: #{vae_forward.1} parent=103 // pred_fallthru
          _
      $region104: #{vae_forward.1} parent=5 // pred_fallthru
        _
    $region6: #{vae_forward.1} parent=1 // loop_footer
      %s33 = sadd.s32 1, %s29
    $region7: #{vae_forward.1} parent=1 // loop_footer_branch
      %28 = sbr.rel target = $region3
    $region8: #{vae_forward.1} parent=1 // loop_exit
      _
    %6711 = vsyncpa [#allocation3], 1
    %s6712 = scalar_lea.sflag [#allocation3], 1
    %6713 = vsyncpa %s6712, 1

</llo_original>
